<compile_context>
chip_gen: v7x
topology: tpu7x:2x2x1
jax: 0.10.0
libtpu: 0.0.40
codegen_flags: <defaults>
</compile_context>

<pallas_src>
import functools

import jax
import jax.numpy as jnp
from jax.experimental import pallas as pl
from jax.experimental.pallas import tpu as pltpu


# ----------------------------------------------------------------------------
# cfg blocks (what parse_cfg would return for a tiny darknet-like config)
# ----------------------------------------------------------------------------
CFG_BLOCKS = [
    {'type': 'net', 'height': '16', 'width': '16', 'channels': '3'},
    # i=0
    {'type': 'convolutional', 'batch_normalize': '1', 'filters': '8', 'size': '3',
     'stride': '1', 'pad': '1', 'activation': 'leaky'},
    # i=1 (downsample 16x16 -> 8x8)
    {'type': 'convolutional', 'batch_normalize': '1', 'filters': '16', 'size': '3',
     'stride': '2', 'pad': '1', 'activation': 'leaky'},
    # i=2
    {'type': 'convolutional', 'batch_normalize': '1', 'filters': '8', 'size': '1',
     'stride': '1', 'pad': '1', 'activation': 'leaky'},
    # i=3
    {'type': 'convolutional', 'batch_normalize': '1', 'filters': '16', 'size': '3',
     'stride': '1', 'pad': '1', 'activation': 'leaky'},
    # i=4 : outputs[3] + outputs[1]
    {'type': 'shortcut', 'from': '-3', 'activation': 'linear'},
    # i=5 : cat(outputs[4], outputs[1]) -> 32 channels
    {'type': 'route', 'layers': '-1,1'},
    # i=6 : bilinear x2 -> 16x16
    {'type': 'upsample', 'stride': '2'},
    # i=7 : maxpool 2/2 -> 8x8
    {'type': 'maxpool', 'size': '2', 'stride': '2'},
    # i=8 : detection head, 3 anchors * (5 + 2 classes) = 21 channels, bias conv
    {'type': 'convolutional', 'filters': '21', 'size': '1', 'stride': '1',
     'pad': '1', 'activation': 'linear'},
    # i=9
    {'type': 'yolo', 'mask': '0,1,2',
     'anchors': '10,14, 23,27, 37,58, 81,82, 135,169, 344,319',
     'classes': '2', 'num': '6'},
]


def _round_up(x, m):
    return ((x + m - 1) // m) * m


# ----------------------------------------------------------------------------
# Pallas kernels
# ----------------------------------------------------------------------------
def _implicit_gemm(x_ref, w_ref, *, k, s, Ho, Wo):
    """Accumulate k*k shifted bf16 matmuls from the VMEM-resident input phases.

    x_ref: (s2, 1, Hph, Wph, Cin_p) bf16   (stride-phase-split padded input, 1 image)
    w_ref: (k*k, Cin_p, Cout)        bf16   (pre-packed weights)
    returns f32 accumulator of shape (Ho*Wo, Cout)
    """
    cout = w_ref.shape[-1]
    acc = jnp.zeros((Ho * Wo, cout), jnp.float32)
    for di in range(k):
        for dj in range(k):
            ph = (di % s) * s + (dj % s)
            hs, ws = di // s, dj // s
            patch = x_ref[ph, 0, hs:hs + Ho, ws:ws + Wo, :]      # (Ho, Wo, Cin_p)
            patch = patch.reshape(Ho * Wo, patch.shape[-1])
            acc = acc + jnp.dot(patch, w_ref[di * k + dj],
                                preferred_element_type=jnp.float32)
    return acc


def _conv_bn_kernel(x_ref, w_ref, o_ref, st_ref, *, k, s, Ho, Wo):
    """Conv (implicit GEMM) emitting pre-activation + per-image (sum, sumsq)."""
    acc = _implicit_gemm(x_ref, w_ref, k=k, s=s, Ho=Ho, Wo=Wo)
    o_ref[...] = acc.reshape(o_ref.shape)
    st_ref[0, 0:1, :] = jnp.sum(acc, axis=0, keepdims=True)
    st_ref[0, 1:2, :] = jnp.sum(acc * acc, axis=0, keepdims=True)


def _conv_bias_kernel(x_ref, w_ref, b_ref, o_ref, *, k, s, Ho, Wo, leaky):
    """Conv (implicit GEMM) with fused bias (+ optional LeakyReLU)."""
    acc = _implicit_gemm(x_ref, w_ref, k=k, s=s, Ho=Ho, Wo=Wo)
    y = acc + b_ref[...]
    if leaky:
        y = jnp.where(y > 0, y, 0.1 * y)
    o_ref[...] = y.reshape(o_ref.shape)


def _bn_act_kernel(x_ref, sc_ref, sh_ref, o_ref, *, leaky):
    """Apply per-channel scale/shift (folded BN) + LeakyReLU."""
    y = x_ref[...] * sc_ref[...] + sh_ref[...]
    if leaky:
        y = jnp.where(y > 0, y, 0.1 * y)
    o_ref[...] = y


# ----------------------------------------------------------------------------
# Conv2d (+BN/bias +LeakyReLU) on NHWC input via Pallas implicit-GEMM kernels
# ----------------------------------------------------------------------------
def conv2d_pallas(x, p):
    N, H, W, Cin = x.shape
    k, s, pad = p['ksize'], p['stride'], p['pad']
    Cin_p = p['cin_pad']
    Cout = p['cout']

    Ho = (H + 2 * pad - k) // s + 1
    Wo = (W + 2 * pad - k) // s + 1
    # stride-phase plane sizes (for s==1 there is a single phase == padded input)
    Hph = (k - 1) // s + Ho
    Wph = (k - 1) // s + Wo
    Hp2, Wp2 = s * Hph, s * Wph
    HW = Ho * Wo

    xb = x.astype(jnp.bfloat16)
    pad_b = max(Hp2 - H - pad, 0)
    pad_r = max(Wp2 - W - pad, 0)
    xp = jnp.pad(xb, ((0, 0), (pad, pad_b), (pad, pad_r), (0, Cin_p - Cin)))
    xp = xp[:, :Hp2, :Wp2, :]
    if s == 1:
        phases = xp[None]                                        # (1, N, Hph, Wph, Cin_p)
    else:
        phases = jnp.stack([xp[:, pi::s, pj::s, :]
                            for pi in range(s) for pj in range(s)], axis=0)
    s2 = phases.shape[0]

    wq = p['w_packed']                                           # (k*k, Cin_p, Cout) bf16

    in_specs = [
        pl.BlockSpec((s2, 1, Hph, Wph, Cin_p), lambda n: (0, n, 0, 0, 0)),
        pl.BlockSpec((k * k, Cin_p, Cout), lambda n: (0, 0, 0)),
    ]
    cparams = pltpu.CompilerParams(dimension_semantics=("parallel",))

    if p['bn']:
        kern = functools.partial(_conv_bn_kernel, k=k, s=s, Ho=Ho, Wo=Wo)
        y_pre, stats = pl.pallas_call(
            kern,
            grid=(N,),
            in_specs=in_specs,
            out_shape=(jax.ShapeDtypeStruct((N, HW, Cout), jnp.float32),
                       jax.ShapeDtypeStruct((N, 2, Cout), jnp.float32)),
            out_specs=(pl.BlockSpec((1, HW, Cout), lambda n: (n, 0, 0)),
                       pl.BlockSpec((1, 2, Cout), lambda n: (n, 0, 0))),
            compiler_params=cparams,
        )(phases, wq)

        # combine per-image partials -> training-mode batch stats (biased var)
        M = N * HW
        sums = jnp.sum(stats, axis=0)                            # (2, Cout)
        mean = sums[0] / M
        var = jnp.maximum(sums[1] / M - mean * mean, 0.0)
        scale = p['gamma'] * jax.lax.rsqrt(var + 1e-5)
        shift = p['beta'] - mean * scale

        kern2 = functools.partial(_bn_act_kernel, leaky=p['leaky'])
        y = pl.pallas_call(
            kern2,
            grid=(N,),
            in_specs=[pl.BlockSpec((1, HW, Cout), lambda n: (n, 0, 0)),
                      pl.BlockSpec((1, 1, Cout), lambda n: (0, 0, 0)),
                      pl.BlockSpec((1, 1, Cout), lambda n: (0, 0, 0))],
            out_shape=jax.ShapeDtypeStruct((N, HW, Cout), jnp.float32),
            out_specs=pl.BlockSpec((1, HW, Cout), lambda n: (n, 0, 0)),
            compiler_params=cparams,
        )(y_pre, scale.reshape(1, 1, Cout), shift.reshape(1, 1, Cout))
    else:
        kern = functools.partial(_conv_bias_kernel, k=k, s=s, Ho=Ho, Wo=Wo,
                                 leaky=p['leaky'])
        y = pl.pallas_call(
            kern,
            grid=(N,),
            in_specs=in_specs + [pl.BlockSpec((1, Cout), lambda n: (0, 0))],
            out_shape=jax.ShapeDtypeStruct((N, HW, Cout), jnp.float32),
            out_specs=pl.BlockSpec((1, HW, Cout), lambda n: (n, 0, 0)),
            compiler_params=cparams,
        )(phases, wq, p['bias'].reshape(1, Cout))

    # (N, Ho*Wo, Cout) -> (N, Ho, Wo, Cout): free reshape (channels last, row-major)
    return y.reshape(N, Ho, Wo, Cout)


# ----------------------------------------------------------------------------
# Non-conv modules (glue, NHWC)
# ----------------------------------------------------------------------------
def maxpool2d(x, size, stride):
    # nn.MaxPool2d(size, stride), no padding, floor mode (NHWC)
    # TODO(synk): MaxPoolStride1 (stride==1 replicate-pad variant) not exercised by this cfg.
    return jax.lax.reduce_window(x, -jnp.inf, jax.lax.max,
                                 (1, size, size, 1), (1, stride, stride, 1), 'VALID')


def upsample2x_bilinear(x):
    # nn.Upsample(scale_factor=2, mode='bilinear', align_corners=False), NHWC
    N, H, W, C = x.shape
    return jax.image.resize(x, (N, 2 * H, 2 * W, C), method='bilinear')


def predict_transform(prediction_nhwc, inp_dim, anchors, num_classes):
    # TODO(synk): predict_transform is referenced by DarkNet.forward but not defined
    # in the source file; this is the standard YOLOv3 version (NHWC input here).
    batch_size, H, W, C = prediction_nhwc.shape
    stride = inp_dim // H
    grid_size = inp_dim // stride
    bbox_attrs = 5 + num_classes
    num_anchors = len(anchors)

    # NHWC with C = A*attrs: equal to the NCHW view->transpose->view of the reference
    pred = prediction_nhwc.reshape(batch_size, grid_size * grid_size * num_anchors,
                                   bbox_attrs)

    anchors_s = jnp.array([(a[0] / stride, a[1] / stride) for a in anchors], jnp.float32)

    xy = jax.nn.sigmoid(pred[:, :, 0:2])
    wh = pred[:, :, 2:4]
    obj = jax.nn.sigmoid(pred[:, :, 4:5])
    cls = jax.nn.sigmoid(pred[:, :, 5:])

    g = jnp.arange(grid_size, dtype=jnp.float32)
    a_off, b_off = jnp.meshgrid(g, g)
    offs = jnp.stack([a_off.reshape(-1), b_off.reshape(-1)], axis=1)     # (G*G, 2)
    offs = jnp.repeat(offs, num_anchors, axis=0)[None]                   # (1, G*G*A, 2)
    xy = xy + offs

    anchors_t = jnp.tile(anchors_s, (grid_size * grid_size, 1))[None]    # (1, G*G*A, 2)
    wh = jnp.exp(wh) * anchors_t

    box = jnp.concatenate([xy, wh], axis=2) * float(stride)
    return jnp.concatenate([box, obj, cls], axis=2)


# ----------------------------------------------------------------------------
# Parameter creation (mirrors create_modules filter bookkeeping, prev_filters=3)
# Weights are pre-packed once to the kernel layout: (k*k, Cin_pad, Cout) bf16.
# ----------------------------------------------------------------------------
def create_params(blocks, key):
    params = {}
    prev_filters = 3
    output_filters = []
    filters = None
    index = 0
    for x in blocks:
        if x['type'] == 'net':
            continue
        if x['type'] == 'convolutional':
            bn = ('batch_normalize' in x) and int(x['batch_normalize']) != 0
            filters = int(x['filters'])
            ksize = int(x['size'])
            stride = int(x['stride'])
            pad = (ksize - 1) // 2 if int(x['pad']) else 0
            key, k1, k2, k3 = jax.random.split(key, 4)
            w = 0.1 * jax.random.normal(
                k1, (filters, prev_filters, ksize, ksize), jnp.float32)
            cin_p = _round_up(prev_filters, 8)
            # w_packed[di*k+dj, cin, cout] = w[cout, cin, di, dj]
            w_packed = jnp.transpose(w, (2, 3, 1, 0)).reshape(
                ksize * ksize, prev_filters, filters)
            w_packed = jnp.pad(w_packed, ((0, 0), (0, cin_p - prev_filters), (0, 0)))
            w_packed = w_packed.astype(jnp.bfloat16)
            p = {'stride': stride, 'pad': pad, 'ksize': ksize, 'bn': bn,
                 'leaky': x['activation'] == 'leaky',
                 'cin_pad': cin_p, 'cout': filters,
                 'w_packed': w_packed}
            if bn:
                p['gamma'] = 1.0 + 0.1 * jax.random.normal(k2, (filters,), jnp.float32)
                p['beta'] = 0.1 * jax.random.normal(k3, (filters,), jnp.float32)
            else:
                p['bias'] = 0.1 * jax.random.normal(k2, (filters,), jnp.float32)
            params[index] = p
        elif x['type'] == 'route':
            layers = [int(a) for a in x['layers'].split(',')]
            start = layers[0]
            end = layers[1] if len(layers) > 1 else 0
            if start > 0:
                start -= index
            if end > 0:
                end -= index
            if end < 0:
                filters = output_filters[index + start] + output_filters[index + end]
            else:
                filters = output_filters[index + start]
        elif x['type'] == 'yolo':
            mask = [int(m) for m in x['mask'].split(',')]
            anch = [int(a) for a in x['anchors'].split(',')]
            anch = [(anch[i], anch[i + 1]) for i in range(0, len(anch), 2)]
            params[index] = {'anchors': [anch[m] for m in mask]}
        # upsample / maxpool / shortcut: no parameters, filters unchanged
        prev_filters = filters
        output_filters.append(filters)
        index += 1
    return params


# ----------------------------------------------------------------------------
# DarkNet.forward  (activations NHWC internally; input is NCHW like PyTorch)
# ----------------------------------------------------------------------------
def darknet_forward(x_nchw, blocks, params):
    x = jnp.transpose(x_nchw, (0, 2, 3, 1))    # one-time NCHW -> NHWC
    modules = blocks[1:]
    outputs = {}
    detections = None
    write = 0
    for i in range(len(modules)):
        mtype = modules[i]['type']
        if mtype == 'convolutional':
            x = conv2d_pallas(x, params[i])
            outputs[i] = x
        elif mtype == 'upsample':
            x = upsample2x_bilinear(x)
            outputs[i] = x
        elif mtype == 'maxpool':
            x = maxpool2d(x, int(modules[i]['size']), int(modules[i]['stride']))
            outputs[i] = x
        elif mtype == 'route':
            layers = [int(a) for a in modules[i]['layers'].split(',')]
            if layers[0] > 0:
                layers[0] = layers[0] - i
            if len(layers) == 1:
                x = outputs[i + layers[0]]
            elif layers[1] > 0:            # replicate the reference's exact branch structure
                layers[1] = layers[1] - i
                map1 = outputs[i + layers[0]]
                map2 = outputs[i + layers[1]]
                x = jnp.concatenate([map1, map2], axis=3)   # channel axis in NHWC
        elif mtype == 'shortcut':
            from_ = int(modules[i]['from'])
            x = outputs[i - 1] + outputs[i + from_]
            outputs[i] = x
        elif mtype == 'yolo':
            anchors = params[i]['anchors']
            inp_dim = int(blocks[0]['height'])
            num_classes = int(modules[i]['classes'])
            x = predict_transform(x, inp_dim, anchors, num_classes)
            if not write:
                detections = x
                write = 1
            else:
                detections = jnp.concatenate([detections, x], axis=1)
            outputs[i] = outputs[i - 1]
            return detections
    return detections


# ----------------------------------------------------------------------------
if __name__ == "__main__":
    key = jax.random.PRNGKey(0)
    kp, kx = jax.random.split(key)
    params = create_params(CFG_BLOCKS, kp)

    x = jax.random.normal(kx, (2, 3, 16, 16), jnp.float32)   # NCHW, 3 input channels

    @jax.jit
    def fwd(inp):
        return darknet_forward(inp, CFG_BLOCKS, params)

    detections = fwd(x)
    jax.block_until_ready(detections)
    assert detections.shape == (2, 8 * 8 * 3, 7), detections.shape
    assert bool(jnp.all(jnp.isfinite(detections)))
    print("KERNEL_OK")
</pallas_src>

<mosaic_0001>
module attributes {stable_mosaic.version = 11 : i64} {
  func.func @_conv_bn_kernel(%arg0: i32, %arg1: memref<1x1x18x18x8xbf16, #tpu.memory_space<vmem>>, %arg2: memref<9x8x8xbf16, #tpu.memory_space<vmem>>, %arg3: memref<1x256x8xf32, #tpu.memory_space<vmem>>, %arg4: memref<1x2x8xf32, #tpu.memory_space<vmem>>) attributes {dimension_semantics = [#tpu.dimension_semantics<parallel>], iteration_bounds = array<i64: 2>, scalar_prefetch = 0 : i64, scratch_operands = 0 : i64, tpu.core_type = #tpu.core_type<tc>, window_params = [{transform_indices = @transform_0, window_bounds = array<i64: 1, 1, 18, 18, 8>}, {pipeline_mode = #tpu.pipeline_mode<synchronous>, transform_indices = @transform_1, window_bounds = array<i64: 9, 8, 8>}, {transform_indices = @transform_2, window_bounds = array<i64: 1, 256, 8>}, {transform_indices = @transform_3, window_bounds = array<i64: 1, 2, 8>}]} {
    %cst = arith.constant 0.000000e+00 : f32
    %0 = vector.broadcast %cst : f32 to vector<256x8xf32>
    %c0 = arith.constant 0 : index
    %c0_0 = arith.constant 0 : index
    %c0_1 = arith.constant 0 : index
    %c0_2 = arith.constant 0 : index
    %c0_3 = arith.constant 0 : index
    %1 = vector.load %arg1[%c0, %c0_0, %c0_1, %c0_2, %c0_3] : memref<1x1x18x18x8xbf16, #tpu.memory_space<vmem>>, vector<1x1x16x16x8xbf16>
    %2 = vector.shape_cast %1 : vector<1x1x16x16x8xbf16> to vector<16x16x8xbf16>
    %3 = vector.shape_cast %2 : vector<16x16x8xbf16> to vector<256x8xbf16>
    %c0_4 = arith.constant 0 : index
    %c0_5 = arith.constant 0 : index
    %c0_6 = arith.constant 0 : index
    %4 = vector.load %arg2[%c0_4, %c0_5, %c0_6] : memref<9x8x8xbf16, #tpu.memory_space<vmem>>, vector<1x8x8xbf16>
    %5 = vector.shape_cast %4 : vector<1x8x8xbf16> to vector<8x8xbf16>
    %cst_7 = arith.constant dense<0.000000e+00> : vector<256x8xf32>
    %6 = tpu.matmul %3, %5, %cst_7 {dimension_numbers = #tpu.dot_dimension_numbers<[1], [0], [0], [1], [0, 0, 1, 1], [], []>} : vector<256x8xbf16>, vector<8x8xbf16>, vector<256x8xf32> -> vector<256x8xf32>
    %7 = arith.addf %0, %6 : vector<256x8xf32>
    %c0_8 = arith.constant 0 : index
    %c0_9 = arith.constant 0 : index
    %c0_10 = arith.constant 0 : index
    %c1 = arith.constant 1 : index
    %c0_11 = arith.constant 0 : index
    %8 = vector.load %arg1[%c0_8, %c0_9, %c0_10, %c1, %c0_11] : memref<1x1x18x18x8xbf16, #tpu.memory_space<vmem>>, vector<1x1x16x16x8xbf16>
    %9 = vector.shape_cast %8 : vector<1x1x16x16x8xbf16> to vector<16x16x8xbf16>
    %10 = vector.shape_cast %9 : vector<16x16x8xbf16> to vector<256x8xbf16>
    %c1_12 = arith.constant 1 : index
    %c0_13 = arith.constant 0 : index
    %c0_14 = arith.constant 0 : index
    %11 = vector.load %arg2[%c1_12, %c0_13, %c0_14] : memref<9x8x8xbf16, #tpu.memory_space<vmem>>, vector<1x8x8xbf16>
    %12 = vector.shape_cast %11 : vector<1x8x8xbf16> to vector<8x8xbf16>
    %cst_15 = arith.constant dense<0.000000e+00> : vector<256x8xf32>
    %13 = tpu.matmul %10, %12, %cst_15 {dimension_numbers = #tpu.dot_dimension_numbers<[1], [0], [0], [1], [0, 0, 1, 1], [], []>} : vector<256x8xbf16>, vector<8x8xbf16>, vector<256x8xf32> -> vector<256x8xf32>
    %14 = arith.addf %7, %13 : vector<256x8xf32>
    %c0_16 = arith.constant 0 : index
    %c0_17 = arith.constant 0 : index
    %c0_18 = arith.constant 0 : index
    %c2 = arith.constant 2 : index
    %c0_19 = arith.constant 0 : index
    %15 = vector.load %arg1[%c0_16, %c0_17, %c0_18, %c2, %c0_19] : memref<1x1x18x18x8xbf16, #tpu.memory_space<vmem>>, vector<1x1x16x16x8xbf16>
    %16 = vector.shape_cast %15 : vector<1x1x16x16x8xbf16> to vector<16x16x8xbf16>
    %17 = vector.shape_cast %16 : vector<16x16x8xbf16> to vector<256x8xbf16>
    %c2_20 = arith.constant 2 : index
    %c0_21 = arith.constant 0 : index
    %c0_22 = arith.constant 0 : index
    %18 = vector.load %arg2[%c2_20, %c0_21, %c0_22] : memref<9x8x8xbf16, #tpu.memory_space<vmem>>, vector<1x8x8xbf16>
    %19 = vector.shape_cast %18 : vector<1x8x8xbf16> to vector<8x8xbf16>
    %cst_23 = arith.constant dense<0.000000e+00> : vector<256x8xf32>
    %20 = tpu.matmul %17, %19, %cst_23 {dimension_numbers = #tpu.dot_dimension_numbers<[1], [0], [0], [1], [0, 0, 1, 1], [], []>} : vector<256x8xbf16>, vector<8x8xbf16>, vector<256x8xf32> -> vector<256x8xf32>
    %21 = arith.addf %14, %20 : vector<256x8xf32>
    %c0_24 = arith.constant 0 : index
    %c0_25 = arith.constant 0 : index
    %c1_26 = arith.constant 1 : index
    %c0_27 = arith.constant 0 : index
    %c0_28 = arith.constant 0 : index
    %22 = vector.load %arg1[%c0_24, %c0_25, %c1_26, %c0_27, %c0_28] : memref<1x1x18x18x8xbf16, #tpu.memory_space<vmem>>, vector<1x1x16x16x8xbf16>
    %23 = vector.shape_cast %22 : vector<1x1x16x16x8xbf16> to vector<16x16x8xbf16>
    %24 = vector.shape_cast %23 : vector<16x16x8xbf16> to vector<256x8xbf16>
    %c3 = arith.constant 3 : index
    %c0_29 = arith.constant 0 : index
    %c0_30 = arith.constant 0 : index
    %25 = vector.load %arg2[%c3, %c0_29, %c0_30] : memref<9x8x8xbf16, #tpu.memory_space<vmem>>, vector<1x8x8xbf16>
    %26 = vector.shape_cast %25 : vector<1x8x8xbf16> to vector<8x8xbf16>
    %cst_31 = arith.constant dense<0.000000e+00> : vector<256x8xf32>
    %27 = tpu.matmul %24, %26, %cst_31 {dimension_numbers = #tpu.dot_dimension_numbers<[1], [0], [0], [1], [0, 0, 1, 1], [], []>} : vector<256x8xbf16>, vector<8x8xbf16>, vector<256x8xf32> -> vector<256x8xf32>
    %28 = arith.addf %21, %27 : vector<256x8xf32>
    %c0_32 = arith.constant 0 : index
    %c0_33 = arith.constant 0 : index
    %c1_34 = arith.constant 1 : index
    %c1_35 = arith.constant 1 : index
    %c0_36 = arith.constant 0 : index
    %29 = vector.load %arg1[%c0_32, %c0_33, %c1_34, %c1_35, %c0_36] : memref<1x1x18x18x8xbf16, #tpu.memory_space<vmem>>, vector<1x1x16x16x8xbf16>
    %30 = vector.shape_cast %29 : vector<1x1x16x16x8xbf16> to vector<16x16x8xbf16>
    %31 = vector.shape_cast %30 : vector<16x16x8xbf16> to vector<256x8xbf16>
    %c4 = arith.constant 4 : index
    %c0_37 = arith.constant 0 : index
    %c0_38 = arith.constant 0 : index
    %32 = vector.load %arg2[%c4, %c0_37, %c0_38] : memref<9x8x8xbf16, #tpu.memory_space<vmem>>, vector<1x8x8xbf16>
    %33 = vector.shape_cast %32 : vector<1x8x8xbf16> to vector<8x8xbf16>
    %cst_39 = arith.constant dense<0.000000e+00> : vector<256x8xf32>
    %34 = tpu.matmul %31, %33, %cst_39 {dimension_numbers = #tpu.dot_dimension_numbers<[1], [0], [0], [1], [0, 0, 1, 1], [], []>} : vector<256x8xbf16>, vector<8x8xbf16>, vector<256x8xf32> -> vector<256x8xf32>
    %35 = arith.addf %28, %34 : vector<256x8xf32>
    %c0_40 = arith.constant 0 : index
    %c0_41 = arith.constant 0 : index
    %c1_42 = arith.constant 1 : index
    %c2_43 = arith.constant 2 : index
    %c0_44 = arith.constant 0 : index
    %36 = vector.load %arg1[%c0_40, %c0_41, %c1_42, %c2_43, %c0_44] : memref<1x1x18x18x8xbf16, #tpu.memory_space<vmem>>, vector<1x1x16x16x8xbf16>
    %37 = vector.shape_cast %36 : vector<1x1x16x16x8xbf16> to vector<16x16x8xbf16>
    %38 = vector.shape_cast %37 : vector<16x16x8xbf16> to vector<256x8xbf16>
    %c5 = arith.constant 5 : index
    %c0_45 = arith.constant 0 : index
    %c0_46 = arith.constant 0 : index
    %39 = vector.load %arg2[%c5, %c0_45, %c0_46] : memref<9x8x8xbf16, #tpu.memory_space<vmem>>, vector<1x8x8xbf16>
    %40 = vector.shape_cast %39 : vector<1x8x8xbf16> to vector<8x8xbf16>
    %cst_47 = arith.constant dense<0.000000e+00> : vector<256x8xf32>
    %41 = tpu.matmul %38, %40, %cst_47 {dimension_numbers = #tpu.dot_dimension_numbers<[1], [0], [0], [1], [0, 0, 1, 1], [], []>} : vector<256x8xbf16>, vector<8x8xbf16>, vector<256x8xf32> -> vector<256x8xf32>
    %42 = arith.addf %35, %41 : vector<256x8xf32>
    %c0_48 = arith.constant 0 : index
    %c0_49 = arith.constant 0 : index
    %c2_50 = arith.constant 2 : index
    %c0_51 = arith.constant 0 : index
    %c0_52 = arith.constant 0 : index
    %43 = vector.load %arg1[%c0_48, %c0_49, %c2_50, %c0_51, %c0_52] : memref<1x1x18x18x8xbf16, #tpu.memory_space<vmem>>, vector<1x1x16x16x8xbf16>
    %44 = vector.shape_cast %43 : vector<1x1x16x16x8xbf16> to vector<16x16x8xbf16>
    %45 = vector.shape_cast %44 : vector<16x16x8xbf16> to vector<256x8xbf16>
    %c6 = arith.constant 6 : index
    %c0_53 = arith.constant 0 : index
    %c0_54 = arith.constant 0 : index
    %46 = vector.load %arg2[%c6, %c0_53, %c0_54] : memref<9x8x8xbf16, #tpu.memory_space<vmem>>, vector<1x8x8xbf16>
    %47 = vector.shape_cast %46 : vector<1x8x8xbf16> to vector<8x8xbf16>
    %cst_55 = arith.constant dense<0.000000e+00> : vector<256x8xf32>
    %48 = tpu.matmul %45, %47, %cst_55 {dimension_numbers = #tpu.dot_dimension_numbers<[1], [0], [0], [1], [0, 0, 1, 1], [], []>} : vector<256x8xbf16>, vector<8x8xbf16>, vector<256x8xf32> -> vector<256x8xf32>
    %49 = arith.addf %42, %48 : vector<256x8xf32>
    %c0_56 = arith.constant 0 : index
    %c0_57 = arith.constant 0 : index
    %c2_58 = arith.constant 2 : index
    %c1_59 = arith.constant 1 : index
    %c0_60 = arith.constant 0 : index
    %50 = vector.load %arg1[%c0_56, %c0_57, %c2_58, %c1_59, %c0_60] : memref<1x1x18x18x8xbf16, #tpu.memory_space<vmem>>, vector<1x1x16x16x8xbf16>
    %51 = vector.shape_cast %50 : vector<1x1x16x16x8xbf16> to vector<16x16x8xbf16>
    %52 = vector.shape_cast %51 : vector<16x16x8xbf16> to vector<256x8xbf16>
    %c7 = arith.constant 7 : index
    %c0_61 = arith.constant 0 : index
    %c0_62 = arith.constant 0 : index
    %53 = vector.load %arg2[%c7, %c0_61, %c0_62] : memref<9x8x8xbf16, #tpu.memory_space<vmem>>, vector<1x8x8xbf16>
    %54 = vector.shape_cast %53 : vector<1x8x8xbf16> to vector<8x8xbf16>
    %cst_63 = arith.constant dense<0.000000e+00> : vector<256x8xf32>
    %55 = tpu.matmul %52, %54, %cst_63 {dimension_numbers = #tpu.dot_dimension_numbers<[1], [0], [0], [1], [0, 0, 1, 1], [], []>} : vector<256x8xbf16>, vector<8x8xbf16>, vector<256x8xf32> -> vector<256x8xf32>
    %56 = arith.addf %49, %55 : vector<256x8xf32>
    %c0_64 = arith.constant 0 : index
    %c0_65 = arith.constant 0 : index
    %c2_66 = arith.constant 2 : index
    %c2_67 = arith.constant 2 : index
    %c0_68 = arith.constant 0 : index
    %57 = vector.load %arg1[%c0_64, %c0_65, %c2_66, %c2_67, %c0_68] : memref<1x1x18x18x8xbf16, #tpu.memory_space<vmem>>, vector<1x1x16x16x8xbf16>
    %58 = vector.shape_cast %57 : vector<1x1x16x16x8xbf16> to vector<16x16x8xbf16>
    %59 = vector.shape_cast %58 : vector<16x16x8xbf16> to vector<256x8xbf16>
    %c8 = arith.constant 8 : index
    %c0_69 = arith.constant 0 : index
    %c0_70 = arith.constant 0 : index
    %60 = vector.load %arg2[%c8, %c0_69, %c0_70] : memref<9x8x8xbf16, #tpu.memory_space<vmem>>, vector<1x8x8xbf16>
    %61 = vector.shape_cast %60 : vector<1x8x8xbf16> to vector<8x8xbf16>
    %cst_71 = arith.constant dense<0.000000e+00> : vector<256x8xf32>
    %62 = tpu.matmul %59, %61, %cst_71 {dimension_numbers = #tpu.dot_dimension_numbers<[1], [0], [0], [1], [0, 0, 1, 1], [], []>} : vector<256x8xbf16>, vector<8x8xbf16>, vector<256x8xf32> -> vector<256x8xf32>
    %63 = arith.addf %56, %62 : vector<256x8xf32>
    %64 = vector.shape_cast %63 : vector<256x8xf32> to vector<1x256x8xf32>
    %c0_72 = arith.constant 0 : index
    %c0_73 = arith.constant 0 : index
    %c0_74 = arith.constant 0 : index
    %65 = vector.load %arg3[%c0_72, %c0_73, %c0_74] : memref<1x256x8xf32, #tpu.memory_space<vmem>>, vector<1x256x8xf32>
    tpu.vector_store %arg3[%c0_72, %c0_73, %c0_74], %64 {strides = array<i32>} : memref<1x256x8xf32, #tpu.memory_space<vmem>>, vector<1x256x8xf32>,
    %cst_75 = arith.constant dense<0.000000e+00> : vector<8xf32>
    %66 = vector.multi_reduction <add>, %63, %cst_75 [0] : vector<256x8xf32> to vector<8xf32>
    %67 = vector.shape_cast %66 : vector<8xf32> to vector<1x8xf32>
    %c0_76 = arith.constant 0 : index
    %c0_77 = arith.constant 0 : index
    %c0_78 = arith.constant 0 : index
    %68 = vector.load %arg4[%c0_76, %c0_77, %c0_78] : memref<1x2x8xf32, #tpu.memory_space<vmem>>, vector<1x1x8xf32>
    %69 = vector.shape_cast %68 : vector<1x1x8xf32> to vector<1x8xf32>
    %70 = vector.shape_cast %67 : vector<1x8xf32> to vector<1x1x8xf32>
    tpu.vector_store %arg4[%c0_76, %c0_77, %c0_78], %70 {strides = array<i32>} : memref<1x2x8xf32, #tpu.memory_space<vmem>>, vector<1x1x8xf32>,
    %71 = arith.mulf %63, %63 : vector<256x8xf32>
    %cst_79 = arith.constant dense<0.000000e+00> : vector<8xf32>
    %72 = vector.multi_reduction <add>, %71, %cst_79 [0] : vector<256x8xf32> to vector<8xf32>
    %73 = vector.shape_cast %72 : vector<8xf32> to vector<1x8xf32>
    %c0_80 = arith.constant 0 : index
    %c1_81 = arith.constant 1 : index
    %c0_82 = arith.constant 0 : index
    %74 = vector.load %arg4[%c0_80, %c1_81, %c0_82] : memref<1x2x8xf32, #tpu.memory_space<vmem>>, vector<1x1x8xf32>
    %75 = vector.shape_cast %74 : vector<1x1x8xf32> to vector<1x8xf32>
    %76 = vector.shape_cast %73 : vector<1x8xf32> to vector<1x1x8xf32>
    tpu.vector_store %arg4[%c0_80, %c1_81, %c0_82], %76 {strides = array<i32>} : memref<1x2x8xf32, #tpu.memory_space<vmem>>, vector<1x1x8xf32>,
    return
  }
  func.func @transform_0(%arg0: i32) -> (i32, i32, i32, i32, i32) {
    %c0_i32 = arith.constant 0 : i32
    %c0_i32_0 = arith.constant 0 : i32
    %c0_i32_1 = arith.constant 0 : i32
    %c0_i32_2 = arith.constant 0 : i32
    %c0_i32_3 = arith.constant 0 : i32
    return %c0_i32, %arg0, %c0_i32_0, %c0_i32_1, %c0_i32_2 : i32, i32, i32, i32, i32
  }
  func.func @transform_1(%arg0: i32) -> (i32, i32, i32) {
    %c0_i32 = arith.constant 0 : i32
    %c0_i32_0 = arith.constant 0 : i32
    %c0_i32_1 = arith.constant 0 : i32
    %c0_i32_2 = arith.constant 0 : i32
    return %c0_i32, %c0_i32_0, %c0_i32_1 : i32, i32, i32
  }
  func.func @transform_2(%arg0: i32) -> (i32, i32, i32) {
    %c0_i32 = arith.constant 0 : i32
    %c0_i32_0 = arith.constant 0 : i32
    %c0_i32_1 = arith.constant 0 : i32
    return %arg0, %c0_i32, %c0_i32_0 : i32, i32, i32
  }
  func.func @transform_3(%arg0: i32) -> (i32, i32, i32) {
    %c0_i32 = arith.constant 0 : i32
    %c0_i32_0 = arith.constant 0 : i32
    %c0_i32_1 = arith.constant 0 : i32
    return %arg0, %c0_i32, %c0_i32_0 : i32, i32, i32
  }
}

module attributes {stable_mosaic.version = 11 : i64} {
  func.func @_bn_act_kernel(%arg0: i32, %arg1: memref<1x256x8xf32, #tpu.memory_space<vmem>>, %arg2: memref<1x1x8xf32, #tpu.memory_space<vmem>>, %arg3: memref<1x1x8xf32, #tpu.memory_space<vmem>>, %arg4: memref<1x256x8xf32, #tpu.memory_space<vmem>>) attributes {dimension_semantics = [#tpu.dimension_semantics<parallel>], iteration_bounds = array<i64: 2>, scalar_prefetch = 0 : i64, scratch_operands = 0 : i64, tpu.core_type = #tpu.core_type<tc>, window_params = [{transform_indices = @transform_0, window_bounds = array<i64: 1, 256, 8>}, {pipeline_mode = #tpu.pipeline_mode<synchronous>, transform_indices = @transform_1, window_bounds = array<i64: 1, 1, 8>}, {pipeline_mode = #tpu.pipeline_mode<synchronous>, transform_indices = @transform_2, window_bounds = array<i64: 1, 1, 8>}, {transform_indices = @transform_3, window_bounds = array<i64: 1, 256, 8>}]} {
    %c0 = arith.constant 0 : index
    %c0_0 = arith.constant 0 : index
    %c0_1 = arith.constant 0 : index
    %0 = vector.load %arg1[%c0, %c0_0, %c0_1] : memref<1x256x8xf32, #tpu.memory_space<vmem>>, vector<1x256x8xf32>
    %c0_2 = arith.constant 0 : index
    %c0_3 = arith.constant 0 : index
    %c0_4 = arith.constant 0 : index
    %1 = vector.load %arg2[%c0_2, %c0_3, %c0_4] : memref<1x1x8xf32, #tpu.memory_space<vmem>>, vector<1x1x8xf32>
    %2 = vector.broadcast %1 : vector<1x1x8xf32> to vector<1x256x8xf32>
    %3 = arith.mulf %0, %2 : vector<1x256x8xf32>
    %c0_5 = arith.constant 0 : index
    %c0_6 = arith.constant 0 : index
    %c0_7 = arith.constant 0 : index
    %4 = vector.load %arg3[%c0_5, %c0_6, %c0_7] : memref<1x1x8xf32, #tpu.memory_space<vmem>>, vector<1x1x8xf32>
    %5 = vector.broadcast %4 : vector<1x1x8xf32> to vector<1x256x8xf32>
    %6 = arith.addf %3, %5 : vector<1x256x8xf32>
    %cst = arith.constant 0.000000e+00 : f32
    %7 = vector.broadcast %cst : f32 to vector<1x256x8xf32>
    %8 = arith.cmpf ogt, %6, %7 : vector<1x256x8xf32>
    %cst_8 = arith.constant 1.000000e-01 : f32
    %9 = vector.broadcast %cst_8 : f32 to vector<1x256x8xf32>
    %10 = arith.mulf %9, %6 : vector<1x256x8xf32>
    %11 = arith.select %8, %6, %10 : vector<1x256x8xi1>, vector<1x256x8xf32>
    %c0_9 = arith.constant 0 : index
    %c0_10 = arith.constant 0 : index
    %c0_11 = arith.constant 0 : index
    %12 = vector.load %arg4[%c0_9, %c0_10, %c0_11] : memref<1x256x8xf32, #tpu.memory_space<vmem>>, vector<1x256x8xf32>
    tpu.vector_store %arg4[%c0_9, %c0_10, %c0_11], %11 {strides = array<i32>} : memref<1x256x8xf32, #tpu.memory_space<vmem>>, vector<1x256x8xf32>,
    return
  }
  func.func @transform_0(%arg0: i32) -> (i32, i32, i32) {
    %c0_i32 = arith.constant 0 : i32
    %c0_i32_0 = arith.constant 0 : i32
    %c0_i32_1 = arith.constant 0 : i32
    return %arg0, %c0_i32, %c0_i32_0 : i32, i32, i32
  }
  func.func @transform_1(%arg0: i32) -> (i32, i32, i32) {
    %c0_i32 = arith.constant 0 : i32
    %c0_i32_0 = arith.constant 0 : i32
    %c0_i32_1 = arith.constant 0 : i32
    %c0_i32_2 = arith.constant 0 : i32
    return %c0_i32, %c0_i32_0, %c0_i32_1 : i32, i32, i32
  }
  func.func @transform_2(%arg0: i32) -> (i32, i32, i32) {
    %c0_i32 = arith.constant 0 : i32
    %c0_i32_0 = arith.constant 0 : i32
    %c0_i32_1 = arith.constant 0 : i32
    %c0_i32_2 = arith.constant 0 : i32
    return %c0_i32, %c0_i32_0, %c0_i32_1 : i32, i32, i32
  }
  func.func @transform_3(%arg0: i32) -> (i32, i32, i32) {
    %c0_i32 = arith.constant 0 : i32
    %c0_i32_0 = arith.constant 0 : i32
    %c0_i32_1 = arith.constant 0 : i32
    return %arg0, %c0_i32, %c0_i32_0 : i32, i32, i32
  }
}

module attributes {stable_mosaic.version = 11 : i64} {
  func.func @_conv_bn_kernel(%arg0: i32, %arg1: memref<4x1x9x9x8xbf16, #tpu.memory_space<vmem>>, %arg2: memref<9x8x16xbf16, #tpu.memory_space<vmem>>, %arg3: memref<1x64x16xf32, #tpu.memory_space<vmem>>, %arg4: memref<1x2x16xf32, #tpu.memory_space<vmem>>) attributes {dimension_semantics = [#tpu.dimension_semantics<parallel>], iteration_bounds = array<i64: 2>, scalar_prefetch = 0 : i64, scratch_operands = 0 : i64, tpu.core_type = #tpu.core_type<tc>, window_params = [{transform_indices = @transform_0, window_bounds = array<i64: 4, 1, 9, 9, 8>}, {pipeline_mode = #tpu.pipeline_mode<synchronous>, transform_indices = @transform_1, window_bounds = array<i64: 9, 8, 16>}, {transform_indices = @transform_2, window_bounds = array<i64: 1, 64, 16>}, {transform_indices = @transform_3, window_bounds = array<i64: 1, 2, 16>}]} {
    %cst = arith.constant 0.000000e+00 : f32
    %0 = vector.broadcast %cst : f32 to vector<64x16xf32>
    %c0 = arith.constant 0 : index
    %c0_0 = arith.constant 0 : index
    %c0_1 = arith.constant 0 : index
    %c0_2 = arith.constant 0 : index
    %c0_3 = arith.constant 0 : index
    %1 = vector.load %arg1[%c0, %c0_0, %c0_1, %c0_2, %c0_3] : memref<4x1x9x9x8xbf16, #tpu.memory_space<vmem>>, vector<1x1x8x8x8xbf16>
    %2 = vector.shape_cast %1 : vector<1x1x8x8x8xbf16> to vector<8x8x8xbf16>
    %3 = vector.shape_cast %2 : vector<8x8x8xbf16> to vector<64x8xbf16>
    %c0_4 = arith.constant 0 : index
    %c0_5 = arith.constant 0 : index
    %c0_6 = arith.constant 0 : index
    %4 = vector.load %arg2[%c0_4, %c0_5, %c0_6] : memref<9x8x16xbf16, #tpu.memory_space<vmem>>, vector<1x8x16xbf16>
    %5 = vector.shape_cast %4 : vector<1x8x16xbf16> to vector<8x16xbf16>
    %cst_7 = arith.constant dense<0.000000e+00> : vector<64x16xf32>
    %6 = tpu.matmul %3, %5, %cst_7 {dimension_numbers = #tpu.dot_dimension_numbers<[1], [0], [0], [1], [0, 0, 1, 1], [], []>} : vector<64x8xbf16>, vector<8x16xbf16>, vector<64x16xf32> -> vector<64x16xf32>
    %7 = arith.addf %0, %6 : vector<64x16xf32>
    %c1 = arith.constant 1 : index
    %c0_8 = arith.constant 0 : index
    %c0_9 = arith.constant 0 : index
    %c0_10 = arith.constant 0 : index
    %c0_11 = arith.constant 0 : index
    %8 = vector.load %arg1[%c1, %c0_8, %c0_9, %c0_10, %c0_11] : memref<4x1x9x9x8xbf16, #tpu.memory_space<vmem>>, vector<1x1x8x8x8xbf16>
    %9 = vector.shape_cast %8 : vector<1x1x8x8x8xbf16> to vector<8x8x8xbf16>
    %10 = vector.shape_cast %9 : vector<8x8x8xbf16> to vector<64x8xbf16>
    %c1_12 = arith.constant 1 : index
    %c0_13 = arith.constant 0 : index
    %c0_14 = arith.constant 0 : index
    %11 = vector.load %arg2[%c1_12, %c0_13, %c0_14] : memref<9x8x16xbf16, #tpu.memory_space<vmem>>, vector<1x8x16xbf16>
    %12 = vector.shape_cast %11 : vector<1x8x16xbf16> to vector<8x16xbf16>
    %cst_15 = arith.constant dense<0.000000e+00> : vector<64x16xf32>
    %13 = tpu.matmul %10, %12, %cst_15 {dimension_numbers = #tpu.dot_dimension_numbers<[1], [0], [0], [1], [0, 0, 1, 1], [], []>} : vector<64x8xbf16>, vector<8x16xbf16>, vector<64x16xf32> -> vector<64x16xf32>
    %14 = arith.addf %7, %13 : vector<64x16xf32>
    %c0_16 = arith.constant 0 : index
    %c0_17 = arith.constant 0 : index
    %c0_18 = arith.constant 0 : index
    %c1_19 = arith.constant 1 : index
    %c0_20 = arith.constant 0 : index
    %15 = vector.load %arg1[%c0_16, %c0_17, %c0_18, %c1_19, %c0_20] : memref<4x1x9x9x8xbf16, #tpu.memory_space<vmem>>, vector<1x1x8x8x8xbf16>
    %16 = vector.shape_cast %15 : vector<1x1x8x8x8xbf16> to vector<8x8x8xbf16>
    %17 = vector.shape_cast %16 : vector<8x8x8xbf16> to vector<64x8xbf16>
    %c2 = arith.constant 2 : index
    %c0_21 = arith.constant 0 : index
    %c0_22 = arith.constant 0 : index
    %18 = vector.load %arg2[%c2, %c0_21, %c0_22] : memref<9x8x16xbf16, #tpu.memory_space<vmem>>, vector<1x8x16xbf16>
    %19 = vector.shape_cast %18 : vector<1x8x16xbf16> to vector<8x16xbf16>
    %cst_23 = arith.constant dense<0.000000e+00> : vector<64x16xf32>
    %20 = tpu.matmul %17, %19, %cst_23 {dimension_numbers = #tpu.dot_dimension_numbers<[1], [0], [0], [1], [0, 0, 1, 1], [], []>} : vector<64x8xbf16>, vector<8x16xbf16>, vector<64x16xf32> -> vector<64x16xf32>
    %21 = arith.addf %14, %20 : vector<64x16xf32>
    %c2_24 = arith.constant 2 : index
    %c0_25 = arith.constant 0 : index
    %c0_26 = arith.constant 0 : index
    %c0_27 = arith.constant 0 : index
    %c0_28 = arith.constant 0 : index
    %22 = vector.load %arg1[%c2_24, %c0_25, %c0_26, %c0_27, %c0_28] : memref<4x1x9x9x8xbf16, #tpu.memory_space<vmem>>, vector<1x1x8x8x8xbf16>
    %23 = vector.shape_cast %22 : vector<1x1x8x8x8xbf16> to vector<8x8x8xbf16>
    %24 = vector.shape_cast %23 : vector<8x8x8xbf16> to vector<64x8xbf16>
    %c3 = arith.constant 3 : index
    %c0_29 = arith.constant 0 : index
    %c0_30 = arith.constant 0 : index
    %25 = vector.load %arg2[%c3, %c0_29, %c0_30] : memref<9x8x16xbf16, #tpu.memory_space<vmem>>, vector<1x8x16xbf16>
    %26 = vector.shape_cast %25 : vector<1x8x16xbf16> to vector<8x16xbf16>
    %cst_31 = arith.constant dense<0.000000e+00> : vector<64x16xf32>
    %27 = tpu.matmul %24, %26, %cst_31 {dimension_numbers = #tpu.dot_dimension_numbers<[1], [0], [0], [1], [0, 0, 1, 1], [], []>} : vector<64x8xbf16>, vector<8x16xbf16>, vector<64x16xf32> -> vector<64x16xf32>
    %28 = arith.addf %21, %27 : vector<64x16xf32>
    %c3_32 = arith.constant 3 : index
    %c0_33 = arith.constant 0 : index
    %c0_34 = arith.constant 0 : index
    %c0_35 = arith.constant 0 : index
    %c0_36 = arith.constant 0 : index
    %29 = vector.load %arg1[%c3_32, %c0_33, %c0_34, %c0_35, %c0_36] : memref<4x1x9x9x8xbf16, #tpu.memory_space<vmem>>, vector<1x1x8x8x8xbf16>
    %30 = vector.shape_cast %29 : vector<1x1x8x8x8xbf16> to vector<8x8x8xbf16>
    %31 = vector.shape_cast %30 : vector<8x8x8xbf16> to vector<64x8xbf16>
    %c4 = arith.constant 4 : index
    %c0_37 = arith.constant 0 : index
    %c0_38 = arith.constant 0 : index
    %32 = vector.load %arg2[%c4, %c0_37, %c0_38] : memref<9x8x16xbf16, #tpu.memory_space<vmem>>, vector<1x8x16xbf16>
    %33 = vector.shape_cast %32 : vector<1x8x16xbf16> to vector<8x16xbf16>
    %cst_39 = arith.constant dense<0.000000e+00> : vector<64x16xf32>
    %34 = tpu.matmul %31, %33, %cst_39 {dimension_numbers = #tpu.dot_dimension_numbers<[1], [0], [0], [1], [0, 0, 1, 1], [], []>} : vector<64x8xbf16>, vector<8x16xbf16>, vector<64x16xf32> -> vector<64x16xf32>
    %35 = arith.addf %28, %34 : vector<64x16xf32>
    %c2_40 = arith.constant 2 : index
    %c0_41 = arith.constant 0 : index
    %c0_42 = arith.constant 0 : index
    %c1_43 = arith.constant 1 : index
    %c0_44 = arith.constant 0 : index
    %36 = vector.load %arg1[%c2_40, %c0_41, %c0_42, %c1_43, %c0_44] : memref<4x1x9x9x8xbf16, #tpu.memory_space<vmem>>, vector<1x1x8x8x8xbf16>
    %37 = vector.shape_cast %36 : vector<1x1x8x8x8xbf16> to vector<8x8x8xbf16>
    %38 = vector.shape_cast %37 : vector<8x8x8xbf16> to vector<64x8xbf16>
    %c5 = arith.constant 5 : index
    %c0_45 = arith.constant 0 : index
    %c0_46 = arith.constant 0 : index
    %39 = vector.load %arg2[%c5, %c0_45, %c0_46] : memref<9x8x16xbf16, #tpu.memory_space<vmem>>, vector<1x8x16xbf16>
    %40 = vector.shape_cast %39 : vector<1x8x16xbf16> to vector<8x16xbf16>
    %cst_47 = arith.constant dense<0.000000e+00> : vector<64x16xf32>
    %41 = tpu.matmul %38, %40, %cst_47 {dimension_numbers = #tpu.dot_dimension_numbers<[1], [0], [0], [1], [0, 0, 1, 1], [], []>} : vector<64x8xbf16>, vector<8x16xbf16>, vector<64x16xf32> -> vector<64x16xf32>
    %42 = arith.addf %35, %41 : vector<64x16xf32>
    %c0_48 = arith.constant 0 : index
    %c0_49 = arith.constant 0 : index
    %c1_50 = arith.constant 1 : index
    %c0_51 = arith.constant 0 : index
    %c0_52 = arith.constant 0 : index
    %43 = vector.load %arg1[%c0_48, %c0_49, %c1_50, %c0_51, %c0_52] : memref<4x1x9x9x8xbf16, #tpu.memory_space<vmem>>, vector<1x1x8x8x8xbf16>
    %44 = vector.shape_cast %43 : vector<1x1x8x8x8xbf16> to vector<8x8x8xbf16>
    %45 = vector.shape_cast %44 : vector<8x8x8xbf16> to vector<64x8xbf16>
    %c6 = arith.constant 6 : index
    %c0_53 = arith.constant 0 : index
    %c0_54 = arith.constant 0 : index
    %46 = vector.load %arg2[%c6, %c0_53, %c0_54] : memref<9x8x16xbf16, #tpu.memory_space<vmem>>, vector<1x8x16xbf16>
    %47 = vector.shape_cast %46 : vector<1x8x16xbf16> to vector<8x16xbf16>
    %cst_55 = arith.constant dense<0.000000e+00> : vector<64x16xf32>
    %48 = tpu.matmul %45, %47, %cst_55 {dimension_numbers = #tpu.dot_dimension_numbers<[1], [0], [0], [1], [0, 0, 1, 1], [], []>} : vector<64x8xbf16>, vector<8x16xbf16>, vector<64x16xf32> -> vector<64x16xf32>
    %49 = arith.addf %42, %48 : vector<64x16xf32>
    %c1_56 = arith.constant 1 : index
    %c0_57 = arith.constant 0 : index
    %c1_58 = arith.constant 1 : index
    %c0_59 = arith.constant 0 : index
    %c0_60 = arith.constant 0 : index
    %50 = vector.load %arg1[%c1_56, %c0_57, %c1_58, %c0_59, %c0_60] : memref<4x1x9x9x8xbf16, #tpu.memory_space<vmem>>, vector<1x1x8x8x8xbf16>
    %51 = vector.shape_cast %50 : vector<1x1x8x8x8xbf16> to vector<8x8x8xbf16>
    %52 = vector.shape_cast %51 : vector<8x8x8xbf16> to vector<64x8xbf16>
    %c7 = arith.constant 7 : index
    %c0_61 = arith.constant 0 : index
    %c0_62 = arith.constant 0 : index
    %53 = vector.load %arg2[%c7, %c0_61, %c0_62] : memref<9x8x16xbf16, #tpu.memory_space<vmem>>, vector<1x8x16xbf16>
    %54 = vector.shape_cast %53 : vector<1x8x16xbf16> to vector<8x16xbf16>
    %cst_63 = arith.constant dense<0.000000e+00> : vector<64x16xf32>
    %55 = tpu.matmul %52, %54, %cst_63 {dimension_numbers = #tpu.dot_dimension_numbers<[1], [0], [0], [1], [0, 0, 1, 1], [], []>} : vector<64x8xbf16>, vector<8x16xbf16>, vector<64x16xf32> -> vector<64x16xf32>
    %56 = arith.addf %49, %55 : vector<64x16xf32>
    %c0_64 = arith.constant 0 : index
    %c0_65 = arith.constant 0 : index
    %c1_66 = arith.constant 1 : index
    %c1_67 = arith.constant 1 : index
    %c0_68 = arith.constant 0 : index
    %57 = vector.load %arg1[%c0_64, %c0_65, %c1_66, %c1_67, %c0_68] : memref<4x1x9x9x8xbf16, #tpu.memory_space<vmem>>, vector<1x1x8x8x8xbf16>
    %58 = vector.shape_cast %57 : vector<1x1x8x8x8xbf16> to vector<8x8x8xbf16>
    %59 = vector.shape_cast %58 : vector<8x8x8xbf16> to vector<64x8xbf16>
    %c8 = arith.constant 8 : index
    %c0_69 = arith.constant 0 : index
    %c0_70 = arith.constant 0 : index
    %60 = vector.load %arg2[%c8, %c0_69, %c0_70] : memref<9x8x16xbf16, #tpu.memory_space<vmem>>, vector<1x8x16xbf16>
    %61 = vector.shape_cast %60 : vector<1x8x16xbf16> to vector<8x16xbf16>
    %cst_71 = arith.constant dense<0.000000e+00> : vector<64x16xf32>
    %62 = tpu.matmul %59, %61, %cst_71 {dimension_numbers = #tpu.dot_dimension_numbers<[1], [0], [0], [1], [0, 0, 1, 1], [], []>} : vector<64x8xbf16>, vector<8x16xbf16>, vector<64x16xf32> -> vector<64x16xf32>
    %63 = arith.addf %56, %62 : vector<64x16xf32>
    %64 = vector.shape_cast %63 : vector<64x16xf32> to vector<1x64x16xf32>
    %c0_72 = arith.constant 0 : index
    %c0_73 = arith.constant 0 : index
    %c0_74 = arith.constant 0 : index
    %65 = vector.load %arg3[%c0_72, %c0_73, %c0_74] : memref<1x64x16xf32, #tpu.memory_space<vmem>>, vector<1x64x16xf32>
    tpu.vector_store %arg3[%c0_72, %c0_73, %c0_74], %64 {strides = array<i32>} : memref<1x64x16xf32, #tpu.memory_space<vmem>>, vector<1x64x16xf32>,
    %cst_75 = arith.constant dense<0.000000e+00> : vector<16xf32>
    %66 = vector.multi_reduction <add>, %63, %cst_75 [0] : vector<64x16xf32> to vector<16xf32>
    %67 = vector.shape_cast %66 : vector<16xf32> to vector<1x16xf32>
    %c0_76 = arith.constant 0 : index
    %c0_77 = arith.constant 0 : index
    %c0_78 = arith.constant 0 : index
    %68 = vector.load %arg4[%c0_76, %c0_77, %c0_78] : memref<1x2x16xf32, #tpu.memory_space<vmem>>, vector<1x1x16xf32>
    %69 = vector.shape_cast %68 : vector<1x1x16xf32> to vector<1x16xf32>
    %70 = vector.shape_cast %67 : vector<1x16xf32> to vector<1x1x16xf32>
    tpu.vector_store %arg4[%c0_76, %c0_77, %c0_78], %70 {strides = array<i32>} : memref<1x2x16xf32, #tpu.memory_space<vmem>>, vector<1x1x16xf32>,
    %71 = arith.mulf %63, %63 : vector<64x16xf32>
    %cst_79 = arith.constant dense<0.000000e+00> : vector<16xf32>
    %72 = vector.multi_reduction <add>, %71, %cst_79 [0] : vector<64x16xf32> to vector<16xf32>
    %73 = vector.shape_cast %72 : vector<16xf32> to vector<1x16xf32>
    %c0_80 = arith.constant 0 : index
    %c1_81 = arith.constant 1 : index
    %c0_82 = arith.constant 0 : index
    %74 = vector.load %arg4[%c0_80, %c1_81, %c0_82] : memref<1x2x16xf32, #tpu.memory_space<vmem>>, vector<1x1x16xf32>
    %75 = vector.shape_cast %74 : vector<1x1x16xf32> to vector<1x16xf32>
    %76 = vector.shape_cast %73 : vector<1x16xf32> to vector<1x1x16xf32>
    tpu.vector_store %arg4[%c0_80, %c1_81, %c0_82], %76 {strides = array<i32>} : memref<1x2x16xf32, #tpu.memory_space<vmem>>, vector<1x1x16xf32>,
    return
  }
  func.func @transform_0(%arg0: i32) -> (i32, i32, i32, i32, i32) {
    %c0_i32 = arith.constant 0 : i32
    %c0_i32_0 = arith.constant 0 : i32
    %c0_i32_1 = arith.constant 0 : i32
    %c0_i32_2 = arith.constant 0 : i32
    %c0_i32_3 = arith.constant 0 : i32
    return %c0_i32, %arg0, %c0_i32_0, %c0_i32_1, %c0_i32_2 : i32, i32, i32, i32, i32
  }
  func.func @transform_1(%arg0: i32) -> (i32, i32, i32) {
    %c0_i32 = arith.constant 0 : i32
    %c0_i32_0 = arith.constant 0 : i32
    %c0_i32_1 = arith.constant 0 : i32
    %c0_i32_2 = arith.constant 0 : i32
    return %c0_i32, %c0_i32_0, %c0_i32_1 : i32, i32, i32
  }
  func.func @transform_2(%arg0: i32) -> (i32, i32, i32) {
    %c0_i32 = arith.constant 0 : i32
    %c0_i32_0 = arith.constant 0 : i32
    %c0_i32_1 = arith.constant 0 : i32
    return %arg0, %c0_i32, %c0_i32_0 : i32, i32, i32
  }
  func.func @transform_3(%arg0: i32) -> (i32, i32, i32) {
    %c0_i32 = arith.constant 0 : i32
    %c0_i32_0 = arith.constant 0 : i32
    %c0_i32_1 = arith.constant 0 : i32
    return %arg0, %c0_i32, %c0_i32_0 : i32, i32, i32
  }
}

module attributes {stable_mosaic.version = 11 : i64} {
  func.func @_bn_act_kernel(%arg0: i32, %arg1: memref<1x64x16xf32, #tpu.memory_space<vmem>>, %arg2: memref<1x1x16xf32, #tpu.memory_space<vmem>>, %arg3: memref<1x1x16xf32, #tpu.memory_space<vmem>>, %arg4: memref<1x64x16xf32, #tpu.memory_space<vmem>>) attributes {dimension_semantics = [#tpu.dimension_semantics<parallel>], iteration_bounds = array<i64: 2>, scalar_prefetch = 0 : i64, scratch_operands = 0 : i64, tpu.core_type = #tpu.core_type<tc>, window_params = [{transform_indices = @transform_0, window_bounds = array<i64: 1, 64, 16>}, {pipeline_mode = #tpu.pipeline_mode<synchronous>, transform_indices = @transform_1, window_bounds = array<i64: 1, 1, 16>}, {pipeline_mode = #tpu.pipeline_mode<synchronous>, transform_indices = @transform_2, window_bounds = array<i64: 1, 1, 16>}, {transform_indices = @transform_3, window_bounds = array<i64: 1, 64, 16>}]} {
    %c0 = arith.constant 0 : index
    %c0_0 = arith.constant 0 : index
    %c0_1 = arith.constant 0 : index
    %0 = vector.load %arg1[%c0, %c0_0, %c0_1] : memref<1x64x16xf32, #tpu.memory_space<vmem>>, vector<1x64x16xf32>
    %c0_2 = arith.constant 0 : index
    %c0_3 = arith.constant 0 : index
    %c0_4 = arith.constant 0 : index
    %1 = vector.load %arg2[%c0_2, %c0_3, %c0_4] : memref<1x1x16xf32, #tpu.memory_space<vmem>>, vector<1x1x16xf32>
    %2 = vector.broadcast %1 : vector<1x1x16xf32> to vector<1x64x16xf32>
    %3 = arith.mulf %0, %2 : vector<1x64x16xf32>
    %c0_5 = arith.constant 0 : index
    %c0_6 = arith.constant 0 : index
    %c0_7 = arith.constant 0 : index
    %4 = vector.load %arg3[%c0_5, %c0_6, %c0_7] : memref<1x1x16xf32, #tpu.memory_space<vmem>>, vector<1x1x16xf32>
    %5 = vector.broadcast %4 : vector<1x1x16xf32> to vector<1x64x16xf32>
    %6 = arith.addf %3, %5 : vector<1x64x16xf32>
    %cst = arith.constant 0.000000e+00 : f32
    %7 = vector.broadcast %cst : f32 to vector<1x64x16xf32>
    %8 = arith.cmpf ogt, %6, %7 : vector<1x64x16xf32>
    %cst_8 = arith.constant 1.000000e-01 : f32
    %9 = vector.broadcast %cst_8 : f32 to vector<1x64x16xf32>
    %10 = arith.mulf %9, %6 : vector<1x64x16xf32>
    %11 = arith.select %8, %6, %10 : vector<1x64x16xi1>, vector<1x64x16xf32>
    %c0_9 = arith.constant 0 : index
    %c0_10 = arith.constant 0 : index
    %c0_11 = arith.constant 0 : index
    %12 = vector.load %arg4[%c0_9, %c0_10, %c0_11] : memref<1x64x16xf32, #tpu.memory_space<vmem>>, vector<1x64x16xf32>
    tpu.vector_store %arg4[%c0_9, %c0_10, %c0_11], %11 {strides = array<i32>} : memref<1x64x16xf32, #tpu.memory_space<vmem>>, vector<1x64x16xf32>,
    return
  }
  func.func @transform_0(%arg0: i32) -> (i32, i32, i32) {
    %c0_i32 = arith.constant 0 : i32
    %c0_i32_0 = arith.constant 0 : i32
    %c0_i32_1 = arith.constant 0 : i32
    return %arg0, %c0_i32, %c0_i32_0 : i32, i32, i32
  }
  func.func @transform_1(%arg0: i32) -> (i32, i32, i32) {
    %c0_i32 = arith.constant 0 : i32
    %c0_i32_0 = arith.constant 0 : i32
    %c0_i32_1 = arith.constant 0 : i32
    %c0_i32_2 = arith.constant 0 : i32
    return %c0_i32, %c0_i32_0, %c0_i32_1 : i32, i32, i32
  }
  func.func @transform_2(%arg0: i32) -> (i32, i32, i32) {
    %c0_i32 = arith.constant 0 : i32
    %c0_i32_0 = arith.constant 0 : i32
    %c0_i32_1 = arith.constant 0 : i32
    %c0_i32_2 = arith.constant 0 : i32
    return %c0_i32, %c0_i32_0, %c0_i32_1 : i32, i32, i32
  }
  func.func @transform_3(%arg0: i32) -> (i32, i32, i32) {
    %c0_i32 = arith.constant 0 : i32
    %c0_i32_0 = arith.constant 0 : i32
    %c0_i32_1 = arith.constant 0 : i32
    return %arg0, %c0_i32, %c0_i32_0 : i32, i32, i32
  }
}

module attributes {stable_mosaic.version = 11 : i64} {
  func.func @_conv_bn_kernel(%arg0: i32, %arg1: memref<1x1x8x8x16xbf16, #tpu.memory_space<vmem>>, %arg2: memref<1x16x8xbf16, #tpu.memory_space<vmem>>, %arg3: memref<1x64x8xf32, #tpu.memory_space<vmem>>, %arg4: memref<1x2x8xf32, #tpu.memory_space<vmem>>) attributes {dimension_semantics = [#tpu.dimension_semantics<parallel>], iteration_bounds = array<i64: 2>, scalar_prefetch = 0 : i64, scratch_operands = 0 : i64, tpu.core_type = #tpu.core_type<tc>, window_params = [{transform_indices = @transform_0, window_bounds = array<i64: 1, 1, 8, 8, 16>}, {pipeline_mode = #tpu.pipeline_mode<synchronous>, transform_indices = @transform_1, window_bounds = array<i64: 1, 16, 8>}, {transform_indices = @transform_2, window_bounds = array<i64: 1, 64, 8>}, {transform_indices = @transform_3, window_bounds = array<i64: 1, 2, 8>}]} {
    %cst = arith.constant 0.000000e+00 : f32
    %0 = vector.broadcast %cst : f32 to vector<64x8xf32>
    %c0 = arith.constant 0 : index
    %c0_0 = arith.constant 0 : index
    %c0_1 = arith.constant 0 : index
    %c0_2 = arith.constant 0 : index
    %c0_3 = arith.constant 0 : index
    %1 = vector.load %arg1[%c0, %c0_0, %c0_1, %c0_2, %c0_3] : memref<1x1x8x8x16xbf16, #tpu.memory_space<vmem>>, vector<1x1x8x8x16xbf16>
    %2 = vector.shape_cast %1 : vector<1x1x8x8x16xbf16> to vector<8x8x16xbf16>
    %3 = vector.shape_cast %2 : vector<8x8x16xbf16> to vector<64x16xbf16>
    %c0_4 = arith.constant 0 : index
    %c0_5 = arith.constant 0 : index
    %c0_6 = arith.constant 0 : index
    %4 = vector.load %arg2[%c0_4, %c0_5, %c0_6] : memref<1x16x8xbf16, #tpu.memory_space<vmem>>, vector<1x16x8xbf16>
    %5 = vector.shape_cast %4 : vector<1x16x8xbf16> to vector<16x8xbf16>
    %cst_7 = arith.constant dense<0.000000e+00> : vector<64x8xf32>
    %6 = tpu.matmul %3, %5, %cst_7 {dimension_numbers = #tpu.dot_dimension_numbers<[1], [0], [0], [1], [0, 0, 1, 1], [], []>} : vector<64x16xbf16>, vector<16x8xbf16>, vector<64x8xf32> -> vector<64x8xf32>
    %7 = arith.addf %0, %6 : vector<64x8xf32>
    %8 = vector.shape_cast %7 : vector<64x8xf32> to vector<1x64x8xf32>
    %c0_8 = arith.constant 0 : index
    %c0_9 = arith.constant 0 : index
    %c0_10 = arith.constant 0 : index
    %9 = vector.load %arg3[%c0_8, %c0_9, %c0_10] : memref<1x64x8xf32, #tpu.memory_space<vmem>>, vector<1x64x8xf32>
    tpu.vector_store %arg3[%c0_8, %c0_9, %c0_10], %8 {strides = array<i32>} : memref<1x64x8xf32, #tpu.memory_space<vmem>>, vector<1x64x8xf32>,
    %cst_11 = arith.constant dense<0.000000e+00> : vector<8xf32>
    %10 = vector.multi_reduction <add>, %7, %cst_11 [0] : vector<64x8xf32> to vector<8xf32>
    %11 = vector.shape_cast %10 : vector<8xf32> to vector<1x8xf32>
    %c0_12 = arith.constant 0 : index
    %c0_13 = arith.constant 0 : index
    %c0_14 = arith.constant 0 : index
    %12 = vector.load %arg4[%c0_12, %c0_13, %c0_14] : memref<1x2x8xf32, #tpu.memory_space<vmem>>, vector<1x1x8xf32>
    %13 = vector.shape_cast %12 : vector<1x1x8xf32> to vector<1x8xf32>
    %14 = vector.shape_cast %11 : vector<1x8xf32> to vector<1x1x8xf32>
    tpu.vector_store %arg4[%c0_12, %c0_13, %c0_14], %14 {strides = array<i32>} : memref<1x2x8xf32, #tpu.memory_space<vmem>>, vector<1x1x8xf32>,
    %15 = arith.mulf %7, %7 : vector<64x8xf32>
    %cst_15 = arith.constant dense<0.000000e+00> : vector<8xf32>
    %16 = vector.multi_reduction <add>, %15, %cst_15 [0] : vector<64x8xf32> to vector<8xf32>
    %17 = vector.shape_cast %16 : vector<8xf32> to vector<1x8xf32>
    %c0_16 = arith.constant 0 : index
    %c1 = arith.constant 1 : index
    %c0_17 = arith.constant 0 : index
    %18 = vector.load %arg4[%c0_16, %c1, %c0_17] : memref<1x2x8xf32, #tpu.memory_space<vmem>>, vector<1x1x8xf32>
    %19 = vector.shape_cast %18 : vector<1x1x8xf32> to vector<1x8xf32>
    %20 = vector.shape_cast %17 : vector<1x8xf32> to vector<1x1x8xf32>
    tpu.vector_store %arg4[%c0_16, %c1, %c0_17], %20 {strides = array<i32>} : memref<1x2x8xf32, #tpu.memory_space<vmem>>, vector<1x1x8xf32>,
    return
  }
  func.func @transform_0(%arg0: i32) -> (i32, i32, i32, i32, i32) {
    %c0_i32 = arith.constant 0 : i32
    %c0_i32_0 = arith.constant 0 : i32
    %c0_i32_1 = arith.constant 0 : i32
    %c0_i32_2 = arith.constant 0 : i32
    %c0_i32_3 = arith.constant 0 : i32
    return %c0_i32, %arg0, %c0_i32_0, %c0_i32_1, %c0_i32_2 : i32, i32, i32, i32, i32
  }
  func.func @transform_1(%arg0: i32) -> (i32, i32, i32) {
    %c0_i32 = arith.constant 0 : i32
    %c0_i32_0 = arith.constant 0 : i32
    %c0_i32_1 = arith.constant 0 : i32
    %c0_i32_2 = arith.constant 0 : i32
    return %c0_i32, %c0_i32_0, %c0_i32_1 : i32, i32, i32
  }
  func.func @transform_2(%arg0: i32) -> (i32, i32, i32) {
    %c0_i32 = arith.constant 0 : i32
    %c0_i32_0 = arith.constant 0 : i32
    %c0_i32_1 = arith.constant 0 : i32
    return %arg0, %c0_i32, %c0_i32_0 : i32, i32, i32
  }
  func.func @transform_3(%arg0: i32) -> (i32, i32, i32) {
    %c0_i32 = arith.constant 0 : i32
    %c0_i32_0 = arith.constant 0 : i32
    %c0_i32_1 = arith.constant 0 : i32
    return %arg0, %c0_i32, %c0_i32_0 : i32, i32, i32
  }
}

module attributes {stable_mosaic.version = 11 : i64} {
  func.func @_bn_act_kernel(%arg0: i32, %arg1: memref<1x64x8xf32, #tpu.memory_space<vmem>>, %arg2: memref<1x1x8xf32, #tpu.memory_space<vmem>>, %arg3: memref<1x1x8xf32, #tpu.memory_space<vmem>>, %arg4: memref<1x64x8xf32, #tpu.memory_space<vmem>>) attributes {dimension_semantics = [#tpu.dimension_semantics<parallel>], iteration_bounds = array<i64: 2>, scalar_prefetch = 0 : i64, scratch_operands = 0 : i64, tpu.core_type = #tpu.core_type<tc>, window_params = [{transform_indices = @transform_0, window_bounds = array<i64: 1, 64, 8>}, {pipeline_mode = #tpu.pipeline_mode<synchronous>, transform_indices = @transform_1, window_bounds = array<i64: 1, 1, 8>}, {pipeline_mode = #tpu.pipeline_mode<synchronous>, transform_indices = @transform_2, window_bounds = array<i64: 1, 1, 8>}, {transform_indices = @transform_3, window_bounds = array<i64: 1, 64, 8>}]} {
    %c0 = arith.constant 0 : index
    %c0_0 = arith.constant 0 : index
    %c0_1 = arith.constant 0 : index
    %0 = vector.load %arg1[%c0, %c0_0, %c0_1] : memref<1x64x8xf32, #tpu.memory_space<vmem>>, vector<1x64x8xf32>
    %c0_2 = arith.constant 0 : index
    %c0_3 = arith.constant 0 : index
    %c0_4 = arith.constant 0 : index
    %1 = vector.load %arg2[%c0_2, %c0_3, %c0_4] : memref<1x1x8xf32, #tpu.memory_space<vmem>>, vector<1x1x8xf32>
    %2 = vector.broadcast %1 : vector<1x1x8xf32> to vector<1x64x8xf32>
    %3 = arith.mulf %0, %2 : vector<1x64x8xf32>
    %c0_5 = arith.constant 0 : index
    %c0_6 = arith.constant 0 : index
    %c0_7 = arith.constant 0 : index
    %4 = vector.load %arg3[%c0_5, %c0_6, %c0_7] : memref<1x1x8xf32, #tpu.memory_space<vmem>>, vector<1x1x8xf32>
    %5 = vector.broadcast %4 : vector<1x1x8xf32> to vector<1x64x8xf32>
    %6 = arith.addf %3, %5 : vector<1x64x8xf32>
    %cst = arith.constant 0.000000e+00 : f32
    %7 = vector.broadcast %cst : f32 to vector<1x64x8xf32>
    %8 = arith.cmpf ogt, %6, %7 : vector<1x64x8xf32>
    %cst_8 = arith.constant 1.000000e-01 : f32
    %9 = vector.broadcast %cst_8 : f32 to vector<1x64x8xf32>
    %10 = arith.mulf %9, %6 : vector<1x64x8xf32>
    %11 = arith.select %8, %6, %10 : vector<1x64x8xi1>, vector<1x64x8xf32>
    %c0_9 = arith.constant 0 : index
    %c0_10 = arith.constant 0 : index
    %c0_11 = arith.constant 0 : index
    %12 = vector.load %arg4[%c0_9, %c0_10, %c0_11] : memref<1x64x8xf32, #tpu.memory_space<vmem>>, vector<1x64x8xf32>
    tpu.vector_store %arg4[%c0_9, %c0_10, %c0_11], %11 {strides = array<i32>} : memref<1x64x8xf32, #tpu.memory_space<vmem>>, vector<1x64x8xf32>,
    return
  }
  func.func @transform_0(%arg0: i32) -> (i32, i32, i32) {
    %c0_i32 = arith.constant 0 : i32
    %c0_i32_0 = arith.constant 0 : i32
    %c0_i32_1 = arith.constant 0 : i32
    return %arg0, %c0_i32, %c0_i32_0 : i32, i32, i32
  }
  func.func @transform_1(%arg0: i32) -> (i32, i32, i32) {
    %c0_i32 = arith.constant 0 : i32
    %c0_i32_0 = arith.constant 0 : i32
    %c0_i32_1 = arith.constant 0 : i32
    %c0_i32_2 = arith.constant 0 : i32
    return %c0_i32, %c0_i32_0, %c0_i32_1 : i32, i32, i32
  }
  func.func @transform_2(%arg0: i32) -> (i32, i32, i32) {
    %c0_i32 = arith.constant 0 : i32
    %c0_i32_0 = arith.constant 0 : i32
    %c0_i32_1 = arith.constant 0 : i32
    %c0_i32_2 = arith.constant 0 : i32
    return %c0_i32, %c0_i32_0, %c0_i32_1 : i32, i32, i32
  }
  func.func @transform_3(%arg0: i32) -> (i32, i32, i32) {
    %c0_i32 = arith.constant 0 : i32
    %c0_i32_0 = arith.constant 0 : i32
    %c0_i32_1 = arith.constant 0 : i32
    return %arg0, %c0_i32, %c0_i32_0 : i32, i32, i32
  }
}

module attributes {stable_mosaic.version = 11 : i64} {
  func.func @_conv_bn_kernel(%arg0: i32, %arg1: memref<1x1x10x10x8xbf16, #tpu.memory_space<vmem>>, %arg2: memref<9x8x16xbf16, #tpu.memory_space<vmem>>, %arg3: memref<1x64x16xf32, #tpu.memory_space<vmem>>, %arg4: memref<1x2x16xf32, #tpu.memory_space<vmem>>) attributes {dimension_semantics = [#tpu.dimension_semantics<parallel>], iteration_bounds = array<i64: 2>, scalar_prefetch = 0 : i64, scratch_operands = 0 : i64, tpu.core_type = #tpu.core_type<tc>, window_params = [{transform_indices = @transform_0, window_bounds = array<i64: 1, 1, 10, 10, 8>}, {pipeline_mode = #tpu.pipeline_mode<synchronous>, transform_indices = @transform_1, window_bounds = array<i64: 9, 8, 16>}, {transform_indices = @transform_2, window_bounds = array<i64: 1, 64, 16>}, {transform_indices = @transform_3, window_bounds = array<i64: 1, 2, 16>}]} {
    %cst = arith.constant 0.000000e+00 : f32
    %0 = vector.broadcast %cst : f32 to vector<64x16xf32>
    %c0 = arith.constant 0 : index
    %c0_0 = arith.constant 0 : index
    %c0_1 = arith.constant 0 : index
    %c0_2 = arith.constant 0 : index
    %c0_3 = arith.constant 0 : index
    %1 = vector.load %arg1[%c0, %c0_0, %c0_1, %c0_2, %c0_3] : memref<1x1x10x10x8xbf16, #tpu.memory_space<vmem>>, vector<1x1x8x8x8xbf16>
    %2 = vector.shape_cast %1 : vector<1x1x8x8x8xbf16> to vector<8x8x8xbf16>
    %3 = vector.shape_cast %2 : vector<8x8x8xbf16> to vector<64x8xbf16>
    %c0_4 = arith.constant 0 : index
    %c0_5 = arith.constant 0 : index
    %c0_6 = arith.constant 0 : index
    %4 = vector.load %arg2[%c0_4, %c0_5, %c0_6] : memref<9x8x16xbf16, #tpu.memory_space<vmem>>, vector<1x8x16xbf16>
    %5 = vector.shape_cast %4 : vector<1x8x16xbf16> to vector<8x16xbf16>
    %cst_7 = arith.constant dense<0.000000e+00> : vector<64x16xf32>
    %6 = tpu.matmul %3, %5, %cst_7 {dimension_numbers = #tpu.dot_dimension_numbers<[1], [0], [0], [1], [0, 0, 1, 1], [], []>} : vector<64x8xbf16>, vector<8x16xbf16>, vector<64x16xf32> -> vector<64x16xf32>
    %7 = arith.addf %0, %6 : vector<64x16xf32>
    %c0_8 = arith.constant 0 : index
    %c0_9 = arith.constant 0 : index
    %c0_10 = arith.constant 0 : index
    %c1 = arith.constant 1 : index
    %c0_11 = arith.constant 0 : index
    %8 = vector.load %arg1[%c0_8, %c0_9, %c0_10, %c1, %c0_11] : memref<1x1x10x10x8xbf16, #tpu.memory_space<vmem>>, vector<1x1x8x8x8xbf16>
    %9 = vector.shape_cast %8 : vector<1x1x8x8x8xbf16> to vector<8x8x8xbf16>
    %10 = vector.shape_cast %9 : vector<8x8x8xbf16> to vector<64x8xbf16>
    %c1_12 = arith.constant 1 : index
    %c0_13 = arith.constant 0 : index
    %c0_14 = arith.constant 0 : index
    %11 = vector.load %arg2[%c1_12, %c0_13, %c0_14] : memref<9x8x16xbf16, #tpu.memory_space<vmem>>, vector<1x8x16xbf16>
    %12 = vector.shape_cast %11 : vector<1x8x16xbf16> to vector<8x16xbf16>
    %cst_15 = arith.constant dense<0.000000e+00> : vector<64x16xf32>
    %13 = tpu.matmul %10, %12, %cst_15 {dimension_numbers = #tpu.dot_dimension_numbers<[1], [0], [0], [1], [0, 0, 1, 1], [], []>} : vector<64x8xbf16>, vector<8x16xbf16>, vector<64x16xf32> -> vector<64x16xf32>
    %14 = arith.addf %7, %13 : vector<64x16xf32>
    %c0_16 = arith.constant 0 : index
    %c0_17 = arith.constant 0 : index
    %c0_18 = arith.constant 0 : index
    %c2 = arith.constant 2 : index
    %c0_19 = arith.constant 0 : index
    %15 = vector.load %arg1[%c0_16, %c0_17, %c0_18, %c2, %c0_19] : memref<1x1x10x10x8xbf16, #tpu.memory_space<vmem>>, vector<1x1x8x8x8xbf16>
    %16 = vector.shape_cast %15 : vector<1x1x8x8x8xbf16> to vector<8x8x8xbf16>
    %17 = vector.shape_cast %16 : vector<8x8x8xbf16> to vector<64x8xbf16>
    %c2_20 = arith.constant 2 : index
    %c0_21 = arith.constant 0 : index
    %c0_22 = arith.constant 0 : index
    %18 = vector.load %arg2[%c2_20, %c0_21, %c0_22] : memref<9x8x16xbf16, #tpu.memory_space<vmem>>, vector<1x8x16xbf16>
    %19 = vector.shape_cast %18 : vector<1x8x16xbf16> to vector<8x16xbf16>
    %cst_23 = arith.constant dense<0.000000e+00> : vector<64x16xf32>
    %20 = tpu.matmul %17, %19, %cst_23 {dimension_numbers = #tpu.dot_dimension_numbers<[1], [0], [0], [1], [0, 0, 1, 1], [], []>} : vector<64x8xbf16>, vector<8x16xbf16>, vector<64x16xf32> -> vector<64x16xf32>
    %21 = arith.addf %14, %20 : vector<64x16xf32>
    %c0_24 = arith.constant 0 : index
    %c0_25 = arith.constant 0 : index
    %c1_26 = arith.constant 1 : index
    %c0_27 = arith.constant 0 : index
    %c0_28 = arith.constant 0 : index
    %22 = vector.load %arg1[%c0_24, %c0_25, %c1_26, %c0_27, %c0_28] : memref<1x1x10x10x8xbf16, #tpu.memory_space<vmem>>, vector<1x1x8x8x8xbf16>
    %23 = vector.shape_cast %22 : vector<1x1x8x8x8xbf16> to vector<8x8x8xbf16>
    %24 = vector.shape_cast %23 : vector<8x8x8xbf16> to vector<64x8xbf16>
    %c3 = arith.constant 3 : index
    %c0_29 = arith.constant 0 : index
    %c0_30 = arith.constant 0 : index
    %25 = vector.load %arg2[%c3, %c0_29, %c0_30] : memref<9x8x16xbf16, #tpu.memory_space<vmem>>, vector<1x8x16xbf16>
    %26 = vector.shape_cast %25 : vector<1x8x16xbf16> to vector<8x16xbf16>
    %cst_31 = arith.constant dense<0.000000e+00> : vector<64x16xf32>
    %27 = tpu.matmul %24, %26, %cst_31 {dimension_numbers = #tpu.dot_dimension_numbers<[1], [0], [0], [1], [0, 0, 1, 1], [], []>} : vector<64x8xbf16>, vector<8x16xbf16>, vector<64x16xf32> -> vector<64x16xf32>
    %28 = arith.addf %21, %27 : vector<64x16xf32>
    %c0_32 = arith.constant 0 : index
    %c0_33 = arith.constant 0 : index
    %c1_34 = arith.constant 1 : index
    %c1_35 = arith.constant 1 : index
    %c0_36 = arith.constant 0 : index
    %29 = vector.load %arg1[%c0_32, %c0_33, %c1_34, %c1_35, %c0_36] : memref<1x1x10x10x8xbf16, #tpu.memory_space<vmem>>, vector<1x1x8x8x8xbf16>
    %30 = vector.shape_cast %29 : vector<1x1x8x8x8xbf16> to vector<8x8x8xbf16>
    %31 = vector.shape_cast %30 : vector<8x8x8xbf16> to vector<64x8xbf16>
    %c4 = arith.constant 4 : index
    %c0_37 = arith.constant 0 : index
    %c0_38 = arith.constant 0 : index
    %32 = vector.load %arg2[%c4, %c0_37, %c0_38] : memref<9x8x16xbf16, #tpu.memory_space<vmem>>, vector<1x8x16xbf16>
    %33 = vector.shape_cast %32 : vector<1x8x16xbf16> to vector<8x16xbf16>
    %cst_39 = arith.constant dense<0.000000e+00> : vector<64x16xf32>
    %34 = tpu.matmul %31, %33, %cst_39 {dimension_numbers = #tpu.dot_dimension_numbers<[1], [0], [0], [1], [0, 0, 1, 1], [], []>} : vector<64x8xbf16>, vector<8x16xbf16>, vector<64x16xf32> -> vector<64x16xf32>
    %35 = arith.addf %28, %34 : vector<64x16xf32>
    %c0_40 = arith.constant 0 : index
    %c0_41 = arith.constant 0 : index
    %c1_42 = arith.constant 1 : index
    %c2_43 = arith.constant 2 : index
    %c0_44 = arith.constant 0 : index
    %36 = vector.load %arg1[%c0_40, %c0_41, %c1_42, %c2_43, %c0_44] : memref<1x1x10x10x8xbf16, #tpu.memory_space<vmem>>, vector<1x1x8x8x8xbf16>
    %37 = vector.shape_cast %36 : vector<1x1x8x8x8xbf16> to vector<8x8x8xbf16>
    %38 = vector.shape_cast %37 : vector<8x8x8xbf16> to vector<64x8xbf16>
    %c5 = arith.constant 5 : index
    %c0_45 = arith.constant 0 : index
    %c0_46 = arith.constant 0 : index
    %39 = vector.load %arg2[%c5, %c0_45, %c0_46] : memref<9x8x16xbf16, #tpu.memory_space<vmem>>, vector<1x8x16xbf16>
    %40 = vector.shape_cast %39 : vector<1x8x16xbf16> to vector<8x16xbf16>
    %cst_47 = arith.constant dense<0.000000e+00> : vector<64x16xf32>
    %41 = tpu.matmul %38, %40, %cst_47 {dimension_numbers = #tpu.dot_dimension_numbers<[1], [0], [0], [1], [0, 0, 1, 1], [], []>} : vector<64x8xbf16>, vector<8x16xbf16>, vector<64x16xf32> -> vector<64x16xf32>
    %42 = arith.addf %35, %41 : vector<64x16xf32>
    %c0_48 = arith.constant 0 : index
    %c0_49 = arith.constant 0 : index
    %c2_50 = arith.constant 2 : index
    %c0_51 = arith.constant 0 : index
    %c0_52 = arith.constant 0 : index
    %43 = vector.load %arg1[%c0_48, %c0_49, %c2_50, %c0_51, %c0_52] : memref<1x1x10x10x8xbf16, #tpu.memory_space<vmem>>, vector<1x1x8x8x8xbf16>
    %44 = vector.shape_cast %43 : vector<1x1x8x8x8xbf16> to vector<8x8x8xbf16>
    %45 = vector.shape_cast %44 : vector<8x8x8xbf16> to vector<64x8xbf16>
    %c6 = arith.constant 6 : index
    %c0_53 = arith.constant 0 : index
    %c0_54 = arith.constant 0 : index
    %46 = vector.load %arg2[%c6, %c0_53, %c0_54] : memref<9x8x16xbf16, #tpu.memory_space<vmem>>, vector<1x8x16xbf16>
    %47 = vector.shape_cast %46 : vector<1x8x16xbf16> to vector<8x16xbf16>
    %cst_55 = arith.constant dense<0.000000e+00> : vector<64x16xf32>
    %48 = tpu.matmul %45, %47, %cst_55 {dimension_numbers = #tpu.dot_dimension_numbers<[1], [0], [0], [1], [0, 0, 1, 1], [], []>} : vector<64x8xbf16>, vector<8x16xbf16>, vector<64x16xf32> -> vector<64x16xf32>
    %49 = arith.addf %42, %48 : vector<64x16xf32>
    %c0_56 = arith.constant 0 : index
    %c0_57 = arith.constant 0 : index
    %c2_58 = arith.constant 2 : index
    %c1_59 = arith.constant 1 : index
    %c0_60 = arith.constant 0 : index
    %50 = vector.load %arg1[%c0_56, %c0_57, %c2_58, %c1_59, %c0_60] : memref<1x1x10x10x8xbf16, #tpu.memory_space<vmem>>, vector<1x1x8x8x8xbf16>
    %51 = vector.shape_cast %50 : vector<1x1x8x8x8xbf16> to vector<8x8x8xbf16>
    %52 = vector.shape_cast %51 : vector<8x8x8xbf16> to vector<64x8xbf16>
    %c7 = arith.constant 7 : index
    %c0_61 = arith.constant 0 : index
    %c0_62 = arith.constant 0 : index
    %53 = vector.load %arg2[%c7, %c0_61, %c0_62] : memref<9x8x16xbf16, #tpu.memory_space<vmem>>, vector<1x8x16xbf16>
    %54 = vector.shape_cast %53 : vector<1x8x16xbf16> to vector<8x16xbf16>
    %cst_63 = arith.constant dense<0.000000e+00> : vector<64x16xf32>
    %55 = tpu.matmul %52, %54, %cst_63 {dimension_numbers = #tpu.dot_dimension_numbers<[1], [0], [0], [1], [0, 0, 1, 1], [], []>} : vector<64x8xbf16>, vector<8x16xbf16>, vector<64x16xf32> -> vector<64x16xf32>
    %56 = arith.addf %49, %55 : vector<64x16xf32>
    %c0_64 = arith.constant 0 : index
    %c0_65 = arith.constant 0 : index
    %c2_66 = arith.constant 2 : index
    %c2_67 = arith.constant 2 : index
    %c0_68 = arith.constant 0 : index
    %57 = vector.load %arg1[%c0_64, %c0_65, %c2_66, %c2_67, %c0_68] : memref<1x1x10x10x8xbf16, #tpu.memory_space<vmem>>, vector<1x1x8x8x8xbf16>
    %58 = vector.shape_cast %57 : vector<1x1x8x8x8xbf16> to vector<8x8x8xbf16>
    %59 = vector.shape_cast %58 : vector<8x8x8xbf16> to vector<64x8xbf16>
    %c8 = arith.constant 8 : index
    %c0_69 = arith.constant 0 : index
    %c0_70 = arith.constant 0 : index
    %60 = vector.load %arg2[%c8, %c0_69, %c0_70] : memref<9x8x16xbf16, #tpu.memory_space<vmem>>, vector<1x8x16xbf16>
    %61 = vector.shape_cast %60 : vector<1x8x16xbf16> to vector<8x16xbf16>
    %cst_71 = arith.constant dense<0.000000e+00> : vector<64x16xf32>
    %62 = tpu.matmul %59, %61, %cst_71 {dimension_numbers = #tpu.dot_dimension_numbers<[1], [0], [0], [1], [0, 0, 1, 1], [], []>} : vector<64x8xbf16>, vector<8x16xbf16>, vector<64x16xf32> -> vector<64x16xf32>
    %63 = arith.addf %56, %62 : vector<64x16xf32>
    %64 = vector.shape_cast %63 : vector<64x16xf32> to vector<1x64x16xf32>
    %c0_72 = arith.constant 0 : index
    %c0_73 = arith.constant 0 : index
    %c0_74 = arith.constant 0 : index
    %65 = vector.load %arg3[%c0_72, %c0_73, %c0_74] : memref<1x64x16xf32, #tpu.memory_space<vmem>>, vector<1x64x16xf32>
    tpu.vector_store %arg3[%c0_72, %c0_73, %c0_74], %64 {strides = array<i32>} : memref<1x64x16xf32, #tpu.memory_space<vmem>>, vector<1x64x16xf32>,
    %cst_75 = arith.constant dense<0.000000e+00> : vector<16xf32>
    %66 = vector.multi_reduction <add>, %63, %cst_75 [0] : vector<64x16xf32> to vector<16xf32>
    %67 = vector.shape_cast %66 : vector<16xf32> to vector<1x16xf32>
    %c0_76 = arith.constant 0 : index
    %c0_77 = arith.constant 0 : index
    %c0_78 = arith.constant 0 : index
    %68 = vector.load %arg4[%c0_76, %c0_77, %c0_78] : memref<1x2x16xf32, #tpu.memory_space<vmem>>, vector<1x1x16xf32>
    %69 = vector.shape_cast %68 : vector<1x1x16xf32> to vector<1x16xf32>
    %70 = vector.shape_cast %67 : vector<1x16xf32> to vector<1x1x16xf32>
    tpu.vector_store %arg4[%c0_76, %c0_77, %c0_78], %70 {strides = array<i32>} : memref<1x2x16xf32, #tpu.memory_space<vmem>>, vector<1x1x16xf32>,
    %71 = arith.mulf %63, %63 : vector<64x16xf32>
    %cst_79 = arith.constant dense<0.000000e+00> : vector<16xf32>
    %72 = vector.multi_reduction <add>, %71, %cst_79 [0] : vector<64x16xf32> to vector<16xf32>
    %73 = vector.shape_cast %72 : vector<16xf32> to vector<1x16xf32>
    %c0_80 = arith.constant 0 : index
    %c1_81 = arith.constant 1 : index
    %c0_82 = arith.constant 0 : index
    %74 = vector.load %arg4[%c0_80, %c1_81, %c0_82] : memref<1x2x16xf32, #tpu.memory_space<vmem>>, vector<1x1x16xf32>
    %75 = vector.shape_cast %74 : vector<1x1x16xf32> to vector<1x16xf32>
    %76 = vector.shape_cast %73 : vector<1x16xf32> to vector<1x1x16xf32>
    tpu.vector_store %arg4[%c0_80, %c1_81, %c0_82], %76 {strides = array<i32>} : memref<1x2x16xf32, #tpu.memory_space<vmem>>, vector<1x1x16xf32>,
    return
  }
  func.func @transform_0(%arg0: i32) -> (i32, i32, i32, i32, i32) {
    %c0_i32 = arith.constant 0 : i32
    %c0_i32_0 = arith.constant 0 : i32
    %c0_i32_1 = arith.constant 0 : i32
    %c0_i32_2 = arith.constant 0 : i32
    %c0_i32_3 = arith.constant 0 : i32
    return %c0_i32, %arg0, %c0_i32_0, %c0_i32_1, %c0_i32_2 : i32, i32, i32, i32, i32
  }
  func.func @transform_1(%arg0: i32) -> (i32, i32, i32) {
    %c0_i32 = arith.constant 0 : i32
    %c0_i32_0 = arith.constant 0 : i32
    %c0_i32_1 = arith.constant 0 : i32
    %c0_i32_2 = arith.constant 0 : i32
    return %c0_i32, %c0_i32_0, %c0_i32_1 : i32, i32, i32
  }
  func.func @transform_2(%arg0: i32) -> (i32, i32, i32) {
    %c0_i32 = arith.constant 0 : i32
    %c0_i32_0 = arith.constant 0 : i32
    %c0_i32_1 = arith.constant 0 : i32
    return %arg0, %c0_i32, %c0_i32_0 : i32, i32, i32
  }
  func.func @transform_3(%arg0: i32) -> (i32, i32, i32) {
    %c0_i32 = arith.constant 0 : i32
    %c0_i32_0 = arith.constant 0 : i32
    %c0_i32_1 = arith.constant 0 : i32
    return %arg0, %c0_i32, %c0_i32_0 : i32, i32, i32
  }
}

module attributes {stable_mosaic.version = 11 : i64} {
  func.func @_conv_bias_kernel(%arg0: i32, %arg1: memref<1x1x8x8x32xbf16, #tpu.memory_space<vmem>>, %arg2: memref<1x32x21xbf16, #tpu.memory_space<vmem>>, %arg3: memref<1x21xf32, #tpu.memory_space<vmem>>, %arg4: memref<1x64x21xf32, #tpu.memory_space<vmem>>) attributes {dimension_semantics = [#tpu.dimension_semantics<parallel>], iteration_bounds = array<i64: 2>, scalar_prefetch = 0 : i64, scratch_operands = 0 : i64, tpu.core_type = #tpu.core_type<tc>, window_params = [{transform_indices = @transform_0, window_bounds = array<i64: 1, 1, 8, 8, 32>}, {pipeline_mode = #tpu.pipeline_mode<synchronous>, transform_indices = @transform_1, window_bounds = array<i64: 1, 32, 21>}, {pipeline_mode = #tpu.pipeline_mode<synchronous>, transform_indices = @transform_2, window_bounds = array<i64: 1, 21>}, {transform_indices = @transform_3, window_bounds = array<i64: 1, 64, 21>}]} {
    %cst = arith.constant 0.000000e+00 : f32
    %0 = vector.broadcast %cst : f32 to vector<64x21xf32>
    %c0 = arith.constant 0 : index
    %c0_0 = arith.constant 0 : index
    %c0_1 = arith.constant 0 : index
    %c0_2 = arith.constant 0 : index
    %c0_3 = arith.constant 0 : index
    %1 = vector.load %arg1[%c0, %c0_0, %c0_1, %c0_2, %c0_3] : memref<1x1x8x8x32xbf16, #tpu.memory_space<vmem>>, vector<1x1x8x8x32xbf16>
    %2 = vector.shape_cast %1 : vector<1x1x8x8x32xbf16> to vector<8x8x32xbf16>
    %3 = vector.shape_cast %2 : vector<8x8x32xbf16> to vector<64x32xbf16>
    %c0_4 = arith.constant 0 : index
    %c0_5 = arith.constant 0 : index
    %c0_6 = arith.constant 0 : index
    %4 = vector.load %arg2[%c0_4, %c0_5, %c0_6] : memref<1x32x21xbf16, #tpu.memory_space<vmem>>, vector<1x32x21xbf16>
    %5 = vector.shape_cast %4 : vector<1x32x21xbf16> to vector<32x21xbf16>
    %cst_7 = arith.constant dense<0.000000e+00> : vector<64x21xf32>
    %6 = tpu.matmul %3, %5, %cst_7 {dimension_numbers = #tpu.dot_dimension_numbers<[1], [0], [0], [1], [0, 0, 1, 1], [], []>} : vector<64x32xbf16>, vector<32x21xbf16>, vector<64x21xf32> -> vector<64x21xf32>
    %7 = arith.addf %0, %6 : vector<64x21xf32>
    %c0_8 = arith.constant 0 : index
    %c0_9 = arith.constant 0 : index
    %8 = vector.load %arg3[%c0_8, %c0_9] : memref<1x21xf32, #tpu.memory_space<vmem>>, vector<1x21xf32>
    %9 = vector.broadcast %8 : vector<1x21xf32> to vector<64x21xf32>
    %10 = arith.addf %7, %9 : vector<64x21xf32>
    %11 = vector.shape_cast %10 : vector<64x21xf32> to vector<1x64x21xf32>
    %c0_10 = arith.constant 0 : index
    %c0_11 = arith.constant 0 : index
    %c0_12 = arith.constant 0 : index
    %12 = vector.load %arg4[%c0_10, %c0_11, %c0_12] : memref<1x64x21xf32, #tpu.memory_space<vmem>>, vector<1x64x21xf32>
    tpu.vector_store %arg4[%c0_10, %c0_11, %c0_12], %11 {strides = array<i32>} : memref<1x64x21xf32, #tpu.memory_space<vmem>>, vector<1x64x21xf32>,
    return
  }
  func.func @transform_0(%arg0: i32) -> (i32, i32, i32, i32, i32) {
    %c0_i32 = arith.constant 0 : i32
    %c0_i32_0 = arith.constant 0 : i32
    %c0_i32_1 = arith.constant 0 : i32
    %c0_i32_2 = arith.constant 0 : i32
    %c0_i32_3 = arith.constant 0 : i32
    return %c0_i32, %arg0, %c0_i32_0, %c0_i32_1, %c0_i32_2 : i32, i32, i32, i32, i32
  }
  func.func @transform_1(%arg0: i32) -> (i32, i32, i32) {
    %c0_i32 = arith.constant 0 : i32
    %c0_i32_0 = arith.constant 0 : i32
    %c0_i32_1 = arith.constant 0 : i32
    %c0_i32_2 = arith.constant 0 : i32
    return %c0_i32, %c0_i32_0, %c0_i32_1 : i32, i32, i32
  }
  func.func @transform_2(%arg0: i32) -> (i32, i32) {
    %c0_i32 = arith.constant 0 : i32
    %c0_i32_0 = arith.constant 0 : i32
    %c0_i32_1 = arith.constant 0 : i32
    return %c0_i32, %c0_i32_0 : i32, i32
  }
  func.func @transform_3(%arg0: i32) -> (i32, i32, i32) {
    %c0_i32 = arith.constant 0 : i32
    %c0_i32_0 = arith.constant 0 : i32
    %c0_i32_1 = arith.constant 0 : i32
    return %arg0, %c0_i32, %c0_i32_0 : i32, i32, i32
  }
}

</mosaic_0001>

<llo_original>
// kernel: fwd.10
$region0: #{fwd.10}
  #allocation0 [shape = 'u32[]', space=smem, size = 0x4, offset = 0x4, fixed_abs, tag = 'smem constant byte address 0x4 - core index']
  #allocation1 [shape = 'u32[144,128]{1,0:T(1,128)}', space=vmem, size = 0x12000, scoped, tag = 'internal scratch']
  %s0 = inlined_call_operand.vmem [shape: f32[2,256,8], index: 0, kind: input, shape index: {}]
  %s1 = inlined_call_operand.vmem [shape: f32[1,1,8], index: 1, kind: input, shape index: {}]
  %s2 = inlined_call_operand.vmem [shape: f32[1,1,8], index: 2, kind: input, shape index: {}]
  %s3 = inlined_call_operand.vmem [shape: f32[2,256,8], index: 3, kind: output, shape index: {}]
  %s4 = sld [smem:[#allocation0]]
  $region45: #{fwd.10} parent=0
    _
  %s6 = ssub.s32 1, %s4
  %s7 = scalar_select 0, %s6, %s4
  loop: start=0, step=1, limit=4
  $region2: #{fwd.10} parent=0 // loop_pre_header
    _
  $region3: #{fwd.10} parent=0 // loop_header
    %s9 = sphi 0, %s13
    %p10 = scmp.ge.s32.totalorder %s9, 4
    %s19 = sphi 0, %s21
    %s22 = sphi 0, %s19
    %s23 = sphi 0, %s22
    %s39 = sphi 0, %s23
    %s43 = sphi 0, %s43
    %s45 = sphi 0, %s43
    %s46 = sphi 0, %s45
    %s60 = sphi 0, %s46
    %s64 = sphi 0, %s64
    %s66 = sphi 0, %s64
    %s67 = sphi 0, %s66
    %s81 = sphi 0, %s67
    %s87 = sphi 0, %s89
    %s90 = sphi 0, %s87
    %s91 = sphi 0, %s90
    %s107 = sphi 0, %s91
  $region4: #{fwd.10} parent=0 // loop_header_branch
    %12 = sbr.rel (%p10) target = $region8
  $region5: #{fwd.10} parent=0 // loop_body
    %s14 = ssub.s32 %s9, 1
    %s15 = ssub.s32 %s9, 2
    %s16 = sadd.s32 %s9, 1
    %s17 = ssub.s32 %s9, %s16
    %p18 = scmp.eq.s32.totalorder %s17, 0
    %s20 = sadd.s32 %s19, 1
    %s21 = scalar_select %p18, %s19, %s20
    %p24 = pneg %p18
    %p25 = scmp.eq.s32.totalorder %s9, 1
    %p26 = por %p24, %p25
    %p27 = scmp.ne.s32.totalorder %s19, %s22
    %p28 = scmp.eq.s32.totalorder %s9, 0
    %p29 = por %p27, %p28
    %p30 = scmp.ne.s32.totalorder %s19, %s22
    %p31 = scmp.eq.s32.totalorder %s14, 1
    %p32 = por %p30, %p31
    %p33 = scmp.ne.s32.totalorder %s22, %s23
    %p34 = scmp.eq.s32.totalorder %s14, 0
    %p35 = por %p33, %p34
    %p36 = scmp.ne.s32.totalorder %s22, %s23
    %p37 = scmp.eq.s32.totalorder %s15, 1
    %p38 = por %p36, %p37
    %p40 = scmp.ne.s32.totalorder %s23, %s39
    %p41 = scmp.eq.s32.totalorder %s15, 0
    %p42 = por %p40, %p41
    %s44 = sadd.s32 %s43, 1
    %p47 = scmp.eq.s32.totalorder %s9, 1
    %p48 = scmp.ne.s32.totalorder %s43, %s45
    %p49 = scmp.eq.s32.totalorder %s9, 0
    %p50 = por %p48, %p49
    %p51 = scmp.ne.s32.totalorder %s43, %s45
    %p52 = scmp.eq.s32.totalorder %s14, 1
    %p53 = por %p51, %p52
    %p54 = scmp.ne.s32.totalorder %s45, %s46
    %p55 = scmp.eq.s32.totalorder %s14, 0
    %p56 = por %p54, %p55
    %p57 = scmp.ne.s32.totalorder %s45, %s46
    %p58 = scmp.eq.s32.totalorder %s15, 1
    %p59 = por %p57, %p58
    %p61 = scmp.ne.s32.totalorder %s46, %s60
    %p62 = scmp.eq.s32.totalorder %s15, 0
    %p63 = por %p61, %p62
    %s65 = sadd.s32 %s64, 1
    %p68 = scmp.eq.s32.totalorder %s9, 1
    %p69 = scmp.ne.s32.totalorder %s64, %s66
    %p70 = scmp.eq.s32.totalorder %s9, 0
    %p71 = por %p69, %p70
    %p72 = scmp.ne.s32.totalorder %s64, %s66
    %p73 = scmp.eq.s32.totalorder %s14, 1
    %p74 = por %p72, %p73
    %p75 = scmp.ne.s32.totalorder %s66, %s67
    %p76 = scmp.eq.s32.totalorder %s14, 0
    %p77 = por %p75, %p76
    %p78 = scmp.ne.s32.totalorder %s66, %s67
    %p79 = scmp.eq.s32.totalorder %s15, 1
    %p80 = por %p78, %p79
    %p82 = scmp.ne.s32.totalorder %s67, %s81
    %p83 = scmp.eq.s32.totalorder %s15, 0
    %p84 = por %p82, %p83
    %s85 = ssub.s32 %s9, %s16
    %p86 = scmp.eq.s32.totalorder %s85, 0
    %s88 = sadd.s32 %s87, 1
    %s89 = scalar_select %p86, %s87, %s88
    %p92 = pneg %p86
    %p93 = scmp.eq.s32.totalorder %s9, 1
    %p94 = por %p92, %p93
    %p95 = scmp.ne.s32.totalorder %s87, %s90
    %p96 = scmp.eq.s32.totalorder %s9, 0
    %p97 = por %p95, %p96
    %p98 = scmp.ne.s32.totalorder %s87, %s90
    %p99 = scmp.eq.s32.totalorder %s14, 1
    %p100 = por %p98, %p99
    %p101 = scmp.ne.s32.totalorder %s90, %s91
    %p102 = scmp.eq.s32.totalorder %s14, 0
    %p103 = por %p101, %p102
    %p104 = scmp.ne.s32.totalorder %s90, %s91
    %p105 = scmp.eq.s32.totalorder %s15, 1
    %p106 = por %p104, %p105
    %p108 = scmp.ne.s32.totalorder %s91, %s107
    %p109 = scmp.eq.s32.totalorder %s15, 0
    %p110 = por %p108, %p109
    %p111 = scmp.le.s32.totalorder 1, %s9
    %p112 = scmp.lt.s32.totalorder %s9, 3
    %p113 = pnand %p111, %p112
    %p114 = pneg %p113
    // Predicated region
    $region9: #{fwd.10} parent=5 // pred_check
      _
    $region10: #{fwd.10} parent=5 // pred_check_branch
      %116 = sbr.rel (%p113) target = $region12
    $region11: #{fwd.10} parent=5 // pred_region
      %s117 = ssub.s32 %s9, 1
      // Predicated region
      $region13: #{fwd.10} parent=11 // pred_check
        %p118 = pneg %p56
      $region14: #{fwd.10} parent=11 // pred_check_branch
        %120 = sbr.rel (%p118) target = $region16
      $region15: #{fwd.10} parent=11 // pred_region
        _
      $region16: #{fwd.10} parent=11 // pred_fallthru
        _
      // Predicated region
      $region17: #{fwd.10} parent=11 // pred_check
        %p121 = pneg %p77
      $region18: #{fwd.10} parent=11 // pred_check_branch
        %123 = sbr.rel (%p121) target = $region20
      $region19: #{fwd.10} parent=11 // pred_region
        _
      $region20: #{fwd.10} parent=11 // pred_fallthru
        _
    $region12: #{fwd.10} parent=5 // pred_fallthru
      _
    %p124 = scmp.lt.s32.totalorder %s9, 2
    // Predicated region
    $region21: #{fwd.10} parent=5 // pred_check
      %p125 = pneg %p124
    $region22: #{fwd.10} parent=5 // pred_check_branch
      %127 = sbr.rel (%p125) target = $region24
    $region23: #{fwd.10} parent=5 // pred_region
      // Predicated region
      $region25: #{fwd.10} parent=23 // pred_check
        %p128 = pneg %p29
      $region26: #{fwd.10} parent=23 // pred_check_branch
        %130 = sbr.rel (%p128) target = $region28
      $region27: #{fwd.10} parent=23 // pred_region
        %p131 = scmp.lt.s32.totalorder %s9, 1
        %s132 = scalar_select %p131, %s9, 1
        %s133 = smul.addr %s132, 32
        %s134 = smul.addr %s133, 8
        %s135 = scalar_lea.vmem %s0, %s134
      $region28: #{fwd.10} parent=23 // pred_fallthru
        _
    $region24: #{fwd.10} parent=5 // pred_fallthru
      _
    %p136 = scmp.le.s32.totalorder 1, %s9
    %p137 = scmp.lt.s32.totalorder %s9, 3
    %p138 = pnand %p136, %p137
    %p139 = pneg %p138
    // Predicated region
    $region29: #{fwd.10} parent=5 // pred_check
      _
    $region30: #{fwd.10} parent=5 // pred_check_branch
      %141 = sbr.rel (%p138) target = $region32
    $region31: #{fwd.10} parent=5 // pred_region
      %s142 = ssub.s32 %s9, 1
      %p143 = scmp.lt.s32.totalorder %s14, 1
      %s144 = scalar_select %p143, %s14, 1
      %s145 = smul.addr %s144, 32
      %s146 = smul.addr %s145, 8
      %s147 = scalar_lea.vmem %s0, %s146
      %p148 = pneg %p35
      %p149 = pneg %p32
      %p150 = pneg %p56
      %p151 = pneg %p53
      %p152 = pneg %p77
      %p153 = pneg %p74
      %p154 = pneg %p103
      %p155 = pneg %p100
      %p156 = scmp.lt.s32.totalorder %s14, 1
      %s157 = scalar_select %p156, %s14, 1
      %s158 = smul.addr %s157, 32
      %s159 = smul.addr %s158, 8
      %s160 = scalar_lea.vmem %s3, %s159
      %p161 = scmp.lt.s32.totalorder %s14, 1
      %s162 = scalar_select %p161, %s14, 1
      %s163 = smul.addr %s162, 32
      %s164 = smul.addr %s163, 8
      %s165 = scalar_lea.vmem %s0, %s164
      %p166 = scmp.lt.s32.totalorder %s14, 1
      %s167 = scalar_select %p166, %s14, 1
      %s168 = smul.addr %s167, 32
      %s169 = smul.addr %s168, 8
      %s170 = scalar_lea.vmem %s3, %s169
      %v171 = vld [vmem:[%s165] sm:$0xff]
      %v172 = vld [vmem:[%s165 + $0x8] sm:$0xff]
      %v173 = vld [vmem:[%s165 + $0x10] sm:$0xff]
      %v174 = vld [vmem:[%s165 + $0x18] sm:$0xff]
      %v175 = vld [vmem:[%s165 + $0x20] sm:$0xff]
      %v176 = vld [vmem:[%s165 + $0x28] sm:$0xff]
      %v177 = vld [vmem:[%s165 + $0x30] sm:$0xff]
      %v178 = vld [vmem:[%s165 + $0x38] sm:$0xff]
      %v179 = vld [vmem:[%s165 + $0x40] sm:$0xff]
      %v180 = vld [vmem:[%s165 + $0x48] sm:$0xff]
      %v181 = vld [vmem:[%s165 + $0x50] sm:$0xff]
      %v182 = vld [vmem:[%s165 + $0x58] sm:$0xff]
      %v183 = vld [vmem:[%s165 + $0x60] sm:$0xff]
      %v184 = vld [vmem:[%s165 + $0x68] sm:$0xff]
      %v185 = vld [vmem:[%s165 + $0x70] sm:$0xff]
      %v186 = vld [vmem:[%s165 + $0x78] sm:$0xff]
      %v187 = vld [vmem:[%s165 + $0x80] sm:$0xff]
      %v188 = vld [vmem:[%s165 + $0x88] sm:$0xff]
      %v189 = vld [vmem:[%s165 + $0x90] sm:$0xff]
      %v190 = vld [vmem:[%s165 + $0x98] sm:$0xff]
      %v191 = vld [vmem:[%s165 + $0xa0] sm:$0xff]
      %v192 = vld [vmem:[%s165 + $0xa8] sm:$0xff]
      %v193 = vld [vmem:[%s165 + $0xb0] sm:$0xff]
      %v194 = vld [vmem:[%s165 + $0xb8] sm:$0xff]
      %v195 = vld [vmem:[%s165 + $0xc0] sm:$0xff]
      %v196 = vld [vmem:[%s165 + $0xc8] sm:$0xff]
      %v197 = vld [vmem:[%s165 + $0xd0] sm:$0xff]
      %v198 = vld [vmem:[%s165 + $0xd8] sm:$0xff]
      %v199 = vld [vmem:[%s165 + $0xe0] sm:$0xff]
      %v200 = vld [vmem:[%s165 + $0xe8] sm:$0xff]
      %v201 = vld [vmem:[%s165 + $0xf0] sm:$0xff]
      %v202 = vld [vmem:[%s165 + $0xf8] sm:$0xff]
      %v203 = vld [vmem:[%s1] sm:$0x1]
      %v205 = vlaneseq
      %v206 = vshrl.u32 %v205, 7
      %v207 = vsub.s32 0, %v206
      %v208 = vrot.slane %v203, %v207
      %v210 = vmul.f32 %v171, %v208
      %v211 = vmul.f32 %v172, %v208
      %v212 = vmul.f32 %v173, %v208
      %v213 = vmul.f32 %v174, %v208
      %v214 = vmul.f32 %v175, %v208
      %v215 = vmul.f32 %v176, %v208
      %v216 = vmul.f32 %v177, %v208
      %v217 = vmul.f32 %v178, %v208
      %v218 = vmul.f32 %v179, %v208
      %v219 = vmul.f32 %v180, %v208
      %v220 = vmul.f32 %v181, %v208
      %v221 = vmul.f32 %v182, %v208
      %v222 = vmul.f32 %v183, %v208
      %v223 = vmul.f32 %v184, %v208
      %v224 = vmul.f32 %v185, %v208
      %v225 = vmul.f32 %v186, %v208
      %v226 = vmul.f32 %v187, %v208
      %v227 = vmul.f32 %v188, %v208
      %v228 = vmul.f32 %v189, %v208
      %v229 = vmul.f32 %v190, %v208
      %v230 = vmul.f32 %v191, %v208
      %v231 = vmul.f32 %v192, %v208
      %v232 = vmul.f32 %v193, %v208
      %v233 = vmul.f32 %v194, %v208
      %v234 = vmul.f32 %v195, %v208
      %v235 = vmul.f32 %v196, %v208
      %v236 = vmul.f32 %v197, %v208
      %v237 = vmul.f32 %v198, %v208
      %v238 = vmul.f32 %v199, %v208
      %v239 = vmul.f32 %v200, %v208
      %v240 = vmul.f32 %v201, %v208
      %v241 = vmul.f32 %v202, %v208
      %v242 = vld [vmem:[%s2] sm:$0x1]
      %v244 = vlaneseq
      %v245 = vshrl.u32 %v244, 7
      %v246 = vsub.s32 0, %v245
      %v247 = vrot.slane %v242, %v246
      %v249 = vadd.f32 %v210, %v247
      %v250 = vadd.f32 %v211, %v247
      %v251 = vadd.f32 %v212, %v247
      %v252 = vadd.f32 %v213, %v247
      %v253 = vadd.f32 %v214, %v247
      %v254 = vadd.f32 %v215, %v247
      %v255 = vadd.f32 %v216, %v247
      %v256 = vadd.f32 %v217, %v247
      %v257 = vadd.f32 %v218, %v247
      %v258 = vadd.f32 %v219, %v247
      %v259 = vadd.f32 %v220, %v247
      %v260 = vadd.f32 %v221, %v247
      %v261 = vadd.f32 %v222, %v247
      %v262 = vadd.f32 %v223, %v247
      %v263 = vadd.f32 %v224, %v247
      %v264 = vadd.f32 %v225, %v247
      %v265 = vadd.f32 %v226, %v247
      %v266 = vadd.f32 %v227, %v247
      %v267 = vadd.f32 %v228, %v247
      %v268 = vadd.f32 %v229, %v247
      %v269 = vadd.f32 %v230, %v247
      %v270 = vadd.f32 %v231, %v247
      %v271 = vadd.f32 %v232, %v247
      %v272 = vadd.f32 %v233, %v247
      %v273 = vadd.f32 %v234, %v247
      %v274 = vadd.f32 %v235, %v247
      %v275 = vadd.f32 %v236, %v247
      %v276 = vadd.f32 %v237, %v247
      %v277 = vadd.f32 %v238, %v247
      %v278 = vadd.f32 %v239, %v247
      %v279 = vadd.f32 %v240, %v247
      %v280 = vadd.f32 %v241, %v247
      %vm281 = vcmp.gt.f32.partialorder %v249, 0.0
      %vm282 = vcmp.gt.f32.partialorder %v250, 0.0
      %vm283 = vcmp.gt.f32.partialorder %v251, 0.0
      %vm284 = vcmp.gt.f32.partialorder %v252, 0.0
      %vm285 = vcmp.gt.f32.partialorder %v253, 0.0
      %vm286 = vcmp.gt.f32.partialorder %v254, 0.0
      %vm287 = vcmp.gt.f32.partialorder %v255, 0.0
      %vm288 = vcmp.gt.f32.partialorder %v256, 0.0
      %vm289 = vcmp.gt.f32.partialorder %v257, 0.0
      %vm290 = vcmp.gt.f32.partialorder %v258, 0.0
      %vm291 = vcmp.gt.f32.partialorder %v259, 0.0
      %vm292 = vcmp.gt.f32.partialorder %v260, 0.0
      %vm293 = vcmp.gt.f32.partialorder %v261, 0.0
      %vm294 = vcmp.gt.f32.partialorder %v262, 0.0
      %vm295 = vcmp.gt.f32.partialorder %v263, 0.0
      %vm296 = vcmp.gt.f32.partialorder %v264, 0.0
      %vm297 = vcmp.gt.f32.partialorder %v265, 0.0
      %vm298 = vcmp.gt.f32.partialorder %v266, 0.0
      %vm299 = vcmp.gt.f32.partialorder %v267, 0.0
      %vm300 = vcmp.gt.f32.partialorder %v268, 0.0
      %vm301 = vcmp.gt.f32.partialorder %v269, 0.0
      %vm302 = vcmp.gt.f32.partialorder %v270, 0.0
      %vm303 = vcmp.gt.f32.partialorder %v271, 0.0
      %vm304 = vcmp.gt.f32.partialorder %v272, 0.0
      %vm305 = vcmp.gt.f32.partialorder %v273, 0.0
      %vm306 = vcmp.gt.f32.partialorder %v274, 0.0
      %vm307 = vcmp.gt.f32.partialorder %v275, 0.0
      %vm308 = vcmp.gt.f32.partialorder %v276, 0.0
      %vm309 = vcmp.gt.f32.partialorder %v277, 0.0
      %vm310 = vcmp.gt.f32.partialorder %v278, 0.0
      %vm311 = vcmp.gt.f32.partialorder %v279, 0.0
      %vm312 = vcmp.gt.f32.partialorder %v280, 0.0
      %v313 = vmul.f32 %v249, 0.1
      %v314 = vmul.f32 %v250, 0.1
      %v315 = vmul.f32 %v251, 0.1
      %v316 = vmul.f32 %v252, 0.1
      %v317 = vmul.f32 %v253, 0.1
      %v318 = vmul.f32 %v254, 0.1
      %v319 = vmul.f32 %v255, 0.1
      %v320 = vmul.f32 %v256, 0.1
      %v321 = vmul.f32 %v257, 0.1
      %v322 = vmul.f32 %v258, 0.1
      %v323 = vmul.f32 %v259, 0.1
      %v324 = vmul.f32 %v260, 0.1
      %v325 = vmul.f32 %v261, 0.1
      %v326 = vmul.f32 %v262, 0.1
      %v327 = vmul.f32 %v263, 0.1
      %v328 = vmul.f32 %v264, 0.1
      %v329 = vmul.f32 %v265, 0.1
      %v330 = vmul.f32 %v266, 0.1
      %v331 = vmul.f32 %v267, 0.1
      %v332 = vmul.f32 %v268, 0.1
      %v333 = vmul.f32 %v269, 0.1
      %v334 = vmul.f32 %v270, 0.1
      %v335 = vmul.f32 %v271, 0.1
      %v336 = vmul.f32 %v272, 0.1
      %v337 = vmul.f32 %v273, 0.1
      %v338 = vmul.f32 %v274, 0.1
      %v339 = vmul.f32 %v275, 0.1
      %v340 = vmul.f32 %v276, 0.1
      %v341 = vmul.f32 %v277, 0.1
      %v342 = vmul.f32 %v278, 0.1
      %v343 = vmul.f32 %v279, 0.1
      %v344 = vmul.f32 %v280, 0.1
      %v345 = vsel %vm281, %v249, %v313
      %v346 = vsel %vm282, %v250, %v314
      %v347 = vsel %vm283, %v251, %v315
      %v348 = vsel %vm284, %v252, %v316
      %v349 = vsel %vm285, %v253, %v317
      %v350 = vsel %vm286, %v254, %v318
      %v351 = vsel %vm287, %v255, %v319
      %v352 = vsel %vm288, %v256, %v320
      %v353 = vsel %vm289, %v257, %v321
      %v354 = vsel %vm290, %v258, %v322
      %v355 = vsel %vm291, %v259, %v323
      %v356 = vsel %vm292, %v260, %v324
      %v357 = vsel %vm293, %v261, %v325
      %v358 = vsel %vm294, %v262, %v326
      %v359 = vsel %vm295, %v263, %v327
      %v360 = vsel %vm296, %v264, %v328
      %v361 = vsel %vm297, %v265, %v329
      %v362 = vsel %vm298, %v266, %v330
      %v363 = vsel %vm299, %v267, %v331
      %v364 = vsel %vm300, %v268, %v332
      %v365 = vsel %vm301, %v269, %v333
      %v366 = vsel %vm302, %v270, %v334
      %v367 = vsel %vm303, %v271, %v335
      %v368 = vsel %vm304, %v272, %v336
      %v369 = vsel %vm305, %v273, %v337
      %v370 = vsel %vm306, %v274, %v338
      %v371 = vsel %vm307, %v275, %v339
      %v372 = vsel %vm308, %v276, %v340
      %v373 = vsel %vm309, %v277, %v341
      %v374 = vsel %vm310, %v278, %v342
      %v375 = vsel %vm311, %v279, %v343
      %v376 = vsel %vm312, %v280, %v344
      %vm377 = vcmask 64512
      %378 = vst.msk [vmem:[%s170] sm:$0xff] %vm377, %v345
      %379 = vst.msk [vmem:[%s170 + $0x8] sm:$0xff] %vm377, %v346
      %380 = vst.msk [vmem:[%s170 + $0x10] sm:$0xff] %vm377, %v347
      %381 = vst.msk [vmem:[%s170 + $0x18] sm:$0xff] %vm377, %v348
      %382 = vst.msk [vmem:[%s170 + $0x20] sm:$0xff] %vm377, %v349
      %383 = vst.msk [vmem:[%s170 + $0x28] sm:$0xff] %vm377, %v350
      %384 = vst.msk [vmem:[%s170 + $0x30] sm:$0xff] %vm377, %v351
      %385 = vst.msk [vmem:[%s170 + $0x38] sm:$0xff] %vm377, %v352
      %386 = vst.msk [vmem:[%s170 + $0x40] sm:$0xff] %vm377, %v353
      %387 = vst.msk [vmem:[%s170 + $0x48] sm:$0xff] %vm377, %v354
      %388 = vst.msk [vmem:[%s170 + $0x50] sm:$0xff] %vm377, %v355
      %389 = vst.msk [vmem:[%s170 + $0x58] sm:$0xff] %vm377, %v356
      %390 = vst.msk [vmem:[%s170 + $0x60] sm:$0xff] %vm377, %v357
      %391 = vst.msk [vmem:[%s170 + $0x68] sm:$0xff] %vm377, %v358
      %392 = vst.msk [vmem:[%s170 + $0x70] sm:$0xff] %vm377, %v359
      %393 = vst.msk [vmem:[%s170 + $0x78] sm:$0xff] %vm377, %v360
      %394 = vst.msk [vmem:[%s170 + $0x80] sm:$0xff] %vm377, %v361
      %395 = vst.msk [vmem:[%s170 + $0x88] sm:$0xff] %vm377, %v362
      %396 = vst.msk [vmem:[%s170 + $0x90] sm:$0xff] %vm377, %v363
      %397 = vst.msk [vmem:[%s170 + $0x98] sm:$0xff] %vm377, %v364
      %398 = vst.msk [vmem:[%s170 + $0xa0] sm:$0xff] %vm377, %v365
      %399 = vst.msk [vmem:[%s170 + $0xa8] sm:$0xff] %vm377, %v366
      %400 = vst.msk [vmem:[%s170 + $0xb0] sm:$0xff] %vm377, %v367
      %401 = vst.msk [vmem:[%s170 + $0xb8] sm:$0xff] %vm377, %v368
      %402 = vst.msk [vmem:[%s170 + $0xc0] sm:$0xff] %vm377, %v369
      %403 = vst.msk [vmem:[%s170 + $0xc8] sm:$0xff] %vm377, %v370
      %404 = vst.msk [vmem:[%s170 + $0xd0] sm:$0xff] %vm377, %v371
      %405 = vst.msk [vmem:[%s170 + $0xd8] sm:$0xff] %vm377, %v372
      %406 = vst.msk [vmem:[%s170 + $0xe0] sm:$0xff] %vm377, %v373
      %407 = vst.msk [vmem:[%s170 + $0xe8] sm:$0xff] %vm377, %v374
      %408 = vst.msk [vmem:[%s170 + $0xf0] sm:$0xff] %vm377, %v375
      %409 = vst.msk [vmem:[%s170 + $0xf8] sm:$0xff] %vm377, %v376
      %p410 = scmp.lt.s32.totalorder %s14, 1
      %s411 = scalar_select %p410, %s14, 1
      %s412 = smul.addr %s411, 32
      %s413 = smul.addr %s412, 8
      %s414 = scalar_lea.vmem %s3, %s413
      // Predicated region
      $region33: #{fwd.10} parent=31 // pred_check
        %p415 = pneg %p100
      $region34: #{fwd.10} parent=31 // pred_check_branch
        %417 = sbr.rel (%p415) target = $region36
      $region35: #{fwd.10} parent=31 // pred_region
        _
      $region36: #{fwd.10} parent=31 // pred_fallthru
        _
    $region32: #{fwd.10} parent=5 // pred_fallthru
      _
    %p418 = scmp.le.s32.totalorder 2, %s9
    // Predicated region
    $region37: #{fwd.10} parent=5 // pred_check
      %p419 = pneg %p418
    $region38: #{fwd.10} parent=5 // pred_check_branch
      %421 = sbr.rel (%p419) target = $region40
    $region39: #{fwd.10} parent=5 // pred_region
      %s422 = ssub.s32 %s9, 2
      // Predicated region
      $region41: #{fwd.10} parent=39 // pred_check
        %p423 = pneg %p106
      $region42: #{fwd.10} parent=39 // pred_check_branch
        %425 = sbr.rel (%p423) target = $region44
      $region43: #{fwd.10} parent=39 // pred_region
        %p426 = scmp.lt.s32.totalorder %s15, 1
        %s427 = scalar_select %p426, %s15, 1
        %s428 = smul.addr %s427, 32
        %s429 = smul.addr %s428, 8
        %s430 = scalar_lea.vmem %s3, %s429
      $region44: #{fwd.10} parent=39 // pred_fallthru
        _
    $region40: #{fwd.10} parent=5 // pred_fallthru
      _
  $region6: #{fwd.10} parent=0 // loop_footer
    %s13 = sadd.s32 1, %s9
  $region7: #{fwd.10} parent=0 // loop_footer_branch
    %8 = sbr.rel target = $region3
  $region8: #{fwd.10} parent=0 // loop_exit
    _

// kernel: fwd.12
$region0: #{fwd.12}
  #allocation0 [shape = 'u32[]', space=smem, size = 0x4, offset = 0x4, fixed_abs, tag = 'smem constant byte address 0x4 - core index']
  #allocation1 [shape = 'u32[144,128]{1,0:T(1,128)}', space=vmem, size = 0x12000, scoped, tag = 'internal scratch']
  %s0 = inlined_call_operand.vmem [shape: f32[2,64,16], index: 0, kind: input, shape index: {}]
  %s1 = inlined_call_operand.vmem [shape: f32[1,1,16], index: 1, kind: input, shape index: {}]
  %s2 = inlined_call_operand.vmem [shape: f32[1,1,16], index: 2, kind: input, shape index: {}]
  %s3 = inlined_call_operand.vmem [shape: f32[2,64,16], index: 3, kind: output, shape index: {}]
  %s4 = sld [smem:[#allocation0]]
  $region45: #{fwd.12} parent=0
    _
  %s6 = ssub.s32 1, %s4
  %s7 = scalar_select 0, %s6, %s4
  loop: start=0, step=1, limit=4
  $region2: #{fwd.12} parent=0 // loop_pre_header
    _
  $region3: #{fwd.12} parent=0 // loop_header
    %s9 = sphi 0, %s13
    %p10 = scmp.ge.s32.totalorder %s9, 4
    %s19 = sphi 0, %s21
    %s22 = sphi 0, %s19
    %s23 = sphi 0, %s22
    %s39 = sphi 0, %s23
    %s43 = sphi 0, %s43
    %s45 = sphi 0, %s43
    %s46 = sphi 0, %s45
    %s60 = sphi 0, %s46
    %s64 = sphi 0, %s64
    %s66 = sphi 0, %s64
    %s67 = sphi 0, %s66
    %s81 = sphi 0, %s67
    %s87 = sphi 0, %s89
    %s90 = sphi 0, %s87
    %s91 = sphi 0, %s90
    %s107 = sphi 0, %s91
  $region4: #{fwd.12} parent=0 // loop_header_branch
    %12 = sbr.rel (%p10) target = $region8
  $region5: #{fwd.12} parent=0 // loop_body
    %s14 = ssub.s32 %s9, 1
    %s15 = ssub.s32 %s9, 2
    %s16 = sadd.s32 %s9, 1
    %s17 = ssub.s32 %s9, %s16
    %p18 = scmp.eq.s32.totalorder %s17, 0
    %s20 = sadd.s32 %s19, 1
    %s21 = scalar_select %p18, %s19, %s20
    %p24 = pneg %p18
    %p25 = scmp.eq.s32.totalorder %s9, 1
    %p26 = por %p24, %p25
    %p27 = scmp.ne.s32.totalorder %s19, %s22
    %p28 = scmp.eq.s32.totalorder %s9, 0
    %p29 = por %p27, %p28
    %p30 = scmp.ne.s32.totalorder %s19, %s22
    %p31 = scmp.eq.s32.totalorder %s14, 1
    %p32 = por %p30, %p31
    %p33 = scmp.ne.s32.totalorder %s22, %s23
    %p34 = scmp.eq.s32.totalorder %s14, 0
    %p35 = por %p33, %p34
    %p36 = scmp.ne.s32.totalorder %s22, %s23
    %p37 = scmp.eq.s32.totalorder %s15, 1
    %p38 = por %p36, %p37
    %p40 = scmp.ne.s32.totalorder %s23, %s39
    %p41 = scmp.eq.s32.totalorder %s15, 0
    %p42 = por %p40, %p41
    %s44 = sadd.s32 %s43, 1
    %p47 = scmp.eq.s32.totalorder %s9, 1
    %p48 = scmp.ne.s32.totalorder %s43, %s45
    %p49 = scmp.eq.s32.totalorder %s9, 0
    %p50 = por %p48, %p49
    %p51 = scmp.ne.s32.totalorder %s43, %s45
    %p52 = scmp.eq.s32.totalorder %s14, 1
    %p53 = por %p51, %p52
    %p54 = scmp.ne.s32.totalorder %s45, %s46
    %p55 = scmp.eq.s32.totalorder %s14, 0
    %p56 = por %p54, %p55
    %p57 = scmp.ne.s32.totalorder %s45, %s46
    %p58 = scmp.eq.s32.totalorder %s15, 1
    %p59 = por %p57, %p58
    %p61 = scmp.ne.s32.totalorder %s46, %s60
    %p62 = scmp.eq.s32.totalorder %s15, 0
    %p63 = por %p61, %p62
    %s65 = sadd.s32 %s64, 1
    %p68 = scmp.eq.s32.totalorder %s9, 1
    %p69 = scmp.ne.s32.totalorder %s64, %s66
    %p70 = scmp.eq.s32.totalorder %s9, 0
    %p71 = por %p69, %p70
    %p72 = scmp.ne.s32.totalorder %s64, %s66
    %p73 = scmp.eq.s32.totalorder %s14, 1
    %p74 = por %p72, %p73
    %p75 = scmp.ne.s32.totalorder %s66, %s67
    %p76 = scmp.eq.s32.totalorder %s14, 0
    %p77 = por %p75, %p76
    %p78 = scmp.ne.s32.totalorder %s66, %s67
    %p79 = scmp.eq.s32.totalorder %s15, 1
    %p80 = por %p78, %p79
    %p82 = scmp.ne.s32.totalorder %s67, %s81
    %p83 = scmp.eq.s32.totalorder %s15, 0
    %p84 = por %p82, %p83
    %s85 = ssub.s32 %s9, %s16
    %p86 = scmp.eq.s32.totalorder %s85, 0
    %s88 = sadd.s32 %s87, 1
    %s89 = scalar_select %p86, %s87, %s88
    %p92 = pneg %p86
    %p93 = scmp.eq.s32.totalorder %s9, 1
    %p94 = por %p92, %p93
    %p95 = scmp.ne.s32.totalorder %s87, %s90
    %p96 = scmp.eq.s32.totalorder %s9, 0
    %p97 = por %p95, %p96
    %p98 = scmp.ne.s32.totalorder %s87, %s90
    %p99 = scmp.eq.s32.totalorder %s14, 1
    %p100 = por %p98, %p99
    %p101 = scmp.ne.s32.totalorder %s90, %s91
    %p102 = scmp.eq.s32.totalorder %s14, 0
    %p103 = por %p101, %p102
    %p104 = scmp.ne.s32.totalorder %s90, %s91
    %p105 = scmp.eq.s32.totalorder %s15, 1
    %p106 = por %p104, %p105
    %p108 = scmp.ne.s32.totalorder %s91, %s107
    %p109 = scmp.eq.s32.totalorder %s15, 0
    %p110 = por %p108, %p109
    %p111 = scmp.le.s32.totalorder 1, %s9
    %p112 = scmp.lt.s32.totalorder %s9, 3
    %p113 = pnand %p111, %p112
    %p114 = pneg %p113
    // Predicated region
    $region9: #{fwd.12} parent=5 // pred_check
      _
    $region10: #{fwd.12} parent=5 // pred_check_branch
      %116 = sbr.rel (%p113) target = $region12
    $region11: #{fwd.12} parent=5 // pred_region
      %s117 = ssub.s32 %s9, 1
      // Predicated region
      $region13: #{fwd.12} parent=11 // pred_check
        %p118 = pneg %p56
      $region14: #{fwd.12} parent=11 // pred_check_branch
        %120 = sbr.rel (%p118) target = $region16
      $region15: #{fwd.12} parent=11 // pred_region
        _
      $region16: #{fwd.12} parent=11 // pred_fallthru
        _
      // Predicated region
      $region17: #{fwd.12} parent=11 // pred_check
        %p121 = pneg %p77
      $region18: #{fwd.12} parent=11 // pred_check_branch
        %123 = sbr.rel (%p121) target = $region20
      $region19: #{fwd.12} parent=11 // pred_region
        _
      $region20: #{fwd.12} parent=11 // pred_fallthru
        _
    $region12: #{fwd.12} parent=5 // pred_fallthru
      _
    %p124 = scmp.lt.s32.totalorder %s9, 2
    // Predicated region
    $region21: #{fwd.12} parent=5 // pred_check
      %p125 = pneg %p124
    $region22: #{fwd.12} parent=5 // pred_check_branch
      %127 = sbr.rel (%p125) target = $region24
    $region23: #{fwd.12} parent=5 // pred_region
      // Predicated region
      $region25: #{fwd.12} parent=23 // pred_check
        %p128 = pneg %p29
      $region26: #{fwd.12} parent=23 // pred_check_branch
        %130 = sbr.rel (%p128) target = $region28
      $region27: #{fwd.12} parent=23 // pred_region
        %p131 = scmp.lt.s32.totalorder %s9, 1
        %s132 = scalar_select %p131, %s9, 1
        %s133 = smul.addr %s132, 8
        %s134 = smul.addr %s133, 8
        %s135 = scalar_lea.vmem %s0, %s134
      $region28: #{fwd.12} parent=23 // pred_fallthru
        _
    $region24: #{fwd.12} parent=5 // pred_fallthru
      _
    %p136 = scmp.le.s32.totalorder 1, %s9
    %p137 = scmp.lt.s32.totalorder %s9, 3
    %p138 = pnand %p136, %p137
    %p139 = pneg %p138
    // Predicated region
    $region29: #{fwd.12} parent=5 // pred_check
      _
    $region30: #{fwd.12} parent=5 // pred_check_branch
      %141 = sbr.rel (%p138) target = $region32
    $region31: #{fwd.12} parent=5 // pred_region
      %s142 = ssub.s32 %s9, 1
      %p143 = scmp.lt.s32.totalorder %s14, 1
      %s144 = scalar_select %p143, %s14, 1
      %s145 = smul.addr %s144, 8
      %s146 = smul.addr %s145, 8
      %s147 = scalar_lea.vmem %s0, %s146
      %p148 = pneg %p35
      %p149 = pneg %p32
      %p150 = pneg %p56
      %p151 = pneg %p53
      %p152 = pneg %p77
      %p153 = pneg %p74
      %p154 = pneg %p103
      %p155 = pneg %p100
      %p156 = scmp.lt.s32.totalorder %s14, 1
      %s157 = scalar_select %p156, %s14, 1
      %s158 = smul.addr %s157, 8
      %s159 = smul.addr %s158, 8
      %s160 = scalar_lea.vmem %s3, %s159
      %p161 = scmp.lt.s32.totalorder %s14, 1
      %s162 = scalar_select %p161, %s14, 1
      %s163 = smul.addr %s162, 8
      %s164 = smul.addr %s163, 8
      %s165 = scalar_lea.vmem %s0, %s164
      %p166 = scmp.lt.s32.totalorder %s14, 1
      %s167 = scalar_select %p166, %s14, 1
      %s168 = smul.addr %s167, 8
      %s169 = smul.addr %s168, 8
      %s170 = scalar_lea.vmem %s3, %s169
      %v171 = vld [vmem:[%s165] sm:$0xff]
      %v172 = vld [vmem:[%s165 + $0x8] sm:$0xff]
      %v173 = vld [vmem:[%s165 + $0x10] sm:$0xff]
      %v174 = vld [vmem:[%s165 + $0x18] sm:$0xff]
      %v175 = vld [vmem:[%s165 + $0x20] sm:$0xff]
      %v176 = vld [vmem:[%s165 + $0x28] sm:$0xff]
      %v177 = vld [vmem:[%s165 + $0x30] sm:$0xff]
      %v178 = vld [vmem:[%s165 + $0x38] sm:$0xff]
      %v179 = vld [vmem:[%s1] sm:$0x1]
      %v181 = vlaneseq
      %v182 = vshrl.u32 %v181, 7
      %v183 = vsub.s32 0, %v182
      %v184 = vrot.slane %v179, %v183
      %v186 = vmul.f32 %v171, %v184
      %v187 = vmul.f32 %v172, %v184
      %v188 = vmul.f32 %v173, %v184
      %v189 = vmul.f32 %v174, %v184
      %v190 = vmul.f32 %v175, %v184
      %v191 = vmul.f32 %v176, %v184
      %v192 = vmul.f32 %v177, %v184
      %v193 = vmul.f32 %v178, %v184
      %v194 = vld [vmem:[%s2] sm:$0x1]
      %v196 = vlaneseq
      %v197 = vshrl.u32 %v196, 7
      %v198 = vsub.s32 0, %v197
      %v199 = vrot.slane %v194, %v198
      %v201 = vadd.f32 %v186, %v199
      %v202 = vadd.f32 %v187, %v199
      %v203 = vadd.f32 %v188, %v199
      %v204 = vadd.f32 %v189, %v199
      %v205 = vadd.f32 %v190, %v199
      %v206 = vadd.f32 %v191, %v199
      %v207 = vadd.f32 %v192, %v199
      %v208 = vadd.f32 %v193, %v199
      %vm209 = vcmp.gt.f32.partialorder %v201, 0.0
      %vm210 = vcmp.gt.f32.partialorder %v202, 0.0
      %vm211 = vcmp.gt.f32.partialorder %v203, 0.0
      %vm212 = vcmp.gt.f32.partialorder %v204, 0.0
      %vm213 = vcmp.gt.f32.partialorder %v205, 0.0
      %vm214 = vcmp.gt.f32.partialorder %v206, 0.0
      %vm215 = vcmp.gt.f32.partialorder %v207, 0.0
      %vm216 = vcmp.gt.f32.partialorder %v208, 0.0
      %v217 = vmul.f32 %v201, 0.1
      %v218 = vmul.f32 %v202, 0.1
      %v219 = vmul.f32 %v203, 0.1
      %v220 = vmul.f32 %v204, 0.1
      %v221 = vmul.f32 %v205, 0.1
      %v222 = vmul.f32 %v206, 0.1
      %v223 = vmul.f32 %v207, 0.1
      %v224 = vmul.f32 %v208, 0.1
      %v225 = vsel %vm209, %v201, %v217
      %v226 = vsel %vm210, %v202, %v218
      %v227 = vsel %vm211, %v203, %v219
      %v228 = vsel %vm212, %v204, %v220
      %v229 = vsel %vm213, %v205, %v221
      %v230 = vsel %vm214, %v206, %v222
      %v231 = vsel %vm215, %v207, %v223
      %v232 = vsel %vm216, %v208, %v224
      %vm233 = vcmask 130048
      %234 = vst.msk [vmem:[%s170] sm:$0xff] %vm233, %v225
      %235 = vst.msk [vmem:[%s170 + $0x8] sm:$0xff] %vm233, %v226
      %236 = vst.msk [vmem:[%s170 + $0x10] sm:$0xff] %vm233, %v227
      %237 = vst.msk [vmem:[%s170 + $0x18] sm:$0xff] %vm233, %v228
      %238 = vst.msk [vmem:[%s170 + $0x20] sm:$0xff] %vm233, %v229
      %239 = vst.msk [vmem:[%s170 + $0x28] sm:$0xff] %vm233, %v230
      %240 = vst.msk [vmem:[%s170 + $0x30] sm:$0xff] %vm233, %v231
      %241 = vst.msk [vmem:[%s170 + $0x38] sm:$0xff] %vm233, %v232
      %p242 = scmp.lt.s32.totalorder %s14, 1
      %s243 = scalar_select %p242, %s14, 1
      %s244 = smul.addr %s243, 8
      %s245 = smul.addr %s244, 8
      %s246 = scalar_lea.vmem %s3, %s245
      // Predicated region
      $region33: #{fwd.12} parent=31 // pred_check
        %p247 = pneg %p100
      $region34: #{fwd.12} parent=31 // pred_check_branch
        %249 = sbr.rel (%p247) target = $region36
      $region35: #{fwd.12} parent=31 // pred_region
        _
      $region36: #{fwd.12} parent=31 // pred_fallthru
        _
    $region32: #{fwd.12} parent=5 // pred_fallthru
      _
    %p250 = scmp.le.s32.totalorder 2, %s9
    // Predicated region
    $region37: #{fwd.12} parent=5 // pred_check
      %p251 = pneg %p250
    $region38: #{fwd.12} parent=5 // pred_check_branch
      %253 = sbr.rel (%p251) target = $region40
    $region39: #{fwd.12} parent=5 // pred_region
      %s254 = ssub.s32 %s9, 2
      // Predicated region
      $region41: #{fwd.12} parent=39 // pred_check
        %p255 = pneg %p106
      $region42: #{fwd.12} parent=39 // pred_check_branch
        %257 = sbr.rel (%p255) target = $region44
      $region43: #{fwd.12} parent=39 // pred_region
        %p258 = scmp.lt.s32.totalorder %s15, 1
        %s259 = scalar_select %p258, %s15, 1
        %s260 = smul.addr %s259, 8
        %s261 = smul.addr %s260, 8
        %s262 = scalar_lea.vmem %s3, %s261
      $region44: #{fwd.12} parent=39 // pred_fallthru
        _
    $region40: #{fwd.12} parent=5 // pred_fallthru
      _
  $region6: #{fwd.12} parent=0 // loop_footer
    %s13 = sadd.s32 1, %s9
  $region7: #{fwd.12} parent=0 // loop_footer_branch
    %8 = sbr.rel target = $region3
  $region8: #{fwd.12} parent=0 // loop_exit
    _

// kernel: fwd.11
$region0: #{fwd.11}
  #allocation0 [shape = 'u32[]', space=smem, size = 0x4, offset = 0x4, fixed_abs, tag = 'smem constant byte address 0x4 - core index']
  #allocation1 [shape = 'u32[144,128]{1,0:T(1,128)}', space=vmem, size = 0x12000, scoped, tag = 'internal scratch']
  %s0 = inlined_call_operand.vmem [shape: bf16[4,2,9,9,8], index: 0, kind: input, shape index: {}]
  %s1 = inlined_call_operand.vmem [shape: bf16[9,8,16], index: 1, kind: input, shape index: {}]
  %s2 = inlined_call_operand.vmem [shape: f32[2,64,16], index: 2, kind: output, shape index: {0}]
  %s3 = inlined_call_operand.vmem [shape: f32[2,2,16], index: 3, kind: output, shape index: {1}]
  %4 = xla_tuple %s2, %s3
  %s5 = sld [smem:[#allocation0]]
  $region90: #{fwd.11} parent=0
    _
  %s7 = ssub.s32 1, %s5
  %s8 = scalar_select 0, %s7, %s5
  $region1: #{fwd.11} parent=0
    #allocation2 [shape = 'u8[294912]{0}', space=vmem, size = 0x48000, scoped, tag = 'input window, operand 0']
    loop: start=0, step=1, limit=4
    $region2: #{fwd.11} parent=1 // loop_pre_header
      _
    $region3: #{fwd.11} parent=1 // loop_header
      %s10 = sphi 0, %s14
      %p11 = scmp.ge.s32.totalorder %s10, 4
      %s20 = sphi 0, %s22
      %s23 = sphi 0, %s20
      %s24 = sphi 0, %s23
      %s40 = sphi 0, %s24
      %s44 = sphi 0, %s44
      %s46 = sphi 0, %s44
      %s47 = sphi 0, %s46
      %s61 = sphi 0, %s47
      %s67 = sphi 0, %s69
      %s70 = sphi 0, %s67
      %s71 = sphi 0, %s70
      %s87 = sphi 0, %s71
      %s93 = sphi 0, %s95
      %s96 = sphi 0, %s93
      %s97 = sphi 0, %s96
      %s113 = sphi 0, %s97
    $region4: #{fwd.11} parent=1 // loop_header_branch
      %13 = sbr.rel (%p11) target = $region8
    $region5: #{fwd.11} parent=1 // loop_body
      %s15 = ssub.s32 %s10, 1
      %s16 = ssub.s32 %s10, 2
      %s17 = sadd.s32 %s10, 1
      %s18 = ssub.s32 %s10, %s17
      %p19 = scmp.eq.s32.totalorder %s18, 0
      %s21 = sadd.s32 %s20, 1
      %s22 = scalar_select %p19, %s20, %s21
      %p25 = pneg %p19
      %p26 = scmp.eq.s32.totalorder %s10, 1
      %p27 = por %p25, %p26
      %p28 = scmp.ne.s32.totalorder %s20, %s23
      %p29 = scmp.eq.s32.totalorder %s10, 0
      %p30 = por %p28, %p29
      %p31 = scmp.ne.s32.totalorder %s20, %s23
      %p32 = scmp.eq.s32.totalorder %s15, 1
      %p33 = por %p31, %p32
      %p34 = scmp.ne.s32.totalorder %s23, %s24
      %p35 = scmp.eq.s32.totalorder %s15, 0
      %p36 = por %p34, %p35
      %p37 = scmp.ne.s32.totalorder %s23, %s24
      %p38 = scmp.eq.s32.totalorder %s16, 1
      %p39 = por %p37, %p38
      %p41 = scmp.ne.s32.totalorder %s24, %s40
      %p42 = scmp.eq.s32.totalorder %s16, 0
      %p43 = por %p41, %p42
      %s45 = sadd.s32 %s44, 1
      %p48 = scmp.eq.s32.totalorder %s10, 1
      %p49 = scmp.ne.s32.totalorder %s44, %s46
      %p50 = scmp.eq.s32.totalorder %s10, 0
      %p51 = por %p49, %p50
      %p52 = scmp.ne.s32.totalorder %s44, %s46
      %p53 = scmp.eq.s32.totalorder %s15, 1
      %p54 = por %p52, %p53
      %p55 = scmp.ne.s32.totalorder %s46, %s47
      %p56 = scmp.eq.s32.totalorder %s15, 0
      %p57 = por %p55, %p56
      %p58 = scmp.ne.s32.totalorder %s46, %s47
      %p59 = scmp.eq.s32.totalorder %s16, 1
      %p60 = por %p58, %p59
      %p62 = scmp.ne.s32.totalorder %s47, %s61
      %p63 = scmp.eq.s32.totalorder %s16, 0
      %p64 = por %p62, %p63
      %s65 = ssub.s32 %s10, %s17
      %p66 = scmp.eq.s32.totalorder %s65, 0
      %s68 = sadd.s32 %s67, 1
      %s69 = scalar_select %p66, %s67, %s68
      %p72 = pneg %p66
      %p73 = scmp.eq.s32.totalorder %s10, 1
      %p74 = por %p72, %p73
      %p75 = scmp.ne.s32.totalorder %s67, %s70
      %p76 = scmp.eq.s32.totalorder %s10, 0
      %p77 = por %p75, %p76
      %p78 = scmp.ne.s32.totalorder %s67, %s70
      %p79 = scmp.eq.s32.totalorder %s15, 1
      %p80 = por %p78, %p79
      %p81 = scmp.ne.s32.totalorder %s70, %s71
      %p82 = scmp.eq.s32.totalorder %s15, 0
      %p83 = por %p81, %p82
      %p84 = scmp.ne.s32.totalorder %s70, %s71
      %p85 = scmp.eq.s32.totalorder %s16, 1
      %p86 = por %p84, %p85
      %p88 = scmp.ne.s32.totalorder %s71, %s87
      %p89 = scmp.eq.s32.totalorder %s16, 0
      %p90 = por %p88, %p89
      %s91 = ssub.s32 %s10, %s17
      %p92 = scmp.eq.s32.totalorder %s91, 0
      %s94 = sadd.s32 %s93, 1
      %s95 = scalar_select %p92, %s93, %s94
      %p98 = pneg %p92
      %p99 = scmp.eq.s32.totalorder %s10, 1
      %p100 = por %p98, %p99
      %p101 = scmp.ne.s32.totalorder %s93, %s96
      %p102 = scmp.eq.s32.totalorder %s10, 0
      %p103 = por %p101, %p102
      %p104 = scmp.ne.s32.totalorder %s93, %s96
      %p105 = scmp.eq.s32.totalorder %s15, 1
      %p106 = por %p104, %p105
      %p107 = scmp.ne.s32.totalorder %s96, %s97
      %p108 = scmp.eq.s32.totalorder %s15, 0
      %p109 = por %p107, %p108
      %p110 = scmp.ne.s32.totalorder %s96, %s97
      %p111 = scmp.eq.s32.totalorder %s16, 1
      %p112 = por %p110, %p111
      %p114 = scmp.ne.s32.totalorder %s97, %s113
      %p115 = scmp.eq.s32.totalorder %s16, 0
      %p116 = por %p114, %p115
      %p117 = scmp.le.s32.totalorder 1, %s10
      %p118 = scmp.lt.s32.totalorder %s10, 3
      %p119 = pnand %p117, %p118
      %p120 = pneg %p119
      // Predicated region
      $region9: #{fwd.11} parent=5 // pred_check
        _
      $region10: #{fwd.11} parent=5 // pred_check_branch
        %122 = sbr.rel (%p119) target = $region12
      $region11: #{fwd.11} parent=5 // pred_region
        %s123 = ssub.s32 %s10, 1
        // Predicated region
        $region13: #{fwd.11} parent=11 // pred_check
          %p124 = pneg %p57
        $region14: #{fwd.11} parent=11 // pred_check_branch
          %126 = sbr.rel (%p124) target = $region16
        $region15: #{fwd.11} parent=11 // pred_region
          _
        $region16: #{fwd.11} parent=11 // pred_fallthru
          _
      $region12: #{fwd.11} parent=5 // pred_fallthru
        _
      %p127 = scmp.lt.s32.totalorder %s10, 2
      // Predicated region
      $region17: #{fwd.11} parent=5 // pred_check
        %p128 = pneg %p127
      $region18: #{fwd.11} parent=5 // pred_check_branch
        %130 = sbr.rel (%p128) target = $region20
      $region19: #{fwd.11} parent=5 // pred_region
        // Predicated region
        $region21: #{fwd.11} parent=19 // pred_check
          %p131 = pneg %p30
        $region22: #{fwd.11} parent=19 // pred_check_branch
          %133 = sbr.rel (%p131) target = $region24
        $region23: #{fwd.11} parent=19 // pred_region
          %s134 = sand.u32 %s20, 1
          %s135 = sand.u32 %s20, 1
          %s136 = smul.addr %s135, 288
          %s137 = scalar_lea.vmem [#allocation2], %s136
          %s138 = smul.addr %s10, 18
          %s139 = smul.addr %s138, 4
          %s140 = scalar_lea.vmem %s0, %s139
          // Predicated region
          $region25: #{fwd.11} parent=23 // pred_check
            _
          $region26: #{fwd.11} parent=23 // pred_check_branch
            %142 = sbr.rel (0) target = $region28
          $region27: #{fwd.11} parent=23 // pred_region
            // Predicated region
            $region29: #{fwd.11} parent=27 // pred_check
              _
            $region30: #{fwd.11} parent=27 // pred_check_branch
              %144 = sbr.rel target = $region32
            $region31: #{fwd.11} parent=27 // pred_region
              // Predicated region
              $region44: #{fwd.11} parent=31 // pred_check
                _
              $region45: #{fwd.11} parent=31 // pred_check_branch
                %301 = sbr.rel (0) target = $region47
              $region46: #{fwd.11} parent=31 // pred_region
                loop: start=0, step=1, limit=1
                $region48: #{fwd.11} parent=46 // loop_pre_header
                  _
                $region49: #{fwd.11} parent=46 // loop_header
                  %s303 = sphi 0, %s307
                  %p304 = scmp.ge.s32.totalorder %s303, 1
                  %s308 = sphi %s140, %s140
                  %s309 = sphi %s137, %s137
                $region50: #{fwd.11} parent=46 // loop_header_branch
                  %306 = sbr.rel (%p304) target = $region54
                $region51: #{fwd.11} parent=46 // loop_body
                  _
                $region52: #{fwd.11} parent=46 // loop_footer
                  %s307 = sadd.s32 1, %s303
                $region53: #{fwd.11} parent=46 // loop_footer_branch
                  %302 = sbr.rel target = $region49
                $region54: #{fwd.11} parent=46 // loop_exit
                  _
                loop: start=0, step=1, limit=1
                $region55: #{fwd.11} parent=46 // loop_pre_header
                  _
                $region56: #{fwd.11} parent=46 // loop_header
                  %s312 = sphi 0, %s316
                  %p313 = scmp.ge.s32.totalorder %s312, 1
                  %s317 = sphi %s140, %s140
                  %s318 = sphi %s137, %s137
                $region57: #{fwd.11} parent=46 // loop_header_branch
                  %315 = sbr.rel (%p313) target = $region61
                $region58: #{fwd.11} parent=46 // loop_body
                  %v319 = vld [vmem:[%s317] sm:$0xf]
                  %320 = vst [vmem:[%s318] sm:$0xf] %v319
                  %v321 = vld [vmem:[%s317 + $0x4] sm:$0xf]
                  %322 = vst [vmem:[%s318 + $0x4] sm:$0xf] %v321
                  %v323 = vld [vmem:[%s317 + $0x8] sm:$0xf]
                  %324 = vst [vmem:[%s318 + $0x8] sm:$0xf] %v323
                  %v325 = vld [vmem:[%s317 + $0xc] sm:$0xf]
                  %326 = vst [vmem:[%s318 + $0xc] sm:$0xf] %v325
                  %v327 = vld [vmem:[%s317 + $0x10] sm:$0xf]
                  %328 = vst [vmem:[%s318 + $0x10] sm:$0xf] %v327
                  %v329 = vld [vmem:[%s317 + $0x14] sm:$0xf]
                  %330 = vst [vmem:[%s318 + $0x14] sm:$0xf] %v329
                  %v331 = vld [vmem:[%s317 + $0x18] sm:$0xf]
                  %332 = vst [vmem:[%s318 + $0x18] sm:$0xf] %v331
                  %v333 = vld [vmem:[%s317 + $0x1c] sm:$0xf]
                  %334 = vst [vmem:[%s318 + $0x1c] sm:$0xf] %v333
                  %v335 = vld [vmem:[%s317 + $0x20] sm:$0xf]
                  %336 = vst [vmem:[%s318 + $0x20] sm:$0xf] %v335
                  %v337 = vld [vmem:[%s317 + $0x24] sm:$0xf]
                  %338 = vst [vmem:[%s318 + $0x24] sm:$0xf] %v337
                  %v339 = vld [vmem:[%s317 + $0x28] sm:$0xf]
                  %340 = vst [vmem:[%s318 + $0x28] sm:$0xf] %v339
                  %v341 = vld [vmem:[%s317 + $0x2c] sm:$0xf]
                  %342 = vst [vmem:[%s318 + $0x2c] sm:$0xf] %v341
                  %v343 = vld [vmem:[%s317 + $0x30] sm:$0xf]
                  %344 = vst [vmem:[%s318 + $0x30] sm:$0xf] %v343
                  %v345 = vld [vmem:[%s317 + $0x34] sm:$0xf]
                  %346 = vst [vmem:[%s318 + $0x34] sm:$0xf] %v345
                  %v347 = vld [vmem:[%s317 + $0x38] sm:$0xf]
                  %348 = vst [vmem:[%s318 + $0x38] sm:$0xf] %v347
                  %v349 = vld [vmem:[%s317 + $0x3c] sm:$0xf]
                  %350 = vst [vmem:[%s318 + $0x3c] sm:$0xf] %v349
                  %v351 = vld [vmem:[%s317 + $0x40] sm:$0xf]
                  %352 = vst [vmem:[%s318 + $0x40] sm:$0xf] %v351
                  %v353 = vld [vmem:[%s317 + $0x44] sm:$0xf]
                  %354 = vst [vmem:[%s318 + $0x44] sm:$0xf] %v353
                  %v355 = vld [vmem:[%s317 + $0x90] sm:$0xf]
                  %356 = vst [vmem:[%s318 + $0x48] sm:$0xf] %v355
                  %v357 = vld [vmem:[%s317 + $0x94] sm:$0xf]
                  %358 = vst [vmem:[%s318 + $0x4c] sm:$0xf] %v357
                  %v359 = vld [vmem:[%s317 + $0x98] sm:$0xf]
                  %360 = vst [vmem:[%s318 + $0x50] sm:$0xf] %v359
                  %v361 = vld [vmem:[%s317 + $0x9c] sm:$0xf]
                  %362 = vst [vmem:[%s318 + $0x54] sm:$0xf] %v361
                  %v363 = vld [vmem:[%s317 + $0xa0] sm:$0xf]
                  %364 = vst [vmem:[%s318 + $0x58] sm:$0xf] %v363
                  %v365 = vld [vmem:[%s317 + $0xa4] sm:$0xf]
                  %366 = vst [vmem:[%s318 + $0x5c] sm:$0xf] %v365
                  %v367 = vld [vmem:[%s317 + $0xa8] sm:$0xf]
                  %368 = vst [vmem:[%s318 + $0x60] sm:$0xf] %v367
                  %v369 = vld [vmem:[%s317 + $0xac] sm:$0xf]
                  %370 = vst [vmem:[%s318 + $0x64] sm:$0xf] %v369
                  %v371 = vld [vmem:[%s317 + $0xb0] sm:$0xf]
                  %372 = vst [vmem:[%s318 + $0x68] sm:$0xf] %v371
                  %v373 = vld [vmem:[%s317 + $0xb4] sm:$0xf]
                  %374 = vst [vmem:[%s318 + $0x6c] sm:$0xf] %v373
                  %v375 = vld [vmem:[%s317 + $0xb8] sm:$0xf]
                  %376 = vst [vmem:[%s318 + $0x70] sm:$0xf] %v375
                  %v377 = vld [vmem:[%s317 + $0xbc] sm:$0xf]
                  %378 = vst [vmem:[%s318 + $0x74] sm:$0xf] %v377
                  %v379 = vld [vmem:[%s317 + $0xc0] sm:$0xf]
                  %380 = vst [vmem:[%s318 + $0x78] sm:$0xf] %v379
                  %v381 = vld [vmem:[%s317 + $0xc4] sm:$0xf]
                  %382 = vst [vmem:[%s318 + $0x7c] sm:$0xf] %v381
                  %v383 = vld [vmem:[%s317 + $0xc8] sm:$0xf]
                  %384 = vst [vmem:[%s318 + $0x80] sm:$0xf] %v383
                  %v385 = vld [vmem:[%s317 + $0xcc] sm:$0xf]
                  %386 = vst [vmem:[%s318 + $0x84] sm:$0xf] %v385
                  %v387 = vld [vmem:[%s317 + $0xd0] sm:$0xf]
                  %388 = vst [vmem:[%s318 + $0x88] sm:$0xf] %v387
                  %v389 = vld [vmem:[%s317 + $0xd4] sm:$0xf]
                  %390 = vst [vmem:[%s318 + $0x8c] sm:$0xf] %v389
                  %v391 = vld [vmem:[%s317 + $0x120] sm:$0xf]
                  %392 = vst [vmem:[%s318 + $0x90] sm:$0xf] %v391
                  %v393 = vld [vmem:[%s317 + $0x124] sm:$0xf]
                  %394 = vst [vmem:[%s318 + $0x94] sm:$0xf] %v393
                  %v395 = vld [vmem:[%s317 + $0x128] sm:$0xf]
                  %396 = vst [vmem:[%s318 + $0x98] sm:$0xf] %v395
                  %v397 = vld [vmem:[%s317 + $0x12c] sm:$0xf]
                  %398 = vst [vmem:[%s318 + $0x9c] sm:$0xf] %v397
                  %v399 = vld [vmem:[%s317 + $0x130] sm:$0xf]
                  %400 = vst [vmem:[%s318 + $0xa0] sm:$0xf] %v399
                  %v401 = vld [vmem:[%s317 + $0x134] sm:$0xf]
                  %402 = vst [vmem:[%s318 + $0xa4] sm:$0xf] %v401
                  %v403 = vld [vmem:[%s317 + $0x138] sm:$0xf]
                  %404 = vst [vmem:[%s318 + $0xa8] sm:$0xf] %v403
                  %v405 = vld [vmem:[%s317 + $0x13c] sm:$0xf]
                  %406 = vst [vmem:[%s318 + $0xac] sm:$0xf] %v405
                  %v407 = vld [vmem:[%s317 + $0x140] sm:$0xf]
                  %408 = vst [vmem:[%s318 + $0xb0] sm:$0xf] %v407
                  %v409 = vld [vmem:[%s317 + $0x144] sm:$0xf]
                  %410 = vst [vmem:[%s318 + $0xb4] sm:$0xf] %v409
                  %v411 = vld [vmem:[%s317 + $0x148] sm:$0xf]
                  %412 = vst [vmem:[%s318 + $0xb8] sm:$0xf] %v411
                  %v413 = vld [vmem:[%s317 + $0x14c] sm:$0xf]
                  %414 = vst [vmem:[%s318 + $0xbc] sm:$0xf] %v413
                  %v415 = vld [vmem:[%s317 + $0x150] sm:$0xf]
                  %416 = vst [vmem:[%s318 + $0xc0] sm:$0xf] %v415
                  %v417 = vld [vmem:[%s317 + $0x154] sm:$0xf]
                  %418 = vst [vmem:[%s318 + $0xc4] sm:$0xf] %v417
                  %v419 = vld [vmem:[%s317 + $0x158] sm:$0xf]
                  %420 = vst [vmem:[%s318 + $0xc8] sm:$0xf] %v419
                  %v421 = vld [vmem:[%s317 + $0x15c] sm:$0xf]
                  %422 = vst [vmem:[%s318 + $0xcc] sm:$0xf] %v421
                  %v423 = vld [vmem:[%s317 + $0x160] sm:$0xf]
                  %424 = vst [vmem:[%s318 + $0xd0] sm:$0xf] %v423
                  %v425 = vld [vmem:[%s317 + $0x164] sm:$0xf]
                  %426 = vst [vmem:[%s318 + $0xd4] sm:$0xf] %v425
                  %v427 = vld [vmem:[%s317 + $0x1b0] sm:$0xf]
                  %428 = vst [vmem:[%s318 + $0xd8] sm:$0xf] %v427
                  %v429 = vld [vmem:[%s317 + $0x1b4] sm:$0xf]
                  %430 = vst [vmem:[%s318 + $0xdc] sm:$0xf] %v429
                  %v431 = vld [vmem:[%s317 + $0x1b8] sm:$0xf]
                  %432 = vst [vmem:[%s318 + $0xe0] sm:$0xf] %v431
                  %v433 = vld [vmem:[%s317 + $0x1bc] sm:$0xf]
                  %434 = vst [vmem:[%s318 + $0xe4] sm:$0xf] %v433
                  %v435 = vld [vmem:[%s317 + $0x1c0] sm:$0xf]
                  %436 = vst [vmem:[%s318 + $0xe8] sm:$0xf] %v435
                  %v437 = vld [vmem:[%s317 + $0x1c4] sm:$0xf]
                  %438 = vst [vmem:[%s318 + $0xec] sm:$0xf] %v437
                  %v439 = vld [vmem:[%s317 + $0x1c8] sm:$0xf]
                  %440 = vst [vmem:[%s318 + $0xf0] sm:$0xf] %v439
                  %v441 = vld [vmem:[%s317 + $0x1cc] sm:$0xf]
                  %442 = vst [vmem:[%s318 + $0xf4] sm:$0xf] %v441
                  %v443 = vld [vmem:[%s317 + $0x1d0] sm:$0xf]
                  %444 = vst [vmem:[%s318 + $0xf8] sm:$0xf] %v443
                  %v445 = vld [vmem:[%s317 + $0x1d4] sm:$0xf]
                  %446 = vst [vmem:[%s318 + $0xfc] sm:$0xf] %v445
                  %v447 = vld [vmem:[%s317 + $0x1d8] sm:$0xf]
                  %448 = vst [vmem:[%s318 + $0x100] sm:$0xf] %v447
                  %v449 = vld [vmem:[%s317 + $0x1dc] sm:$0xf]
                  %450 = vst [vmem:[%s318 + $0x104] sm:$0xf] %v449
                  %v451 = vld [vmem:[%s317 + $0x1e0] sm:$0xf]
                  %452 = vst [vmem:[%s318 + $0x108] sm:$0xf] %v451
                  %v453 = vld [vmem:[%s317 + $0x1e4] sm:$0xf]
                  %454 = vst [vmem:[%s318 + $0x10c] sm:$0xf] %v453
                  %v455 = vld [vmem:[%s317 + $0x1e8] sm:$0xf]
                  %456 = vst [vmem:[%s318 + $0x110] sm:$0xf] %v455
                  %v457 = vld [vmem:[%s317 + $0x1ec] sm:$0xf]
                  %458 = vst [vmem:[%s318 + $0x114] sm:$0xf] %v457
                  %v459 = vld [vmem:[%s317 + $0x1f0] sm:$0xf]
                  %460 = vst [vmem:[%s318 + $0x118] sm:$0xf] %v459
                  %v461 = vld [vmem:[%s317 + $0x1f4] sm:$0xf]
                  %462 = vst [vmem:[%s318 + $0x11c] sm:$0xf] %v461
                $region59: #{fwd.11} parent=46 // loop_footer
                  %s316 = sadd.s32 1, %s312
                $region60: #{fwd.11} parent=46 // loop_footer_branch
                  %311 = sbr.rel target = $region56
                $region61: #{fwd.11} parent=46 // loop_exit
                  _
              $region47: #{fwd.11} parent=31 // pred_fallthru
                _
            $region32: #{fwd.11} parent=27 // pred_fallthru
              _
            // Predicated region
            $region33: #{fwd.11} parent=27 // pred_check
              _
            $region34: #{fwd.11} parent=27 // pred_check_branch
              %146 = sbr.rel (0) target = $region36
            $region35: #{fwd.11} parent=27 // pred_region
              loop: start=0, step=1, limit=1
              $region37: #{fwd.11} parent=35 // loop_pre_header
                _
              $region38: #{fwd.11} parent=35 // loop_header
                %s149 = sphi 0, %s153
                %p150 = scmp.ge.s32.totalorder %s149, 1
                %s154 = sphi %s140, %s140
                %s155 = sphi %s137, %s137
              $region39: #{fwd.11} parent=35 // loop_header_branch
                %152 = sbr.rel (%p150) target = $region43
              $region40: #{fwd.11} parent=35 // loop_body
                %v156 = vld [vmem:[%s154] sm:$0xf]
                %157 = vst [vmem:[%s155] sm:$0xf] %v156
                %v158 = vld [vmem:[%s154 + $0x4] sm:$0xf]
                %159 = vst [vmem:[%s155 + $0x4] sm:$0xf] %v158
                %v160 = vld [vmem:[%s154 + $0x8] sm:$0xf]
                %161 = vst [vmem:[%s155 + $0x8] sm:$0xf] %v160
                %v162 = vld [vmem:[%s154 + $0xc] sm:$0xf]
                %163 = vst [vmem:[%s155 + $0xc] sm:$0xf] %v162
                %v164 = vld [vmem:[%s154 + $0x10] sm:$0xf]
                %165 = vst [vmem:[%s155 + $0x10] sm:$0xf] %v164
                %v166 = vld [vmem:[%s154 + $0x14] sm:$0xf]
                %167 = vst [vmem:[%s155 + $0x14] sm:$0xf] %v166
                %v168 = vld [vmem:[%s154 + $0x18] sm:$0xf]
                %169 = vst [vmem:[%s155 + $0x18] sm:$0xf] %v168
                %v170 = vld [vmem:[%s154 + $0x1c] sm:$0xf]
                %171 = vst [vmem:[%s155 + $0x1c] sm:$0xf] %v170
                %v172 = vld [vmem:[%s154 + $0x20] sm:$0xf]
                %173 = vst [vmem:[%s155 + $0x20] sm:$0xf] %v172
                %v174 = vld [vmem:[%s154 + $0x24] sm:$0xf]
                %175 = vst [vmem:[%s155 + $0x24] sm:$0xf] %v174
                %v176 = vld [vmem:[%s154 + $0x28] sm:$0xf]
                %177 = vst [vmem:[%s155 + $0x28] sm:$0xf] %v176
                %v178 = vld [vmem:[%s154 + $0x2c] sm:$0xf]
                %179 = vst [vmem:[%s155 + $0x2c] sm:$0xf] %v178
                %v180 = vld [vmem:[%s154 + $0x30] sm:$0xf]
                %181 = vst [vmem:[%s155 + $0x30] sm:$0xf] %v180
                %v182 = vld [vmem:[%s154 + $0x34] sm:$0xf]
                %183 = vst [vmem:[%s155 + $0x34] sm:$0xf] %v182
                %v184 = vld [vmem:[%s154 + $0x38] sm:$0xf]
                %185 = vst [vmem:[%s155 + $0x38] sm:$0xf] %v184
                %v186 = vld [vmem:[%s154 + $0x3c] sm:$0xf]
                %187 = vst [vmem:[%s155 + $0x3c] sm:$0xf] %v186
                %v188 = vld [vmem:[%s154 + $0x40] sm:$0xf]
                %189 = vst [vmem:[%s155 + $0x40] sm:$0xf] %v188
                %v190 = vld [vmem:[%s154 + $0x44] sm:$0xf]
                %191 = vst [vmem:[%s155 + $0x44] sm:$0xf] %v190
                %v192 = vld [vmem:[%s154 + $0x90] sm:$0xf]
                %193 = vst [vmem:[%s155 + $0x48] sm:$0xf] %v192
                %v194 = vld [vmem:[%s154 + $0x94] sm:$0xf]
                %195 = vst [vmem:[%s155 + $0x4c] sm:$0xf] %v194
                %v196 = vld [vmem:[%s154 + $0x98] sm:$0xf]
                %197 = vst [vmem:[%s155 + $0x50] sm:$0xf] %v196
                %v198 = vld [vmem:[%s154 + $0x9c] sm:$0xf]
                %199 = vst [vmem:[%s155 + $0x54] sm:$0xf] %v198
                %v200 = vld [vmem:[%s154 + $0xa0] sm:$0xf]
                %201 = vst [vmem:[%s155 + $0x58] sm:$0xf] %v200
                %v202 = vld [vmem:[%s154 + $0xa4] sm:$0xf]
                %203 = vst [vmem:[%s155 + $0x5c] sm:$0xf] %v202
                %v204 = vld [vmem:[%s154 + $0xa8] sm:$0xf]
                %205 = vst [vmem:[%s155 + $0x60] sm:$0xf] %v204
                %v206 = vld [vmem:[%s154 + $0xac] sm:$0xf]
                %207 = vst [vmem:[%s155 + $0x64] sm:$0xf] %v206
                %v208 = vld [vmem:[%s154 + $0xb0] sm:$0xf]
                %209 = vst [vmem:[%s155 + $0x68] sm:$0xf] %v208
                %v210 = vld [vmem:[%s154 + $0xb4] sm:$0xf]
                %211 = vst [vmem:[%s155 + $0x6c] sm:$0xf] %v210
                %v212 = vld [vmem:[%s154 + $0xb8] sm:$0xf]
                %213 = vst [vmem:[%s155 + $0x70] sm:$0xf] %v212
                %v214 = vld [vmem:[%s154 + $0xbc] sm:$0xf]
                %215 = vst [vmem:[%s155 + $0x74] sm:$0xf] %v214
                %v216 = vld [vmem:[%s154 + $0xc0] sm:$0xf]
                %217 = vst [vmem:[%s155 + $0x78] sm:$0xf] %v216
                %v218 = vld [vmem:[%s154 + $0xc4] sm:$0xf]
                %219 = vst [vmem:[%s155 + $0x7c] sm:$0xf] %v218
                %v220 = vld [vmem:[%s154 + $0xc8] sm:$0xf]
                %221 = vst [vmem:[%s155 + $0x80] sm:$0xf] %v220
                %v222 = vld [vmem:[%s154 + $0xcc] sm:$0xf]
                %223 = vst [vmem:[%s155 + $0x84] sm:$0xf] %v222
                %v224 = vld [vmem:[%s154 + $0xd0] sm:$0xf]
                %225 = vst [vmem:[%s155 + $0x88] sm:$0xf] %v224
                %v226 = vld [vmem:[%s154 + $0xd4] sm:$0xf]
                %227 = vst [vmem:[%s155 + $0x8c] sm:$0xf] %v226
                %v228 = vld [vmem:[%s154 + $0x120] sm:$0xf]
                %229 = vst [vmem:[%s155 + $0x90] sm:$0xf] %v228
                %v230 = vld [vmem:[%s154 + $0x124] sm:$0xf]
                %231 = vst [vmem:[%s155 + $0x94] sm:$0xf] %v230
                %v232 = vld [vmem:[%s154 + $0x128] sm:$0xf]
                %233 = vst [vmem:[%s155 + $0x98] sm:$0xf] %v232
                %v234 = vld [vmem:[%s154 + $0x12c] sm:$0xf]
                %235 = vst [vmem:[%s155 + $0x9c] sm:$0xf] %v234
                %v236 = vld [vmem:[%s154 + $0x130] sm:$0xf]
                %237 = vst [vmem:[%s155 + $0xa0] sm:$0xf] %v236
                %v238 = vld [vmem:[%s154 + $0x134] sm:$0xf]
                %239 = vst [vmem:[%s155 + $0xa4] sm:$0xf] %v238
                %v240 = vld [vmem:[%s154 + $0x138] sm:$0xf]
                %241 = vst [vmem:[%s155 + $0xa8] sm:$0xf] %v240
                %v242 = vld [vmem:[%s154 + $0x13c] sm:$0xf]
                %243 = vst [vmem:[%s155 + $0xac] sm:$0xf] %v242
                %v244 = vld [vmem:[%s154 + $0x140] sm:$0xf]
                %245 = vst [vmem:[%s155 + $0xb0] sm:$0xf] %v244
                %v246 = vld [vmem:[%s154 + $0x144] sm:$0xf]
                %247 = vst [vmem:[%s155 + $0xb4] sm:$0xf] %v246
                %v248 = vld [vmem:[%s154 + $0x148] sm:$0xf]
                %249 = vst [vmem:[%s155 + $0xb8] sm:$0xf] %v248
                %v250 = vld [vmem:[%s154 + $0x14c] sm:$0xf]
                %251 = vst [vmem:[%s155 + $0xbc] sm:$0xf] %v250
                %v252 = vld [vmem:[%s154 + $0x150] sm:$0xf]
                %253 = vst [vmem:[%s155 + $0xc0] sm:$0xf] %v252
                %v254 = vld [vmem:[%s154 + $0x154] sm:$0xf]
                %255 = vst [vmem:[%s155 + $0xc4] sm:$0xf] %v254
                %v256 = vld [vmem:[%s154 + $0x158] sm:$0xf]
                %257 = vst [vmem:[%s155 + $0xc8] sm:$0xf] %v256
                %v258 = vld [vmem:[%s154 + $0x15c] sm:$0xf]
                %259 = vst [vmem:[%s155 + $0xcc] sm:$0xf] %v258
                %v260 = vld [vmem:[%s154 + $0x160] sm:$0xf]
                %261 = vst [vmem:[%s155 + $0xd0] sm:$0xf] %v260
                %v262 = vld [vmem:[%s154 + $0x164] sm:$0xf]
                %263 = vst [vmem:[%s155 + $0xd4] sm:$0xf] %v262
                %v264 = vld [vmem:[%s154 + $0x1b0] sm:$0xf]
                %265 = vst [vmem:[%s155 + $0xd8] sm:$0xf] %v264
                %v266 = vld [vmem:[%s154 + $0x1b4] sm:$0xf]
                %267 = vst [vmem:[%s155 + $0xdc] sm:$0xf] %v266
                %v268 = vld [vmem:[%s154 + $0x1b8] sm:$0xf]
                %269 = vst [vmem:[%s155 + $0xe0] sm:$0xf] %v268
                %v270 = vld [vmem:[%s154 + $0x1bc] sm:$0xf]
                %271 = vst [vmem:[%s155 + $0xe4] sm:$0xf] %v270
                %v272 = vld [vmem:[%s154 + $0x1c0] sm:$0xf]
                %273 = vst [vmem:[%s155 + $0xe8] sm:$0xf] %v272
                %v274 = vld [vmem:[%s154 + $0x1c4] sm:$0xf]
                %275 = vst [vmem:[%s155 + $0xec] sm:$0xf] %v274
                %v276 = vld [vmem:[%s154 + $0x1c8] sm:$0xf]
                %277 = vst [vmem:[%s155 + $0xf0] sm:$0xf] %v276
                %v278 = vld [vmem:[%s154 + $0x1cc] sm:$0xf]
                %279 = vst [vmem:[%s155 + $0xf4] sm:$0xf] %v278
                %v280 = vld [vmem:[%s154 + $0x1d0] sm:$0xf]
                %281 = vst [vmem:[%s155 + $0xf8] sm:$0xf] %v280
                %v282 = vld [vmem:[%s154 + $0x1d4] sm:$0xf]
                %283 = vst [vmem:[%s155 + $0xfc] sm:$0xf] %v282
                %v284 = vld [vmem:[%s154 + $0x1d8] sm:$0xf]
                %285 = vst [vmem:[%s155 + $0x100] sm:$0xf] %v284
                %v286 = vld [vmem:[%s154 + $0x1dc] sm:$0xf]
                %287 = vst [vmem:[%s155 + $0x104] sm:$0xf] %v286
                %v288 = vld [vmem:[%s154 + $0x1e0] sm:$0xf]
                %289 = vst [vmem:[%s155 + $0x108] sm:$0xf] %v288
                %v290 = vld [vmem:[%s154 + $0x1e4] sm:$0xf]
                %291 = vst [vmem:[%s155 + $0x10c] sm:$0xf] %v290
                %v292 = vld [vmem:[%s154 + $0x1e8] sm:$0xf]
                %293 = vst [vmem:[%s155 + $0x110] sm:$0xf] %v292
                %v294 = vld [vmem:[%s154 + $0x1ec] sm:$0xf]
                %295 = vst [vmem:[%s155 + $0x114] sm:$0xf] %v294
                %v296 = vld [vmem:[%s154 + $0x1f0] sm:$0xf]
                %297 = vst [vmem:[%s155 + $0x118] sm:$0xf] %v296
                %v298 = vld [vmem:[%s154 + $0x1f4] sm:$0xf]
                %299 = vst [vmem:[%s155 + $0x11c] sm:$0xf] %v298
              $region41: #{fwd.11} parent=35 // loop_footer
                %s153 = sadd.s32 1, %s149
              $region42: #{fwd.11} parent=35 // loop_footer_branch
                %148 = sbr.rel target = $region38
              $region43: #{fwd.11} parent=35 // loop_exit
                _
            $region36: #{fwd.11} parent=27 // pred_fallthru
              _
          $region28: #{fwd.11} parent=23 // pred_fallthru
            _
          %463 = vnop
        $region24: #{fwd.11} parent=19 // pred_fallthru
          _
      $region20: #{fwd.11} parent=5 // pred_fallthru
        _
      %p464 = scmp.le.s32.totalorder 1, %s10
      %p465 = scmp.lt.s32.totalorder %s10, 3
      %p466 = pnand %p464, %p465
      %p467 = pneg %p466
      // Predicated region
      $region62: #{fwd.11} parent=5 // pred_check
        _
      $region63: #{fwd.11} parent=5 // pred_check_branch
        %469 = sbr.rel (%p466) target = $region65
      $region64: #{fwd.11} parent=5 // pred_region
        %s470 = ssub.s32 %s10, 1
        %s471 = sand.u32 %s23, 1
        %s472 = sand.u32 %s23, 1
        %s473 = smul.addr %s472, 288
        %s474 = scalar_lea.vmem [#allocation2], %s473
        // Predicated region
        $region66: #{fwd.11} parent=64 // pred_check
          %p475 = pneg %p36
        $region67: #{fwd.11} parent=64 // pred_check_branch
          %477 = sbr.rel (%p475) target = $region69
        $region68: #{fwd.11} parent=64 // pred_region
          _
        $region69: #{fwd.11} parent=64 // pred_fallthru
          _
        %s478 = sand.u32 %s23, 1
        %s479 = sand.u32 %s23, 1
        %s480 = smul.addr %s479, 288
        %s481 = scalar_lea.vmem [#allocation2], %s480
        %p482 = pneg %p36
        %p483 = pneg %p33
        %p484 = pneg %p57
        %p485 = pneg %p54
        %p486 = pneg %p83
        %p487 = pneg %p80
        %p488 = scmp.lt.s32.totalorder %s15, 1
        %s489 = scalar_select %p488, %s15, 1
        %s490 = smul.addr %s489, 8
        %s491 = smul.addr %s490, 8
        %s492 = scalar_lea.vmem %s2, %s491
        %p493 = pneg %p109
        %p494 = pneg %p106
        %p495 = scmp.lt.s32.totalorder %s15, 1
        %s496 = scalar_select %p495, %s15, 1
        %s497 = smul.addr %s496, 2
        %s498 = scalar_lea.vmem %s3, %s497
        %p499 = scmp.lt.s32.totalorder %s15, 1
        %s500 = scalar_select %p499, %s15, 1
        %s501 = smul.addr %s500, 8
        %s502 = smul.addr %s501, 8
        %s503 = scalar_lea.vmem %s2, %s502
        %p504 = scmp.lt.s32.totalorder %s15, 1
        %s505 = scalar_select %p504, %s15, 1
        %s506 = smul.addr %s505, 2
        %s507 = scalar_lea.vmem %s3, %s506
        %v509 = vld [vmem:[%s474] sm:$0xf]
        %v510 = vld [vmem:[%s474 + $0x8] sm:$0xf]
        %v511 = vld [vmem:[%s474 + $0x10] sm:$0xf]
        %v512 = vld [vmem:[%s474 + $0x18] sm:$0xf]
        %v513 = vld [vmem:[%s474 + $0x20] sm:$0xf]
        %v514 = vld [vmem:[%s474 + $0x28] sm:$0xf]
        %v515 = vld [vmem:[%s474 + $0x30] sm:$0xf]
        %v516 = vld [vmem:[%s474 + $0x38] sm:$0xf]
        %v517 = vld [vmem:[%s1] sm:$0xf]
        %s518 = scalar_lea.vmem %s474, 72 [#allocation2]
        %v519 = vld [vmem:[%s518] sm:$0xf]
        %v520 = vld [vmem:[%s518 + $0x8] sm:$0xf]
        %v521 = vld [vmem:[%s518 + $0x10] sm:$0xf]
        %v522 = vld [vmem:[%s518 + $0x18] sm:$0xf]
        %v523 = vld [vmem:[%s518 + $0x20] sm:$0xf]
        %v524 = vld [vmem:[%s518 + $0x28] sm:$0xf]
        %v525 = vld [vmem:[%s518 + $0x30] sm:$0xf]
        %v526 = vld [vmem:[%s518 + $0x38] sm:$0xf]
        %s527 = scalar_lea.vmem %s1, 4
        %v528 = vld [vmem:[%s527] sm:$0xf]
        %v537 = vunpack.c.l.b16 %v519
        %v538 = vunpack.c.l.b16 %v520
        %v539 = vunpack.c.l.b16 %v521
        %v540 = vunpack.c.l.b16 %v522
        %v541 = vunpack.c.l.b16 %v523
        %v542 = vunpack.c.l.b16 %v524
        %v543 = vunpack.c.l.b16 %v525
        %v544 = vunpack.c.l.b16 %v526
        %v545 = vpack.c.b16 %v538, %v537
        %v546 = vpack.c.b16 %v540, %v539
        %v547 = vpack.c.b16 %v542, %v541
        %v548 = vpack.c.b16 %v544, %v543
        %vm549 = vcmask 64512
        %v551 = vsel %vm549, %v545, 0
        %v554 = vsel %vm549, %v546, 0
        %v557 = vsel %vm549, %v547, 0
        %v560 = vsel %vm549, %v548, 0
        %vm562 = vcmask 1043456
        %v564 = vsel %vm562, %v528, 0
        %566 = vmatprep.subr.bf16.mxu0 0
        %567 = vmatpush1.bf16.msra.mxu0 %v564
        %568 = vmatprep.subr.bf16.mxu0 0
        %569 = vmatpush1.bf16.msra.mxu0 0
        %570 = vmatprep.subr.bf16.mxu0 0
        %571 = vmatpush1.bf16.msra.mxu0 0
        %572 = vmatprep.subr.bf16.mxu0 0
        %573 = vmatpush1.bf16.msra.mxu0 0
        %574 = vmatprep.subr.bf16.mxu0 0
        %575 = vmatpush1.bf16.msra.mxu0 0
        %576 = vmatprep.subr.bf16.mxu0 0
        %577 = vmatpush1.bf16.msra.mxu0 0
        %578 = vmatprep.subr.bf16.mxu0 0
        %579 = vmatpush1.bf16.msra.mxu0 0
        %580 = vmatprep.subr.bf16.mxu0 0
        %581 = vmatpush1.bf16.msra.mxu0 0
        %582 = vmatprep.subr.bf16.mxu0 0
        %583 = vmatpush1.bf16.msra.mxu0 0
        %584 = vmatprep.subr.bf16.mxu0 0
        %585 = vmatpush1.bf16.msra.mxu0 0
        %586 = vmatprep.subr.bf16.mxu0 0
        %587 = vmatpush1.bf16.msra.mxu0 0
        %588 = vmatprep.subr.bf16.mxu0 0
        %589 = vmatpush1.bf16.msra.mxu0 0
        %590 = vmatprep.subr.bf16.mxu0 0
        %591 = vmatpush1.bf16.msra.mxu0 0
        %592 = vmatprep.subr.bf16.mxu0 0
        %593 = vmatpush1.bf16.msra.mxu0 0
        %594 = vmatprep.subr.bf16.mxu0 0
        %595 = vmatpush1.bf16.msra.mxu0 0
        %596 = vmatprep.subr.bf16.mxu0 0
        %597 = vmatpush1.bf16.msra.mxu0 0
        %598 = vmatprep.mubr.bf16.mxu0 0
        %599 = vmatmul.mubr.bf16.gmra.mrb[0].mxu0 %v551
        %v600 = vpop.f32.mrb[0].mxu0
        %v601 = vadd.f32 0.0, %v600
        %v602 = vpop.f32.mrb[0].mxu0
        %v603 = vpop.f32.mrb[0].mxu0
        %v604 = vadd.f32 0.0, %v603
        %v605 = vpop.f32.mrb[0].mxu0
        %606 = vmatprep.mubr.bf16.mxu0 0
        %607 = vmatmul.mubr.bf16.gmra.mrb[0].mxu0 %v554
        %v608 = vpop.f32.mrb[0].mxu0
        %v609 = vadd.f32 0.0, %v608
        %v610 = vpop.f32.mrb[0].mxu0
        %v611 = vpop.f32.mrb[0].mxu0
        %v612 = vadd.f32 0.0, %v611
        %v613 = vpop.f32.mrb[0].mxu0
        %614 = vmatprep.mubr.bf16.mxu0 0
        %615 = vmatmul.mubr.bf16.gmra.mrb[0].mxu0 %v557
        %v616 = vpop.f32.mrb[0].mxu0
        %v617 = vadd.f32 0.0, %v616
        %v618 = vpop.f32.mrb[0].mxu0
        %v619 = vpop.f32.mrb[0].mxu0
        %v620 = vadd.f32 0.0, %v619
        %v621 = vpop.f32.mrb[0].mxu0
        %622 = vmatprep.mubr.bf16.mxu0 0
        %623 = vmatmul.mubr.bf16.gmra.mrb[0].mxu0 %v560
        %v624 = vpop.f32.mrb[0].mxu0
        %v625 = vadd.f32 0.0, %v624
        %v626 = vpop.f32.mrb[0].mxu0
        %v627 = vpop.f32.mrb[0].mxu0
        %v628 = vadd.f32 0.0, %v627
        %v629 = vpop.f32.mrb[0].mxu0
        %630 = vdwg.mxu0
        %v639 = vunpack.c.l.b16 %v509
        %v640 = vunpack.c.l.b16 %v510
        %v641 = vunpack.c.l.b16 %v511
        %v642 = vunpack.c.l.b16 %v512
        %v643 = vunpack.c.l.b16 %v513
        %v644 = vunpack.c.l.b16 %v514
        %v645 = vunpack.c.l.b16 %v515
        %v646 = vunpack.c.l.b16 %v516
        %v647 = vpack.c.b16 %v640, %v639
        %v648 = vpack.c.b16 %v642, %v641
        %v649 = vpack.c.b16 %v644, %v643
        %v650 = vpack.c.b16 %v646, %v645
        %v652 = vsel %vm549, %v647, 0
        %v655 = vsel %vm549, %v648, 0
        %v658 = vsel %vm549, %v649, 0
        %v661 = vsel %vm549, %v650, 0
        %v664 = vsel %vm562, %v517, 0
        %666 = vmatprep.subr.bf16.mxu0 0
        %667 = vmatpush1.bf16.msra.mxu0 %v664
        %668 = vmatprep.subr.bf16.mxu0 0
        %669 = vmatpush1.bf16.msra.mxu0 0
        %670 = vmatprep.subr.bf16.mxu0 0
        %671 = vmatpush1.bf16.msra.mxu0 0
        %672 = vmatprep.subr.bf16.mxu0 0
        %673 = vmatpush1.bf16.msra.mxu0 0
        %674 = vmatprep.subr.bf16.mxu0 0
        %675 = vmatpush1.bf16.msra.mxu0 0
        %676 = vmatprep.subr.bf16.mxu0 0
        %677 = vmatpush1.bf16.msra.mxu0 0
        %678 = vmatprep.subr.bf16.mxu0 0
        %679 = vmatpush1.bf16.msra.mxu0 0
        %680 = vmatprep.subr.bf16.mxu0 0
        %681 = vmatpush1.bf16.msra.mxu0 0
        %682 = vmatprep.subr.bf16.mxu0 0
        %683 = vmatpush1.bf16.msra.mxu0 0
        %684 = vmatprep.subr.bf16.mxu0 0
        %685 = vmatpush1.bf16.msra.mxu0 0
        %686 = vmatprep.subr.bf16.mxu0 0
        %687 = vmatpush1.bf16.msra.mxu0 0
        %688 = vmatprep.subr.bf16.mxu0 0
        %689 = vmatpush1.bf16.msra.mxu0 0
        %690 = vmatprep.subr.bf16.mxu0 0
        %691 = vmatpush1.bf16.msra.mxu0 0
        %692 = vmatprep.subr.bf16.mxu0 0
        %693 = vmatpush1.bf16.msra.mxu0 0
        %694 = vmatprep.subr.bf16.mxu0 0
        %695 = vmatpush1.bf16.msra.mxu0 0
        %696 = vmatprep.subr.bf16.mxu0 0
        %697 = vmatpush1.bf16.msra.mxu0 0
        %698 = vmatprep.mubr.bf16.mxu0 0
        %699 = vmatmul.mubr.bf16.gmra.mrb[0].mxu0 %v652
        %v700 = vpop.f32.mrb[0].mxu0
        %v701 = vadd.f32 %v601, %v700
        %v702 = vpop.f32.mrb[0].mxu0
        %v703 = vpop.f32.mrb[0].mxu0
        %v704 = vadd.f32 %v604, %v703
        %v705 = vpop.f32.mrb[0].mxu0
        %706 = vmatprep.mubr.bf16.mxu0 0
        %707 = vmatmul.mubr.bf16.gmra.mrb[0].mxu0 %v655
        %v708 = vpop.f32.mrb[0].mxu0
        %v709 = vadd.f32 %v609, %v708
        %v710 = vpop.f32.mrb[0].mxu0
        %v711 = vpop.f32.mrb[0].mxu0
        %v712 = vadd.f32 %v612, %v711
        %v713 = vpop.f32.mrb[0].mxu0
        %714 = vmatprep.mubr.bf16.mxu0 0
        %715 = vmatmul.mubr.bf16.gmra.mrb[0].mxu0 %v658
        %v716 = vpop.f32.mrb[0].mxu0
        %v717 = vadd.f32 %v617, %v716
        %v718 = vpop.f32.mrb[0].mxu0
        %v719 = vpop.f32.mrb[0].mxu0
        %v720 = vadd.f32 %v620, %v719
        %v721 = vpop.f32.mrb[0].mxu0
        %722 = vmatprep.mubr.bf16.mxu0 0
        %723 = vmatmul.mubr.bf16.gmra.mrb[0].mxu0 %v661
        %v724 = vpop.f32.mrb[0].mxu0
        %v725 = vadd.f32 %v625, %v724
        %v726 = vpop.f32.mrb[0].mxu0
        %v727 = vpop.f32.mrb[0].mxu0
        %v728 = vadd.f32 %v628, %v727
        %v729 = vpop.f32.mrb[0].mxu0
        %730 = vdwg.mxu0
        %v731 = vld [vmem:[%s474] sm:$0xf]
        %v732 = vld [vmem:[%s474 + $0x4] sm:$0x1]
        %v733 = vld [vmem:[%s474 + $0x8] sm:$0xf]
        %v734 = vld [vmem:[%s474 + $0xc] sm:$0x1]
        %v735 = vld [vmem:[%s474 + $0x10] sm:$0xf]
        %v736 = vld [vmem:[%s474 + $0x14] sm:$0x1]
        %v737 = vld [vmem:[%s474 + $0x18] sm:$0xf]
        %v738 = vld [vmem:[%s474 + $0x1c] sm:$0x1]
        %v739 = vld [vmem:[%s474 + $0x20] sm:$0xf]
        %v740 = vld [vmem:[%s474 + $0x24] sm:$0x1]
        %v741 = vld [vmem:[%s474 + $0x28] sm:$0xf]
        %v742 = vld [vmem:[%s474 + $0x2c] sm:$0x1]
        %v743 = vld [vmem:[%s474 + $0x30] sm:$0xf]
        %v744 = vld [vmem:[%s474 + $0x34] sm:$0x1]
        %v745 = vld [vmem:[%s474 + $0x38] sm:$0xf]
        %v746 = vld [vmem:[%s474 + $0x3c] sm:$0x1]
        %vm747 = vsmask.f32 3328
        %vm748 = vsmask.f32 7440
        %vm749 = vmor %vm747, %vm748
        %v751 = vshrl.u32 %v731, 16
        %v753 = vrot.slane %v751, 4
        %v754 = vshll.u32 %v731, 16
        %v756 = vrot.slane %v754, 5
        %v757 = vor.u32 %v753, %v756
        %v758 = vrot.slane %v757, 4
        %v760 = vshll.u32 %v732, 16
        %v762 = vrot.slane %v760, 5
        %v763 = vsel %vm749, %v758, %v762
        %v765 = vshrl.u32 %v733, 16
        %v767 = vrot.slane %v765, 4
        %v768 = vshll.u32 %v733, 16
        %v770 = vrot.slane %v768, 5
        %v771 = vor.u32 %v767, %v770
        %v772 = vrot.slane %v771, 4
        %v774 = vshll.u32 %v734, 16
        %v776 = vrot.slane %v774, 5
        %v777 = vsel %vm749, %v772, %v776
        %v779 = vshrl.u32 %v735, 16
        %v781 = vrot.slane %v779, 4
        %v782 = vshll.u32 %v735, 16
        %v784 = vrot.slane %v782, 5
        %v785 = vor.u32 %v781, %v784
        %v786 = vrot.slane %v785, 4
        %v788 = vshll.u32 %v736, 16
        %v790 = vrot.slane %v788, 5
        %v791 = vsel %vm749, %v786, %v790
        %v793 = vshrl.u32 %v737, 16
        %v795 = vrot.slane %v793, 4
        %v796 = vshll.u32 %v737, 16
        %v798 = vrot.slane %v796, 5
        %v799 = vor.u32 %v795, %v798
        %v800 = vrot.slane %v799, 4
        %v802 = vshll.u32 %v738, 16
        %v804 = vrot.slane %v802, 5
        %v805 = vsel %vm749, %v800, %v804
        %v807 = vshrl.u32 %v739, 16
        %v809 = vrot.slane %v807, 4
        %v810 = vshll.u32 %v739, 16
        %v812 = vrot.slane %v810, 5
        %v813 = vor.u32 %v809, %v812
        %v814 = vrot.slane %v813, 4
        %v816 = vshll.u32 %v740, 16
        %v818 = vrot.slane %v816, 5
        %v819 = vsel %vm749, %v814, %v818
        %v821 = vshrl.u32 %v741, 16
        %v823 = vrot.slane %v821, 4
        %v824 = vshll.u32 %v741, 16
        %v826 = vrot.slane %v824, 5
        %v827 = vor.u32 %v823, %v826
        %v828 = vrot.slane %v827, 4
        %v830 = vshll.u32 %v742, 16
        %v832 = vrot.slane %v830, 5
        %v833 = vsel %vm749, %v828, %v832
        %v835 = vshrl.u32 %v743, 16
        %v837 = vrot.slane %v835, 4
        %v838 = vshll.u32 %v743, 16
        %v840 = vrot.slane %v838, 5
        %v841 = vor.u32 %v837, %v840
        %v842 = vrot.slane %v841, 4
        %v844 = vshll.u32 %v744, 16
        %v846 = vrot.slane %v844, 5
        %v847 = vsel %vm749, %v842, %v846
        %v849 = vshrl.u32 %v745, 16
        %v851 = vrot.slane %v849, 4
        %v852 = vshll.u32 %v745, 16
        %v854 = vrot.slane %v852, 5
        %v855 = vor.u32 %v851, %v854
        %v856 = vrot.slane %v855, 4
        %v858 = vshll.u32 %v746, 16
        %v860 = vrot.slane %v858, 5
        %v861 = vsel %vm749, %v856, %v860
        %s862 = scalar_lea.vmem %s1, 8
        %v863 = vld [vmem:[%s862] sm:$0xf]
        %v864 = vunpack.c.l.b16 %v763
        %v865 = vunpack.c.l.b16 %v777
        %v866 = vunpack.c.l.b16 %v791
        %v867 = vunpack.c.l.b16 %v805
        %v868 = vunpack.c.l.b16 %v819
        %v869 = vunpack.c.l.b16 %v833
        %v870 = vunpack.c.l.b16 %v847
        %v871 = vunpack.c.l.b16 %v861
        %v872 = vpack.c.b16 %v865, %v864
        %v873 = vpack.c.b16 %v867, %v866
        %v874 = vpack.c.b16 %v869, %v868
        %v875 = vpack.c.b16 %v871, %v870
        %v877 = vsel %vm549, %v872, 0
        %v880 = vsel %vm549, %v873, 0
        %v883 = vsel %vm549, %v874, 0
        %v886 = vsel %vm549, %v875, 0
        %v889 = vsel %vm562, %v863, 0
        %891 = vmatprep.subr.bf16.mxu0 0
        %892 = vmatpush1.bf16.msra.mxu0 %v889
        %893 = vmatprep.subr.bf16.mxu0 0
        %894 = vmatpush1.bf16.msra.mxu0 0
        %895 = vmatprep.subr.bf16.mxu0 0
        %896 = vmatpush1.bf16.msra.mxu0 0
        %897 = vmatprep.subr.bf16.mxu0 0
        %898 = vmatpush1.bf16.msra.mxu0 0
        %899 = vmatprep.subr.bf16.mxu0 0
        %900 = vmatpush1.bf16.msra.mxu0 0
        %901 = vmatprep.subr.bf16.mxu0 0
        %902 = vmatpush1.bf16.msra.mxu0 0
        %903 = vmatprep.subr.bf16.mxu0 0
        %904 = vmatpush1.bf16.msra.mxu0 0
        %905 = vmatprep.subr.bf16.mxu0 0
        %906 = vmatpush1.bf16.msra.mxu0 0
        %907 = vmatprep.subr.bf16.mxu0 0
        %908 = vmatpush1.bf16.msra.mxu0 0
        %909 = vmatprep.subr.bf16.mxu0 0
        %910 = vmatpush1.bf16.msra.mxu0 0
        %911 = vmatprep.subr.bf16.mxu0 0
        %912 = vmatpush1.bf16.msra.mxu0 0
        %913 = vmatprep.subr.bf16.mxu0 0
        %914 = vmatpush1.bf16.msra.mxu0 0
        %915 = vmatprep.subr.bf16.mxu0 0
        %916 = vmatpush1.bf16.msra.mxu0 0
        %917 = vmatprep.subr.bf16.mxu0 0
        %918 = vmatpush1.bf16.msra.mxu0 0
        %919 = vmatprep.subr.bf16.mxu0 0
        %920 = vmatpush1.bf16.msra.mxu0 0
        %921 = vmatprep.subr.bf16.mxu0 0
        %922 = vmatpush1.bf16.msra.mxu0 0
        %923 = vmatprep.mubr.bf16.mxu0 0
        %924 = vmatmul.mubr.bf16.gmra.mrb[0].mxu0 %v877
        %v925 = vpop.f32.mrb[0].mxu0
        %v926 = vadd.f32 0.0, %v925
        %v927 = vpop.f32.mrb[0].mxu0
        %v928 = vpop.f32.mrb[0].mxu0
        %v929 = vadd.f32 0.0, %v928
        %v930 = vpop.f32.mrb[0].mxu0
        %931 = vmatprep.mubr.bf16.mxu0 0
        %932 = vmatmul.mubr.bf16.gmra.mrb[0].mxu0 %v880
        %v933 = vpop.f32.mrb[0].mxu0
        %v934 = vadd.f32 0.0, %v933
        %v935 = vpop.f32.mrb[0].mxu0
        %v936 = vpop.f32.mrb[0].mxu0
        %v937 = vadd.f32 0.0, %v936
        %v938 = vpop.f32.mrb[0].mxu0
        %939 = vmatprep.mubr.bf16.mxu0 0
        %940 = vmatmul.mubr.bf16.gmra.mrb[0].mxu0 %v883
        %v941 = vpop.f32.mrb[0].mxu0
        %v942 = vadd.f32 0.0, %v941
        %v943 = vpop.f32.mrb[0].mxu0
        %v944 = vpop.f32.mrb[0].mxu0
        %v945 = vadd.f32 0.0, %v944
        %v946 = vpop.f32.mrb[0].mxu0
        %947 = vmatprep.mubr.bf16.mxu0 0
        %948 = vmatmul.mubr.bf16.gmra.mrb[0].mxu0 %v886
        %v949 = vpop.f32.mrb[0].mxu0
        %v950 = vadd.f32 0.0, %v949
        %v951 = vpop.f32.mrb[0].mxu0
        %v952 = vpop.f32.mrb[0].mxu0
        %v953 = vadd.f32 0.0, %v952
        %v954 = vpop.f32.mrb[0].mxu0
        %955 = vdwg.mxu0
        %v956 = vadd.f32 %v701, %v926
        %v957 = vadd.f32 %v704, %v929
        %v958 = vadd.f32 %v709, %v934
        %v959 = vadd.f32 %v712, %v937
        %v960 = vadd.f32 %v717, %v942
        %v961 = vadd.f32 %v720, %v945
        %v962 = vadd.f32 %v725, %v950
        %v963 = vadd.f32 %v728, %v953
        %s964 = scalar_lea.vmem %s474, 144 [#allocation2]
        %v965 = vld [vmem:[%s964] sm:$0xf]
        %v966 = vld [vmem:[%s964 + $0x8] sm:$0xf]
        %v967 = vld [vmem:[%s964 + $0x10] sm:$0xf]
        %v968 = vld [vmem:[%s964 + $0x18] sm:$0xf]
        %v969 = vld [vmem:[%s964 + $0x20] sm:$0xf]
        %v970 = vld [vmem:[%s964 + $0x28] sm:$0xf]
        %v971 = vld [vmem:[%s964 + $0x30] sm:$0xf]
        %v972 = vld [vmem:[%s964 + $0x38] sm:$0xf]
        %s973 = scalar_lea.vmem %s1, 12
        %v974 = vld [vmem:[%s973] sm:$0xf]
        %v983 = vunpack.c.l.b16 %v965
        %v984 = vunpack.c.l.b16 %v966
        %v985 = vunpack.c.l.b16 %v967
        %v986 = vunpack.c.l.b16 %v968
        %v987 = vunpack.c.l.b16 %v969
        %v988 = vunpack.c.l.b16 %v970
        %v989 = vunpack.c.l.b16 %v971
        %v990 = vunpack.c.l.b16 %v972
        %v991 = vpack.c.b16 %v984, %v983
        %v992 = vpack.c.b16 %v986, %v985
        %v993 = vpack.c.b16 %v988, %v987
        %v994 = vpack.c.b16 %v990, %v989
        %v996 = vsel %vm549, %v991, 0
        %v999 = vsel %vm549, %v992, 0
        %v1002 = vsel %vm549, %v993, 0
        %v1005 = vsel %vm549, %v994, 0
        %v1008 = vsel %vm562, %v974, 0
        %1010 = vmatprep.subr.bf16.mxu0 0
        %1011 = vmatpush1.bf16.msra.mxu0 %v1008
        %1012 = vmatprep.subr.bf16.mxu0 0
        %1013 = vmatpush1.bf16.msra.mxu0 0
        %1014 = vmatprep.subr.bf16.mxu0 0
        %1015 = vmatpush1.bf16.msra.mxu0 0
        %1016 = vmatprep.subr.bf16.mxu0 0
        %1017 = vmatpush1.bf16.msra.mxu0 0
        %1018 = vmatprep.subr.bf16.mxu0 0
        %1019 = vmatpush1.bf16.msra.mxu0 0
        %1020 = vmatprep.subr.bf16.mxu0 0
        %1021 = vmatpush1.bf16.msra.mxu0 0
        %1022 = vmatprep.subr.bf16.mxu0 0
        %1023 = vmatpush1.bf16.msra.mxu0 0
        %1024 = vmatprep.subr.bf16.mxu0 0
        %1025 = vmatpush1.bf16.msra.mxu0 0
        %1026 = vmatprep.subr.bf16.mxu0 0
        %1027 = vmatpush1.bf16.msra.mxu0 0
        %1028 = vmatprep.subr.bf16.mxu0 0
        %1029 = vmatpush1.bf16.msra.mxu0 0
        %1030 = vmatprep.subr.bf16.mxu0 0
        %1031 = vmatpush1.bf16.msra.mxu0 0
        %1032 = vmatprep.subr.bf16.mxu0 0
        %1033 = vmatpush1.bf16.msra.mxu0 0
        %1034 = vmatprep.subr.bf16.mxu0 0
        %1035 = vmatpush1.bf16.msra.mxu0 0
        %1036 = vmatprep.subr.bf16.mxu0 0
        %1037 = vmatpush1.bf16.msra.mxu0 0
        %1038 = vmatprep.subr.bf16.mxu0 0
        %1039 = vmatpush1.bf16.msra.mxu0 0
        %1040 = vmatprep.subr.bf16.mxu0 0
        %1041 = vmatpush1.bf16.msra.mxu0 0
        %1042 = vmatprep.mubr.bf16.mxu0 0
        %1043 = vmatmul.mubr.bf16.gmra.mrb[0].mxu0 %v996
        %v1044 = vpop.f32.mrb[0].mxu0
        %v1045 = vadd.f32 0.0, %v1044
        %v1046 = vpop.f32.mrb[0].mxu0
        %v1047 = vpop.f32.mrb[0].mxu0
        %v1048 = vadd.f32 0.0, %v1047
        %v1049 = vpop.f32.mrb[0].mxu0
        %1050 = vmatprep.mubr.bf16.mxu0 0
        %1051 = vmatmul.mubr.bf16.gmra.mrb[0].mxu0 %v999
        %v1052 = vpop.f32.mrb[0].mxu0
        %v1053 = vadd.f32 0.0, %v1052
        %v1054 = vpop.f32.mrb[0].mxu0
        %v1055 = vpop.f32.mrb[0].mxu0
        %v1056 = vadd.f32 0.0, %v1055
        %v1057 = vpop.f32.mrb[0].mxu0
        %1058 = vmatprep.mubr.bf16.mxu0 0
        %1059 = vmatmul.mubr.bf16.gmra.mrb[0].mxu0 %v1002
        %v1060 = vpop.f32.mrb[0].mxu0
        %v1061 = vadd.f32 0.0, %v1060
        %v1062 = vpop.f32.mrb[0].mxu0
        %v1063 = vpop.f32.mrb[0].mxu0
        %v1064 = vadd.f32 0.0, %v1063
        %v1065 = vpop.f32.mrb[0].mxu0
        %1066 = vmatprep.mubr.bf16.mxu0 0
        %1067 = vmatmul.mubr.bf16.gmra.mrb[0].mxu0 %v1005
        %v1068 = vpop.f32.mrb[0].mxu0
        %v1069 = vadd.f32 0.0, %v1068
        %v1070 = vpop.f32.mrb[0].mxu0
        %v1071 = vpop.f32.mrb[0].mxu0
        %v1072 = vadd.f32 0.0, %v1071
        %v1073 = vpop.f32.mrb[0].mxu0
        %1074 = vdwg.mxu0
        %v1075 = vadd.f32 %v956, %v1045
        %v1076 = vadd.f32 %v957, %v1048
        %v1077 = vadd.f32 %v958, %v1053
        %v1078 = vadd.f32 %v959, %v1056
        %v1079 = vadd.f32 %v960, %v1061
        %v1080 = vadd.f32 %v961, %v1064
        %v1081 = vadd.f32 %v962, %v1069
        %v1082 = vadd.f32 %v963, %v1072
        %s1083 = scalar_lea.vmem %s474, 216 [#allocation2]
        %v1084 = vld [vmem:[%s1083] sm:$0xf]
        %v1085 = vld [vmem:[%s1083 + $0x8] sm:$0xf]
        %v1086 = vld [vmem:[%s1083 + $0x10] sm:$0xf]
        %v1087 = vld [vmem:[%s1083 + $0x18] sm:$0xf]
        %v1088 = vld [vmem:[%s1083 + $0x20] sm:$0xf]
        %v1089 = vld [vmem:[%s1083 + $0x28] sm:$0xf]
        %v1090 = vld [vmem:[%s1083 + $0x30] sm:$0xf]
        %v1091 = vld [vmem:[%s1083 + $0x38] sm:$0xf]
        %s1092 = scalar_lea.vmem %s1, 16
        %v1093 = vld [vmem:[%s1092] sm:$0xf]
        %v1102 = vunpack.c.l.b16 %v1084
        %v1103 = vunpack.c.l.b16 %v1085
        %v1104 = vunpack.c.l.b16 %v1086
        %v1105 = vunpack.c.l.b16 %v1087
        %v1106 = vunpack.c.l.b16 %v1088
        %v1107 = vunpack.c.l.b16 %v1089
        %v1108 = vunpack.c.l.b16 %v1090
        %v1109 = vunpack.c.l.b16 %v1091
        %v1110 = vpack.c.b16 %v1103, %v1102
        %v1111 = vpack.c.b16 %v1105, %v1104
        %v1112 = vpack.c.b16 %v1107, %v1106
        %v1113 = vpack.c.b16 %v1109, %v1108
        %v1115 = vsel %vm549, %v1110, 0
        %v1118 = vsel %vm549, %v1111, 0
        %v1121 = vsel %vm549, %v1112, 0
        %v1124 = vsel %vm549, %v1113, 0
        %v1127 = vsel %vm562, %v1093, 0
        %1129 = vmatprep.subr.bf16.mxu0 0
        %1130 = vmatpush1.bf16.msra.mxu0 %v1127
        %1131 = vmatprep.subr.bf16.mxu0 0
        %1132 = vmatpush1.bf16.msra.mxu0 0
        %1133 = vmatprep.subr.bf16.mxu0 0
        %1134 = vmatpush1.bf16.msra.mxu0 0
        %1135 = vmatprep.subr.bf16.mxu0 0
        %1136 = vmatpush1.bf16.msra.mxu0 0
        %1137 = vmatprep.subr.bf16.mxu0 0
        %1138 = vmatpush1.bf16.msra.mxu0 0
        %1139 = vmatprep.subr.bf16.mxu0 0
        %1140 = vmatpush1.bf16.msra.mxu0 0
        %1141 = vmatprep.subr.bf16.mxu0 0
        %1142 = vmatpush1.bf16.msra.mxu0 0
        %1143 = vmatprep.subr.bf16.mxu0 0
        %1144 = vmatpush1.bf16.msra.mxu0 0
        %1145 = vmatprep.subr.bf16.mxu0 0
        %1146 = vmatpush1.bf16.msra.mxu0 0
        %1147 = vmatprep.subr.bf16.mxu0 0
        %1148 = vmatpush1.bf16.msra.mxu0 0
        %1149 = vmatprep.subr.bf16.mxu0 0
        %1150 = vmatpush1.bf16.msra.mxu0 0
        %1151 = vmatprep.subr.bf16.mxu0 0
        %1152 = vmatpush1.bf16.msra.mxu0 0
        %1153 = vmatprep.subr.bf16.mxu0 0
        %1154 = vmatpush1.bf16.msra.mxu0 0
        %1155 = vmatprep.subr.bf16.mxu0 0
        %1156 = vmatpush1.bf16.msra.mxu0 0
        %1157 = vmatprep.subr.bf16.mxu0 0
        %1158 = vmatpush1.bf16.msra.mxu0 0
        %1159 = vmatprep.subr.bf16.mxu0 0
        %1160 = vmatpush1.bf16.msra.mxu0 0
        %1161 = vmatprep.mubr.bf16.mxu0 0
        %1162 = vmatmul.mubr.bf16.gmra.mrb[0].mxu0 %v1115
        %v1163 = vpop.f32.mrb[0].mxu0
        %v1164 = vadd.f32 0.0, %v1163
        %v1165 = vpop.f32.mrb[0].mxu0
        %v1166 = vpop.f32.mrb[0].mxu0
        %v1167 = vadd.f32 0.0, %v1166
        %v1168 = vpop.f32.mrb[0].mxu0
        %1169 = vmatprep.mubr.bf16.mxu0 0
        %1170 = vmatmul.mubr.bf16.gmra.mrb[0].mxu0 %v1118
        %v1171 = vpop.f32.mrb[0].mxu0
        %v1172 = vadd.f32 0.0, %v1171
        %v1173 = vpop.f32.mrb[0].mxu0
        %v1174 = vpop.f32.mrb[0].mxu0
        %v1175 = vadd.f32 0.0, %v1174
        %v1176 = vpop.f32.mrb[0].mxu0
        %1177 = vmatprep.mubr.bf16.mxu0 0
        %1178 = vmatmul.mubr.bf16.gmra.mrb[0].mxu0 %v1121
        %v1179 = vpop.f32.mrb[0].mxu0
        %v1180 = vadd.f32 0.0, %v1179
        %v1181 = vpop.f32.mrb[0].mxu0
        %v1182 = vpop.f32.mrb[0].mxu0
        %v1183 = vadd.f32 0.0, %v1182
        %v1184 = vpop.f32.mrb[0].mxu0
        %1185 = vmatprep.mubr.bf16.mxu0 0
        %1186 = vmatmul.mubr.bf16.gmra.mrb[0].mxu0 %v1124
        %v1187 = vpop.f32.mrb[0].mxu0
        %v1188 = vadd.f32 0.0, %v1187
        %v1189 = vpop.f32.mrb[0].mxu0
        %v1190 = vpop.f32.mrb[0].mxu0
        %v1191 = vadd.f32 0.0, %v1190
        %v1192 = vpop.f32.mrb[0].mxu0
        %1193 = vdwg.mxu0
        %v1194 = vadd.f32 %v1075, %v1164
        %v1195 = vadd.f32 %v1076, %v1167
        %v1196 = vadd.f32 %v1077, %v1172
        %v1197 = vadd.f32 %v1078, %v1175
        %v1198 = vadd.f32 %v1079, %v1180
        %v1199 = vadd.f32 %v1080, %v1183
        %v1200 = vadd.f32 %v1081, %v1188
        %v1201 = vadd.f32 %v1082, %v1191
        %v1202 = vld [vmem:[%s964] sm:$0xf]
        %v1203 = vld [vmem:[%s964 + $0x4] sm:$0x1]
        %v1204 = vld [vmem:[%s964 + $0x8] sm:$0xf]
        %v1205 = vld [vmem:[%s964 + $0xc] sm:$0x1]
        %v1206 = vld [vmem:[%s964 + $0x10] sm:$0xf]
        %v1207 = vld [vmem:[%s964 + $0x14] sm:$0x1]
        %v1208 = vld [vmem:[%s964 + $0x18] sm:$0xf]
        %v1209 = vld [vmem:[%s964 + $0x1c] sm:$0x1]
        %v1210 = vld [vmem:[%s964 + $0x20] sm:$0xf]
        %v1211 = vld [vmem:[%s964 + $0x24] sm:$0x1]
        %v1212 = vld [vmem:[%s964 + $0x28] sm:$0xf]
        %v1213 = vld [vmem:[%s964 + $0x2c] sm:$0x1]
        %v1214 = vld [vmem:[%s964 + $0x30] sm:$0xf]
        %v1215 = vld [vmem:[%s964 + $0x34] sm:$0x1]
        %v1216 = vld [vmem:[%s964 + $0x38] sm:$0xf]
        %v1217 = vld [vmem:[%s964 + $0x3c] sm:$0x1]
        %v1219 = vshrl.u32 %v1202, 16
        %v1221 = vrot.slane %v1219, 4
        %v1222 = vshll.u32 %v1202, 16
        %v1224 = vrot.slane %v1222, 5
        %v1225 = vor.u32 %v1221, %v1224
        %v1226 = vrot.slane %v1225, 4
        %v1228 = vshll.u32 %v1203, 16
        %v1230 = vrot.slane %v1228, 5
        %v1231 = vsel %vm749, %v1226, %v1230
        %v1233 = vshrl.u32 %v1204, 16
        %v1235 = vrot.slane %v1233, 4
        %v1236 = vshll.u32 %v1204, 16
        %v1238 = vrot.slane %v1236, 5
        %v1239 = vor.u32 %v1235, %v1238
        %v1240 = vrot.slane %v1239, 4
        %v1242 = vshll.u32 %v1205, 16
        %v1244 = vrot.slane %v1242, 5
        %v1245 = vsel %vm749, %v1240, %v1244
        %v1247 = vshrl.u32 %v1206, 16
        %v1249 = vrot.slane %v1247, 4
        %v1250 = vshll.u32 %v1206, 16
        %v1252 = vrot.slane %v1250, 5
        %v1253 = vor.u32 %v1249, %v1252
        %v1254 = vrot.slane %v1253, 4
        %v1256 = vshll.u32 %v1207, 16
        %v1258 = vrot.slane %v1256, 5
        %v1259 = vsel %vm749, %v1254, %v1258
        %v1261 = vshrl.u32 %v1208, 16
        %v1263 = vrot.slane %v1261, 4
        %v1264 = vshll.u32 %v1208, 16
        %v1266 = vrot.slane %v1264, 5
        %v1267 = vor.u32 %v1263, %v1266
        %v1268 = vrot.slane %v1267, 4
        %v1270 = vshll.u32 %v1209, 16
        %v1272 = vrot.slane %v1270, 5
        %v1273 = vsel %vm749, %v1268, %v1272
        %v1275 = vshrl.u32 %v1210, 16
        %v1277 = vrot.slane %v1275, 4
        %v1278 = vshll.u32 %v1210, 16
        %v1280 = vrot.slane %v1278, 5
        %v1281 = vor.u32 %v1277, %v1280
        %v1282 = vrot.slane %v1281, 4
        %v1284 = vshll.u32 %v1211, 16
        %v1286 = vrot.slane %v1284, 5
        %v1287 = vsel %vm749, %v1282, %v1286
        %v1289 = vshrl.u32 %v1212, 16
        %v1291 = vrot.slane %v1289, 4
        %v1292 = vshll.u32 %v1212, 16
        %v1294 = vrot.slane %v1292, 5
        %v1295 = vor.u32 %v1291, %v1294
        %v1296 = vrot.slane %v1295, 4
        %v1298 = vshll.u32 %v1213, 16
        %v1300 = vrot.slane %v1298, 5
        %v1301 = vsel %vm749, %v1296, %v1300
        %v1303 = vshrl.u32 %v1214, 16
        %v1305 = vrot.slane %v1303, 4
        %v1306 = vshll.u32 %v1214, 16
        %v1308 = vrot.slane %v1306, 5
        %v1309 = vor.u32 %v1305, %v1308
        %v1310 = vrot.slane %v1309, 4
        %v1312 = vshll.u32 %v1215, 16
        %v1314 = vrot.slane %v1312, 5
        %v1315 = vsel %vm749, %v1310, %v1314
        %v1317 = vshrl.u32 %v1216, 16
        %v1319 = vrot.slane %v1317, 4
        %v1320 = vshll.u32 %v1216, 16
        %v1322 = vrot.slane %v1320, 5
        %v1323 = vor.u32 %v1319, %v1322
        %v1324 = vrot.slane %v1323, 4
        %v1326 = vshll.u32 %v1217, 16
        %v1328 = vrot.slane %v1326, 5
        %v1329 = vsel %vm749, %v1324, %v1328
        %s1330 = scalar_lea.vmem %s1, 20
        %v1331 = vld [vmem:[%s1330] sm:$0xf]
        %v1332 = vunpack.c.l.b16 %v1231
        %v1333 = vunpack.c.l.b16 %v1245
        %v1334 = vunpack.c.l.b16 %v1259
        %v1335 = vunpack.c.l.b16 %v1273
        %v1336 = vunpack.c.l.b16 %v1287
        %v1337 = vunpack.c.l.b16 %v1301
        %v1338 = vunpack.c.l.b16 %v1315
        %v1339 = vunpack.c.l.b16 %v1329
        %v1340 = vpack.c.b16 %v1333, %v1332
        %v1341 = vpack.c.b16 %v1335, %v1334
        %v1342 = vpack.c.b16 %v1337, %v1336
        %v1343 = vpack.c.b16 %v1339, %v1338
        %v1345 = vsel %vm549, %v1340, 0
        %v1348 = vsel %vm549, %v1341, 0
        %v1351 = vsel %vm549, %v1342, 0
        %v1354 = vsel %vm549, %v1343, 0
        %v1357 = vsel %vm562, %v1331, 0
        %1359 = vmatprep.subr.bf16.mxu0 0
        %1360 = vmatpush1.bf16.msra.mxu0 %v1357
        %1361 = vmatprep.subr.bf16.mxu0 0
        %1362 = vmatpush1.bf16.msra.mxu0 0
        %1363 = vmatprep.subr.bf16.mxu0 0
        %1364 = vmatpush1.bf16.msra.mxu0 0
        %1365 = vmatprep.subr.bf16.mxu0 0
        %1366 = vmatpush1.bf16.msra.mxu0 0
        %1367 = vmatprep.subr.bf16.mxu0 0
        %1368 = vmatpush1.bf16.msra.mxu0 0
        %1369 = vmatprep.subr.bf16.mxu0 0
        %1370 = vmatpush1.bf16.msra.mxu0 0
        %1371 = vmatprep.subr.bf16.mxu0 0
        %1372 = vmatpush1.bf16.msra.mxu0 0
        %1373 = vmatprep.subr.bf16.mxu0 0
        %1374 = vmatpush1.bf16.msra.mxu0 0
        %1375 = vmatprep.subr.bf16.mxu0 0
        %1376 = vmatpush1.bf16.msra.mxu0 0
        %1377 = vmatprep.subr.bf16.mxu0 0
        %1378 = vmatpush1.bf16.msra.mxu0 0
        %1379 = vmatprep.subr.bf16.mxu0 0
        %1380 = vmatpush1.bf16.msra.mxu0 0
        %1381 = vmatprep.subr.bf16.mxu0 0
        %1382 = vmatpush1.bf16.msra.mxu0 0
        %1383 = vmatprep.subr.bf16.mxu0 0
        %1384 = vmatpush1.bf16.msra.mxu0 0
        %1385 = vmatprep.subr.bf16.mxu0 0
        %1386 = vmatpush1.bf16.msra.mxu0 0
        %1387 = vmatprep.subr.bf16.mxu0 0
        %1388 = vmatpush1.bf16.msra.mxu0 0
        %1389 = vmatprep.subr.bf16.mxu0 0
        %1390 = vmatpush1.bf16.msra.mxu0 0
        %1391 = vmatprep.mubr.bf16.mxu0 0
        %1392 = vmatmul.mubr.bf16.gmra.mrb[0].mxu0 %v1345
        %v1393 = vpop.f32.mrb[0].mxu0
        %v1394 = vadd.f32 0.0, %v1393
        %v1395 = vpop.f32.mrb[0].mxu0
        %v1396 = vpop.f32.mrb[0].mxu0
        %v1397 = vadd.f32 0.0, %v1396
        %v1398 = vpop.f32.mrb[0].mxu0
        %1399 = vmatprep.mubr.bf16.mxu0 0
        %1400 = vmatmul.mubr.bf16.gmra.mrb[0].mxu0 %v1348
        %v1401 = vpop.f32.mrb[0].mxu0
        %v1402 = vadd.f32 0.0, %v1401
        %v1403 = vpop.f32.mrb[0].mxu0
        %v1404 = vpop.f32.mrb[0].mxu0
        %v1405 = vadd.f32 0.0, %v1404
        %v1406 = vpop.f32.mrb[0].mxu0
        %1407 = vmatprep.mubr.bf16.mxu0 0
        %1408 = vmatmul.mubr.bf16.gmra.mrb[0].mxu0 %v1351
        %v1409 = vpop.f32.mrb[0].mxu0
        %v1410 = vadd.f32 0.0, %v1409
        %v1411 = vpop.f32.mrb[0].mxu0
        %v1412 = vpop.f32.mrb[0].mxu0
        %v1413 = vadd.f32 0.0, %v1412
        %v1414 = vpop.f32.mrb[0].mxu0
        %1415 = vmatprep.mubr.bf16.mxu0 0
        %1416 = vmatmul.mubr.bf16.gmra.mrb[0].mxu0 %v1354
        %v1417 = vpop.f32.mrb[0].mxu0
        %v1418 = vadd.f32 0.0, %v1417
        %v1419 = vpop.f32.mrb[0].mxu0
        %v1420 = vpop.f32.mrb[0].mxu0
        %v1421 = vadd.f32 0.0, %v1420
        %v1422 = vpop.f32.mrb[0].mxu0
        %1423 = vdwg.mxu0
        %v1424 = vadd.f32 %v1194, %v1394
        %v1425 = vadd.f32 %v1195, %v1397
        %v1426 = vadd.f32 %v1196, %v1402
        %v1427 = vadd.f32 %v1197, %v1405
        %v1428 = vadd.f32 %v1198, %v1410
        %v1429 = vadd.f32 %v1199, %v1413
        %v1430 = vadd.f32 %v1200, %v1418
        %v1431 = vadd.f32 %v1201, %v1421
        %s1432 = scalar_lea.vmem %s474, 8 [#allocation2]
        %v1433 = vld [vmem:[%s1432] sm:$0xf]
        %v1434 = vld [vmem:[%s1432 + $0x8] sm:$0xf]
        %v1435 = vld [vmem:[%s1432 + $0x10] sm:$0xf]
        %v1436 = vld [vmem:[%s1432 + $0x18] sm:$0xf]
        %v1437 = vld [vmem:[%s1432 + $0x20] sm:$0xf]
        %v1438 = vld [vmem:[%s1432 + $0x28] sm:$0xf]
        %v1439 = vld [vmem:[%s1432 + $0x30] sm:$0xf]
        %v1440 = vld [vmem:[%s1432 + $0x38] sm:$0xf]
        %s1441 = scalar_lea.vmem %s1, 24
        %v1442 = vld [vmem:[%s1441] sm:$0xf]
        %v1451 = vunpack.c.l.b16 %v1433
        %v1452 = vunpack.c.l.b16 %v1434
        %v1453 = vunpack.c.l.b16 %v1435
        %v1454 = vunpack.c.l.b16 %v1436
        %v1455 = vunpack.c.l.b16 %v1437
        %v1456 = vunpack.c.l.b16 %v1438
        %v1457 = vunpack.c.l.b16 %v1439
        %v1458 = vunpack.c.l.b16 %v1440
        %v1459 = vpack.c.b16 %v1452, %v1451
        %v1460 = vpack.c.b16 %v1454, %v1453
        %v1461 = vpack.c.b16 %v1456, %v1455
        %v1462 = vpack.c.b16 %v1458, %v1457
        %v1464 = vsel %vm549, %v1459, 0
        %v1467 = vsel %vm549, %v1460, 0
        %v1470 = vsel %vm549, %v1461, 0
        %v1473 = vsel %vm549, %v1462, 0
        %v1476 = vsel %vm562, %v1442, 0
        %1478 = vmatprep.subr.bf16.mxu0 0
        %1479 = vmatpush1.bf16.msra.mxu0 %v1476
        %1480 = vmatprep.subr.bf16.mxu0 0
        %1481 = vmatpush1.bf16.msra.mxu0 0
        %1482 = vmatprep.subr.bf16.mxu0 0
        %1483 = vmatpush1.bf16.msra.mxu0 0
        %1484 = vmatprep.subr.bf16.mxu0 0
        %1485 = vmatpush1.bf16.msra.mxu0 0
        %1486 = vmatprep.subr.bf16.mxu0 0
        %1487 = vmatpush1.bf16.msra.mxu0 0
        %1488 = vmatprep.subr.bf16.mxu0 0
        %1489 = vmatpush1.bf16.msra.mxu0 0
        %1490 = vmatprep.subr.bf16.mxu0 0
        %1491 = vmatpush1.bf16.msra.mxu0 0
        %1492 = vmatprep.subr.bf16.mxu0 0
        %1493 = vmatpush1.bf16.msra.mxu0 0
        %1494 = vmatprep.subr.bf16.mxu0 0
        %1495 = vmatpush1.bf16.msra.mxu0 0
        %1496 = vmatprep.subr.bf16.mxu0 0
        %1497 = vmatpush1.bf16.msra.mxu0 0
        %1498 = vmatprep.subr.bf16.mxu0 0
        %1499 = vmatpush1.bf16.msra.mxu0 0
        %1500 = vmatprep.subr.bf16.mxu0 0
        %1501 = vmatpush1.bf16.msra.mxu0 0
        %1502 = vmatprep.subr.bf16.mxu0 0
        %1503 = vmatpush1.bf16.msra.mxu0 0
        %1504 = vmatprep.subr.bf16.mxu0 0
        %1505 = vmatpush1.bf16.msra.mxu0 0
        %1506 = vmatprep.subr.bf16.mxu0 0
        %1507 = vmatpush1.bf16.msra.mxu0 0
        %1508 = vmatprep.subr.bf16.mxu0 0
        %1509 = vmatpush1.bf16.msra.mxu0 0
        %1510 = vmatprep.mubr.bf16.mxu0 0
        %1511 = vmatmul.mubr.bf16.gmra.mrb[0].mxu0 %v1464
        %v1512 = vpop.f32.mrb[0].mxu0
        %v1513 = vadd.f32 0.0, %v1512
        %v1514 = vpop.f32.mrb[0].mxu0
        %v1515 = vpop.f32.mrb[0].mxu0
        %v1516 = vadd.f32 0.0, %v1515
        %v1517 = vpop.f32.mrb[0].mxu0
        %1518 = vmatprep.mubr.bf16.mxu0 0
        %1519 = vmatmul.mubr.bf16.gmra.mrb[0].mxu0 %v1467
        %v1520 = vpop.f32.mrb[0].mxu0
        %v1521 = vadd.f32 0.0, %v1520
        %v1522 = vpop.f32.mrb[0].mxu0
        %v1523 = vpop.f32.mrb[0].mxu0
        %v1524 = vadd.f32 0.0, %v1523
        %v1525 = vpop.f32.mrb[0].mxu0
        %1526 = vmatprep.mubr.bf16.mxu0 0
        %1527 = vmatmul.mubr.bf16.gmra.mrb[0].mxu0 %v1470
        %v1528 = vpop.f32.mrb[0].mxu0
        %v1529 = vadd.f32 0.0, %v1528
        %v1530 = vpop.f32.mrb[0].mxu0
        %v1531 = vpop.f32.mrb[0].mxu0
        %v1532 = vadd.f32 0.0, %v1531
        %v1533 = vpop.f32.mrb[0].mxu0
        %1534 = vmatprep.mubr.bf16.mxu0 0
        %1535 = vmatmul.mubr.bf16.gmra.mrb[0].mxu0 %v1473
        %v1536 = vpop.f32.mrb[0].mxu0
        %v1537 = vadd.f32 0.0, %v1536
        %v1538 = vpop.f32.mrb[0].mxu0
        %v1539 = vpop.f32.mrb[0].mxu0
        %v1540 = vadd.f32 0.0, %v1539
        %v1541 = vpop.f32.mrb[0].mxu0
        %1542 = vdwg.mxu0
        %v1543 = vadd.f32 %v1424, %v1513
        %v1544 = vadd.f32 %v1425, %v1516
        %v1545 = vadd.f32 %v1426, %v1521
        %v1546 = vadd.f32 %v1427, %v1524
        %v1547 = vadd.f32 %v1428, %v1529
        %v1548 = vadd.f32 %v1429, %v1532
        %v1549 = vadd.f32 %v1430, %v1537
        %v1550 = vadd.f32 %v1431, %v1540
        %s1551 = scalar_lea.vmem %s474, 80 [#allocation2]
        %v1552 = vld [vmem:[%s1551] sm:$0xf]
        %v1553 = vld [vmem:[%s1551 + $0x8] sm:$0xf]
        %v1554 = vld [vmem:[%s1551 + $0x10] sm:$0xf]
        %v1555 = vld [vmem:[%s1551 + $0x18] sm:$0xf]
        %v1556 = vld [vmem:[%s1551 + $0x20] sm:$0xf]
        %v1557 = vld [vmem:[%s1551 + $0x28] sm:$0xf]
        %v1558 = vld [vmem:[%s1551 + $0x30] sm:$0xf]
        %v1559 = vld [vmem:[%s1551 + $0x38] sm:$0xf]
        %s1560 = scalar_lea.vmem %s1, 28
        %v1561 = vld [vmem:[%s1560] sm:$0xf]
        %v1570 = vunpack.c.l.b16 %v1552
        %v1571 = vunpack.c.l.b16 %v1553
        %v1572 = vunpack.c.l.b16 %v1554
        %v1573 = vunpack.c.l.b16 %v1555
        %v1574 = vunpack.c.l.b16 %v1556
        %v1575 = vunpack.c.l.b16 %v1557
        %v1576 = vunpack.c.l.b16 %v1558
        %v1577 = vunpack.c.l.b16 %v1559
        %v1578 = vpack.c.b16 %v1571, %v1570
        %v1579 = vpack.c.b16 %v1573, %v1572
        %v1580 = vpack.c.b16 %v1575, %v1574
        %v1581 = vpack.c.b16 %v1577, %v1576
        %v1583 = vsel %vm549, %v1578, 0
        %v1586 = vsel %vm549, %v1579, 0
        %v1589 = vsel %vm549, %v1580, 0
        %v1592 = vsel %vm549, %v1581, 0
        %v1595 = vsel %vm562, %v1561, 0
        %1597 = vmatprep.subr.bf16.mxu0 0
        %1598 = vmatpush1.bf16.msra.mxu0 %v1595
        %1599 = vmatprep.subr.bf16.mxu0 0
        %1600 = vmatpush1.bf16.msra.mxu0 0
        %1601 = vmatprep.subr.bf16.mxu0 0
        %1602 = vmatpush1.bf16.msra.mxu0 0
        %1603 = vmatprep.subr.bf16.mxu0 0
        %1604 = vmatpush1.bf16.msra.mxu0 0
        %1605 = vmatprep.subr.bf16.mxu0 0
        %1606 = vmatpush1.bf16.msra.mxu0 0
        %1607 = vmatprep.subr.bf16.mxu0 0
        %1608 = vmatpush1.bf16.msra.mxu0 0
        %1609 = vmatprep.subr.bf16.mxu0 0
        %1610 = vmatpush1.bf16.msra.mxu0 0
        %1611 = vmatprep.subr.bf16.mxu0 0
        %1612 = vmatpush1.bf16.msra.mxu0 0
        %1613 = vmatprep.subr.bf16.mxu0 0
        %1614 = vmatpush1.bf16.msra.mxu0 0
        %1615 = vmatprep.subr.bf16.mxu0 0
        %1616 = vmatpush1.bf16.msra.mxu0 0
        %1617 = vmatprep.subr.bf16.mxu0 0
        %1618 = vmatpush1.bf16.msra.mxu0 0
        %1619 = vmatprep.subr.bf16.mxu0 0
        %1620 = vmatpush1.bf16.msra.mxu0 0
        %1621 = vmatprep.subr.bf16.mxu0 0
        %1622 = vmatpush1.bf16.msra.mxu0 0
        %1623 = vmatprep.subr.bf16.mxu0 0
        %1624 = vmatpush1.bf16.msra.mxu0 0
        %1625 = vmatprep.subr.bf16.mxu0 0
        %1626 = vmatpush1.bf16.msra.mxu0 0
        %1627 = vmatprep.subr.bf16.mxu0 0
        %1628 = vmatpush1.bf16.msra.mxu0 0
        %1629 = vmatprep.mubr.bf16.mxu0 0
        %1630 = vmatmul.mubr.bf16.gmra.mrb[0].mxu0 %v1583
        %v1631 = vpop.f32.mrb[0].mxu0
        %v1632 = vadd.f32 0.0, %v1631
        %v1633 = vpop.f32.mrb[0].mxu0
        %v1634 = vpop.f32.mrb[0].mxu0
        %v1635 = vadd.f32 0.0, %v1634
        %v1636 = vpop.f32.mrb[0].mxu0
        %1637 = vmatprep.mubr.bf16.mxu0 0
        %1638 = vmatmul.mubr.bf16.gmra.mrb[0].mxu0 %v1586
        %v1639 = vpop.f32.mrb[0].mxu0
        %v1640 = vadd.f32 0.0, %v1639
        %v1641 = vpop.f32.mrb[0].mxu0
        %v1642 = vpop.f32.mrb[0].mxu0
        %v1643 = vadd.f32 0.0, %v1642
        %v1644 = vpop.f32.mrb[0].mxu0
        %1645 = vmatprep.mubr.bf16.mxu0 0
        %1646 = vmatmul.mubr.bf16.gmra.mrb[0].mxu0 %v1589
        %v1647 = vpop.f32.mrb[0].mxu0
        %v1648 = vadd.f32 0.0, %v1647
        %v1649 = vpop.f32.mrb[0].mxu0
        %v1650 = vpop.f32.mrb[0].mxu0
        %v1651 = vadd.f32 0.0, %v1650
        %v1652 = vpop.f32.mrb[0].mxu0
        %1653 = vmatprep.mubr.bf16.mxu0 0
        %1654 = vmatmul.mubr.bf16.gmra.mrb[0].mxu0 %v1592
        %v1655 = vpop.f32.mrb[0].mxu0
        %v1656 = vadd.f32 0.0, %v1655
        %v1657 = vpop.f32.mrb[0].mxu0
        %v1658 = vpop.f32.mrb[0].mxu0
        %v1659 = vadd.f32 0.0, %v1658
        %v1660 = vpop.f32.mrb[0].mxu0
        %1661 = vdwg.mxu0
        %v1662 = vadd.f32 %v1543, %v1632
        %v1663 = vadd.f32 %v1544, %v1635
        %v1664 = vadd.f32 %v1545, %v1640
        %v1665 = vadd.f32 %v1546, %v1643
        %v1666 = vadd.f32 %v1547, %v1648
        %v1667 = vadd.f32 %v1548, %v1651
        %v1668 = vadd.f32 %v1549, %v1656
        %v1669 = vadd.f32 %v1550, %v1659
        %v1670 = vld [vmem:[%s1432] sm:$0xf]
        %v1671 = vld [vmem:[%s1432 + $0x4] sm:$0x1]
        %v1672 = vld [vmem:[%s1432 + $0x8] sm:$0xf]
        %v1673 = vld [vmem:[%s1432 + $0xc] sm:$0x1]
        %v1674 = vld [vmem:[%s1432 + $0x10] sm:$0xf]
        %v1675 = vld [vmem:[%s1432 + $0x14] sm:$0x1]
        %v1676 = vld [vmem:[%s1432 + $0x18] sm:$0xf]
        %v1677 = vld [vmem:[%s1432 + $0x1c] sm:$0x1]
        %v1678 = vld [vmem:[%s1432 + $0x20] sm:$0xf]
        %v1679 = vld [vmem:[%s1432 + $0x24] sm:$0x1]
        %v1680 = vld [vmem:[%s1432 + $0x28] sm:$0xf]
        %v1681 = vld [vmem:[%s1432 + $0x2c] sm:$0x1]
        %v1682 = vld [vmem:[%s1432 + $0x30] sm:$0xf]
        %v1683 = vld [vmem:[%s1432 + $0x34] sm:$0x1]
        %v1684 = vld [vmem:[%s1432 + $0x38] sm:$0xf]
        %v1685 = vld [vmem:[%s1432 + $0x3c] sm:$0x1]
        %v1687 = vshrl.u32 %v1670, 16
        %v1689 = vrot.slane %v1687, 4
        %v1690 = vshll.u32 %v1670, 16
        %v1692 = vrot.slane %v1690, 5
        %v1693 = vor.u32 %v1689, %v1692
        %v1694 = vrot.slane %v1693, 4
        %v1696 = vshll.u32 %v1671, 16
        %v1698 = vrot.slane %v1696, 5
        %v1699 = vsel %vm749, %v1694, %v1698
        %v1701 = vshrl.u32 %v1672, 16
        %v1703 = vrot.slane %v1701, 4
        %v1704 = vshll.u32 %v1672, 16
        %v1706 = vrot.slane %v1704, 5
        %v1707 = vor.u32 %v1703, %v1706
        %v1708 = vrot.slane %v1707, 4
        %v1710 = vshll.u32 %v1673, 16
        %v1712 = vrot.slane %v1710, 5
        %v1713 = vsel %vm749, %v1708, %v1712
        %v1715 = vshrl.u32 %v1674, 16
        %v1717 = vrot.slane %v1715, 4
        %v1718 = vshll.u32 %v1674, 16
        %v1720 = vrot.slane %v1718, 5
        %v1721 = vor.u32 %v1717, %v1720
        %v1722 = vrot.slane %v1721, 4
        %v1724 = vshll.u32 %v1675, 16
        %v1726 = vrot.slane %v1724, 5
        %v1727 = vsel %vm749, %v1722, %v1726
        %v1729 = vshrl.u32 %v1676, 16
        %v1731 = vrot.slane %v1729, 4
        %v1732 = vshll.u32 %v1676, 16
        %v1734 = vrot.slane %v1732, 5
        %v1735 = vor.u32 %v1731, %v1734
        %v1736 = vrot.slane %v1735, 4
        %v1738 = vshll.u32 %v1677, 16
        %v1740 = vrot.slane %v1738, 5
        %v1741 = vsel %vm749, %v1736, %v1740
        %v1743 = vshrl.u32 %v1678, 16
        %v1745 = vrot.slane %v1743, 4
        %v1746 = vshll.u32 %v1678, 16
        %v1748 = vrot.slane %v1746, 5
        %v1749 = vor.u32 %v1745, %v1748
        %v1750 = vrot.slane %v1749, 4
        %v1752 = vshll.u32 %v1679, 16
        %v1754 = vrot.slane %v1752, 5
        %v1755 = vsel %vm749, %v1750, %v1754
        %v1757 = vshrl.u32 %v1680, 16
        %v1759 = vrot.slane %v1757, 4
        %v1760 = vshll.u32 %v1680, 16
        %v1762 = vrot.slane %v1760, 5
        %v1763 = vor.u32 %v1759, %v1762
        %v1764 = vrot.slane %v1763, 4
        %v1766 = vshll.u32 %v1681, 16
        %v1768 = vrot.slane %v1766, 5
        %v1769 = vsel %vm749, %v1764, %v1768
        %v1771 = vshrl.u32 %v1682, 16
        %v1773 = vrot.slane %v1771, 4
        %v1774 = vshll.u32 %v1682, 16
        %v1776 = vrot.slane %v1774, 5
        %v1777 = vor.u32 %v1773, %v1776
        %v1778 = vrot.slane %v1777, 4
        %v1780 = vshll.u32 %v1683, 16
        %v1782 = vrot.slane %v1780, 5
        %v1783 = vsel %vm749, %v1778, %v1782
        %v1785 = vshrl.u32 %v1684, 16
        %v1787 = vrot.slane %v1785, 4
        %v1788 = vshll.u32 %v1684, 16
        %v1790 = vrot.slane %v1788, 5
        %v1791 = vor.u32 %v1787, %v1790
        %v1792 = vrot.slane %v1791, 4
        %v1794 = vshll.u32 %v1685, 16
        %v1796 = vrot.slane %v1794, 5
        %v1797 = vsel %vm749, %v1792, %v1796
        %s1798 = scalar_lea.vmem %s1, 32
        %v1799 = vld [vmem:[%s1798] sm:$0xf]
        %v1800 = vunpack.c.l.b16 %v1699
        %v1801 = vunpack.c.l.b16 %v1713
        %v1802 = vunpack.c.l.b16 %v1727
        %v1803 = vunpack.c.l.b16 %v1741
        %v1804 = vunpack.c.l.b16 %v1755
        %v1805 = vunpack.c.l.b16 %v1769
        %v1806 = vunpack.c.l.b16 %v1783
        %v1807 = vunpack.c.l.b16 %v1797
        %v1808 = vpack.c.b16 %v1801, %v1800
        %v1809 = vpack.c.b16 %v1803, %v1802
        %v1810 = vpack.c.b16 %v1805, %v1804
        %v1811 = vpack.c.b16 %v1807, %v1806
        %v1813 = vsel %vm549, %v1808, 0
        %v1816 = vsel %vm549, %v1809, 0
        %v1819 = vsel %vm549, %v1810, 0
        %v1822 = vsel %vm549, %v1811, 0
        %v1825 = vsel %vm562, %v1799, 0
        %1827 = vmatprep.subr.bf16.mxu0 0
        %1828 = vmatpush1.bf16.msra.mxu0 %v1825
        %1829 = vmatprep.subr.bf16.mxu0 0
        %1830 = vmatpush1.bf16.msra.mxu0 0
        %1831 = vmatprep.subr.bf16.mxu0 0
        %1832 = vmatpush1.bf16.msra.mxu0 0
        %1833 = vmatprep.subr.bf16.mxu0 0
        %1834 = vmatpush1.bf16.msra.mxu0 0
        %1835 = vmatprep.subr.bf16.mxu0 0
        %1836 = vmatpush1.bf16.msra.mxu0 0
        %1837 = vmatprep.subr.bf16.mxu0 0
        %1838 = vmatpush1.bf16.msra.mxu0 0
        %1839 = vmatprep.subr.bf16.mxu0 0
        %1840 = vmatpush1.bf16.msra.mxu0 0
        %1841 = vmatprep.subr.bf16.mxu0 0
        %1842 = vmatpush1.bf16.msra.mxu0 0
        %1843 = vmatprep.subr.bf16.mxu0 0
        %1844 = vmatpush1.bf16.msra.mxu0 0
        %1845 = vmatprep.subr.bf16.mxu0 0
        %1846 = vmatpush1.bf16.msra.mxu0 0
        %1847 = vmatprep.subr.bf16.mxu0 0
        %1848 = vmatpush1.bf16.msra.mxu0 0
        %1849 = vmatprep.subr.bf16.mxu0 0
        %1850 = vmatpush1.bf16.msra.mxu0 0
        %1851 = vmatprep.subr.bf16.mxu0 0
        %1852 = vmatpush1.bf16.msra.mxu0 0
        %1853 = vmatprep.subr.bf16.mxu0 0
        %1854 = vmatpush1.bf16.msra.mxu0 0
        %1855 = vmatprep.subr.bf16.mxu0 0
        %1856 = vmatpush1.bf16.msra.mxu0 0
        %1857 = vmatprep.subr.bf16.mxu0 0
        %1858 = vmatpush1.bf16.msra.mxu0 0
        %1859 = vmatprep.mubr.bf16.mxu0 0
        %1860 = vmatmul.mubr.bf16.gmra.mrb[0].mxu0 %v1813
        %v1861 = vpop.f32.mrb[0].mxu0
        %v1862 = vadd.f32 0.0, %v1861
        %v1863 = vpop.f32.mrb[0].mxu0
        %v1864 = vpop.f32.mrb[0].mxu0
        %v1865 = vadd.f32 0.0, %v1864
        %v1866 = vpop.f32.mrb[0].mxu0
        %1867 = vmatprep.mubr.bf16.mxu0 0
        %1868 = vmatmul.mubr.bf16.gmra.mrb[0].mxu0 %v1816
        %v1869 = vpop.f32.mrb[0].mxu0
        %v1870 = vadd.f32 0.0, %v1869
        %v1871 = vpop.f32.mrb[0].mxu0
        %v1872 = vpop.f32.mrb[0].mxu0
        %v1873 = vadd.f32 0.0, %v1872
        %v1874 = vpop.f32.mrb[0].mxu0
        %1875 = vmatprep.mubr.bf16.mxu0 0
        %1876 = vmatmul.mubr.bf16.gmra.mrb[0].mxu0 %v1819
        %v1877 = vpop.f32.mrb[0].mxu0
        %v1878 = vadd.f32 0.0, %v1877
        %v1879 = vpop.f32.mrb[0].mxu0
        %v1880 = vpop.f32.mrb[0].mxu0
        %v1881 = vadd.f32 0.0, %v1880
        %v1882 = vpop.f32.mrb[0].mxu0
        %1883 = vmatprep.mubr.bf16.mxu0 0
        %1884 = vmatmul.mubr.bf16.gmra.mrb[0].mxu0 %v1822
        %v1885 = vpop.f32.mrb[0].mxu0
        %v1886 = vadd.f32 0.0, %v1885
        %v1887 = vpop.f32.mrb[0].mxu0
        %v1888 = vpop.f32.mrb[0].mxu0
        %v1889 = vadd.f32 0.0, %v1888
        %v1890 = vpop.f32.mrb[0].mxu0
        %1891 = vdwg.mxu0
        %v1892 = vadd.f32 %v1662, %v1862
        %v1893 = vadd.f32 %v1663, %v1865
        %v1894 = vadd.f32 %v1664, %v1870
        %v1895 = vadd.f32 %v1665, %v1873
        %v1896 = vadd.f32 %v1666, %v1878
        %v1897 = vadd.f32 %v1667, %v1881
        %v1898 = vadd.f32 %v1668, %v1886
        %v1899 = vadd.f32 %v1669, %v1889
        %vm1900 = vcmask 130048
        %1901 = vst.msk [vmem:[%s503] sm:$0xff] %vm1900, %v1892
        %1902 = vst.msk [vmem:[%s503 + $0x8] sm:$0xff] %vm1900, %v1893
        %1903 = vst.msk [vmem:[%s503 + $0x10] sm:$0xff] %vm1900, %v1894
        %1904 = vst.msk [vmem:[%s503 + $0x18] sm:$0xff] %vm1900, %v1895
        %1905 = vst.msk [vmem:[%s503 + $0x20] sm:$0xff] %vm1900, %v1896
        %1906 = vst.msk [vmem:[%s503 + $0x28] sm:$0xff] %vm1900, %v1897
        %1907 = vst.msk [vmem:[%s503 + $0x30] sm:$0xff] %vm1900, %v1898
        %1908 = vst.msk [vmem:[%s503 + $0x38] sm:$0xff] %vm1900, %v1899
        %v1909 = vsel %vm1900, %v1892, 0.0
        %v1910 = vsel %vm1900, %v1893, 0.0
        %v1911 = vadd.f32 %v1909, %v1910
        %v1912 = vsel %vm1900, %v1894, 0.0
        %v1913 = vadd.f32 %v1911, %v1912
        %v1914 = vsel %vm1900, %v1895, 0.0
        %v1915 = vadd.f32 %v1913, %v1914
        %v1916 = vsel %vm1900, %v1896, 0.0
        %v1917 = vadd.f32 %v1915, %v1916
        %v1918 = vsel %vm1900, %v1897, 0.0
        %v1919 = vadd.f32 %v1917, %v1918
        %v1920 = vsel %vm1900, %v1898, 0.0
        %v1921 = vadd.f32 %v1919, %v1920
        %v1922 = vsel %vm1900, %v1899, 0.0
        %v1923 = vadd.f32 %v1921, %v1922
        %v1924 = vrot.slane %v1923, 4
        %v1925 = vadd.f32 %v1923, %v1924
        %v1926 = vrot.slane %v1925, 2
        %v1927 = vadd.f32 %v1925, %v1926
        %v1928 = vrot.slane %v1927, 1
        %v1929 = vadd.f32 %v1927, %v1928
        %vm1930 = vcmask 122880
        %1931 = vst.msk [vmem:[%s507] sm:$0x1] %vm1930, %v1929
        %v1932 = vmul.f32 %v1892, %v1892
        %v1933 = vmul.f32 %v1893, %v1893
        %v1934 = vmul.f32 %v1894, %v1894
        %v1935 = vmul.f32 %v1895, %v1895
        %v1936 = vmul.f32 %v1896, %v1896
        %v1937 = vmul.f32 %v1897, %v1897
        %v1938 = vmul.f32 %v1898, %v1898
        %v1939 = vmul.f32 %v1899, %v1899
        %v1940 = vsel %vm1900, %v1932, 0.0
        %v1941 = vsel %vm1900, %v1933, 0.0
        %v1942 = vadd.f32 %v1940, %v1941
        %v1943 = vsel %vm1900, %v1934, 0.0
        %v1944 = vadd.f32 %v1942, %v1943
        %v1945 = vsel %vm1900, %v1935, 0.0
        %v1946 = vadd.f32 %v1944, %v1945
        %v1947 = vsel %vm1900, %v1936, 0.0
        %v1948 = vadd.f32 %v1946, %v1947
        %v1949 = vsel %vm1900, %v1937, 0.0
        %v1950 = vadd.f32 %v1948, %v1949
        %v1951 = vsel %vm1900, %v1938, 0.0
        %v1952 = vadd.f32 %v1950, %v1951
        %v1953 = vsel %vm1900, %v1939, 0.0
        %v1954 = vadd.f32 %v1952, %v1953
        %v1955 = vrot.slane %v1954, 4
        %v1956 = vadd.f32 %v1954, %v1955
        %v1957 = vrot.slane %v1956, 2
        %v1958 = vadd.f32 %v1956, %v1957
        %v1959 = vrot.slane %v1958, 1
        %v1960 = vadd.f32 %v1958, %v1959
        %1961 = vst.msk [vmem:[%s507 + $0x1] sm:$0x1] %vm1930, %v1960
        %p1962 = scmp.lt.s32.totalorder %s15, 1
        %s1963 = scalar_select %p1962, %s15, 1
        %s1964 = smul.addr %s1963, 8
        %s1965 = smul.addr %s1964, 8
        %s1966 = scalar_lea.vmem %s2, %s1965
        %p1967 = scmp.lt.s32.totalorder %s15, 1
        %s1968 = scalar_select %p1967, %s15, 1
        %s1969 = smul.addr %s1968, 2
        %s1970 = scalar_lea.vmem %s3, %s1969
        // Predicated region
        $region70: #{fwd.11} parent=64 // pred_check
          %p1971 = pneg %p80
        $region71: #{fwd.11} parent=64 // pred_check_branch
          %1973 = sbr.rel (%p1971) target = $region73
        $region72: #{fwd.11} parent=64 // pred_region
          _
        $region73: #{fwd.11} parent=64 // pred_fallthru
          _
        // Predicated region
        $region74: #{fwd.11} parent=64 // pred_check
          %p1974 = pneg %p106
        $region75: #{fwd.11} parent=64 // pred_check_branch
          %1976 = sbr.rel (%p1974) target = $region77
        $region76: #{fwd.11} parent=64 // pred_region
          _
        $region77: #{fwd.11} parent=64 // pred_fallthru
          _
      $region65: #{fwd.11} parent=5 // pred_fallthru
        _
      %p1977 = scmp.le.s32.totalorder 2, %s10
      // Predicated region
      $region78: #{fwd.11} parent=5 // pred_check
        %p1978 = pneg %p1977
      $region79: #{fwd.11} parent=5 // pred_check_branch
        %1980 = sbr.rel (%p1978) target = $region81
      $region80: #{fwd.11} parent=5 // pred_region
        %s1981 = ssub.s32 %s10, 2
        // Predicated region
        $region82: #{fwd.11} parent=80 // pred_check
          %p1982 = pneg %p86
        $region83: #{fwd.11} parent=80 // pred_check_branch
          %1984 = sbr.rel (%p1982) target = $region85
        $region84: #{fwd.11} parent=80 // pred_region
          %p1985 = scmp.lt.s32.totalorder %s16, 1
          %s1986 = scalar_select %p1985, %s16, 1
          %s1987 = smul.addr %s1986, 8
          %s1988 = smul.addr %s1987, 8
          %s1989 = scalar_lea.vmem %s2, %s1988
        $region85: #{fwd.11} parent=80 // pred_fallthru
          _
        // Predicated region
        $region86: #{fwd.11} parent=80 // pred_check
          %p1990 = pneg %p112
        $region87: #{fwd.11} parent=80 // pred_check_branch
          %1992 = sbr.rel (%p1990) target = $region89
        $region88: #{fwd.11} parent=80 // pred_region
          %p1993 = scmp.lt.s32.totalorder %s16, 1
          %s1994 = scalar_select %p1993, %s16, 1
          %s1995 = smul.addr %s1994, 2
          %s1996 = scalar_lea.vmem %s3, %s1995
        $region89: #{fwd.11} parent=80 // pred_fallthru
          _
      $region81: #{fwd.11} parent=5 // pred_fallthru
        _
    $region6: #{fwd.11} parent=1 // loop_footer
      %s14 = sadd.s32 1, %s10
    $region7: #{fwd.11} parent=1 // loop_footer_branch
      %9 = sbr.rel target = $region3
    $region8: #{fwd.11} parent=1 // loop_exit
      _

// kernel: fwd.13
$region0: #{fwd.13}
  #allocation0 [shape = 'u32[]', space=smem, size = 0x4, offset = 0x4, fixed_abs, tag = 'smem constant byte address 0x4 - core index']
  #allocation1 [shape = 'u32[144,128]{1,0:T(1,128)}', space=vmem, size = 0x12000, scoped, tag = 'internal scratch']
  %s0 = inlined_call_operand.vmem [shape: bf16[1,2,8,8,16], index: 0, kind: input, shape index: {}]
  %s1 = inlined_call_operand.vmem [shape: bf16[1,16,8], index: 1, kind: input, shape index: {}]
  %s2 = inlined_call_operand.vmem [shape: f32[2,64,8], index: 2, kind: output, shape index: {0}]
  %s3 = inlined_call_operand.vmem [shape: f32[2,2,8], index: 3, kind: output, shape index: {1}]
  %4 = xla_tuple %s2, %s3
  %s5 = sld [smem:[#allocation0]]
  $region49: #{fwd.13} parent=0
    _
  %s7 = ssub.s32 1, %s5
  %s8 = scalar_select 0, %s7, %s5
  loop: start=0, step=1, limit=4
  $region2: #{fwd.13} parent=0 // loop_pre_header
    _
  $region3: #{fwd.13} parent=0 // loop_header
    %s10 = sphi 0, %s14
    %p11 = scmp.ge.s32.totalorder %s10, 4
    %s20 = sphi 0, %s22
    %s23 = sphi 0, %s20
    %s24 = sphi 0, %s23
    %s40 = sphi 0, %s24
    %s44 = sphi 0, %s44
    %s46 = sphi 0, %s44
    %s47 = sphi 0, %s46
    %s61 = sphi 0, %s47
    %s67 = sphi 0, %s69
    %s70 = sphi 0, %s67
    %s71 = sphi 0, %s70
    %s87 = sphi 0, %s71
    %s93 = sphi 0, %s95
    %s96 = sphi 0, %s93
    %s97 = sphi 0, %s96
    %s113 = sphi 0, %s97
  $region4: #{fwd.13} parent=0 // loop_header_branch
    %13 = sbr.rel (%p11) target = $region8
  $region5: #{fwd.13} parent=0 // loop_body
    %s15 = ssub.s32 %s10, 1
    %s16 = ssub.s32 %s10, 2
    %s17 = sadd.s32 %s10, 1
    %s18 = ssub.s32 %s10, %s17
    %p19 = scmp.eq.s32.totalorder %s18, 0
    %s21 = sadd.s32 %s20, 1
    %s22 = scalar_select %p19, %s20, %s21
    %p25 = pneg %p19
    %p26 = scmp.eq.s32.totalorder %s10, 1
    %p27 = por %p25, %p26
    %p28 = scmp.ne.s32.totalorder %s20, %s23
    %p29 = scmp.eq.s32.totalorder %s10, 0
    %p30 = por %p28, %p29
    %p31 = scmp.ne.s32.totalorder %s20, %s23
    %p32 = scmp.eq.s32.totalorder %s15, 1
    %p33 = por %p31, %p32
    %p34 = scmp.ne.s32.totalorder %s23, %s24
    %p35 = scmp.eq.s32.totalorder %s15, 0
    %p36 = por %p34, %p35
    %p37 = scmp.ne.s32.totalorder %s23, %s24
    %p38 = scmp.eq.s32.totalorder %s16, 1
    %p39 = por %p37, %p38
    %p41 = scmp.ne.s32.totalorder %s24, %s40
    %p42 = scmp.eq.s32.totalorder %s16, 0
    %p43 = por %p41, %p42
    %s45 = sadd.s32 %s44, 1
    %p48 = scmp.eq.s32.totalorder %s10, 1
    %p49 = scmp.ne.s32.totalorder %s44, %s46
    %p50 = scmp.eq.s32.totalorder %s10, 0
    %p51 = por %p49, %p50
    %p52 = scmp.ne.s32.totalorder %s44, %s46
    %p53 = scmp.eq.s32.totalorder %s15, 1
    %p54 = por %p52, %p53
    %p55 = scmp.ne.s32.totalorder %s46, %s47
    %p56 = scmp.eq.s32.totalorder %s15, 0
    %p57 = por %p55, %p56
    %p58 = scmp.ne.s32.totalorder %s46, %s47
    %p59 = scmp.eq.s32.totalorder %s16, 1
    %p60 = por %p58, %p59
    %p62 = scmp.ne.s32.totalorder %s47, %s61
    %p63 = scmp.eq.s32.totalorder %s16, 0
    %p64 = por %p62, %p63
    %s65 = ssub.s32 %s10, %s17
    %p66 = scmp.eq.s32.totalorder %s65, 0
    %s68 = sadd.s32 %s67, 1
    %s69 = scalar_select %p66, %s67, %s68
    %p72 = pneg %p66
    %p73 = scmp.eq.s32.totalorder %s10, 1
    %p74 = por %p72, %p73
    %p75 = scmp.ne.s32.totalorder %s67, %s70
    %p76 = scmp.eq.s32.totalorder %s10, 0
    %p77 = por %p75, %p76
    %p78 = scmp.ne.s32.totalorder %s67, %s70
    %p79 = scmp.eq.s32.totalorder %s15, 1
    %p80 = por %p78, %p79
    %p81 = scmp.ne.s32.totalorder %s70, %s71
    %p82 = scmp.eq.s32.totalorder %s15, 0
    %p83 = por %p81, %p82
    %p84 = scmp.ne.s32.totalorder %s70, %s71
    %p85 = scmp.eq.s32.totalorder %s16, 1
    %p86 = por %p84, %p85
    %p88 = scmp.ne.s32.totalorder %s71, %s87
    %p89 = scmp.eq.s32.totalorder %s16, 0
    %p90 = por %p88, %p89
    %s91 = ssub.s32 %s10, %s17
    %p92 = scmp.eq.s32.totalorder %s91, 0
    %s94 = sadd.s32 %s93, 1
    %s95 = scalar_select %p92, %s93, %s94
    %p98 = pneg %p92
    %p99 = scmp.eq.s32.totalorder %s10, 1
    %p100 = por %p98, %p99
    %p101 = scmp.ne.s32.totalorder %s93, %s96
    %p102 = scmp.eq.s32.totalorder %s10, 0
    %p103 = por %p101, %p102
    %p104 = scmp.ne.s32.totalorder %s93, %s96
    %p105 = scmp.eq.s32.totalorder %s15, 1
    %p106 = por %p104, %p105
    %p107 = scmp.ne.s32.totalorder %s96, %s97
    %p108 = scmp.eq.s32.totalorder %s15, 0
    %p109 = por %p107, %p108
    %p110 = scmp.ne.s32.totalorder %s96, %s97
    %p111 = scmp.eq.s32.totalorder %s16, 1
    %p112 = por %p110, %p111
    %p114 = scmp.ne.s32.totalorder %s97, %s113
    %p115 = scmp.eq.s32.totalorder %s16, 0
    %p116 = por %p114, %p115
    %p117 = scmp.le.s32.totalorder 1, %s10
    %p118 = scmp.lt.s32.totalorder %s10, 3
    %p119 = pnand %p117, %p118
    %p120 = pneg %p119
    // Predicated region
    $region9: #{fwd.13} parent=5 // pred_check
      _
    $region10: #{fwd.13} parent=5 // pred_check_branch
      %122 = sbr.rel (%p119) target = $region12
    $region11: #{fwd.13} parent=5 // pred_region
      %s123 = ssub.s32 %s10, 1
      // Predicated region
      $region13: #{fwd.13} parent=11 // pred_check
        %p124 = pneg %p57
      $region14: #{fwd.13} parent=11 // pred_check_branch
        %126 = sbr.rel (%p124) target = $region16
      $region15: #{fwd.13} parent=11 // pred_region
        _
      $region16: #{fwd.13} parent=11 // pred_fallthru
        _
    $region12: #{fwd.13} parent=5 // pred_fallthru
      _
    %p127 = scmp.lt.s32.totalorder %s10, 2
    // Predicated region
    $region17: #{fwd.13} parent=5 // pred_check
      %p128 = pneg %p127
    $region18: #{fwd.13} parent=5 // pred_check_branch
      %130 = sbr.rel (%p128) target = $region20
    $region19: #{fwd.13} parent=5 // pred_region
      // Predicated region
      $region21: #{fwd.13} parent=19 // pred_check
        %p131 = pneg %p30
      $region22: #{fwd.13} parent=19 // pred_check_branch
        %133 = sbr.rel (%p131) target = $region24
      $region23: #{fwd.13} parent=19 // pred_region
        %p134 = scmp.lt.s32.totalorder %s10, 1
        %s135 = scalar_select %p134, %s10, 1
        %s136 = smul.addr %s135, 8
        %s137 = smul.addr %s136, 4
        %s138 = scalar_lea.vmem %s0, %s137
      $region24: #{fwd.13} parent=19 // pred_fallthru
        _
    $region20: #{fwd.13} parent=5 // pred_fallthru
      _
    %p139 = scmp.le.s32.totalorder 1, %s10
    %p140 = scmp.lt.s32.totalorder %s10, 3
    %p141 = pnand %p139, %p140
    %p142 = pneg %p141
    // Predicated region
    $region25: #{fwd.13} parent=5 // pred_check
      _
    $region26: #{fwd.13} parent=5 // pred_check_branch
      %144 = sbr.rel (%p141) target = $region28
    $region27: #{fwd.13} parent=5 // pred_region
      %s145 = ssub.s32 %s10, 1
      %p146 = scmp.lt.s32.totalorder %s15, 1
      %s147 = scalar_select %p146, %s15, 1
      %s148 = smul.addr %s147, 8
      %s149 = smul.addr %s148, 4
      %s150 = scalar_lea.vmem %s0, %s149
      %p151 = pneg %p36
      %p152 = pneg %p33
      %p153 = pneg %p57
      %p154 = pneg %p54
      %p155 = pneg %p83
      %p156 = pneg %p80
      %p157 = scmp.lt.s32.totalorder %s15, 1
      %s158 = scalar_select %p157, %s15, 1
      %s159 = smul.addr %s158, 8
      %s160 = smul.addr %s159, 8
      %s161 = scalar_lea.vmem %s2, %s160
      %p162 = pneg %p109
      %p163 = pneg %p106
      %p164 = scmp.lt.s32.totalorder %s15, 1
      %s165 = scalar_select %p164, %s15, 1
      %s166 = smul.addr %s165, 2
      %s167 = scalar_lea.vmem %s3, %s166
      %p168 = scmp.lt.s32.totalorder %s15, 1
      %s169 = scalar_select %p168, %s15, 1
      %s170 = smul.addr %s169, 8
      %s171 = smul.addr %s170, 4
      %s172 = scalar_lea.vmem %s0, %s171
      %p173 = scmp.lt.s32.totalorder %s15, 1
      %s174 = scalar_select %p173, %s15, 1
      %s175 = smul.addr %s174, 8
      %s176 = smul.addr %s175, 8
      %s177 = scalar_lea.vmem %s2, %s176
      %p178 = scmp.lt.s32.totalorder %s15, 1
      %s179 = scalar_select %p178, %s15, 1
      %s180 = smul.addr %s179, 2
      %s181 = scalar_lea.vmem %s3, %s180
      %v183 = vld [vmem:[%s172] sm:$0xf]
      %v184 = vld [vmem:[%s172 + $0x4] sm:$0xf]
      %v185 = vld [vmem:[%s172 + $0x8] sm:$0xf]
      %v186 = vld [vmem:[%s172 + $0xc] sm:$0xf]
      %v187 = vld [vmem:[%s172 + $0x10] sm:$0xf]
      %v188 = vld [vmem:[%s172 + $0x14] sm:$0xf]
      %v189 = vld [vmem:[%s172 + $0x18] sm:$0xf]
      %v190 = vld [vmem:[%s172 + $0x1c] sm:$0xf]
      %v191 = vld [vmem:[%s1] sm:$0xf]
      %v192 = vld [vmem:[%s1 + $0x4] sm:$0xf]
      %v201 = vunpack.c.l.b16 %v183
      %v202 = vunpack.c.l.b16 %v184
      %v203 = vunpack.c.l.b16 %v185
      %v204 = vunpack.c.l.b16 %v186
      %v205 = vunpack.c.l.b16 %v187
      %v206 = vunpack.c.l.b16 %v188
      %v207 = vunpack.c.l.b16 %v189
      %v208 = vunpack.c.l.b16 %v190
      %v209 = vpack.c.b16 %v202, %v201
      %v210 = vpack.c.b16 %v204, %v203
      %v211 = vpack.c.b16 %v206, %v205
      %v212 = vpack.c.b16 %v208, %v207
      %v215 = vunpack.c.l.b16 %v191
      %v216 = vunpack.c.l.b16 %v192
      %v217 = vpack.c.b16 %v216, %v215
      %vm219 = vcmask 130048
      %v221 = vsel %vm219, %v209, 0
      %v224 = vsel %vm219, %v210, 0
      %v227 = vsel %vm219, %v211, 0
      %v230 = vsel %vm219, %v212, 0
      %232 = vmatprep.subr.bf16.mxu0 0
      %233 = vmatpush1.bf16.msra.mxu0 %v217
      %234 = vmatprep.subr.bf16.mxu0 0
      %235 = vmatpush1.bf16.msra.mxu0 0
      %236 = vmatprep.subr.bf16.mxu0 0
      %237 = vmatpush1.bf16.msra.mxu0 0
      %238 = vmatprep.subr.bf16.mxu0 0
      %239 = vmatpush1.bf16.msra.mxu0 0
      %240 = vmatprep.subr.bf16.mxu0 0
      %241 = vmatpush1.bf16.msra.mxu0 0
      %242 = vmatprep.subr.bf16.mxu0 0
      %243 = vmatpush1.bf16.msra.mxu0 0
      %244 = vmatprep.subr.bf16.mxu0 0
      %245 = vmatpush1.bf16.msra.mxu0 0
      %246 = vmatprep.subr.bf16.mxu0 0
      %247 = vmatpush1.bf16.msra.mxu0 0
      %248 = vmatprep.subr.bf16.mxu0 0
      %249 = vmatpush1.bf16.msra.mxu0 0
      %250 = vmatprep.subr.bf16.mxu0 0
      %251 = vmatpush1.bf16.msra.mxu0 0
      %252 = vmatprep.subr.bf16.mxu0 0
      %253 = vmatpush1.bf16.msra.mxu0 0
      %254 = vmatprep.subr.bf16.mxu0 0
      %255 = vmatpush1.bf16.msra.mxu0 0
      %256 = vmatprep.subr.bf16.mxu0 0
      %257 = vmatpush1.bf16.msra.mxu0 0
      %258 = vmatprep.subr.bf16.mxu0 0
      %259 = vmatpush1.bf16.msra.mxu0 0
      %260 = vmatprep.subr.bf16.mxu0 0
      %261 = vmatpush1.bf16.msra.mxu0 0
      %262 = vmatprep.subr.bf16.mxu0 0
      %263 = vmatpush1.bf16.msra.mxu0 0
      %264 = vmatprep.mubr.bf16.mxu0 0
      %265 = vmatmul.mubr.bf16.gmra.mrb[0].mxu0 %v221
      %v266 = vpop.f32.mrb[0].mxu0
      %v267 = vadd.f32 0.0, %v266
      %v268 = vpop.f32.mrb[0].mxu0
      %v269 = vpop.f32.mrb[0].mxu0
      %v270 = vadd.f32 0.0, %v269
      %v271 = vpop.f32.mrb[0].mxu0
      %272 = vmatprep.mubr.bf16.mxu0 0
      %273 = vmatmul.mubr.bf16.gmra.mrb[0].mxu0 %v224
      %v274 = vpop.f32.mrb[0].mxu0
      %v275 = vadd.f32 0.0, %v274
      %v276 = vpop.f32.mrb[0].mxu0
      %v277 = vpop.f32.mrb[0].mxu0
      %v278 = vadd.f32 0.0, %v277
      %v279 = vpop.f32.mrb[0].mxu0
      %280 = vmatprep.mubr.bf16.mxu0 0
      %281 = vmatmul.mubr.bf16.gmra.mrb[0].mxu0 %v227
      %v282 = vpop.f32.mrb[0].mxu0
      %v283 = vadd.f32 0.0, %v282
      %v284 = vpop.f32.mrb[0].mxu0
      %v285 = vpop.f32.mrb[0].mxu0
      %v286 = vadd.f32 0.0, %v285
      %v287 = vpop.f32.mrb[0].mxu0
      %288 = vmatprep.mubr.bf16.mxu0 0
      %289 = vmatmul.mubr.bf16.gmra.mrb[0].mxu0 %v230
      %v290 = vpop.f32.mrb[0].mxu0
      %v291 = vadd.f32 0.0, %v290
      %v292 = vpop.f32.mrb[0].mxu0
      %v293 = vpop.f32.mrb[0].mxu0
      %v294 = vadd.f32 0.0, %v293
      %v295 = vpop.f32.mrb[0].mxu0
      %296 = vdwg.mxu0
      %vm297 = vcmask 64512
      %298 = vst.msk [vmem:[%s177] sm:$0xff] %vm297, %v267
      %299 = vst.msk [vmem:[%s177 + $0x8] sm:$0xff] %vm297, %v270
      %300 = vst.msk [vmem:[%s177 + $0x10] sm:$0xff] %vm297, %v275
      %301 = vst.msk [vmem:[%s177 + $0x18] sm:$0xff] %vm297, %v278
      %302 = vst.msk [vmem:[%s177 + $0x20] sm:$0xff] %vm297, %v283
      %303 = vst.msk [vmem:[%s177 + $0x28] sm:$0xff] %vm297, %v286
      %304 = vst.msk [vmem:[%s177 + $0x30] sm:$0xff] %vm297, %v291
      %305 = vst.msk [vmem:[%s177 + $0x38] sm:$0xff] %vm297, %v294
      %v306 = vsel %vm297, %v267, 0.0
      %v307 = vsel %vm297, %v270, 0.0
      %v308 = vadd.f32 %v306, %v307
      %v309 = vsel %vm297, %v275, 0.0
      %v310 = vadd.f32 %v308, %v309
      %v311 = vsel %vm297, %v278, 0.0
      %v312 = vadd.f32 %v310, %v311
      %v313 = vsel %vm297, %v283, 0.0
      %v314 = vadd.f32 %v312, %v313
      %v315 = vsel %vm297, %v286, 0.0
      %v316 = vadd.f32 %v314, %v315
      %v317 = vsel %vm297, %v291, 0.0
      %v318 = vadd.f32 %v316, %v317
      %v319 = vsel %vm297, %v294, 0.0
      %v320 = vadd.f32 %v318, %v319
      %v321 = vrot.slane %v320, 4
      %v322 = vadd.f32 %v320, %v321
      %v323 = vrot.slane %v322, 2
      %v324 = vadd.f32 %v322, %v323
      %v325 = vrot.slane %v324, 1
      %v326 = vadd.f32 %v324, %v325
      %vm327 = vcmask 57344
      %328 = vst.msk [vmem:[%s181] sm:$0x1] %vm327, %v326
      %v329 = vmul.f32 %v267, %v267
      %v330 = vmul.f32 %v270, %v270
      %v331 = vmul.f32 %v275, %v275
      %v332 = vmul.f32 %v278, %v278
      %v333 = vmul.f32 %v283, %v283
      %v334 = vmul.f32 %v286, %v286
      %v335 = vmul.f32 %v291, %v291
      %v336 = vmul.f32 %v294, %v294
      %v337 = vsel %vm297, %v329, 0.0
      %v338 = vsel %vm297, %v330, 0.0
      %v339 = vadd.f32 %v337, %v338
      %v340 = vsel %vm297, %v331, 0.0
      %v341 = vadd.f32 %v339, %v340
      %v342 = vsel %vm297, %v332, 0.0
      %v343 = vadd.f32 %v341, %v342
      %v344 = vsel %vm297, %v333, 0.0
      %v345 = vadd.f32 %v343, %v344
      %v346 = vsel %vm297, %v334, 0.0
      %v347 = vadd.f32 %v345, %v346
      %v348 = vsel %vm297, %v335, 0.0
      %v349 = vadd.f32 %v347, %v348
      %v350 = vsel %vm297, %v336, 0.0
      %v351 = vadd.f32 %v349, %v350
      %v352 = vrot.slane %v351, 4
      %v353 = vadd.f32 %v351, %v352
      %v354 = vrot.slane %v353, 2
      %v355 = vadd.f32 %v353, %v354
      %v356 = vrot.slane %v355, 1
      %v357 = vadd.f32 %v355, %v356
      %358 = vst.msk [vmem:[%s181 + $0x1] sm:$0x1] %vm327, %v357
      %p359 = scmp.lt.s32.totalorder %s15, 1
      %s360 = scalar_select %p359, %s15, 1
      %s361 = smul.addr %s360, 8
      %s362 = smul.addr %s361, 8
      %s363 = scalar_lea.vmem %s2, %s362
      %p364 = scmp.lt.s32.totalorder %s15, 1
      %s365 = scalar_select %p364, %s15, 1
      %s366 = smul.addr %s365, 2
      %s367 = scalar_lea.vmem %s3, %s366
      // Predicated region
      $region29: #{fwd.13} parent=27 // pred_check
        %p368 = pneg %p80
      $region30: #{fwd.13} parent=27 // pred_check_branch
        %370 = sbr.rel (%p368) target = $region32
      $region31: #{fwd.13} parent=27 // pred_region
        _
      $region32: #{fwd.13} parent=27 // pred_fallthru
        _
      // Predicated region
      $region33: #{fwd.13} parent=27 // pred_check
        %p371 = pneg %p106
      $region34: #{fwd.13} parent=27 // pred_check_branch
        %373 = sbr.rel (%p371) target = $region36
      $region35: #{fwd.13} parent=27 // pred_region
        _
      $region36: #{fwd.13} parent=27 // pred_fallthru
        _
    $region28: #{fwd.13} parent=5 // pred_fallthru
      _
    %p374 = scmp.le.s32.totalorder 2, %s10
    // Predicated region
    $region37: #{fwd.13} parent=5 // pred_check
      %p375 = pneg %p374
    $region38: #{fwd.13} parent=5 // pred_check_branch
      %377 = sbr.rel (%p375) target = $region40
    $region39: #{fwd.13} parent=5 // pred_region
      %s378 = ssub.s32 %s10, 2
      // Predicated region
      $region41: #{fwd.13} parent=39 // pred_check
        %p379 = pneg %p86
      $region42: #{fwd.13} parent=39 // pred_check_branch
        %381 = sbr.rel (%p379) target = $region44
      $region43: #{fwd.13} parent=39 // pred_region
        %p382 = scmp.lt.s32.totalorder %s16, 1
        %s383 = scalar_select %p382, %s16, 1
        %s384 = smul.addr %s383, 8
        %s385 = smul.addr %s384, 8
        %s386 = scalar_lea.vmem %s2, %s385
      $region44: #{fwd.13} parent=39 // pred_fallthru
        _
      // Predicated region
      $region45: #{fwd.13} parent=39 // pred_check
        %p387 = pneg %p112
      $region46: #{fwd.13} parent=39 // pred_check_branch
        %389 = sbr.rel (%p387) target = $region48
      $region47: #{fwd.13} parent=39 // pred_region
        %p390 = scmp.lt.s32.totalorder %s16, 1
        %s391 = scalar_select %p390, %s16, 1
        %s392 = smul.addr %s391, 2
        %s393 = scalar_lea.vmem %s3, %s392
      $region48: #{fwd.13} parent=39 // pred_fallthru
        _
    $region40: #{fwd.13} parent=5 // pred_fallthru
      _
  $region6: #{fwd.13} parent=0 // loop_footer
    %s14 = sadd.s32 1, %s10
  $region7: #{fwd.13} parent=0 // loop_footer_branch
    %9 = sbr.rel target = $region3
  $region8: #{fwd.13} parent=0 // loop_exit
    _

// kernel: fwd.14
$region0: #{fwd.14}
  #allocation0 [shape = 'u32[]', space=smem, size = 0x4, offset = 0x4, fixed_abs, tag = 'smem constant byte address 0x4 - core index']
  #allocation1 [shape = 'u32[144,128]{1,0:T(1,128)}', space=vmem, size = 0x12000, scoped, tag = 'internal scratch']
  %s0 = inlined_call_operand.vmem [shape: f32[2,64,8], index: 0, kind: input, shape index: {}]
  %s1 = inlined_call_operand.vmem [shape: f32[1,1,8], index: 1, kind: input, shape index: {}]
  %s2 = inlined_call_operand.vmem [shape: f32[1,1,8], index: 2, kind: input, shape index: {}]
  %s3 = inlined_call_operand.vmem [shape: f32[2,64,8], index: 3, kind: output, shape index: {}]
  %s4 = sld [smem:[#allocation0]]
  $region45: #{fwd.14} parent=0
    _
  %s6 = ssub.s32 1, %s4
  %s7 = scalar_select 0, %s6, %s4
  loop: start=0, step=1, limit=4
  $region2: #{fwd.14} parent=0 // loop_pre_header
    _
  $region3: #{fwd.14} parent=0 // loop_header
    %s9 = sphi 0, %s13
    %p10 = scmp.ge.s32.totalorder %s9, 4
    %s19 = sphi 0, %s21
    %s22 = sphi 0, %s19
    %s23 = sphi 0, %s22
    %s39 = sphi 0, %s23
    %s43 = sphi 0, %s43
    %s45 = sphi 0, %s43
    %s46 = sphi 0, %s45
    %s60 = sphi 0, %s46
    %s64 = sphi 0, %s64
    %s66 = sphi 0, %s64
    %s67 = sphi 0, %s66
    %s81 = sphi 0, %s67
    %s87 = sphi 0, %s89
    %s90 = sphi 0, %s87
    %s91 = sphi 0, %s90
    %s107 = sphi 0, %s91
  $region4: #{fwd.14} parent=0 // loop_header_branch
    %12 = sbr.rel (%p10) target = $region8
  $region5: #{fwd.14} parent=0 // loop_body
    %s14 = ssub.s32 %s9, 1
    %s15 = ssub.s32 %s9, 2
    %s16 = sadd.s32 %s9, 1
    %s17 = ssub.s32 %s9, %s16
    %p18 = scmp.eq.s32.totalorder %s17, 0
    %s20 = sadd.s32 %s19, 1
    %s21 = scalar_select %p18, %s19, %s20
    %p24 = pneg %p18
    %p25 = scmp.eq.s32.totalorder %s9, 1
    %p26 = por %p24, %p25
    %p27 = scmp.ne.s32.totalorder %s19, %s22
    %p28 = scmp.eq.s32.totalorder %s9, 0
    %p29 = por %p27, %p28
    %p30 = scmp.ne.s32.totalorder %s19, %s22
    %p31 = scmp.eq.s32.totalorder %s14, 1
    %p32 = por %p30, %p31
    %p33 = scmp.ne.s32.totalorder %s22, %s23
    %p34 = scmp.eq.s32.totalorder %s14, 0
    %p35 = por %p33, %p34
    %p36 = scmp.ne.s32.totalorder %s22, %s23
    %p37 = scmp.eq.s32.totalorder %s15, 1
    %p38 = por %p36, %p37
    %p40 = scmp.ne.s32.totalorder %s23, %s39
    %p41 = scmp.eq.s32.totalorder %s15, 0
    %p42 = por %p40, %p41
    %s44 = sadd.s32 %s43, 1
    %p47 = scmp.eq.s32.totalorder %s9, 1
    %p48 = scmp.ne.s32.totalorder %s43, %s45
    %p49 = scmp.eq.s32.totalorder %s9, 0
    %p50 = por %p48, %p49
    %p51 = scmp.ne.s32.totalorder %s43, %s45
    %p52 = scmp.eq.s32.totalorder %s14, 1
    %p53 = por %p51, %p52
    %p54 = scmp.ne.s32.totalorder %s45, %s46
    %p55 = scmp.eq.s32.totalorder %s14, 0
    %p56 = por %p54, %p55
    %p57 = scmp.ne.s32.totalorder %s45, %s46
    %p58 = scmp.eq.s32.totalorder %s15, 1
    %p59 = por %p57, %p58
    %p61 = scmp.ne.s32.totalorder %s46, %s60
    %p62 = scmp.eq.s32.totalorder %s15, 0
    %p63 = por %p61, %p62
    %s65 = sadd.s32 %s64, 1
    %p68 = scmp.eq.s32.totalorder %s9, 1
    %p69 = scmp.ne.s32.totalorder %s64, %s66
    %p70 = scmp.eq.s32.totalorder %s9, 0
    %p71 = por %p69, %p70
    %p72 = scmp.ne.s32.totalorder %s64, %s66
    %p73 = scmp.eq.s32.totalorder %s14, 1
    %p74 = por %p72, %p73
    %p75 = scmp.ne.s32.totalorder %s66, %s67
    %p76 = scmp.eq.s32.totalorder %s14, 0
    %p77 = por %p75, %p76
    %p78 = scmp.ne.s32.totalorder %s66, %s67
    %p79 = scmp.eq.s32.totalorder %s15, 1
    %p80 = por %p78, %p79
    %p82 = scmp.ne.s32.totalorder %s67, %s81
    %p83 = scmp.eq.s32.totalorder %s15, 0
    %p84 = por %p82, %p83
    %s85 = ssub.s32 %s9, %s16
    %p86 = scmp.eq.s32.totalorder %s85, 0
    %s88 = sadd.s32 %s87, 1
    %s89 = scalar_select %p86, %s87, %s88
    %p92 = pneg %p86
    %p93 = scmp.eq.s32.totalorder %s9, 1
    %p94 = por %p92, %p93
    %p95 = scmp.ne.s32.totalorder %s87, %s90
    %p96 = scmp.eq.s32.totalorder %s9, 0
    %p97 = por %p95, %p96
    %p98 = scmp.ne.s32.totalorder %s87, %s90
    %p99 = scmp.eq.s32.totalorder %s14, 1
    %p100 = por %p98, %p99
    %p101 = scmp.ne.s32.totalorder %s90, %s91
    %p102 = scmp.eq.s32.totalorder %s14, 0
    %p103 = por %p101, %p102
    %p104 = scmp.ne.s32.totalorder %s90, %s91
    %p105 = scmp.eq.s32.totalorder %s15, 1
    %p106 = por %p104, %p105
    %p108 = scmp.ne.s32.totalorder %s91, %s107
    %p109 = scmp.eq.s32.totalorder %s15, 0
    %p110 = por %p108, %p109
    %p111 = scmp.le.s32.totalorder 1, %s9
    %p112 = scmp.lt.s32.totalorder %s9, 3
    %p113 = pnand %p111, %p112
    %p114 = pneg %p113
    // Predicated region
    $region9: #{fwd.14} parent=5 // pred_check
      _
    $region10: #{fwd.14} parent=5 // pred_check_branch
      %116 = sbr.rel (%p113) target = $region12
    $region11: #{fwd.14} parent=5 // pred_region
      %s117 = ssub.s32 %s9, 1
      // Predicated region
      $region13: #{fwd.14} parent=11 // pred_check
        %p118 = pneg %p56
      $region14: #{fwd.14} parent=11 // pred_check_branch
        %120 = sbr.rel (%p118) target = $region16
      $region15: #{fwd.14} parent=11 // pred_region
        _
      $region16: #{fwd.14} parent=11 // pred_fallthru
        _
      // Predicated region
      $region17: #{fwd.14} parent=11 // pred_check
        %p121 = pneg %p77
      $region18: #{fwd.14} parent=11 // pred_check_branch
        %123 = sbr.rel (%p121) target = $region20
      $region19: #{fwd.14} parent=11 // pred_region
        _
      $region20: #{fwd.14} parent=11 // pred_fallthru
        _
    $region12: #{fwd.14} parent=5 // pred_fallthru
      _
    %p124 = scmp.lt.s32.totalorder %s9, 2
    // Predicated region
    $region21: #{fwd.14} parent=5 // pred_check
      %p125 = pneg %p124
    $region22: #{fwd.14} parent=5 // pred_check_branch
      %127 = sbr.rel (%p125) target = $region24
    $region23: #{fwd.14} parent=5 // pred_region
      // Predicated region
      $region25: #{fwd.14} parent=23 // pred_check
        %p128 = pneg %p29
      $region26: #{fwd.14} parent=23 // pred_check_branch
        %130 = sbr.rel (%p128) target = $region28
      $region27: #{fwd.14} parent=23 // pred_region
        %p131 = scmp.lt.s32.totalorder %s9, 1
        %s132 = scalar_select %p131, %s9, 1
        %s133 = smul.addr %s132, 8
        %s134 = smul.addr %s133, 8
        %s135 = scalar_lea.vmem %s0, %s134
      $region28: #{fwd.14} parent=23 // pred_fallthru
        _
    $region24: #{fwd.14} parent=5 // pred_fallthru
      _
    %p136 = scmp.le.s32.totalorder 1, %s9
    %p137 = scmp.lt.s32.totalorder %s9, 3
    %p138 = pnand %p136, %p137
    %p139 = pneg %p138
    // Predicated region
    $region29: #{fwd.14} parent=5 // pred_check
      _
    $region30: #{fwd.14} parent=5 // pred_check_branch
      %141 = sbr.rel (%p138) target = $region32
    $region31: #{fwd.14} parent=5 // pred_region
      %s142 = ssub.s32 %s9, 1
      %p143 = scmp.lt.s32.totalorder %s14, 1
      %s144 = scalar_select %p143, %s14, 1
      %s145 = smul.addr %s144, 8
      %s146 = smul.addr %s145, 8
      %s147 = scalar_lea.vmem %s0, %s146
      %p148 = pneg %p35
      %p149 = pneg %p32
      %p150 = pneg %p56
      %p151 = pneg %p53
      %p152 = pneg %p77
      %p153 = pneg %p74
      %p154 = pneg %p103
      %p155 = pneg %p100
      %p156 = scmp.lt.s32.totalorder %s14, 1
      %s157 = scalar_select %p156, %s14, 1
      %s158 = smul.addr %s157, 8
      %s159 = smul.addr %s158, 8
      %s160 = scalar_lea.vmem %s3, %s159
      %p161 = scmp.lt.s32.totalorder %s14, 1
      %s162 = scalar_select %p161, %s14, 1
      %s163 = smul.addr %s162, 8
      %s164 = smul.addr %s163, 8
      %s165 = scalar_lea.vmem %s0, %s164
      %p166 = scmp.lt.s32.totalorder %s14, 1
      %s167 = scalar_select %p166, %s14, 1
      %s168 = smul.addr %s167, 8
      %s169 = smul.addr %s168, 8
      %s170 = scalar_lea.vmem %s3, %s169
      %v171 = vld [vmem:[%s165] sm:$0xff]
      %v172 = vld [vmem:[%s165 + $0x8] sm:$0xff]
      %v173 = vld [vmem:[%s165 + $0x10] sm:$0xff]
      %v174 = vld [vmem:[%s165 + $0x18] sm:$0xff]
      %v175 = vld [vmem:[%s165 + $0x20] sm:$0xff]
      %v176 = vld [vmem:[%s165 + $0x28] sm:$0xff]
      %v177 = vld [vmem:[%s165 + $0x30] sm:$0xff]
      %v178 = vld [vmem:[%s165 + $0x38] sm:$0xff]
      %v179 = vld [vmem:[%s1] sm:$0x1]
      %v181 = vlaneseq
      %v182 = vshrl.u32 %v181, 7
      %v183 = vsub.s32 0, %v182
      %v184 = vrot.slane %v179, %v183
      %v186 = vmul.f32 %v171, %v184
      %v187 = vmul.f32 %v172, %v184
      %v188 = vmul.f32 %v173, %v184
      %v189 = vmul.f32 %v174, %v184
      %v190 = vmul.f32 %v175, %v184
      %v191 = vmul.f32 %v176, %v184
      %v192 = vmul.f32 %v177, %v184
      %v193 = vmul.f32 %v178, %v184
      %v194 = vld [vmem:[%s2] sm:$0x1]
      %v196 = vlaneseq
      %v197 = vshrl.u32 %v196, 7
      %v198 = vsub.s32 0, %v197
      %v199 = vrot.slane %v194, %v198
      %v201 = vadd.f32 %v186, %v199
      %v202 = vadd.f32 %v187, %v199
      %v203 = vadd.f32 %v188, %v199
      %v204 = vadd.f32 %v189, %v199
      %v205 = vadd.f32 %v190, %v199
      %v206 = vadd.f32 %v191, %v199
      %v207 = vadd.f32 %v192, %v199
      %v208 = vadd.f32 %v193, %v199
      %vm209 = vcmp.gt.f32.partialorder %v201, 0.0
      %vm210 = vcmp.gt.f32.partialorder %v202, 0.0
      %vm211 = vcmp.gt.f32.partialorder %v203, 0.0
      %vm212 = vcmp.gt.f32.partialorder %v204, 0.0
      %vm213 = vcmp.gt.f32.partialorder %v205, 0.0
      %vm214 = vcmp.gt.f32.partialorder %v206, 0.0
      %vm215 = vcmp.gt.f32.partialorder %v207, 0.0
      %vm216 = vcmp.gt.f32.partialorder %v208, 0.0
      %v217 = vmul.f32 %v201, 0.1
      %v218 = vmul.f32 %v202, 0.1
      %v219 = vmul.f32 %v203, 0.1
      %v220 = vmul.f32 %v204, 0.1
      %v221 = vmul.f32 %v205, 0.1
      %v222 = vmul.f32 %v206, 0.1
      %v223 = vmul.f32 %v207, 0.1
      %v224 = vmul.f32 %v208, 0.1
      %v225 = vsel %vm209, %v201, %v217
      %v226 = vsel %vm210, %v202, %v218
      %v227 = vsel %vm211, %v203, %v219
      %v228 = vsel %vm212, %v204, %v220
      %v229 = vsel %vm213, %v205, %v221
      %v230 = vsel %vm214, %v206, %v222
      %v231 = vsel %vm215, %v207, %v223
      %v232 = vsel %vm216, %v208, %v224
      %vm233 = vcmask 64512
      %234 = vst.msk [vmem:[%s170] sm:$0xff] %vm233, %v225
      %235 = vst.msk [vmem:[%s170 + $0x8] sm:$0xff] %vm233, %v226
      %236 = vst.msk [vmem:[%s170 + $0x10] sm:$0xff] %vm233, %v227
      %237 = vst.msk [vmem:[%s170 + $0x18] sm:$0xff] %vm233, %v228
      %238 = vst.msk [vmem:[%s170 + $0x20] sm:$0xff] %vm233, %v229
      %239 = vst.msk [vmem:[%s170 + $0x28] sm:$0xff] %vm233, %v230
      %240 = vst.msk [vmem:[%s170 + $0x30] sm:$0xff] %vm233, %v231
      %241 = vst.msk [vmem:[%s170 + $0x38] sm:$0xff] %vm233, %v232
      %p242 = scmp.lt.s32.totalorder %s14, 1
      %s243 = scalar_select %p242, %s14, 1
      %s244 = smul.addr %s243, 8
      %s245 = smul.addr %s244, 8
      %s246 = scalar_lea.vmem %s3, %s245
      // Predicated region
      $region33: #{fwd.14} parent=31 // pred_check
        %p247 = pneg %p100
      $region34: #{fwd.14} parent=31 // pred_check_branch
        %249 = sbr.rel (%p247) target = $region36
      $region35: #{fwd.14} parent=31 // pred_region
        _
      $region36: #{fwd.14} parent=31 // pred_fallthru
        _
    $region32: #{fwd.14} parent=5 // pred_fallthru
      _
    %p250 = scmp.le.s32.totalorder 2, %s9
    // Predicated region
    $region37: #{fwd.14} parent=5 // pred_check
      %p251 = pneg %p250
    $region38: #{fwd.14} parent=5 // pred_check_branch
      %253 = sbr.rel (%p251) target = $region40
    $region39: #{fwd.14} parent=5 // pred_region
      %s254 = ssub.s32 %s9, 2
      // Predicated region
      $region41: #{fwd.14} parent=39 // pred_check
        %p255 = pneg %p106
      $region42: #{fwd.14} parent=39 // pred_check_branch
        %257 = sbr.rel (%p255) target = $region44
      $region43: #{fwd.14} parent=39 // pred_region
        %p258 = scmp.lt.s32.totalorder %s15, 1
        %s259 = scalar_select %p258, %s15, 1
        %s260 = smul.addr %s259, 8
        %s261 = smul.addr %s260, 8
        %s262 = scalar_lea.vmem %s3, %s261
      $region44: #{fwd.14} parent=39 // pred_fallthru
        _
    $region40: #{fwd.14} parent=5 // pred_fallthru
      _
  $region6: #{fwd.14} parent=0 // loop_footer
    %s13 = sadd.s32 1, %s9
  $region7: #{fwd.14} parent=0 // loop_footer_branch
    %8 = sbr.rel target = $region3
  $region8: #{fwd.14} parent=0 // loop_exit
    _

// kernel: fwd.9
$region0: #{fwd.9}
  #allocation0 [shape = 'u32[]', space=smem, size = 0x4, offset = 0x4, fixed_abs, tag = 'smem constant byte address 0x4 - core index']
  #allocation1 [shape = 'u32[144,128]{1,0:T(1,128)}', space=vmem, size = 0x12000, scoped, tag = 'internal scratch']
  %s0 = inlined_call_operand.vmem [shape: bf16[1,2,18,18,8], index: 0, kind: input, shape index: {}]
  %s1 = inlined_call_operand.vmem [shape: bf16[9,8,8], index: 1, kind: input, shape index: {}]
  %s2 = inlined_call_operand.vmem [shape: f32[2,256,8], index: 2, kind: output, shape index: {0}]
  %s3 = inlined_call_operand.vmem [shape: f32[2,2,8], index: 3, kind: output, shape index: {1}]
  %4 = xla_tuple %s2, %s3
  %s5 = sld [smem:[#allocation0]]
  $region49: #{fwd.9} parent=0
    _
  %s7 = ssub.s32 1, %s5
  %s8 = scalar_select 0, %s7, %s5
  loop: start=0, step=1, limit=4
  $region2: #{fwd.9} parent=0 // loop_pre_header
    _
  $region3: #{fwd.9} parent=0 // loop_header
    %s10 = sphi 0, %s14
    %p11 = scmp.ge.s32.totalorder %s10, 4
    %s20 = sphi 0, %s22
    %s23 = sphi 0, %s20
    %s24 = sphi 0, %s23
    %s40 = sphi 0, %s24
    %s44 = sphi 0, %s44
    %s46 = sphi 0, %s44
    %s47 = sphi 0, %s46
    %s61 = sphi 0, %s47
    %s67 = sphi 0, %s69
    %s70 = sphi 0, %s67
    %s71 = sphi 0, %s70
    %s87 = sphi 0, %s71
    %s93 = sphi 0, %s95
    %s96 = sphi 0, %s93
    %s97 = sphi 0, %s96
    %s113 = sphi 0, %s97
  $region4: #{fwd.9} parent=0 // loop_header_branch
    %13 = sbr.rel (%p11) target = $region8
  $region5: #{fwd.9} parent=0 // loop_body
    %s15 = ssub.s32 %s10, 1
    %s16 = ssub.s32 %s10, 2
    %s17 = sadd.s32 %s10, 1
    %s18 = ssub.s32 %s10, %s17
    %p19 = scmp.eq.s32.totalorder %s18, 0
    %s21 = sadd.s32 %s20, 1
    %s22 = scalar_select %p19, %s20, %s21
    %p25 = pneg %p19
    %p26 = scmp.eq.s32.totalorder %s10, 1
    %p27 = por %p25, %p26
    %p28 = scmp.ne.s32.totalorder %s20, %s23
    %p29 = scmp.eq.s32.totalorder %s10, 0
    %p30 = por %p28, %p29
    %p31 = scmp.ne.s32.totalorder %s20, %s23
    %p32 = scmp.eq.s32.totalorder %s15, 1
    %p33 = por %p31, %p32
    %p34 = scmp.ne.s32.totalorder %s23, %s24
    %p35 = scmp.eq.s32.totalorder %s15, 0
    %p36 = por %p34, %p35
    %p37 = scmp.ne.s32.totalorder %s23, %s24
    %p38 = scmp.eq.s32.totalorder %s16, 1
    %p39 = por %p37, %p38
    %p41 = scmp.ne.s32.totalorder %s24, %s40
    %p42 = scmp.eq.s32.totalorder %s16, 0
    %p43 = por %p41, %p42
    %s45 = sadd.s32 %s44, 1
    %p48 = scmp.eq.s32.totalorder %s10, 1
    %p49 = scmp.ne.s32.totalorder %s44, %s46
    %p50 = scmp.eq.s32.totalorder %s10, 0
    %p51 = por %p49, %p50
    %p52 = scmp.ne.s32.totalorder %s44, %s46
    %p53 = scmp.eq.s32.totalorder %s15, 1
    %p54 = por %p52, %p53
    %p55 = scmp.ne.s32.totalorder %s46, %s47
    %p56 = scmp.eq.s32.totalorder %s15, 0
    %p57 = por %p55, %p56
    %p58 = scmp.ne.s32.totalorder %s46, %s47
    %p59 = scmp.eq.s32.totalorder %s16, 1
    %p60 = por %p58, %p59
    %p62 = scmp.ne.s32.totalorder %s47, %s61
    %p63 = scmp.eq.s32.totalorder %s16, 0
    %p64 = por %p62, %p63
    %s65 = ssub.s32 %s10, %s17
    %p66 = scmp.eq.s32.totalorder %s65, 0
    %s68 = sadd.s32 %s67, 1
    %s69 = scalar_select %p66, %s67, %s68
    %p72 = pneg %p66
    %p73 = scmp.eq.s32.totalorder %s10, 1
    %p74 = por %p72, %p73
    %p75 = scmp.ne.s32.totalorder %s67, %s70
    %p76 = scmp.eq.s32.totalorder %s10, 0
    %p77 = por %p75, %p76
    %p78 = scmp.ne.s32.totalorder %s67, %s70
    %p79 = scmp.eq.s32.totalorder %s15, 1
    %p80 = por %p78, %p79
    %p81 = scmp.ne.s32.totalorder %s70, %s71
    %p82 = scmp.eq.s32.totalorder %s15, 0
    %p83 = por %p81, %p82
    %p84 = scmp.ne.s32.totalorder %s70, %s71
    %p85 = scmp.eq.s32.totalorder %s16, 1
    %p86 = por %p84, %p85
    %p88 = scmp.ne.s32.totalorder %s71, %s87
    %p89 = scmp.eq.s32.totalorder %s16, 0
    %p90 = por %p88, %p89
    %s91 = ssub.s32 %s10, %s17
    %p92 = scmp.eq.s32.totalorder %s91, 0
    %s94 = sadd.s32 %s93, 1
    %s95 = scalar_select %p92, %s93, %s94
    %p98 = pneg %p92
    %p99 = scmp.eq.s32.totalorder %s10, 1
    %p100 = por %p98, %p99
    %p101 = scmp.ne.s32.totalorder %s93, %s96
    %p102 = scmp.eq.s32.totalorder %s10, 0
    %p103 = por %p101, %p102
    %p104 = scmp.ne.s32.totalorder %s93, %s96
    %p105 = scmp.eq.s32.totalorder %s15, 1
    %p106 = por %p104, %p105
    %p107 = scmp.ne.s32.totalorder %s96, %s97
    %p108 = scmp.eq.s32.totalorder %s15, 0
    %p109 = por %p107, %p108
    %p110 = scmp.ne.s32.totalorder %s96, %s97
    %p111 = scmp.eq.s32.totalorder %s16, 1
    %p112 = por %p110, %p111
    %p114 = scmp.ne.s32.totalorder %s97, %s113
    %p115 = scmp.eq.s32.totalorder %s16, 0
    %p116 = por %p114, %p115
    %p117 = scmp.le.s32.totalorder 1, %s10
    %p118 = scmp.lt.s32.totalorder %s10, 3
    %p119 = pnand %p117, %p118
    %p120 = pneg %p119
    // Predicated region
    $region9: #{fwd.9} parent=5 // pred_check
      _
    $region10: #{fwd.9} parent=5 // pred_check_branch
      %122 = sbr.rel (%p119) target = $region12
    $region11: #{fwd.9} parent=5 // pred_region
      %s123 = ssub.s32 %s10, 1
      // Predicated region
      $region13: #{fwd.9} parent=11 // pred_check
        %p124 = pneg %p57
      $region14: #{fwd.9} parent=11 // pred_check_branch
        %126 = sbr.rel (%p124) target = $region16
      $region15: #{fwd.9} parent=11 // pred_region
        _
      $region16: #{fwd.9} parent=11 // pred_fallthru
        _
    $region12: #{fwd.9} parent=5 // pred_fallthru
      _
    %p127 = scmp.lt.s32.totalorder %s10, 2
    // Predicated region
    $region17: #{fwd.9} parent=5 // pred_check
      %p128 = pneg %p127
    $region18: #{fwd.9} parent=5 // pred_check_branch
      %130 = sbr.rel (%p128) target = $region20
    $region19: #{fwd.9} parent=5 // pred_region
      // Predicated region
      $region21: #{fwd.9} parent=19 // pred_check
        %p131 = pneg %p30
      $region22: #{fwd.9} parent=19 // pred_check_branch
        %133 = sbr.rel (%p131) target = $region24
      $region23: #{fwd.9} parent=19 // pred_region
        %p134 = scmp.lt.s32.totalorder %s10, 1
        %s135 = scalar_select %p134, %s10, 1
        %s136 = smul.addr %s135, 54
        %s137 = smul.addr %s136, 4
        %s138 = scalar_lea.vmem %s0, %s137
      $region24: #{fwd.9} parent=19 // pred_fallthru
        _
    $region20: #{fwd.9} parent=5 // pred_fallthru
      _
    %p139 = scmp.le.s32.totalorder 1, %s10
    %p140 = scmp.lt.s32.totalorder %s10, 3
    %p141 = pnand %p139, %p140
    %p142 = pneg %p141
    // Predicated region
    $region25: #{fwd.9} parent=5 // pred_check
      _
    $region26: #{fwd.9} parent=5 // pred_check_branch
      %144 = sbr.rel (%p141) target = $region28
    $region27: #{fwd.9} parent=5 // pred_region
      %s145 = ssub.s32 %s10, 1
      %p146 = scmp.lt.s32.totalorder %s15, 1
      %s147 = scalar_select %p146, %s15, 1
      %s148 = smul.addr %s147, 54
      %s149 = smul.addr %s148, 4
      %s150 = scalar_lea.vmem %s0, %s149
      %p151 = pneg %p36
      %p152 = pneg %p33
      %p153 = pneg %p57
      %p154 = pneg %p54
      %p155 = pneg %p83
      %p156 = pneg %p80
      %p157 = scmp.lt.s32.totalorder %s15, 1
      %s158 = scalar_select %p157, %s15, 1
      %s159 = smul.addr %s158, 32
      %s160 = smul.addr %s159, 8
      %s161 = scalar_lea.vmem %s2, %s160
      %p162 = pneg %p109
      %p163 = pneg %p106
      %p164 = scmp.lt.s32.totalorder %s15, 1
      %s165 = scalar_select %p164, %s15, 1
      %s166 = smul.addr %s165, 2
      %s167 = scalar_lea.vmem %s3, %s166
      %p168 = scmp.lt.s32.totalorder %s15, 1
      %s169 = scalar_select %p168, %s15, 1
      %s170 = smul.addr %s169, 54
      %s171 = smul.addr %s170, 4
      %s172 = scalar_lea.vmem %s0, %s171
      %p173 = scmp.lt.s32.totalorder %s15, 1
      %s174 = scalar_select %p173, %s15, 1
      %s175 = smul.addr %s174, 32
      %s176 = smul.addr %s175, 8
      %s177 = scalar_lea.vmem %s2, %s176
      %p178 = scmp.lt.s32.totalorder %s15, 1
      %s179 = scalar_select %p178, %s15, 1
      %s180 = smul.addr %s179, 2
      %s181 = scalar_lea.vmem %s3, %s180
      %v183 = vld [vmem:[%s172] sm:$0xf]
      %v184 = vld [vmem:[%s172 + $0x4] sm:$0xf]
      %v185 = vld [vmem:[%s172 + $0xc] sm:$0xf]
      %v186 = vld [vmem:[%s172 + $0x10] sm:$0xf]
      %v187 = vld [vmem:[%s172 + $0x18] sm:$0xf]
      %v188 = vld [vmem:[%s172 + $0x1c] sm:$0xf]
      %v189 = vld [vmem:[%s172 + $0x24] sm:$0xf]
      %v190 = vld [vmem:[%s172 + $0x28] sm:$0xf]
      %v191 = vld [vmem:[%s172 + $0x30] sm:$0xf]
      %v192 = vld [vmem:[%s172 + $0x34] sm:$0xf]
      %v193 = vld [vmem:[%s172 + $0x3c] sm:$0xf]
      %v194 = vld [vmem:[%s172 + $0x40] sm:$0xf]
      %v195 = vld [vmem:[%s172 + $0x48] sm:$0xf]
      %v196 = vld [vmem:[%s172 + $0x4c] sm:$0xf]
      %v197 = vld [vmem:[%s172 + $0x54] sm:$0xf]
      %v198 = vld [vmem:[%s172 + $0x58] sm:$0xf]
      %v199 = vld [vmem:[%s172 + $0x60] sm:$0xf]
      %v200 = vld [vmem:[%s172 + $0x64] sm:$0xf]
      %v201 = vld [vmem:[%s172 + $0x6c] sm:$0xf]
      %v202 = vld [vmem:[%s172 + $0x70] sm:$0xf]
      %v203 = vld [vmem:[%s172 + $0x78] sm:$0xf]
      %v204 = vld [vmem:[%s172 + $0x7c] sm:$0xf]
      %v205 = vld [vmem:[%s172 + $0x84] sm:$0xf]
      %v206 = vld [vmem:[%s172 + $0x88] sm:$0xf]
      %v207 = vld [vmem:[%s172 + $0x90] sm:$0xf]
      %v208 = vld [vmem:[%s172 + $0x94] sm:$0xf]
      %v209 = vld [vmem:[%s172 + $0x9c] sm:$0xf]
      %v210 = vld [vmem:[%s172 + $0xa0] sm:$0xf]
      %v211 = vld [vmem:[%s172 + $0xa8] sm:$0xf]
      %v212 = vld [vmem:[%s172 + $0xac] sm:$0xf]
      %v213 = vld [vmem:[%s172 + $0xb4] sm:$0xf]
      %v214 = vld [vmem:[%s172 + $0xb8] sm:$0xf]
      %v215 = vld [vmem:[%s1] sm:$0xf]
      %v216 = vld [vmem:[%s172 + $0x8] sm:$0x1]
      %v217 = vld [vmem:[%s172 + $0x14] sm:$0x1]
      %v218 = vld [vmem:[%s172 + $0x20] sm:$0x1]
      %v219 = vld [vmem:[%s172 + $0x2c] sm:$0x1]
      %v220 = vld [vmem:[%s172 + $0x38] sm:$0x1]
      %v221 = vld [vmem:[%s172 + $0x44] sm:$0x1]
      %v222 = vld [vmem:[%s172 + $0x50] sm:$0x1]
      %v223 = vld [vmem:[%s172 + $0x5c] sm:$0x1]
      %v224 = vld [vmem:[%s172 + $0x68] sm:$0x1]
      %v225 = vld [vmem:[%s172 + $0x74] sm:$0x1]
      %v226 = vld [vmem:[%s172 + $0x80] sm:$0x1]
      %v227 = vld [vmem:[%s172 + $0x8c] sm:$0x1]
      %v228 = vld [vmem:[%s172 + $0x98] sm:$0x1]
      %v229 = vld [vmem:[%s172 + $0xa4] sm:$0x1]
      %v230 = vld [vmem:[%s172 + $0xb0] sm:$0x1]
      %v231 = vld [vmem:[%s172 + $0xbc] sm:$0x1]
      %vm232 = vsmask.f32 3328
      %vm233 = vsmask.f32 7440
      %vm234 = vmor %vm232, %vm233
      %v236 = vshrl.u32 %v183, 16
      %v238 = vrot.slane %v236, 4
      %v239 = vshll.u32 %v183, 16
      %v241 = vrot.slane %v239, 5
      %v242 = vor.u32 %v238, %v241
      %v243 = vrot.slane %v242, 4
      %v245 = vshll.u32 %v184, 16
      %v247 = vrot.slane %v245, 5
      %v248 = vsel %vm234, %v243, %v247
      %v249 = vshrl.u32 %v184, 16
      %v251 = vrot.slane %v249, 4
      %v252 = vor.u32 %v251, %v247
      %v253 = vrot.slane %v252, 4
      %v255 = vshll.u32 %v216, 16
      %v257 = vrot.slane %v255, 5
      %v258 = vsel %vm234, %v253, %v257
      %v260 = vshrl.u32 %v185, 16
      %v262 = vrot.slane %v260, 4
      %v263 = vshll.u32 %v185, 16
      %v265 = vrot.slane %v263, 5
      %v266 = vor.u32 %v262, %v265
      %v267 = vrot.slane %v266, 4
      %v269 = vshll.u32 %v186, 16
      %v271 = vrot.slane %v269, 5
      %v272 = vsel %vm234, %v267, %v271
      %v273 = vshrl.u32 %v186, 16
      %v275 = vrot.slane %v273, 4
      %v276 = vor.u32 %v275, %v271
      %v277 = vrot.slane %v276, 4
      %v279 = vshll.u32 %v217, 16
      %v281 = vrot.slane %v279, 5
      %v282 = vsel %vm234, %v277, %v281
      %v284 = vshrl.u32 %v187, 16
      %v286 = vrot.slane %v284, 4
      %v287 = vshll.u32 %v187, 16
      %v289 = vrot.slane %v287, 5
      %v290 = vor.u32 %v286, %v289
      %v291 = vrot.slane %v290, 4
      %v293 = vshll.u32 %v188, 16
      %v295 = vrot.slane %v293, 5
      %v296 = vsel %vm234, %v291, %v295
      %v297 = vshrl.u32 %v188, 16
      %v299 = vrot.slane %v297, 4
      %v300 = vor.u32 %v299, %v295
      %v301 = vrot.slane %v300, 4
      %v303 = vshll.u32 %v218, 16
      %v305 = vrot.slane %v303, 5
      %v306 = vsel %vm234, %v301, %v305
      %v308 = vshrl.u32 %v189, 16
      %v310 = vrot.slane %v308, 4
      %v311 = vshll.u32 %v189, 16
      %v313 = vrot.slane %v311, 5
      %v314 = vor.u32 %v310, %v313
      %v315 = vrot.slane %v314, 4
      %v317 = vshll.u32 %v190, 16
      %v319 = vrot.slane %v317, 5
      %v320 = vsel %vm234, %v315, %v319
      %v321 = vshrl.u32 %v190, 16
      %v323 = vrot.slane %v321, 4
      %v324 = vor.u32 %v323, %v319
      %v325 = vrot.slane %v324, 4
      %v327 = vshll.u32 %v219, 16
      %v329 = vrot.slane %v327, 5
      %v330 = vsel %vm234, %v325, %v329
      %v332 = vshrl.u32 %v191, 16
      %v334 = vrot.slane %v332, 4
      %v335 = vshll.u32 %v191, 16
      %v337 = vrot.slane %v335, 5
      %v338 = vor.u32 %v334, %v337
      %v339 = vrot.slane %v338, 4
      %v341 = vshll.u32 %v192, 16
      %v343 = vrot.slane %v341, 5
      %v344 = vsel %vm234, %v339, %v343
      %v345 = vshrl.u32 %v192, 16
      %v347 = vrot.slane %v345, 4
      %v348 = vor.u32 %v347, %v343
      %v349 = vrot.slane %v348, 4
      %v351 = vshll.u32 %v220, 16
      %v353 = vrot.slane %v351, 5
      %v354 = vsel %vm234, %v349, %v353
      %v356 = vshrl.u32 %v193, 16
      %v358 = vrot.slane %v356, 4
      %v359 = vshll.u32 %v193, 16
      %v361 = vrot.slane %v359, 5
      %v362 = vor.u32 %v358, %v361
      %v363 = vrot.slane %v362, 4
      %v365 = vshll.u32 %v194, 16
      %v367 = vrot.slane %v365, 5
      %v368 = vsel %vm234, %v363, %v367
      %v369 = vshrl.u32 %v194, 16
      %v371 = vrot.slane %v369, 4
      %v372 = vor.u32 %v371, %v367
      %v373 = vrot.slane %v372, 4
      %v375 = vshll.u32 %v221, 16
      %v377 = vrot.slane %v375, 5
      %v378 = vsel %vm234, %v373, %v377
      %v380 = vshrl.u32 %v195, 16
      %v382 = vrot.slane %v380, 4
      %v383 = vshll.u32 %v195, 16
      %v385 = vrot.slane %v383, 5
      %v386 = vor.u32 %v382, %v385
      %v387 = vrot.slane %v386, 4
      %v389 = vshll.u32 %v196, 16
      %v391 = vrot.slane %v389, 5
      %v392 = vsel %vm234, %v387, %v391
      %v393 = vshrl.u32 %v196, 16
      %v395 = vrot.slane %v393, 4
      %v396 = vor.u32 %v395, %v391
      %v397 = vrot.slane %v396, 4
      %v399 = vshll.u32 %v222, 16
      %v401 = vrot.slane %v399, 5
      %v402 = vsel %vm234, %v397, %v401
      %v404 = vshrl.u32 %v197, 16
      %v406 = vrot.slane %v404, 4
      %v407 = vshll.u32 %v197, 16
      %v409 = vrot.slane %v407, 5
      %v410 = vor.u32 %v406, %v409
      %v411 = vrot.slane %v410, 4
      %v413 = vshll.u32 %v198, 16
      %v415 = vrot.slane %v413, 5
      %v416 = vsel %vm234, %v411, %v415
      %v417 = vshrl.u32 %v198, 16
      %v419 = vrot.slane %v417, 4
      %v420 = vor.u32 %v419, %v415
      %v421 = vrot.slane %v420, 4
      %v423 = vshll.u32 %v223, 16
      %v425 = vrot.slane %v423, 5
      %v426 = vsel %vm234, %v421, %v425
      %v428 = vshrl.u32 %v199, 16
      %v430 = vrot.slane %v428, 4
      %v431 = vshll.u32 %v199, 16
      %v433 = vrot.slane %v431, 5
      %v434 = vor.u32 %v430, %v433
      %v435 = vrot.slane %v434, 4
      %v437 = vshll.u32 %v200, 16
      %v439 = vrot.slane %v437, 5
      %v440 = vsel %vm234, %v435, %v439
      %v441 = vshrl.u32 %v200, 16
      %v443 = vrot.slane %v441, 4
      %v444 = vor.u32 %v443, %v439
      %v445 = vrot.slane %v444, 4
      %v447 = vshll.u32 %v224, 16
      %v449 = vrot.slane %v447, 5
      %v450 = vsel %vm234, %v445, %v449
      %v452 = vshrl.u32 %v201, 16
      %v454 = vrot.slane %v452, 4
      %v455 = vshll.u32 %v201, 16
      %v457 = vrot.slane %v455, 5
      %v458 = vor.u32 %v454, %v457
      %v459 = vrot.slane %v458, 4
      %v461 = vshll.u32 %v202, 16
      %v463 = vrot.slane %v461, 5
      %v464 = vsel %vm234, %v459, %v463
      %v465 = vshrl.u32 %v202, 16
      %v467 = vrot.slane %v465, 4
      %v468 = vor.u32 %v467, %v463
      %v469 = vrot.slane %v468, 4
      %v471 = vshll.u32 %v225, 16
      %v473 = vrot.slane %v471, 5
      %v474 = vsel %vm234, %v469, %v473
      %v476 = vshrl.u32 %v203, 16
      %v478 = vrot.slane %v476, 4
      %v479 = vshll.u32 %v203, 16
      %v481 = vrot.slane %v479, 5
      %v482 = vor.u32 %v478, %v481
      %v483 = vrot.slane %v482, 4
      %v485 = vshll.u32 %v204, 16
      %v487 = vrot.slane %v485, 5
      %v488 = vsel %vm234, %v483, %v487
      %v489 = vshrl.u32 %v204, 16
      %v491 = vrot.slane %v489, 4
      %v492 = vor.u32 %v491, %v487
      %v493 = vrot.slane %v492, 4
      %v495 = vshll.u32 %v226, 16
      %v497 = vrot.slane %v495, 5
      %v498 = vsel %vm234, %v493, %v497
      %v500 = vshrl.u32 %v205, 16
      %v502 = vrot.slane %v500, 4
      %v503 = vshll.u32 %v205, 16
      %v505 = vrot.slane %v503, 5
      %v506 = vor.u32 %v502, %v505
      %v507 = vrot.slane %v506, 4
      %v509 = vshll.u32 %v206, 16
      %v511 = vrot.slane %v509, 5
      %v512 = vsel %vm234, %v507, %v511
      %v513 = vshrl.u32 %v206, 16
      %v515 = vrot.slane %v513, 4
      %v516 = vor.u32 %v515, %v511
      %v517 = vrot.slane %v516, 4
      %v519 = vshll.u32 %v227, 16
      %v521 = vrot.slane %v519, 5
      %v522 = vsel %vm234, %v517, %v521
      %v524 = vshrl.u32 %v207, 16
      %v526 = vrot.slane %v524, 4
      %v527 = vshll.u32 %v207, 16
      %v529 = vrot.slane %v527, 5
      %v530 = vor.u32 %v526, %v529
      %v531 = vrot.slane %v530, 4
      %v533 = vshll.u32 %v208, 16
      %v535 = vrot.slane %v533, 5
      %v536 = vsel %vm234, %v531, %v535
      %v537 = vshrl.u32 %v208, 16
      %v539 = vrot.slane %v537, 4
      %v540 = vor.u32 %v539, %v535
      %v541 = vrot.slane %v540, 4
      %v543 = vshll.u32 %v228, 16
      %v545 = vrot.slane %v543, 5
      %v546 = vsel %vm234, %v541, %v545
      %v548 = vshrl.u32 %v209, 16
      %v550 = vrot.slane %v548, 4
      %v551 = vshll.u32 %v209, 16
      %v553 = vrot.slane %v551, 5
      %v554 = vor.u32 %v550, %v553
      %v555 = vrot.slane %v554, 4
      %v557 = vshll.u32 %v210, 16
      %v559 = vrot.slane %v557, 5
      %v560 = vsel %vm234, %v555, %v559
      %v561 = vshrl.u32 %v210, 16
      %v563 = vrot.slane %v561, 4
      %v564 = vor.u32 %v563, %v559
      %v565 = vrot.slane %v564, 4
      %v567 = vshll.u32 %v229, 16
      %v569 = vrot.slane %v567, 5
      %v570 = vsel %vm234, %v565, %v569
      %v572 = vshrl.u32 %v211, 16
      %v574 = vrot.slane %v572, 4
      %v575 = vshll.u32 %v211, 16
      %v577 = vrot.slane %v575, 5
      %v578 = vor.u32 %v574, %v577
      %v579 = vrot.slane %v578, 4
      %v581 = vshll.u32 %v212, 16
      %v583 = vrot.slane %v581, 5
      %v584 = vsel %vm234, %v579, %v583
      %v585 = vshrl.u32 %v212, 16
      %v587 = vrot.slane %v585, 4
      %v588 = vor.u32 %v587, %v583
      %v589 = vrot.slane %v588, 4
      %v591 = vshll.u32 %v230, 16
      %v593 = vrot.slane %v591, 5
      %v594 = vsel %vm234, %v589, %v593
      %v596 = vshrl.u32 %v213, 16
      %v598 = vrot.slane %v596, 4
      %v599 = vshll.u32 %v213, 16
      %v601 = vrot.slane %v599, 5
      %v602 = vor.u32 %v598, %v601
      %v603 = vrot.slane %v602, 4
      %v605 = vshll.u32 %v214, 16
      %v607 = vrot.slane %v605, 5
      %v608 = vsel %vm234, %v603, %v607
      %v609 = vshrl.u32 %v214, 16
      %v611 = vrot.slane %v609, 4
      %v612 = vor.u32 %v611, %v607
      %v613 = vrot.slane %v612, 4
      %v615 = vshll.u32 %v231, 16
      %v617 = vrot.slane %v615, 5
      %v618 = vsel %vm234, %v613, %v617
      %s619 = scalar_lea.vmem %s1, 4
      %v620 = vld [vmem:[%s619] sm:$0xf]
      %v621 = vunpack.c.l.b16 %v248
      %v622 = vunpack.c.l.b16 %v258
      %v623 = vunpack.c.l.b16 %v272
      %v624 = vunpack.c.l.b16 %v282
      %v625 = vunpack.c.l.b16 %v296
      %v626 = vunpack.c.l.b16 %v306
      %v627 = vunpack.c.l.b16 %v320
      %v628 = vunpack.c.l.b16 %v330
      %v629 = vunpack.c.l.b16 %v344
      %v630 = vunpack.c.l.b16 %v354
      %v631 = vunpack.c.l.b16 %v368
      %v632 = vunpack.c.l.b16 %v378
      %v633 = vunpack.c.l.b16 %v392
      %v634 = vunpack.c.l.b16 %v402
      %v635 = vunpack.c.l.b16 %v416
      %v636 = vunpack.c.l.b16 %v426
      %v637 = vunpack.c.l.b16 %v440
      %v638 = vunpack.c.l.b16 %v450
      %v639 = vunpack.c.l.b16 %v464
      %v640 = vunpack.c.l.b16 %v474
      %v641 = vunpack.c.l.b16 %v488
      %v642 = vunpack.c.l.b16 %v498
      %v643 = vunpack.c.l.b16 %v512
      %v644 = vunpack.c.l.b16 %v522
      %v645 = vunpack.c.l.b16 %v536
      %v646 = vunpack.c.l.b16 %v546
      %v647 = vunpack.c.l.b16 %v560
      %v648 = vunpack.c.l.b16 %v570
      %v649 = vunpack.c.l.b16 %v584
      %v650 = vunpack.c.l.b16 %v594
      %v651 = vunpack.c.l.b16 %v608
      %v652 = vunpack.c.l.b16 %v618
      %v653 = vpack.c.b16 %v622, %v621
      %v654 = vpack.c.b16 %v624, %v623
      %v655 = vpack.c.b16 %v626, %v625
      %v656 = vpack.c.b16 %v628, %v627
      %v657 = vpack.c.b16 %v630, %v629
      %v658 = vpack.c.b16 %v632, %v631
      %v659 = vpack.c.b16 %v634, %v633
      %v660 = vpack.c.b16 %v636, %v635
      %v661 = vpack.c.b16 %v638, %v637
      %v662 = vpack.c.b16 %v640, %v639
      %v663 = vpack.c.b16 %v642, %v641
      %v664 = vpack.c.b16 %v644, %v643
      %v665 = vpack.c.b16 %v646, %v645
      %v666 = vpack.c.b16 %v648, %v647
      %v667 = vpack.c.b16 %v650, %v649
      %v668 = vpack.c.b16 %v652, %v651
      %vm669 = vcmask 64512
      %v671 = vsel %vm669, %v653, 0
      %v674 = vsel %vm669, %v654, 0
      %v677 = vsel %vm669, %v655, 0
      %v680 = vsel %vm669, %v656, 0
      %v683 = vsel %vm669, %v657, 0
      %v686 = vsel %vm669, %v658, 0
      %v689 = vsel %vm669, %v659, 0
      %v692 = vsel %vm669, %v660, 0
      %v695 = vsel %vm669, %v661, 0
      %v698 = vsel %vm669, %v662, 0
      %v701 = vsel %vm669, %v663, 0
      %v704 = vsel %vm669, %v664, 0
      %v707 = vsel %vm669, %v665, 0
      %v710 = vsel %vm669, %v666, 0
      %v713 = vsel %vm669, %v667, 0
      %v716 = vsel %vm669, %v668, 0
      %vm718 = vcmask 1043456
      %v720 = vsel %vm718, %v620, 0
      %722 = vmatprep.subr.bf16.mxu0 0
      %723 = vmatpush1.bf16.msra.mxu0 %v720
      %724 = vmatprep.subr.bf16.mxu0 0
      %725 = vmatpush1.bf16.msra.mxu0 0
      %726 = vmatprep.subr.bf16.mxu0 0
      %727 = vmatpush1.bf16.msra.mxu0 0
      %728 = vmatprep.subr.bf16.mxu0 0
      %729 = vmatpush1.bf16.msra.mxu0 0
      %730 = vmatprep.subr.bf16.mxu0 0
      %731 = vmatpush1.bf16.msra.mxu0 0
      %732 = vmatprep.subr.bf16.mxu0 0
      %733 = vmatpush1.bf16.msra.mxu0 0
      %734 = vmatprep.subr.bf16.mxu0 0
      %735 = vmatpush1.bf16.msra.mxu0 0
      %736 = vmatprep.subr.bf16.mxu0 0
      %737 = vmatpush1.bf16.msra.mxu0 0
      %738 = vmatprep.subr.bf16.mxu0 0
      %739 = vmatpush1.bf16.msra.mxu0 0
      %740 = vmatprep.subr.bf16.mxu0 0
      %741 = vmatpush1.bf16.msra.mxu0 0
      %742 = vmatprep.subr.bf16.mxu0 0
      %743 = vmatpush1.bf16.msra.mxu0 0
      %744 = vmatprep.subr.bf16.mxu0 0
      %745 = vmatpush1.bf16.msra.mxu0 0
      %746 = vmatprep.subr.bf16.mxu0 0
      %747 = vmatpush1.bf16.msra.mxu0 0
      %748 = vmatprep.subr.bf16.mxu0 0
      %749 = vmatpush1.bf16.msra.mxu0 0
      %750 = vmatprep.subr.bf16.mxu0 0
      %751 = vmatpush1.bf16.msra.mxu0 0
      %752 = vmatprep.subr.bf16.mxu0 0
      %753 = vmatpush1.bf16.msra.mxu0 0
      %754 = vmatprep.mubr.bf16.mxu0 0
      %755 = vmatmul.mubr.bf16.gmra.mrb[0].mxu0 %v671
      %v756 = vpop.f32.mrb[0].mxu0
      %v757 = vadd.f32 0.0, %v756
      %v758 = vpop.f32.mrb[0].mxu0
      %v759 = vpop.f32.mrb[0].mxu0
      %v760 = vadd.f32 0.0, %v759
      %v761 = vpop.f32.mrb[0].mxu0
      %762 = vmatprep.mubr.bf16.mxu0 0
      %763 = vmatmul.mubr.bf16.gmra.mrb[0].mxu0 %v674
      %v764 = vpop.f32.mrb[0].mxu0
      %v765 = vadd.f32 0.0, %v764
      %v766 = vpop.f32.mrb[0].mxu0
      %v767 = vpop.f32.mrb[0].mxu0
      %v768 = vadd.f32 0.0, %v767
      %v769 = vpop.f32.mrb[0].mxu0
      %770 = vmatprep.mubr.bf16.mxu0 0
      %771 = vmatmul.mubr.bf16.gmra.mrb[0].mxu0 %v677
      %v772 = vpop.f32.mrb[0].mxu0
      %v773 = vadd.f32 0.0, %v772
      %v774 = vpop.f32.mrb[0].mxu0
      %v775 = vpop.f32.mrb[0].mxu0
      %v776 = vadd.f32 0.0, %v775
      %v777 = vpop.f32.mrb[0].mxu0
      %778 = vmatprep.mubr.bf16.mxu0 0
      %779 = vmatmul.mubr.bf16.gmra.mrb[0].mxu0 %v680
      %v780 = vpop.f32.mrb[0].mxu0
      %v781 = vadd.f32 0.0, %v780
      %v782 = vpop.f32.mrb[0].mxu0
      %v783 = vpop.f32.mrb[0].mxu0
      %v784 = vadd.f32 0.0, %v783
      %v785 = vpop.f32.mrb[0].mxu0
      %786 = vmatprep.mubr.bf16.mxu0 0
      %787 = vmatmul.mubr.bf16.gmra.mrb[0].mxu0 %v683
      %v788 = vpop.f32.mrb[0].mxu0
      %v789 = vadd.f32 0.0, %v788
      %v790 = vpop.f32.mrb[0].mxu0
      %v791 = vpop.f32.mrb[0].mxu0
      %v792 = vadd.f32 0.0, %v791
      %v793 = vpop.f32.mrb[0].mxu0
      %794 = vmatprep.mubr.bf16.mxu0 0
      %795 = vmatmul.mubr.bf16.gmra.mrb[0].mxu0 %v686
      %v796 = vpop.f32.mrb[0].mxu0
      %v797 = vadd.f32 0.0, %v796
      %v798 = vpop.f32.mrb[0].mxu0
      %v799 = vpop.f32.mrb[0].mxu0
      %v800 = vadd.f32 0.0, %v799
      %v801 = vpop.f32.mrb[0].mxu0
      %802 = vmatprep.mubr.bf16.mxu0 0
      %803 = vmatmul.mubr.bf16.gmra.mrb[0].mxu0 %v689
      %v804 = vpop.f32.mrb[0].mxu0
      %v805 = vadd.f32 0.0, %v804
      %v806 = vpop.f32.mrb[0].mxu0
      %v807 = vpop.f32.mrb[0].mxu0
      %v808 = vadd.f32 0.0, %v807
      %v809 = vpop.f32.mrb[0].mxu0
      %810 = vmatprep.mubr.bf16.mxu0 0
      %811 = vmatmul.mubr.bf16.gmra.mrb[0].mxu0 %v692
      %v812 = vpop.f32.mrb[0].mxu0
      %v813 = vadd.f32 0.0, %v812
      %v814 = vpop.f32.mrb[0].mxu0
      %v815 = vpop.f32.mrb[0].mxu0
      %v816 = vadd.f32 0.0, %v815
      %v817 = vpop.f32.mrb[0].mxu0
      %818 = vmatprep.mubr.bf16.mxu0 0
      %819 = vmatmul.mubr.bf16.gmra.mrb[0].mxu0 %v695
      %v820 = vpop.f32.mrb[0].mxu0
      %v821 = vadd.f32 0.0, %v820
      %v822 = vpop.f32.mrb[0].mxu0
      %v823 = vpop.f32.mrb[0].mxu0
      %v824 = vadd.f32 0.0, %v823
      %v825 = vpop.f32.mrb[0].mxu0
      %826 = vmatprep.mubr.bf16.mxu0 0
      %827 = vmatmul.mubr.bf16.gmra.mrb[0].mxu0 %v698
      %v828 = vpop.f32.mrb[0].mxu0
      %v829 = vadd.f32 0.0, %v828
      %v830 = vpop.f32.mrb[0].mxu0
      %v831 = vpop.f32.mrb[0].mxu0
      %v832 = vadd.f32 0.0, %v831
      %v833 = vpop.f32.mrb[0].mxu0
      %834 = vmatprep.mubr.bf16.mxu0 0
      %835 = vmatmul.mubr.bf16.gmra.mrb[0].mxu0 %v701
      %v836 = vpop.f32.mrb[0].mxu0
      %v837 = vadd.f32 0.0, %v836
      %v838 = vpop.f32.mrb[0].mxu0
      %v839 = vpop.f32.mrb[0].mxu0
      %v840 = vadd.f32 0.0, %v839
      %v841 = vpop.f32.mrb[0].mxu0
      %842 = vmatprep.mubr.bf16.mxu0 0
      %843 = vmatmul.mubr.bf16.gmra.mrb[0].mxu0 %v704
      %v844 = vpop.f32.mrb[0].mxu0
      %v845 = vadd.f32 0.0, %v844
      %v846 = vpop.f32.mrb[0].mxu0
      %v847 = vpop.f32.mrb[0].mxu0
      %v848 = vadd.f32 0.0, %v847
      %v849 = vpop.f32.mrb[0].mxu0
      %850 = vmatprep.mubr.bf16.mxu0 0
      %851 = vmatmul.mubr.bf16.gmra.mrb[0].mxu0 %v707
      %v852 = vpop.f32.mrb[0].mxu0
      %v853 = vadd.f32 0.0, %v852
      %v854 = vpop.f32.mrb[0].mxu0
      %v855 = vpop.f32.mrb[0].mxu0
      %v856 = vadd.f32 0.0, %v855
      %v857 = vpop.f32.mrb[0].mxu0
      %858 = vmatprep.mubr.bf16.mxu0 0
      %859 = vmatmul.mubr.bf16.gmra.mrb[0].mxu0 %v710
      %v860 = vpop.f32.mrb[0].mxu0
      %v861 = vadd.f32 0.0, %v860
      %v862 = vpop.f32.mrb[0].mxu0
      %v863 = vpop.f32.mrb[0].mxu0
      %v864 = vadd.f32 0.0, %v863
      %v865 = vpop.f32.mrb[0].mxu0
      %866 = vmatprep.mubr.bf16.mxu0 0
      %867 = vmatmul.mubr.bf16.gmra.mrb[0].mxu0 %v713
      %v868 = vpop.f32.mrb[0].mxu0
      %v869 = vadd.f32 0.0, %v868
      %v870 = vpop.f32.mrb[0].mxu0
      %v871 = vpop.f32.mrb[0].mxu0
      %v872 = vadd.f32 0.0, %v871
      %v873 = vpop.f32.mrb[0].mxu0
      %874 = vmatprep.mubr.bf16.mxu0 0
      %875 = vmatmul.mubr.bf16.gmra.mrb[0].mxu0 %v716
      %v876 = vpop.f32.mrb[0].mxu0
      %v877 = vadd.f32 0.0, %v876
      %v878 = vpop.f32.mrb[0].mxu0
      %v879 = vpop.f32.mrb[0].mxu0
      %v880 = vadd.f32 0.0, %v879
      %v881 = vpop.f32.mrb[0].mxu0
      %882 = vdwg.mxu0
      %v915 = vunpack.c.l.b16 %v183
      %v916 = vunpack.c.l.b16 %v184
      %v917 = vunpack.c.l.b16 %v185
      %v918 = vunpack.c.l.b16 %v186
      %v919 = vunpack.c.l.b16 %v187
      %v920 = vunpack.c.l.b16 %v188
      %v921 = vunpack.c.l.b16 %v189
      %v922 = vunpack.c.l.b16 %v190
      %v923 = vunpack.c.l.b16 %v191
      %v924 = vunpack.c.l.b16 %v192
      %v925 = vunpack.c.l.b16 %v193
      %v926 = vunpack.c.l.b16 %v194
      %v927 = vunpack.c.l.b16 %v195
      %v928 = vunpack.c.l.b16 %v196
      %v929 = vunpack.c.l.b16 %v197
      %v930 = vunpack.c.l.b16 %v198
      %v931 = vunpack.c.l.b16 %v199
      %v932 = vunpack.c.l.b16 %v200
      %v933 = vunpack.c.l.b16 %v201
      %v934 = vunpack.c.l.b16 %v202
      %v935 = vunpack.c.l.b16 %v203
      %v936 = vunpack.c.l.b16 %v204
      %v937 = vunpack.c.l.b16 %v205
      %v938 = vunpack.c.l.b16 %v206
      %v939 = vunpack.c.l.b16 %v207
      %v940 = vunpack.c.l.b16 %v208
      %v941 = vunpack.c.l.b16 %v209
      %v942 = vunpack.c.l.b16 %v210
      %v943 = vunpack.c.l.b16 %v211
      %v944 = vunpack.c.l.b16 %v212
      %v945 = vunpack.c.l.b16 %v213
      %v946 = vunpack.c.l.b16 %v214
      %v947 = vpack.c.b16 %v916, %v915
      %v948 = vpack.c.b16 %v918, %v917
      %v949 = vpack.c.b16 %v920, %v919
      %v950 = vpack.c.b16 %v922, %v921
      %v951 = vpack.c.b16 %v924, %v923
      %v952 = vpack.c.b16 %v926, %v925
      %v953 = vpack.c.b16 %v928, %v927
      %v954 = vpack.c.b16 %v930, %v929
      %v955 = vpack.c.b16 %v932, %v931
      %v956 = vpack.c.b16 %v934, %v933
      %v957 = vpack.c.b16 %v936, %v935
      %v958 = vpack.c.b16 %v938, %v937
      %v959 = vpack.c.b16 %v940, %v939
      %v960 = vpack.c.b16 %v942, %v941
      %v961 = vpack.c.b16 %v944, %v943
      %v962 = vpack.c.b16 %v946, %v945
      %v964 = vsel %vm669, %v947, 0
      %v967 = vsel %vm669, %v948, 0
      %v970 = vsel %vm669, %v949, 0
      %v973 = vsel %vm669, %v950, 0
      %v976 = vsel %vm669, %v951, 0
      %v979 = vsel %vm669, %v952, 0
      %v982 = vsel %vm669, %v953, 0
      %v985 = vsel %vm669, %v954, 0
      %v988 = vsel %vm669, %v955, 0
      %v991 = vsel %vm669, %v956, 0
      %v994 = vsel %vm669, %v957, 0
      %v997 = vsel %vm669, %v958, 0
      %v1000 = vsel %vm669, %v959, 0
      %v1003 = vsel %vm669, %v960, 0
      %v1006 = vsel %vm669, %v961, 0
      %v1009 = vsel %vm669, %v962, 0
      %v1012 = vsel %vm718, %v215, 0
      %1014 = vmatprep.subr.bf16.mxu0 0
      %1015 = vmatpush1.bf16.msra.mxu0 %v1012
      %1016 = vmatprep.subr.bf16.mxu0 0
      %1017 = vmatpush1.bf16.msra.mxu0 0
      %1018 = vmatprep.subr.bf16.mxu0 0
      %1019 = vmatpush1.bf16.msra.mxu0 0
      %1020 = vmatprep.subr.bf16.mxu0 0
      %1021 = vmatpush1.bf16.msra.mxu0 0
      %1022 = vmatprep.subr.bf16.mxu0 0
      %1023 = vmatpush1.bf16.msra.mxu0 0
      %1024 = vmatprep.subr.bf16.mxu0 0
      %1025 = vmatpush1.bf16.msra.mxu0 0
      %1026 = vmatprep.subr.bf16.mxu0 0
      %1027 = vmatpush1.bf16.msra.mxu0 0
      %1028 = vmatprep.subr.bf16.mxu0 0
      %1029 = vmatpush1.bf16.msra.mxu0 0
      %1030 = vmatprep.subr.bf16.mxu0 0
      %1031 = vmatpush1.bf16.msra.mxu0 0
      %1032 = vmatprep.subr.bf16.mxu0 0
      %1033 = vmatpush1.bf16.msra.mxu0 0
      %1034 = vmatprep.subr.bf16.mxu0 0
      %1035 = vmatpush1.bf16.msra.mxu0 0
      %1036 = vmatprep.subr.bf16.mxu0 0
      %1037 = vmatpush1.bf16.msra.mxu0 0
      %1038 = vmatprep.subr.bf16.mxu0 0
      %1039 = vmatpush1.bf16.msra.mxu0 0
      %1040 = vmatprep.subr.bf16.mxu0 0
      %1041 = vmatpush1.bf16.msra.mxu0 0
      %1042 = vmatprep.subr.bf16.mxu0 0
      %1043 = vmatpush1.bf16.msra.mxu0 0
      %1044 = vmatprep.subr.bf16.mxu0 0
      %1045 = vmatpush1.bf16.msra.mxu0 0
      %1046 = vmatprep.mubr.bf16.mxu0 0
      %1047 = vmatmul.mubr.bf16.gmra.mrb[0].mxu0 %v964
      %v1048 = vpop.f32.mrb[0].mxu0
      %v1049 = vadd.f32 %v757, %v1048
      %v1050 = vpop.f32.mrb[0].mxu0
      %v1051 = vpop.f32.mrb[0].mxu0
      %v1052 = vadd.f32 %v760, %v1051
      %v1053 = vpop.f32.mrb[0].mxu0
      %1054 = vmatprep.mubr.bf16.mxu0 0
      %1055 = vmatmul.mubr.bf16.gmra.mrb[0].mxu0 %v967
      %v1056 = vpop.f32.mrb[0].mxu0
      %v1057 = vadd.f32 %v765, %v1056
      %v1058 = vpop.f32.mrb[0].mxu0
      %v1059 = vpop.f32.mrb[0].mxu0
      %v1060 = vadd.f32 %v768, %v1059
      %v1061 = vpop.f32.mrb[0].mxu0
      %1062 = vmatprep.mubr.bf16.mxu0 0
      %1063 = vmatmul.mubr.bf16.gmra.mrb[0].mxu0 %v970
      %v1064 = vpop.f32.mrb[0].mxu0
      %v1065 = vadd.f32 %v773, %v1064
      %v1066 = vpop.f32.mrb[0].mxu0
      %v1067 = vpop.f32.mrb[0].mxu0
      %v1068 = vadd.f32 %v776, %v1067
      %v1069 = vpop.f32.mrb[0].mxu0
      %1070 = vmatprep.mubr.bf16.mxu0 0
      %1071 = vmatmul.mubr.bf16.gmra.mrb[0].mxu0 %v973
      %v1072 = vpop.f32.mrb[0].mxu0
      %v1073 = vadd.f32 %v781, %v1072
      %v1074 = vpop.f32.mrb[0].mxu0
      %v1075 = vpop.f32.mrb[0].mxu0
      %v1076 = vadd.f32 %v784, %v1075
      %v1077 = vpop.f32.mrb[0].mxu0
      %1078 = vmatprep.mubr.bf16.mxu0 0
      %1079 = vmatmul.mubr.bf16.gmra.mrb[0].mxu0 %v976
      %v1080 = vpop.f32.mrb[0].mxu0
      %v1081 = vadd.f32 %v789, %v1080
      %v1082 = vpop.f32.mrb[0].mxu0
      %v1083 = vpop.f32.mrb[0].mxu0
      %v1084 = vadd.f32 %v792, %v1083
      %v1085 = vpop.f32.mrb[0].mxu0
      %1086 = vmatprep.mubr.bf16.mxu0 0
      %1087 = vmatmul.mubr.bf16.gmra.mrb[0].mxu0 %v979
      %v1088 = vpop.f32.mrb[0].mxu0
      %v1089 = vadd.f32 %v797, %v1088
      %v1090 = vpop.f32.mrb[0].mxu0
      %v1091 = vpop.f32.mrb[0].mxu0
      %v1092 = vadd.f32 %v800, %v1091
      %v1093 = vpop.f32.mrb[0].mxu0
      %1094 = vmatprep.mubr.bf16.mxu0 0
      %1095 = vmatmul.mubr.bf16.gmra.mrb[0].mxu0 %v982
      %v1096 = vpop.f32.mrb[0].mxu0
      %v1097 = vadd.f32 %v805, %v1096
      %v1098 = vpop.f32.mrb[0].mxu0
      %v1099 = vpop.f32.mrb[0].mxu0
      %v1100 = vadd.f32 %v808, %v1099
      %v1101 = vpop.f32.mrb[0].mxu0
      %1102 = vmatprep.mubr.bf16.mxu0 0
      %1103 = vmatmul.mubr.bf16.gmra.mrb[0].mxu0 %v985
      %v1104 = vpop.f32.mrb[0].mxu0
      %v1105 = vadd.f32 %v813, %v1104
      %v1106 = vpop.f32.mrb[0].mxu0
      %v1107 = vpop.f32.mrb[0].mxu0
      %v1108 = vadd.f32 %v816, %v1107
      %v1109 = vpop.f32.mrb[0].mxu0
      %1110 = vmatprep.mubr.bf16.mxu0 0
      %1111 = vmatmul.mubr.bf16.gmra.mrb[0].mxu0 %v988
      %v1112 = vpop.f32.mrb[0].mxu0
      %v1113 = vadd.f32 %v821, %v1112
      %v1114 = vpop.f32.mrb[0].mxu0
      %v1115 = vpop.f32.mrb[0].mxu0
      %v1116 = vadd.f32 %v824, %v1115
      %v1117 = vpop.f32.mrb[0].mxu0
      %1118 = vmatprep.mubr.bf16.mxu0 0
      %1119 = vmatmul.mubr.bf16.gmra.mrb[0].mxu0 %v991
      %v1120 = vpop.f32.mrb[0].mxu0
      %v1121 = vadd.f32 %v829, %v1120
      %v1122 = vpop.f32.mrb[0].mxu0
      %v1123 = vpop.f32.mrb[0].mxu0
      %v1124 = vadd.f32 %v832, %v1123
      %v1125 = vpop.f32.mrb[0].mxu0
      %1126 = vmatprep.mubr.bf16.mxu0 0
      %1127 = vmatmul.mubr.bf16.gmra.mrb[0].mxu0 %v994
      %v1128 = vpop.f32.mrb[0].mxu0
      %v1129 = vadd.f32 %v837, %v1128
      %v1130 = vpop.f32.mrb[0].mxu0
      %v1131 = vpop.f32.mrb[0].mxu0
      %v1132 = vadd.f32 %v840, %v1131
      %v1133 = vpop.f32.mrb[0].mxu0
      %1134 = vmatprep.mubr.bf16.mxu0 0
      %1135 = vmatmul.mubr.bf16.gmra.mrb[0].mxu0 %v997
      %v1136 = vpop.f32.mrb[0].mxu0
      %v1137 = vadd.f32 %v845, %v1136
      %v1138 = vpop.f32.mrb[0].mxu0
      %v1139 = vpop.f32.mrb[0].mxu0
      %v1140 = vadd.f32 %v848, %v1139
      %v1141 = vpop.f32.mrb[0].mxu0
      %1142 = vmatprep.mubr.bf16.mxu0 0
      %1143 = vmatmul.mubr.bf16.gmra.mrb[0].mxu0 %v1000
      %v1144 = vpop.f32.mrb[0].mxu0
      %v1145 = vadd.f32 %v853, %v1144
      %v1146 = vpop.f32.mrb[0].mxu0
      %v1147 = vpop.f32.mrb[0].mxu0
      %v1148 = vadd.f32 %v856, %v1147
      %v1149 = vpop.f32.mrb[0].mxu0
      %1150 = vmatprep.mubr.bf16.mxu0 0
      %1151 = vmatmul.mubr.bf16.gmra.mrb[0].mxu0 %v1003
      %v1152 = vpop.f32.mrb[0].mxu0
      %v1153 = vadd.f32 %v861, %v1152
      %v1154 = vpop.f32.mrb[0].mxu0
      %v1155 = vpop.f32.mrb[0].mxu0
      %v1156 = vadd.f32 %v864, %v1155
      %v1157 = vpop.f32.mrb[0].mxu0
      %1158 = vmatprep.mubr.bf16.mxu0 0
      %1159 = vmatmul.mubr.bf16.gmra.mrb[0].mxu0 %v1006
      %v1160 = vpop.f32.mrb[0].mxu0
      %v1161 = vadd.f32 %v869, %v1160
      %v1162 = vpop.f32.mrb[0].mxu0
      %v1163 = vpop.f32.mrb[0].mxu0
      %v1164 = vadd.f32 %v872, %v1163
      %v1165 = vpop.f32.mrb[0].mxu0
      %1166 = vmatprep.mubr.bf16.mxu0 0
      %1167 = vmatmul.mubr.bf16.gmra.mrb[0].mxu0 %v1009
      %v1168 = vpop.f32.mrb[0].mxu0
      %v1169 = vadd.f32 %v877, %v1168
      %v1170 = vpop.f32.mrb[0].mxu0
      %v1171 = vpop.f32.mrb[0].mxu0
      %v1172 = vadd.f32 %v880, %v1171
      %v1173 = vpop.f32.mrb[0].mxu0
      %1174 = vdwg.mxu0
      %v1175 = vld [vmem:[%s172] sm:$0xe]
      %v1176 = vld [vmem:[%s172 + $0xc] sm:$0xe]
      %v1177 = vld [vmem:[%s172 + $0x18] sm:$0xe]
      %v1178 = vld [vmem:[%s172 + $0x24] sm:$0xe]
      %v1179 = vld [vmem:[%s172 + $0x30] sm:$0xe]
      %v1180 = vld [vmem:[%s172 + $0x3c] sm:$0xe]
      %v1181 = vld [vmem:[%s172 + $0x48] sm:$0xe]
      %v1182 = vld [vmem:[%s172 + $0x54] sm:$0xe]
      %v1183 = vld [vmem:[%s172 + $0x60] sm:$0xe]
      %v1184 = vld [vmem:[%s172 + $0x6c] sm:$0xe]
      %v1185 = vld [vmem:[%s172 + $0x78] sm:$0xe]
      %v1186 = vld [vmem:[%s172 + $0x84] sm:$0xe]
      %v1187 = vld [vmem:[%s172 + $0x90] sm:$0xe]
      %v1188 = vld [vmem:[%s172 + $0x9c] sm:$0xe]
      %v1189 = vld [vmem:[%s172 + $0xa8] sm:$0xe]
      %v1190 = vld [vmem:[%s172 + $0xb4] sm:$0xe]
      %vm1223 = vcmask 1042432
      %vm1224 = vcmask 1046532
      %vm1225 = vmor %vm1223, %vm1224
      %v1226 = vrot.slane %v1175, 5
      %v1227 = vrot.slane %v1226, 4
      %v1228 = vrot.slane %v184, 5
      %v1229 = vsel %vm1225, %v1227, %v1228
      %v1230 = vrot.slane %v1228, 4
      %v1231 = vrot.slane %v216, 5
      %v1232 = vsel %vm1225, %v1230, %v1231
      %v1233 = vrot.slane %v1176, 5
      %v1234 = vrot.slane %v1233, 4
      %v1235 = vrot.slane %v186, 5
      %v1236 = vsel %vm1225, %v1234, %v1235
      %v1237 = vrot.slane %v1235, 4
      %v1238 = vrot.slane %v217, 5
      %v1239 = vsel %vm1225, %v1237, %v1238
      %v1240 = vrot.slane %v1177, 5
      %v1241 = vrot.slane %v1240, 4
      %v1242 = vrot.slane %v188, 5
      %v1243 = vsel %vm1225, %v1241, %v1242
      %v1244 = vrot.slane %v1242, 4
      %v1245 = vrot.slane %v218, 5
      %v1246 = vsel %vm1225, %v1244, %v1245
      %v1247 = vrot.slane %v1178, 5
      %v1248 = vrot.slane %v1247, 4
      %v1249 = vrot.slane %v190, 5
      %v1250 = vsel %vm1225, %v1248, %v1249
      %v1251 = vrot.slane %v1249, 4
      %v1252 = vrot.slane %v219, 5
      %v1253 = vsel %vm1225, %v1251, %v1252
      %v1254 = vrot.slane %v1179, 5
      %v1255 = vrot.slane %v1254, 4
      %v1256 = vrot.slane %v192, 5
      %v1257 = vsel %vm1225, %v1255, %v1256
      %v1258 = vrot.slane %v1256, 4
      %v1259 = vrot.slane %v220, 5
      %v1260 = vsel %vm1225, %v1258, %v1259
      %v1261 = vrot.slane %v1180, 5
      %v1262 = vrot.slane %v1261, 4
      %v1263 = vrot.slane %v194, 5
      %v1264 = vsel %vm1225, %v1262, %v1263
      %v1265 = vrot.slane %v1263, 4
      %v1266 = vrot.slane %v221, 5
      %v1267 = vsel %vm1225, %v1265, %v1266
      %v1268 = vrot.slane %v1181, 5
      %v1269 = vrot.slane %v1268, 4
      %v1270 = vrot.slane %v196, 5
      %v1271 = vsel %vm1225, %v1269, %v1270
      %v1272 = vrot.slane %v1270, 4
      %v1273 = vrot.slane %v222, 5
      %v1274 = vsel %vm1225, %v1272, %v1273
      %v1275 = vrot.slane %v1182, 5
      %v1276 = vrot.slane %v1275, 4
      %v1277 = vrot.slane %v198, 5
      %v1278 = vsel %vm1225, %v1276, %v1277
      %v1279 = vrot.slane %v1277, 4
      %v1280 = vrot.slane %v223, 5
      %v1281 = vsel %vm1225, %v1279, %v1280
      %v1282 = vrot.slane %v1183, 5
      %v1283 = vrot.slane %v1282, 4
      %v1284 = vrot.slane %v200, 5
      %v1285 = vsel %vm1225, %v1283, %v1284
      %v1286 = vrot.slane %v1284, 4
      %v1287 = vrot.slane %v224, 5
      %v1288 = vsel %vm1225, %v1286, %v1287
      %v1289 = vrot.slane %v1184, 5
      %v1290 = vrot.slane %v1289, 4
      %v1291 = vrot.slane %v202, 5
      %v1292 = vsel %vm1225, %v1290, %v1291
      %v1293 = vrot.slane %v1291, 4
      %v1294 = vrot.slane %v225, 5
      %v1295 = vsel %vm1225, %v1293, %v1294
      %v1296 = vrot.slane %v1185, 5
      %v1297 = vrot.slane %v1296, 4
      %v1298 = vrot.slane %v204, 5
      %v1299 = vsel %vm1225, %v1297, %v1298
      %v1300 = vrot.slane %v1298, 4
      %v1301 = vrot.slane %v226, 5
      %v1302 = vsel %vm1225, %v1300, %v1301
      %v1303 = vrot.slane %v1186, 5
      %v1304 = vrot.slane %v1303, 4
      %v1305 = vrot.slane %v206, 5
      %v1306 = vsel %vm1225, %v1304, %v1305
      %v1307 = vrot.slane %v1305, 4
      %v1308 = vrot.slane %v227, 5
      %v1309 = vsel %vm1225, %v1307, %v1308
      %v1310 = vrot.slane %v1187, 5
      %v1311 = vrot.slane %v1310, 4
      %v1312 = vrot.slane %v208, 5
      %v1313 = vsel %vm1225, %v1311, %v1312
      %v1314 = vrot.slane %v1312, 4
      %v1315 = vrot.slane %v228, 5
      %v1316 = vsel %vm1225, %v1314, %v1315
      %v1317 = vrot.slane %v1188, 5
      %v1318 = vrot.slane %v1317, 4
      %v1319 = vrot.slane %v210, 5
      %v1320 = vsel %vm1225, %v1318, %v1319
      %v1321 = vrot.slane %v1319, 4
      %v1322 = vrot.slane %v229, 5
      %v1323 = vsel %vm1225, %v1321, %v1322
      %v1324 = vrot.slane %v1189, 5
      %v1325 = vrot.slane %v1324, 4
      %v1326 = vrot.slane %v212, 5
      %v1327 = vsel %vm1225, %v1325, %v1326
      %v1328 = vrot.slane %v1326, 4
      %v1329 = vrot.slane %v230, 5
      %v1330 = vsel %vm1225, %v1328, %v1329
      %v1331 = vrot.slane %v1190, 5
      %v1332 = vrot.slane %v1331, 4
      %v1333 = vrot.slane %v214, 5
      %v1334 = vsel %vm1225, %v1332, %v1333
      %v1335 = vrot.slane %v1333, 4
      %v1336 = vrot.slane %v231, 5
      %v1337 = vsel %vm1225, %v1335, %v1336
      %s1338 = scalar_lea.vmem %s1, 8
      %v1339 = vld [vmem:[%s1338] sm:$0xf]
      %v1340 = vunpack.c.l.b16 %v1229
      %v1341 = vunpack.c.l.b16 %v1232
      %v1342 = vunpack.c.l.b16 %v1236
      %v1343 = vunpack.c.l.b16 %v1239
      %v1344 = vunpack.c.l.b16 %v1243
      %v1345 = vunpack.c.l.b16 %v1246
      %v1346 = vunpack.c.l.b16 %v1250
      %v1347 = vunpack.c.l.b16 %v1253
      %v1348 = vunpack.c.l.b16 %v1257
      %v1349 = vunpack.c.l.b16 %v1260
      %v1350 = vunpack.c.l.b16 %v1264
      %v1351 = vunpack.c.l.b16 %v1267
      %v1352 = vunpack.c.l.b16 %v1271
      %v1353 = vunpack.c.l.b16 %v1274
      %v1354 = vunpack.c.l.b16 %v1278
      %v1355 = vunpack.c.l.b16 %v1281
      %v1356 = vunpack.c.l.b16 %v1285
      %v1357 = vunpack.c.l.b16 %v1288
      %v1358 = vunpack.c.l.b16 %v1292
      %v1359 = vunpack.c.l.b16 %v1295
      %v1360 = vunpack.c.l.b16 %v1299
      %v1361 = vunpack.c.l.b16 %v1302
      %v1362 = vunpack.c.l.b16 %v1306
      %v1363 = vunpack.c.l.b16 %v1309
      %v1364 = vunpack.c.l.b16 %v1313
      %v1365 = vunpack.c.l.b16 %v1316
      %v1366 = vunpack.c.l.b16 %v1320
      %v1367 = vunpack.c.l.b16 %v1323
      %v1368 = vunpack.c.l.b16 %v1327
      %v1369 = vunpack.c.l.b16 %v1330
      %v1370 = vunpack.c.l.b16 %v1334
      %v1371 = vunpack.c.l.b16 %v1337
      %v1372 = vpack.c.b16 %v1341, %v1340
      %v1373 = vpack.c.b16 %v1343, %v1342
      %v1374 = vpack.c.b16 %v1345, %v1344
      %v1375 = vpack.c.b16 %v1347, %v1346
      %v1376 = vpack.c.b16 %v1349, %v1348
      %v1377 = vpack.c.b16 %v1351, %v1350
      %v1378 = vpack.c.b16 %v1353, %v1352
      %v1379 = vpack.c.b16 %v1355, %v1354
      %v1380 = vpack.c.b16 %v1357, %v1356
      %v1381 = vpack.c.b16 %v1359, %v1358
      %v1382 = vpack.c.b16 %v1361, %v1360
      %v1383 = vpack.c.b16 %v1363, %v1362
      %v1384 = vpack.c.b16 %v1365, %v1364
      %v1385 = vpack.c.b16 %v1367, %v1366
      %v1386 = vpack.c.b16 %v1369, %v1368
      %v1387 = vpack.c.b16 %v1371, %v1370
      %v1389 = vsel %vm669, %v1372, 0
      %v1392 = vsel %vm669, %v1373, 0
      %v1395 = vsel %vm669, %v1374, 0
      %v1398 = vsel %vm669, %v1375, 0
      %v1401 = vsel %vm669, %v1376, 0
      %v1404 = vsel %vm669, %v1377, 0
      %v1407 = vsel %vm669, %v1378, 0
      %v1410 = vsel %vm669, %v1379, 0
      %v1413 = vsel %vm669, %v1380, 0
      %v1416 = vsel %vm669, %v1381, 0
      %v1419 = vsel %vm669, %v1382, 0
      %v1422 = vsel %vm669, %v1383, 0
      %v1425 = vsel %vm669, %v1384, 0
      %v1428 = vsel %vm669, %v1385, 0
      %v1431 = vsel %vm669, %v1386, 0
      %v1434 = vsel %vm669, %v1387, 0
      %v1437 = vsel %vm718, %v1339, 0
      %1439 = vmatprep.subr.bf16.mxu0 0
      %1440 = vmatpush1.bf16.msra.mxu0 %v1437
      %1441 = vmatprep.subr.bf16.mxu0 0
      %1442 = vmatpush1.bf16.msra.mxu0 0
      %1443 = vmatprep.subr.bf16.mxu0 0
      %1444 = vmatpush1.bf16.msra.mxu0 0
      %1445 = vmatprep.subr.bf16.mxu0 0
      %1446 = vmatpush1.bf16.msra.mxu0 0
      %1447 = vmatprep.subr.bf16.mxu0 0
      %1448 = vmatpush1.bf16.msra.mxu0 0
      %1449 = vmatprep.subr.bf16.mxu0 0
      %1450 = vmatpush1.bf16.msra.mxu0 0
      %1451 = vmatprep.subr.bf16.mxu0 0
      %1452 = vmatpush1.bf16.msra.mxu0 0
      %1453 = vmatprep.subr.bf16.mxu0 0
      %1454 = vmatpush1.bf16.msra.mxu0 0
      %1455 = vmatprep.subr.bf16.mxu0 0
      %1456 = vmatpush1.bf16.msra.mxu0 0
      %1457 = vmatprep.subr.bf16.mxu0 0
      %1458 = vmatpush1.bf16.msra.mxu0 0
      %1459 = vmatprep.subr.bf16.mxu0 0
      %1460 = vmatpush1.bf16.msra.mxu0 0
      %1461 = vmatprep.subr.bf16.mxu0 0
      %1462 = vmatpush1.bf16.msra.mxu0 0
      %1463 = vmatprep.subr.bf16.mxu0 0
      %1464 = vmatpush1.bf16.msra.mxu0 0
      %1465 = vmatprep.subr.bf16.mxu0 0
      %1466 = vmatpush1.bf16.msra.mxu0 0
      %1467 = vmatprep.subr.bf16.mxu0 0
      %1468 = vmatpush1.bf16.msra.mxu0 0
      %1469 = vmatprep.subr.bf16.mxu0 0
      %1470 = vmatpush1.bf16.msra.mxu0 0
      %1471 = vmatprep.mubr.bf16.mxu0 0
      %1472 = vmatmul.mubr.bf16.gmra.mrb[0].mxu0 %v1389
      %v1473 = vpop.f32.mrb[0].mxu0
      %v1474 = vadd.f32 0.0, %v1473
      %v1475 = vpop.f32.mrb[0].mxu0
      %v1476 = vpop.f32.mrb[0].mxu0
      %v1477 = vadd.f32 0.0, %v1476
      %v1478 = vpop.f32.mrb[0].mxu0
      %1479 = vmatprep.mubr.bf16.mxu0 0
      %1480 = vmatmul.mubr.bf16.gmra.mrb[0].mxu0 %v1392
      %v1481 = vpop.f32.mrb[0].mxu0
      %v1482 = vadd.f32 0.0, %v1481
      %v1483 = vpop.f32.mrb[0].mxu0
      %v1484 = vpop.f32.mrb[0].mxu0
      %v1485 = vadd.f32 0.0, %v1484
      %v1486 = vpop.f32.mrb[0].mxu0
      %1487 = vmatprep.mubr.bf16.mxu0 0
      %1488 = vmatmul.mubr.bf16.gmra.mrb[0].mxu0 %v1395
      %v1489 = vpop.f32.mrb[0].mxu0
      %v1490 = vadd.f32 0.0, %v1489
      %v1491 = vpop.f32.mrb[0].mxu0
      %v1492 = vpop.f32.mrb[0].mxu0
      %v1493 = vadd.f32 0.0, %v1492
      %v1494 = vpop.f32.mrb[0].mxu0
      %1495 = vmatprep.mubr.bf16.mxu0 0
      %1496 = vmatmul.mubr.bf16.gmra.mrb[0].mxu0 %v1398
      %v1497 = vpop.f32.mrb[0].mxu0
      %v1498 = vadd.f32 0.0, %v1497
      %v1499 = vpop.f32.mrb[0].mxu0
      %v1500 = vpop.f32.mrb[0].mxu0
      %v1501 = vadd.f32 0.0, %v1500
      %v1502 = vpop.f32.mrb[0].mxu0
      %1503 = vmatprep.mubr.bf16.mxu0 0
      %1504 = vmatmul.mubr.bf16.gmra.mrb[0].mxu0 %v1401
      %v1505 = vpop.f32.mrb[0].mxu0
      %v1506 = vadd.f32 0.0, %v1505
      %v1507 = vpop.f32.mrb[0].mxu0
      %v1508 = vpop.f32.mrb[0].mxu0
      %v1509 = vadd.f32 0.0, %v1508
      %v1510 = vpop.f32.mrb[0].mxu0
      %1511 = vmatprep.mubr.bf16.mxu0 0
      %1512 = vmatmul.mubr.bf16.gmra.mrb[0].mxu0 %v1404
      %v1513 = vpop.f32.mrb[0].mxu0
      %v1514 = vadd.f32 0.0, %v1513
      %v1515 = vpop.f32.mrb[0].mxu0
      %v1516 = vpop.f32.mrb[0].mxu0
      %v1517 = vadd.f32 0.0, %v1516
      %v1518 = vpop.f32.mrb[0].mxu0
      %1519 = vmatprep.mubr.bf16.mxu0 0
      %1520 = vmatmul.mubr.bf16.gmra.mrb[0].mxu0 %v1407
      %v1521 = vpop.f32.mrb[0].mxu0
      %v1522 = vadd.f32 0.0, %v1521
      %v1523 = vpop.f32.mrb[0].mxu0
      %v1524 = vpop.f32.mrb[0].mxu0
      %v1525 = vadd.f32 0.0, %v1524
      %v1526 = vpop.f32.mrb[0].mxu0
      %1527 = vmatprep.mubr.bf16.mxu0 0
      %1528 = vmatmul.mubr.bf16.gmra.mrb[0].mxu0 %v1410
      %v1529 = vpop.f32.mrb[0].mxu0
      %v1530 = vadd.f32 0.0, %v1529
      %v1531 = vpop.f32.mrb[0].mxu0
      %v1532 = vpop.f32.mrb[0].mxu0
      %v1533 = vadd.f32 0.0, %v1532
      %v1534 = vpop.f32.mrb[0].mxu0
      %1535 = vmatprep.mubr.bf16.mxu0 0
      %1536 = vmatmul.mubr.bf16.gmra.mrb[0].mxu0 %v1413
      %v1537 = vpop.f32.mrb[0].mxu0
      %v1538 = vadd.f32 0.0, %v1537
      %v1539 = vpop.f32.mrb[0].mxu0
      %v1540 = vpop.f32.mrb[0].mxu0
      %v1541 = vadd.f32 0.0, %v1540
      %v1542 = vpop.f32.mrb[0].mxu0
      %1543 = vmatprep.mubr.bf16.mxu0 0
      %1544 = vmatmul.mubr.bf16.gmra.mrb[0].mxu0 %v1416
      %v1545 = vpop.f32.mrb[0].mxu0
      %v1546 = vadd.f32 0.0, %v1545
      %v1547 = vpop.f32.mrb[0].mxu0
      %v1548 = vpop.f32.mrb[0].mxu0
      %v1549 = vadd.f32 0.0, %v1548
      %v1550 = vpop.f32.mrb[0].mxu0
      %1551 = vmatprep.mubr.bf16.mxu0 0
      %1552 = vmatmul.mubr.bf16.gmra.mrb[0].mxu0 %v1419
      %v1553 = vpop.f32.mrb[0].mxu0
      %v1554 = vadd.f32 0.0, %v1553
      %v1555 = vpop.f32.mrb[0].mxu0
      %v1556 = vpop.f32.mrb[0].mxu0
      %v1557 = vadd.f32 0.0, %v1556
      %v1558 = vpop.f32.mrb[0].mxu0
      %1559 = vmatprep.mubr.bf16.mxu0 0
      %1560 = vmatmul.mubr.bf16.gmra.mrb[0].mxu0 %v1422
      %v1561 = vpop.f32.mrb[0].mxu0
      %v1562 = vadd.f32 0.0, %v1561
      %v1563 = vpop.f32.mrb[0].mxu0
      %v1564 = vpop.f32.mrb[0].mxu0
      %v1565 = vadd.f32 0.0, %v1564
      %v1566 = vpop.f32.mrb[0].mxu0
      %1567 = vmatprep.mubr.bf16.mxu0 0
      %1568 = vmatmul.mubr.bf16.gmra.mrb[0].mxu0 %v1425
      %v1569 = vpop.f32.mrb[0].mxu0
      %v1570 = vadd.f32 0.0, %v1569
      %v1571 = vpop.f32.mrb[0].mxu0
      %v1572 = vpop.f32.mrb[0].mxu0
      %v1573 = vadd.f32 0.0, %v1572
      %v1574 = vpop.f32.mrb[0].mxu0
      %1575 = vmatprep.mubr.bf16.mxu0 0
      %1576 = vmatmul.mubr.bf16.gmra.mrb[0].mxu0 %v1428
      %v1577 = vpop.f32.mrb[0].mxu0
      %v1578 = vadd.f32 0.0, %v1577
      %v1579 = vpop.f32.mrb[0].mxu0
      %v1580 = vpop.f32.mrb[0].mxu0
      %v1581 = vadd.f32 0.0, %v1580
      %v1582 = vpop.f32.mrb[0].mxu0
      %1583 = vmatprep.mubr.bf16.mxu0 0
      %1584 = vmatmul.mubr.bf16.gmra.mrb[0].mxu0 %v1431
      %v1585 = vpop.f32.mrb[0].mxu0
      %v1586 = vadd.f32 0.0, %v1585
      %v1587 = vpop.f32.mrb[0].mxu0
      %v1588 = vpop.f32.mrb[0].mxu0
      %v1589 = vadd.f32 0.0, %v1588
      %v1590 = vpop.f32.mrb[0].mxu0
      %1591 = vmatprep.mubr.bf16.mxu0 0
      %1592 = vmatmul.mubr.bf16.gmra.mrb[0].mxu0 %v1434
      %v1593 = vpop.f32.mrb[0].mxu0
      %v1594 = vadd.f32 0.0, %v1593
      %v1595 = vpop.f32.mrb[0].mxu0
      %v1596 = vpop.f32.mrb[0].mxu0
      %v1597 = vadd.f32 0.0, %v1596
      %v1598 = vpop.f32.mrb[0].mxu0
      %1599 = vdwg.mxu0
      %v1600 = vadd.f32 %v1049, %v1474
      %v1601 = vadd.f32 %v1052, %v1477
      %v1602 = vadd.f32 %v1057, %v1482
      %v1603 = vadd.f32 %v1060, %v1485
      %v1604 = vadd.f32 %v1065, %v1490
      %v1605 = vadd.f32 %v1068, %v1493
      %v1606 = vadd.f32 %v1073, %v1498
      %v1607 = vadd.f32 %v1076, %v1501
      %v1608 = vadd.f32 %v1081, %v1506
      %v1609 = vadd.f32 %v1084, %v1509
      %v1610 = vadd.f32 %v1089, %v1514
      %v1611 = vadd.f32 %v1092, %v1517
      %v1612 = vadd.f32 %v1097, %v1522
      %v1613 = vadd.f32 %v1100, %v1525
      %v1614 = vadd.f32 %v1105, %v1530
      %v1615 = vadd.f32 %v1108, %v1533
      %v1616 = vadd.f32 %v1113, %v1538
      %v1617 = vadd.f32 %v1116, %v1541
      %v1618 = vadd.f32 %v1121, %v1546
      %v1619 = vadd.f32 %v1124, %v1549
      %v1620 = vadd.f32 %v1129, %v1554
      %v1621 = vadd.f32 %v1132, %v1557
      %v1622 = vadd.f32 %v1137, %v1562
      %v1623 = vadd.f32 %v1140, %v1565
      %v1624 = vadd.f32 %v1145, %v1570
      %v1625 = vadd.f32 %v1148, %v1573
      %v1626 = vadd.f32 %v1153, %v1578
      %v1627 = vadd.f32 %v1156, %v1581
      %v1628 = vadd.f32 %v1161, %v1586
      %v1629 = vadd.f32 %v1164, %v1589
      %v1630 = vadd.f32 %v1169, %v1594
      %v1631 = vadd.f32 %v1172, %v1597
      %s1632 = scalar_lea.vmem %s172, 12
      %v1633 = vld [vmem:[%s1632] sm:$0xf]
      %v1634 = vld [vmem:[%s1632 + $0x4] sm:$0xf]
      %v1635 = vld [vmem:[%s1632 + $0xc] sm:$0xf]
      %v1636 = vld [vmem:[%s1632 + $0x10] sm:$0xf]
      %v1637 = vld [vmem:[%s1632 + $0x18] sm:$0xf]
      %v1638 = vld [vmem:[%s1632 + $0x1c] sm:$0xf]
      %v1639 = vld [vmem:[%s1632 + $0x24] sm:$0xf]
      %v1640 = vld [vmem:[%s1632 + $0x28] sm:$0xf]
      %v1641 = vld [vmem:[%s1632 + $0x30] sm:$0xf]
      %v1642 = vld [vmem:[%s1632 + $0x34] sm:$0xf]
      %v1643 = vld [vmem:[%s1632 + $0x3c] sm:$0xf]
      %v1644 = vld [vmem:[%s1632 + $0x40] sm:$0xf]
      %v1645 = vld [vmem:[%s1632 + $0x48] sm:$0xf]
      %v1646 = vld [vmem:[%s1632 + $0x4c] sm:$0xf]
      %v1647 = vld [vmem:[%s1632 + $0x54] sm:$0xf]
      %v1648 = vld [vmem:[%s1632 + $0x58] sm:$0xf]
      %v1649 = vld [vmem:[%s1632 + $0x60] sm:$0xf]
      %v1650 = vld [vmem:[%s1632 + $0x64] sm:$0xf]
      %v1651 = vld [vmem:[%s1632 + $0x6c] sm:$0xf]
      %v1652 = vld [vmem:[%s1632 + $0x70] sm:$0xf]
      %v1653 = vld [vmem:[%s1632 + $0x78] sm:$0xf]
      %v1654 = vld [vmem:[%s1632 + $0x7c] sm:$0xf]
      %v1655 = vld [vmem:[%s1632 + $0x84] sm:$0xf]
      %v1656 = vld [vmem:[%s1632 + $0x88] sm:$0xf]
      %v1657 = vld [vmem:[%s1632 + $0x90] sm:$0xf]
      %v1658 = vld [vmem:[%s1632 + $0x94] sm:$0xf]
      %v1659 = vld [vmem:[%s1632 + $0x9c] sm:$0xf]
      %v1660 = vld [vmem:[%s1632 + $0xa0] sm:$0xf]
      %v1661 = vld [vmem:[%s1632 + $0xa8] sm:$0xf]
      %v1662 = vld [vmem:[%s1632 + $0xac] sm:$0xf]
      %v1663 = vld [vmem:[%s1632 + $0xb4] sm:$0xf]
      %v1664 = vld [vmem:[%s1632 + $0xb8] sm:$0xf]
      %s1665 = scalar_lea.vmem %s1, 12
      %v1666 = vld [vmem:[%s1665] sm:$0xf]
      %v1699 = vunpack.c.l.b16 %v1633
      %v1700 = vunpack.c.l.b16 %v1634
      %v1701 = vunpack.c.l.b16 %v1635
      %v1702 = vunpack.c.l.b16 %v1636
      %v1703 = vunpack.c.l.b16 %v1637
      %v1704 = vunpack.c.l.b16 %v1638
      %v1705 = vunpack.c.l.b16 %v1639
      %v1706 = vunpack.c.l.b16 %v1640
      %v1707 = vunpack.c.l.b16 %v1641
      %v1708 = vunpack.c.l.b16 %v1642
      %v1709 = vunpack.c.l.b16 %v1643
      %v1710 = vunpack.c.l.b16 %v1644
      %v1711 = vunpack.c.l.b16 %v1645
      %v1712 = vunpack.c.l.b16 %v1646
      %v1713 = vunpack.c.l.b16 %v1647
      %v1714 = vunpack.c.l.b16 %v1648
      %v1715 = vunpack.c.l.b16 %v1649
      %v1716 = vunpack.c.l.b16 %v1650
      %v1717 = vunpack.c.l.b16 %v1651
      %v1718 = vunpack.c.l.b16 %v1652
      %v1719 = vunpack.c.l.b16 %v1653
      %v1720 = vunpack.c.l.b16 %v1654
      %v1721 = vunpack.c.l.b16 %v1655
      %v1722 = vunpack.c.l.b16 %v1656
      %v1723 = vunpack.c.l.b16 %v1657
      %v1724 = vunpack.c.l.b16 %v1658
      %v1725 = vunpack.c.l.b16 %v1659
      %v1726 = vunpack.c.l.b16 %v1660
      %v1727 = vunpack.c.l.b16 %v1661
      %v1728 = vunpack.c.l.b16 %v1662
      %v1729 = vunpack.c.l.b16 %v1663
      %v1730 = vunpack.c.l.b16 %v1664
      %v1731 = vpack.c.b16 %v1700, %v1699
      %v1732 = vpack.c.b16 %v1702, %v1701
      %v1733 = vpack.c.b16 %v1704, %v1703
      %v1734 = vpack.c.b16 %v1706, %v1705
      %v1735 = vpack.c.b16 %v1708, %v1707
      %v1736 = vpack.c.b16 %v1710, %v1709
      %v1737 = vpack.c.b16 %v1712, %v1711
      %v1738 = vpack.c.b16 %v1714, %v1713
      %v1739 = vpack.c.b16 %v1716, %v1715
      %v1740 = vpack.c.b16 %v1718, %v1717
      %v1741 = vpack.c.b16 %v1720, %v1719
      %v1742 = vpack.c.b16 %v1722, %v1721
      %v1743 = vpack.c.b16 %v1724, %v1723
      %v1744 = vpack.c.b16 %v1726, %v1725
      %v1745 = vpack.c.b16 %v1728, %v1727
      %v1746 = vpack.c.b16 %v1730, %v1729
      %v1748 = vsel %vm669, %v1731, 0
      %v1751 = vsel %vm669, %v1732, 0
      %v1754 = vsel %vm669, %v1733, 0
      %v1757 = vsel %vm669, %v1734, 0
      %v1760 = vsel %vm669, %v1735, 0
      %v1763 = vsel %vm669, %v1736, 0
      %v1766 = vsel %vm669, %v1737, 0
      %v1769 = vsel %vm669, %v1738, 0
      %v1772 = vsel %vm669, %v1739, 0
      %v1775 = vsel %vm669, %v1740, 0
      %v1778 = vsel %vm669, %v1741, 0
      %v1781 = vsel %vm669, %v1742, 0
      %v1784 = vsel %vm669, %v1743, 0
      %v1787 = vsel %vm669, %v1744, 0
      %v1790 = vsel %vm669, %v1745, 0
      %v1793 = vsel %vm669, %v1746, 0
      %v1796 = vsel %vm718, %v1666, 0
      %1798 = vmatprep.subr.bf16.mxu0 0
      %1799 = vmatpush1.bf16.msra.mxu0 %v1796
      %1800 = vmatprep.subr.bf16.mxu0 0
      %1801 = vmatpush1.bf16.msra.mxu0 0
      %1802 = vmatprep.subr.bf16.mxu0 0
      %1803 = vmatpush1.bf16.msra.mxu0 0
      %1804 = vmatprep.subr.bf16.mxu0 0
      %1805 = vmatpush1.bf16.msra.mxu0 0
      %1806 = vmatprep.subr.bf16.mxu0 0
      %1807 = vmatpush1.bf16.msra.mxu0 0
      %1808 = vmatprep.subr.bf16.mxu0 0
      %1809 = vmatpush1.bf16.msra.mxu0 0
      %1810 = vmatprep.subr.bf16.mxu0 0
      %1811 = vmatpush1.bf16.msra.mxu0 0
      %1812 = vmatprep.subr.bf16.mxu0 0
      %1813 = vmatpush1.bf16.msra.mxu0 0
      %1814 = vmatprep.subr.bf16.mxu0 0
      %1815 = vmatpush1.bf16.msra.mxu0 0
      %1816 = vmatprep.subr.bf16.mxu0 0
      %1817 = vmatpush1.bf16.msra.mxu0 0
      %1818 = vmatprep.subr.bf16.mxu0 0
      %1819 = vmatpush1.bf16.msra.mxu0 0
      %1820 = vmatprep.subr.bf16.mxu0 0
      %1821 = vmatpush1.bf16.msra.mxu0 0
      %1822 = vmatprep.subr.bf16.mxu0 0
      %1823 = vmatpush1.bf16.msra.mxu0 0
      %1824 = vmatprep.subr.bf16.mxu0 0
      %1825 = vmatpush1.bf16.msra.mxu0 0
      %1826 = vmatprep.subr.bf16.mxu0 0
      %1827 = vmatpush1.bf16.msra.mxu0 0
      %1828 = vmatprep.subr.bf16.mxu0 0
      %1829 = vmatpush1.bf16.msra.mxu0 0
      %1830 = vmatprep.mubr.bf16.mxu0 0
      %1831 = vmatmul.mubr.bf16.gmra.mrb[0].mxu0 %v1748
      %v1832 = vpop.f32.mrb[0].mxu0
      %v1833 = vadd.f32 0.0, %v1832
      %v1834 = vpop.f32.mrb[0].mxu0
      %v1835 = vpop.f32.mrb[0].mxu0
      %v1836 = vadd.f32 0.0, %v1835
      %v1837 = vpop.f32.mrb[0].mxu0
      %1838 = vmatprep.mubr.bf16.mxu0 0
      %1839 = vmatmul.mubr.bf16.gmra.mrb[0].mxu0 %v1751
      %v1840 = vpop.f32.mrb[0].mxu0
      %v1841 = vadd.f32 0.0, %v1840
      %v1842 = vpop.f32.mrb[0].mxu0
      %v1843 = vpop.f32.mrb[0].mxu0
      %v1844 = vadd.f32 0.0, %v1843
      %v1845 = vpop.f32.mrb[0].mxu0
      %1846 = vmatprep.mubr.bf16.mxu0 0
      %1847 = vmatmul.mubr.bf16.gmra.mrb[0].mxu0 %v1754
      %v1848 = vpop.f32.mrb[0].mxu0
      %v1849 = vadd.f32 0.0, %v1848
      %v1850 = vpop.f32.mrb[0].mxu0
      %v1851 = vpop.f32.mrb[0].mxu0
      %v1852 = vadd.f32 0.0, %v1851
      %v1853 = vpop.f32.mrb[0].mxu0
      %1854 = vmatprep.mubr.bf16.mxu0 0
      %1855 = vmatmul.mubr.bf16.gmra.mrb[0].mxu0 %v1757
      %v1856 = vpop.f32.mrb[0].mxu0
      %v1857 = vadd.f32 0.0, %v1856
      %v1858 = vpop.f32.mrb[0].mxu0
      %v1859 = vpop.f32.mrb[0].mxu0
      %v1860 = vadd.f32 0.0, %v1859
      %v1861 = vpop.f32.mrb[0].mxu0
      %1862 = vmatprep.mubr.bf16.mxu0 0
      %1863 = vmatmul.mubr.bf16.gmra.mrb[0].mxu0 %v1760
      %v1864 = vpop.f32.mrb[0].mxu0
      %v1865 = vadd.f32 0.0, %v1864
      %v1866 = vpop.f32.mrb[0].mxu0
      %v1867 = vpop.f32.mrb[0].mxu0
      %v1868 = vadd.f32 0.0, %v1867
      %v1869 = vpop.f32.mrb[0].mxu0
      %1870 = vmatprep.mubr.bf16.mxu0 0
      %1871 = vmatmul.mubr.bf16.gmra.mrb[0].mxu0 %v1763
      %v1872 = vpop.f32.mrb[0].mxu0
      %v1873 = vadd.f32 0.0, %v1872
      %v1874 = vpop.f32.mrb[0].mxu0
      %v1875 = vpop.f32.mrb[0].mxu0
      %v1876 = vadd.f32 0.0, %v1875
      %v1877 = vpop.f32.mrb[0].mxu0
      %1878 = vmatprep.mubr.bf16.mxu0 0
      %1879 = vmatmul.mubr.bf16.gmra.mrb[0].mxu0 %v1766
      %v1880 = vpop.f32.mrb[0].mxu0
      %v1881 = vadd.f32 0.0, %v1880
      %v1882 = vpop.f32.mrb[0].mxu0
      %v1883 = vpop.f32.mrb[0].mxu0
      %v1884 = vadd.f32 0.0, %v1883
      %v1885 = vpop.f32.mrb[0].mxu0
      %1886 = vmatprep.mubr.bf16.mxu0 0
      %1887 = vmatmul.mubr.bf16.gmra.mrb[0].mxu0 %v1769
      %v1888 = vpop.f32.mrb[0].mxu0
      %v1889 = vadd.f32 0.0, %v1888
      %v1890 = vpop.f32.mrb[0].mxu0
      %v1891 = vpop.f32.mrb[0].mxu0
      %v1892 = vadd.f32 0.0, %v1891
      %v1893 = vpop.f32.mrb[0].mxu0
      %1894 = vmatprep.mubr.bf16.mxu0 0
      %1895 = vmatmul.mubr.bf16.gmra.mrb[0].mxu0 %v1772
      %v1896 = vpop.f32.mrb[0].mxu0
      %v1897 = vadd.f32 0.0, %v1896
      %v1898 = vpop.f32.mrb[0].mxu0
      %v1899 = vpop.f32.mrb[0].mxu0
      %v1900 = vadd.f32 0.0, %v1899
      %v1901 = vpop.f32.mrb[0].mxu0
      %1902 = vmatprep.mubr.bf16.mxu0 0
      %1903 = vmatmul.mubr.bf16.gmra.mrb[0].mxu0 %v1775
      %v1904 = vpop.f32.mrb[0].mxu0
      %v1905 = vadd.f32 0.0, %v1904
      %v1906 = vpop.f32.mrb[0].mxu0
      %v1907 = vpop.f32.mrb[0].mxu0
      %v1908 = vadd.f32 0.0, %v1907
      %v1909 = vpop.f32.mrb[0].mxu0
      %1910 = vmatprep.mubr.bf16.mxu0 0
      %1911 = vmatmul.mubr.bf16.gmra.mrb[0].mxu0 %v1778
      %v1912 = vpop.f32.mrb[0].mxu0
      %v1913 = vadd.f32 0.0, %v1912
      %v1914 = vpop.f32.mrb[0].mxu0
      %v1915 = vpop.f32.mrb[0].mxu0
      %v1916 = vadd.f32 0.0, %v1915
      %v1917 = vpop.f32.mrb[0].mxu0
      %1918 = vmatprep.mubr.bf16.mxu0 0
      %1919 = vmatmul.mubr.bf16.gmra.mrb[0].mxu0 %v1781
      %v1920 = vpop.f32.mrb[0].mxu0
      %v1921 = vadd.f32 0.0, %v1920
      %v1922 = vpop.f32.mrb[0].mxu0
      %v1923 = vpop.f32.mrb[0].mxu0
      %v1924 = vadd.f32 0.0, %v1923
      %v1925 = vpop.f32.mrb[0].mxu0
      %1926 = vmatprep.mubr.bf16.mxu0 0
      %1927 = vmatmul.mubr.bf16.gmra.mrb[0].mxu0 %v1784
      %v1928 = vpop.f32.mrb[0].mxu0
      %v1929 = vadd.f32 0.0, %v1928
      %v1930 = vpop.f32.mrb[0].mxu0
      %v1931 = vpop.f32.mrb[0].mxu0
      %v1932 = vadd.f32 0.0, %v1931
      %v1933 = vpop.f32.mrb[0].mxu0
      %1934 = vmatprep.mubr.bf16.mxu0 0
      %1935 = vmatmul.mubr.bf16.gmra.mrb[0].mxu0 %v1787
      %v1936 = vpop.f32.mrb[0].mxu0
      %v1937 = vadd.f32 0.0, %v1936
      %v1938 = vpop.f32.mrb[0].mxu0
      %v1939 = vpop.f32.mrb[0].mxu0
      %v1940 = vadd.f32 0.0, %v1939
      %v1941 = vpop.f32.mrb[0].mxu0
      %1942 = vmatprep.mubr.bf16.mxu0 0
      %1943 = vmatmul.mubr.bf16.gmra.mrb[0].mxu0 %v1790
      %v1944 = vpop.f32.mrb[0].mxu0
      %v1945 = vadd.f32 0.0, %v1944
      %v1946 = vpop.f32.mrb[0].mxu0
      %v1947 = vpop.f32.mrb[0].mxu0
      %v1948 = vadd.f32 0.0, %v1947
      %v1949 = vpop.f32.mrb[0].mxu0
      %1950 = vmatprep.mubr.bf16.mxu0 0
      %1951 = vmatmul.mubr.bf16.gmra.mrb[0].mxu0 %v1793
      %v1952 = vpop.f32.mrb[0].mxu0
      %v1953 = vadd.f32 0.0, %v1952
      %v1954 = vpop.f32.mrb[0].mxu0
      %v1955 = vpop.f32.mrb[0].mxu0
      %v1956 = vadd.f32 0.0, %v1955
      %v1957 = vpop.f32.mrb[0].mxu0
      %1958 = vdwg.mxu0
      %v1959 = vadd.f32 %v1600, %v1833
      %v1960 = vadd.f32 %v1601, %v1836
      %v1961 = vadd.f32 %v1602, %v1841
      %v1962 = vadd.f32 %v1603, %v1844
      %v1963 = vadd.f32 %v1604, %v1849
      %v1964 = vadd.f32 %v1605, %v1852
      %v1965 = vadd.f32 %v1606, %v1857
      %v1966 = vadd.f32 %v1607, %v1860
      %v1967 = vadd.f32 %v1608, %v1865
      %v1968 = vadd.f32 %v1609, %v1868
      %v1969 = vadd.f32 %v1610, %v1873
      %v1970 = vadd.f32 %v1611, %v1876
      %v1971 = vadd.f32 %v1612, %v1881
      %v1972 = vadd.f32 %v1613, %v1884
      %v1973 = vadd.f32 %v1614, %v1889
      %v1974 = vadd.f32 %v1615, %v1892
      %v1975 = vadd.f32 %v1616, %v1897
      %v1976 = vadd.f32 %v1617, %v1900
      %v1977 = vadd.f32 %v1618, %v1905
      %v1978 = vadd.f32 %v1619, %v1908
      %v1979 = vadd.f32 %v1620, %v1913
      %v1980 = vadd.f32 %v1621, %v1916
      %v1981 = vadd.f32 %v1622, %v1921
      %v1982 = vadd.f32 %v1623, %v1924
      %v1983 = vadd.f32 %v1624, %v1929
      %v1984 = vadd.f32 %v1625, %v1932
      %v1985 = vadd.f32 %v1626, %v1937
      %v1986 = vadd.f32 %v1627, %v1940
      %v1987 = vadd.f32 %v1628, %v1945
      %v1988 = vadd.f32 %v1629, %v1948
      %v1989 = vadd.f32 %v1630, %v1953
      %v1990 = vadd.f32 %v1631, %v1956
      %v1991 = vld [vmem:[%s1632] sm:$0xf]
      %v1992 = vld [vmem:[%s1632 + $0x4] sm:$0xf]
      %v1993 = vld [vmem:[%s1632 + $0x8] sm:$0x1]
      %v1994 = vld [vmem:[%s1632 + $0xc] sm:$0xf]
      %v1995 = vld [vmem:[%s1632 + $0x10] sm:$0xf]
      %v1996 = vld [vmem:[%s1632 + $0x14] sm:$0x1]
      %v1997 = vld [vmem:[%s1632 + $0x18] sm:$0xf]
      %v1998 = vld [vmem:[%s1632 + $0x1c] sm:$0xf]
      %v1999 = vld [vmem:[%s1632 + $0x20] sm:$0x1]
      %v2000 = vld [vmem:[%s1632 + $0x24] sm:$0xf]
      %v2001 = vld [vmem:[%s1632 + $0x28] sm:$0xf]
      %v2002 = vld [vmem:[%s1632 + $0x2c] sm:$0x1]
      %v2003 = vld [vmem:[%s1632 + $0x30] sm:$0xf]
      %v2004 = vld [vmem:[%s1632 + $0x34] sm:$0xf]
      %v2005 = vld [vmem:[%s1632 + $0x38] sm:$0x1]
      %v2006 = vld [vmem:[%s1632 + $0x3c] sm:$0xf]
      %v2007 = vld [vmem:[%s1632 + $0x40] sm:$0xf]
      %v2008 = vld [vmem:[%s1632 + $0x44] sm:$0x1]
      %v2009 = vld [vmem:[%s1632 + $0x48] sm:$0xf]
      %v2010 = vld [vmem:[%s1632 + $0x4c] sm:$0xf]
      %v2011 = vld [vmem:[%s1632 + $0x50] sm:$0x1]
      %v2012 = vld [vmem:[%s1632 + $0x54] sm:$0xf]
      %v2013 = vld [vmem:[%s1632 + $0x58] sm:$0xf]
      %v2014 = vld [vmem:[%s1632 + $0x5c] sm:$0x1]
      %v2015 = vld [vmem:[%s1632 + $0x60] sm:$0xf]
      %v2016 = vld [vmem:[%s1632 + $0x64] sm:$0xf]
      %v2017 = vld [vmem:[%s1632 + $0x68] sm:$0x1]
      %v2018 = vld [vmem:[%s1632 + $0x6c] sm:$0xf]
      %v2019 = vld [vmem:[%s1632 + $0x70] sm:$0xf]
      %v2020 = vld [vmem:[%s1632 + $0x74] sm:$0x1]
      %v2021 = vld [vmem:[%s1632 + $0x78] sm:$0xf]
      %v2022 = vld [vmem:[%s1632 + $0x7c] sm:$0xf]
      %v2023 = vld [vmem:[%s1632 + $0x80] sm:$0x1]
      %v2024 = vld [vmem:[%s1632 + $0x84] sm:$0xf]
      %v2025 = vld [vmem:[%s1632 + $0x88] sm:$0xf]
      %v2026 = vld [vmem:[%s1632 + $0x8c] sm:$0x1]
      %v2027 = vld [vmem:[%s1632 + $0x90] sm:$0xf]
      %v2028 = vld [vmem:[%s1632 + $0x94] sm:$0xf]
      %v2029 = vld [vmem:[%s1632 + $0x98] sm:$0x1]
      %v2030 = vld [vmem:[%s1632 + $0x9c] sm:$0xf]
      %v2031 = vld [vmem:[%s1632 + $0xa0] sm:$0xf]
      %v2032 = vld [vmem:[%s1632 + $0xa4] sm:$0x1]
      %v2033 = vld [vmem:[%s1632 + $0xa8] sm:$0xf]
      %v2034 = vld [vmem:[%s1632 + $0xac] sm:$0xf]
      %v2035 = vld [vmem:[%s1632 + $0xb0] sm:$0x1]
      %v2036 = vld [vmem:[%s1632 + $0xb4] sm:$0xf]
      %v2037 = vld [vmem:[%s1632 + $0xb8] sm:$0xf]
      %v2038 = vld [vmem:[%s1632 + $0xbc] sm:$0x1]
      %v2040 = vshrl.u32 %v1991, 16
      %v2042 = vrot.slane %v2040, 4
      %v2043 = vshll.u32 %v1991, 16
      %v2045 = vrot.slane %v2043, 5
      %v2046 = vor.u32 %v2042, %v2045
      %v2047 = vrot.slane %v2046, 4
      %v2049 = vshll.u32 %v1992, 16
      %v2051 = vrot.slane %v2049, 5
      %v2052 = vsel %vm234, %v2047, %v2051
      %v2053 = vshrl.u32 %v1992, 16
      %v2055 = vrot.slane %v2053, 4
      %v2056 = vor.u32 %v2055, %v2051
      %v2057 = vrot.slane %v2056, 4
      %v2059 = vshll.u32 %v1993, 16
      %v2061 = vrot.slane %v2059, 5
      %v2062 = vsel %vm234, %v2057, %v2061
      %v2064 = vshrl.u32 %v1994, 16
      %v2066 = vrot.slane %v2064, 4
      %v2067 = vshll.u32 %v1994, 16
      %v2069 = vrot.slane %v2067, 5
      %v2070 = vor.u32 %v2066, %v2069
      %v2071 = vrot.slane %v2070, 4
      %v2073 = vshll.u32 %v1995, 16
      %v2075 = vrot.slane %v2073, 5
      %v2076 = vsel %vm234, %v2071, %v2075
      %v2077 = vshrl.u32 %v1995, 16
      %v2079 = vrot.slane %v2077, 4
      %v2080 = vor.u32 %v2079, %v2075
      %v2081 = vrot.slane %v2080, 4
      %v2083 = vshll.u32 %v1996, 16
      %v2085 = vrot.slane %v2083, 5
      %v2086 = vsel %vm234, %v2081, %v2085
      %v2088 = vshrl.u32 %v1997, 16
      %v2090 = vrot.slane %v2088, 4
      %v2091 = vshll.u32 %v1997, 16
      %v2093 = vrot.slane %v2091, 5
      %v2094 = vor.u32 %v2090, %v2093
      %v2095 = vrot.slane %v2094, 4
      %v2097 = vshll.u32 %v1998, 16
      %v2099 = vrot.slane %v2097, 5
      %v2100 = vsel %vm234, %v2095, %v2099
      %v2101 = vshrl.u32 %v1998, 16
      %v2103 = vrot.slane %v2101, 4
      %v2104 = vor.u32 %v2103, %v2099
      %v2105 = vrot.slane %v2104, 4
      %v2107 = vshll.u32 %v1999, 16
      %v2109 = vrot.slane %v2107, 5
      %v2110 = vsel %vm234, %v2105, %v2109
      %v2112 = vshrl.u32 %v2000, 16
      %v2114 = vrot.slane %v2112, 4
      %v2115 = vshll.u32 %v2000, 16
      %v2117 = vrot.slane %v2115, 5
      %v2118 = vor.u32 %v2114, %v2117
      %v2119 = vrot.slane %v2118, 4
      %v2121 = vshll.u32 %v2001, 16
      %v2123 = vrot.slane %v2121, 5
      %v2124 = vsel %vm234, %v2119, %v2123
      %v2125 = vshrl.u32 %v2001, 16
      %v2127 = vrot.slane %v2125, 4
      %v2128 = vor.u32 %v2127, %v2123
      %v2129 = vrot.slane %v2128, 4
      %v2131 = vshll.u32 %v2002, 16
      %v2133 = vrot.slane %v2131, 5
      %v2134 = vsel %vm234, %v2129, %v2133
      %v2136 = vshrl.u32 %v2003, 16
      %v2138 = vrot.slane %v2136, 4
      %v2139 = vshll.u32 %v2003, 16
      %v2141 = vrot.slane %v2139, 5
      %v2142 = vor.u32 %v2138, %v2141
      %v2143 = vrot.slane %v2142, 4
      %v2145 = vshll.u32 %v2004, 16
      %v2147 = vrot.slane %v2145, 5
      %v2148 = vsel %vm234, %v2143, %v2147
      %v2149 = vshrl.u32 %v2004, 16
      %v2151 = vrot.slane %v2149, 4
      %v2152 = vor.u32 %v2151, %v2147
      %v2153 = vrot.slane %v2152, 4
      %v2155 = vshll.u32 %v2005, 16
      %v2157 = vrot.slane %v2155, 5
      %v2158 = vsel %vm234, %v2153, %v2157
      %v2160 = vshrl.u32 %v2006, 16
      %v2162 = vrot.slane %v2160, 4
      %v2163 = vshll.u32 %v2006, 16
      %v2165 = vrot.slane %v2163, 5
      %v2166 = vor.u32 %v2162, %v2165
      %v2167 = vrot.slane %v2166, 4
      %v2169 = vshll.u32 %v2007, 16
      %v2171 = vrot.slane %v2169, 5
      %v2172 = vsel %vm234, %v2167, %v2171
      %v2173 = vshrl.u32 %v2007, 16
      %v2175 = vrot.slane %v2173, 4
      %v2176 = vor.u32 %v2175, %v2171
      %v2177 = vrot.slane %v2176, 4
      %v2179 = vshll.u32 %v2008, 16
      %v2181 = vrot.slane %v2179, 5
      %v2182 = vsel %vm234, %v2177, %v2181
      %v2184 = vshrl.u32 %v2009, 16
      %v2186 = vrot.slane %v2184, 4
      %v2187 = vshll.u32 %v2009, 16
      %v2189 = vrot.slane %v2187, 5
      %v2190 = vor.u32 %v2186, %v2189
      %v2191 = vrot.slane %v2190, 4
      %v2193 = vshll.u32 %v2010, 16
      %v2195 = vrot.slane %v2193, 5
      %v2196 = vsel %vm234, %v2191, %v2195
      %v2197 = vshrl.u32 %v2010, 16
      %v2199 = vrot.slane %v2197, 4
      %v2200 = vor.u32 %v2199, %v2195
      %v2201 = vrot.slane %v2200, 4
      %v2203 = vshll.u32 %v2011, 16
      %v2205 = vrot.slane %v2203, 5
      %v2206 = vsel %vm234, %v2201, %v2205
      %v2208 = vshrl.u32 %v2012, 16
      %v2210 = vrot.slane %v2208, 4
      %v2211 = vshll.u32 %v2012, 16
      %v2213 = vrot.slane %v2211, 5
      %v2214 = vor.u32 %v2210, %v2213
      %v2215 = vrot.slane %v2214, 4
      %v2217 = vshll.u32 %v2013, 16
      %v2219 = vrot.slane %v2217, 5
      %v2220 = vsel %vm234, %v2215, %v2219
      %v2221 = vshrl.u32 %v2013, 16
      %v2223 = vrot.slane %v2221, 4
      %v2224 = vor.u32 %v2223, %v2219
      %v2225 = vrot.slane %v2224, 4
      %v2227 = vshll.u32 %v2014, 16
      %v2229 = vrot.slane %v2227, 5
      %v2230 = vsel %vm234, %v2225, %v2229
      %v2232 = vshrl.u32 %v2015, 16
      %v2234 = vrot.slane %v2232, 4
      %v2235 = vshll.u32 %v2015, 16
      %v2237 = vrot.slane %v2235, 5
      %v2238 = vor.u32 %v2234, %v2237
      %v2239 = vrot.slane %v2238, 4
      %v2241 = vshll.u32 %v2016, 16
      %v2243 = vrot.slane %v2241, 5
      %v2244 = vsel %vm234, %v2239, %v2243
      %v2245 = vshrl.u32 %v2016, 16
      %v2247 = vrot.slane %v2245, 4
      %v2248 = vor.u32 %v2247, %v2243
      %v2249 = vrot.slane %v2248, 4
      %v2251 = vshll.u32 %v2017, 16
      %v2253 = vrot.slane %v2251, 5
      %v2254 = vsel %vm234, %v2249, %v2253
      %v2256 = vshrl.u32 %v2018, 16
      %v2258 = vrot.slane %v2256, 4
      %v2259 = vshll.u32 %v2018, 16
      %v2261 = vrot.slane %v2259, 5
      %v2262 = vor.u32 %v2258, %v2261
      %v2263 = vrot.slane %v2262, 4
      %v2265 = vshll.u32 %v2019, 16
      %v2267 = vrot.slane %v2265, 5
      %v2268 = vsel %vm234, %v2263, %v2267
      %v2269 = vshrl.u32 %v2019, 16
      %v2271 = vrot.slane %v2269, 4
      %v2272 = vor.u32 %v2271, %v2267
      %v2273 = vrot.slane %v2272, 4
      %v2275 = vshll.u32 %v2020, 16
      %v2277 = vrot.slane %v2275, 5
      %v2278 = vsel %vm234, %v2273, %v2277
      %v2280 = vshrl.u32 %v2021, 16
      %v2282 = vrot.slane %v2280, 4
      %v2283 = vshll.u32 %v2021, 16
      %v2285 = vrot.slane %v2283, 5
      %v2286 = vor.u32 %v2282, %v2285
      %v2287 = vrot.slane %v2286, 4
      %v2289 = vshll.u32 %v2022, 16
      %v2291 = vrot.slane %v2289, 5
      %v2292 = vsel %vm234, %v2287, %v2291
      %v2293 = vshrl.u32 %v2022, 16
      %v2295 = vrot.slane %v2293, 4
      %v2296 = vor.u32 %v2295, %v2291
      %v2297 = vrot.slane %v2296, 4
      %v2299 = vshll.u32 %v2023, 16
      %v2301 = vrot.slane %v2299, 5
      %v2302 = vsel %vm234, %v2297, %v2301
      %v2304 = vshrl.u32 %v2024, 16
      %v2306 = vrot.slane %v2304, 4
      %v2307 = vshll.u32 %v2024, 16
      %v2309 = vrot.slane %v2307, 5
      %v2310 = vor.u32 %v2306, %v2309
      %v2311 = vrot.slane %v2310, 4
      %v2313 = vshll.u32 %v2025, 16
      %v2315 = vrot.slane %v2313, 5
      %v2316 = vsel %vm234, %v2311, %v2315
      %v2317 = vshrl.u32 %v2025, 16
      %v2319 = vrot.slane %v2317, 4
      %v2320 = vor.u32 %v2319, %v2315
      %v2321 = vrot.slane %v2320, 4
      %v2323 = vshll.u32 %v2026, 16
      %v2325 = vrot.slane %v2323, 5
      %v2326 = vsel %vm234, %v2321, %v2325
      %v2328 = vshrl.u32 %v2027, 16
      %v2330 = vrot.slane %v2328, 4
      %v2331 = vshll.u32 %v2027, 16
      %v2333 = vrot.slane %v2331, 5
      %v2334 = vor.u32 %v2330, %v2333
      %v2335 = vrot.slane %v2334, 4
      %v2337 = vshll.u32 %v2028, 16
      %v2339 = vrot.slane %v2337, 5
      %v2340 = vsel %vm234, %v2335, %v2339
      %v2341 = vshrl.u32 %v2028, 16
      %v2343 = vrot.slane %v2341, 4
      %v2344 = vor.u32 %v2343, %v2339
      %v2345 = vrot.slane %v2344, 4
      %v2347 = vshll.u32 %v2029, 16
      %v2349 = vrot.slane %v2347, 5
      %v2350 = vsel %vm234, %v2345, %v2349
      %v2352 = vshrl.u32 %v2030, 16
      %v2354 = vrot.slane %v2352, 4
      %v2355 = vshll.u32 %v2030, 16
      %v2357 = vrot.slane %v2355, 5
      %v2358 = vor.u32 %v2354, %v2357
      %v2359 = vrot.slane %v2358, 4
      %v2361 = vshll.u32 %v2031, 16
      %v2363 = vrot.slane %v2361, 5
      %v2364 = vsel %vm234, %v2359, %v2363
      %v2365 = vshrl.u32 %v2031, 16
      %v2367 = vrot.slane %v2365, 4
      %v2368 = vor.u32 %v2367, %v2363
      %v2369 = vrot.slane %v2368, 4
      %v2371 = vshll.u32 %v2032, 16
      %v2373 = vrot.slane %v2371, 5
      %v2374 = vsel %vm234, %v2369, %v2373
      %v2376 = vshrl.u32 %v2033, 16
      %v2378 = vrot.slane %v2376, 4
      %v2379 = vshll.u32 %v2033, 16
      %v2381 = vrot.slane %v2379, 5
      %v2382 = vor.u32 %v2378, %v2381
      %v2383 = vrot.slane %v2382, 4
      %v2385 = vshll.u32 %v2034, 16
      %v2387 = vrot.slane %v2385, 5
      %v2388 = vsel %vm234, %v2383, %v2387
      %v2389 = vshrl.u32 %v2034, 16
      %v2391 = vrot.slane %v2389, 4
      %v2392 = vor.u32 %v2391, %v2387
      %v2393 = vrot.slane %v2392, 4
      %v2395 = vshll.u32 %v2035, 16
      %v2397 = vrot.slane %v2395, 5
      %v2398 = vsel %vm234, %v2393, %v2397
      %v2400 = vshrl.u32 %v2036, 16
      %v2402 = vrot.slane %v2400, 4
      %v2403 = vshll.u32 %v2036, 16
      %v2405 = vrot.slane %v2403, 5
      %v2406 = vor.u32 %v2402, %v2405
      %v2407 = vrot.slane %v2406, 4
      %v2409 = vshll.u32 %v2037, 16
      %v2411 = vrot.slane %v2409, 5
      %v2412 = vsel %vm234, %v2407, %v2411
      %v2413 = vshrl.u32 %v2037, 16
      %v2415 = vrot.slane %v2413, 4
      %v2416 = vor.u32 %v2415, %v2411
      %v2417 = vrot.slane %v2416, 4
      %v2419 = vshll.u32 %v2038, 16
      %v2421 = vrot.slane %v2419, 5
      %v2422 = vsel %vm234, %v2417, %v2421
      %s2423 = scalar_lea.vmem %s1, 16
      %v2424 = vld [vmem:[%s2423] sm:$0xf]
      %v2425 = vunpack.c.l.b16 %v2052
      %v2426 = vunpack.c.l.b16 %v2062
      %v2427 = vunpack.c.l.b16 %v2076
      %v2428 = vunpack.c.l.b16 %v2086
      %v2429 = vunpack.c.l.b16 %v2100
      %v2430 = vunpack.c.l.b16 %v2110
      %v2431 = vunpack.c.l.b16 %v2124
      %v2432 = vunpack.c.l.b16 %v2134
      %v2433 = vunpack.c.l.b16 %v2148
      %v2434 = vunpack.c.l.b16 %v2158
      %v2435 = vunpack.c.l.b16 %v2172
      %v2436 = vunpack.c.l.b16 %v2182
      %v2437 = vunpack.c.l.b16 %v2196
      %v2438 = vunpack.c.l.b16 %v2206
      %v2439 = vunpack.c.l.b16 %v2220
      %v2440 = vunpack.c.l.b16 %v2230
      %v2441 = vunpack.c.l.b16 %v2244
      %v2442 = vunpack.c.l.b16 %v2254
      %v2443 = vunpack.c.l.b16 %v2268
      %v2444 = vunpack.c.l.b16 %v2278
      %v2445 = vunpack.c.l.b16 %v2292
      %v2446 = vunpack.c.l.b16 %v2302
      %v2447 = vunpack.c.l.b16 %v2316
      %v2448 = vunpack.c.l.b16 %v2326
      %v2449 = vunpack.c.l.b16 %v2340
      %v2450 = vunpack.c.l.b16 %v2350
      %v2451 = vunpack.c.l.b16 %v2364
      %v2452 = vunpack.c.l.b16 %v2374
      %v2453 = vunpack.c.l.b16 %v2388
      %v2454 = vunpack.c.l.b16 %v2398
      %v2455 = vunpack.c.l.b16 %v2412
      %v2456 = vunpack.c.l.b16 %v2422
      %v2457 = vpack.c.b16 %v2426, %v2425
      %v2458 = vpack.c.b16 %v2428, %v2427
      %v2459 = vpack.c.b16 %v2430, %v2429
      %v2460 = vpack.c.b16 %v2432, %v2431
      %v2461 = vpack.c.b16 %v2434, %v2433
      %v2462 = vpack.c.b16 %v2436, %v2435
      %v2463 = vpack.c.b16 %v2438, %v2437
      %v2464 = vpack.c.b16 %v2440, %v2439
      %v2465 = vpack.c.b16 %v2442, %v2441
      %v2466 = vpack.c.b16 %v2444, %v2443
      %v2467 = vpack.c.b16 %v2446, %v2445
      %v2468 = vpack.c.b16 %v2448, %v2447
      %v2469 = vpack.c.b16 %v2450, %v2449
      %v2470 = vpack.c.b16 %v2452, %v2451
      %v2471 = vpack.c.b16 %v2454, %v2453
      %v2472 = vpack.c.b16 %v2456, %v2455
      %v2474 = vsel %vm669, %v2457, 0
      %v2477 = vsel %vm669, %v2458, 0
      %v2480 = vsel %vm669, %v2459, 0
      %v2483 = vsel %vm669, %v2460, 0
      %v2486 = vsel %vm669, %v2461, 0
      %v2489 = vsel %vm669, %v2462, 0
      %v2492 = vsel %vm669, %v2463, 0
      %v2495 = vsel %vm669, %v2464, 0
      %v2498 = vsel %vm669, %v2465, 0
      %v2501 = vsel %vm669, %v2466, 0
      %v2504 = vsel %vm669, %v2467, 0
      %v2507 = vsel %vm669, %v2468, 0
      %v2510 = vsel %vm669, %v2469, 0
      %v2513 = vsel %vm669, %v2470, 0
      %v2516 = vsel %vm669, %v2471, 0
      %v2519 = vsel %vm669, %v2472, 0
      %v2522 = vsel %vm718, %v2424, 0
      %2524 = vmatprep.subr.bf16.mxu0 0
      %2525 = vmatpush1.bf16.msra.mxu0 %v2522
      %2526 = vmatprep.subr.bf16.mxu0 0
      %2527 = vmatpush1.bf16.msra.mxu0 0
      %2528 = vmatprep.subr.bf16.mxu0 0
      %2529 = vmatpush1.bf16.msra.mxu0 0
      %2530 = vmatprep.subr.bf16.mxu0 0
      %2531 = vmatpush1.bf16.msra.mxu0 0
      %2532 = vmatprep.subr.bf16.mxu0 0
      %2533 = vmatpush1.bf16.msra.mxu0 0
      %2534 = vmatprep.subr.bf16.mxu0 0
      %2535 = vmatpush1.bf16.msra.mxu0 0
      %2536 = vmatprep.subr.bf16.mxu0 0
      %2537 = vmatpush1.bf16.msra.mxu0 0
      %2538 = vmatprep.subr.bf16.mxu0 0
      %2539 = vmatpush1.bf16.msra.mxu0 0
      %2540 = vmatprep.subr.bf16.mxu0 0
      %2541 = vmatpush1.bf16.msra.mxu0 0
      %2542 = vmatprep.subr.bf16.mxu0 0
      %2543 = vmatpush1.bf16.msra.mxu0 0
      %2544 = vmatprep.subr.bf16.mxu0 0
      %2545 = vmatpush1.bf16.msra.mxu0 0
      %2546 = vmatprep.subr.bf16.mxu0 0
      %2547 = vmatpush1.bf16.msra.mxu0 0
      %2548 = vmatprep.subr.bf16.mxu0 0
      %2549 = vmatpush1.bf16.msra.mxu0 0
      %2550 = vmatprep.subr.bf16.mxu0 0
      %2551 = vmatpush1.bf16.msra.mxu0 0
      %2552 = vmatprep.subr.bf16.mxu0 0
      %2553 = vmatpush1.bf16.msra.mxu0 0
      %2554 = vmatprep.subr.bf16.mxu0 0
      %2555 = vmatpush1.bf16.msra.mxu0 0
      %2556 = vmatprep.mubr.bf16.mxu0 0
      %2557 = vmatmul.mubr.bf16.gmra.mrb[0].mxu0 %v2474
      %v2558 = vpop.f32.mrb[0].mxu0
      %v2559 = vadd.f32 0.0, %v2558
      %v2560 = vpop.f32.mrb[0].mxu0
      %v2561 = vpop.f32.mrb[0].mxu0
      %v2562 = vadd.f32 0.0, %v2561
      %v2563 = vpop.f32.mrb[0].mxu0
      %2564 = vmatprep.mubr.bf16.mxu0 0
      %2565 = vmatmul.mubr.bf16.gmra.mrb[0].mxu0 %v2477
      %v2566 = vpop.f32.mrb[0].mxu0
      %v2567 = vadd.f32 0.0, %v2566
      %v2568 = vpop.f32.mrb[0].mxu0
      %v2569 = vpop.f32.mrb[0].mxu0
      %v2570 = vadd.f32 0.0, %v2569
      %v2571 = vpop.f32.mrb[0].mxu0
      %2572 = vmatprep.mubr.bf16.mxu0 0
      %2573 = vmatmul.mubr.bf16.gmra.mrb[0].mxu0 %v2480
      %v2574 = vpop.f32.mrb[0].mxu0
      %v2575 = vadd.f32 0.0, %v2574
      %v2576 = vpop.f32.mrb[0].mxu0
      %v2577 = vpop.f32.mrb[0].mxu0
      %v2578 = vadd.f32 0.0, %v2577
      %v2579 = vpop.f32.mrb[0].mxu0
      %2580 = vmatprep.mubr.bf16.mxu0 0
      %2581 = vmatmul.mubr.bf16.gmra.mrb[0].mxu0 %v2483
      %v2582 = vpop.f32.mrb[0].mxu0
      %v2583 = vadd.f32 0.0, %v2582
      %v2584 = vpop.f32.mrb[0].mxu0
      %v2585 = vpop.f32.mrb[0].mxu0
      %v2586 = vadd.f32 0.0, %v2585
      %v2587 = vpop.f32.mrb[0].mxu0
      %2588 = vmatprep.mubr.bf16.mxu0 0
      %2589 = vmatmul.mubr.bf16.gmra.mrb[0].mxu0 %v2486
      %v2590 = vpop.f32.mrb[0].mxu0
      %v2591 = vadd.f32 0.0, %v2590
      %v2592 = vpop.f32.mrb[0].mxu0
      %v2593 = vpop.f32.mrb[0].mxu0
      %v2594 = vadd.f32 0.0, %v2593
      %v2595 = vpop.f32.mrb[0].mxu0
      %2596 = vmatprep.mubr.bf16.mxu0 0
      %2597 = vmatmul.mubr.bf16.gmra.mrb[0].mxu0 %v2489
      %v2598 = vpop.f32.mrb[0].mxu0
      %v2599 = vadd.f32 0.0, %v2598
      %v2600 = vpop.f32.mrb[0].mxu0
      %v2601 = vpop.f32.mrb[0].mxu0
      %v2602 = vadd.f32 0.0, %v2601
      %v2603 = vpop.f32.mrb[0].mxu0
      %2604 = vmatprep.mubr.bf16.mxu0 0
      %2605 = vmatmul.mubr.bf16.gmra.mrb[0].mxu0 %v2492
      %v2606 = vpop.f32.mrb[0].mxu0
      %v2607 = vadd.f32 0.0, %v2606
      %v2608 = vpop.f32.mrb[0].mxu0
      %v2609 = vpop.f32.mrb[0].mxu0
      %v2610 = vadd.f32 0.0, %v2609
      %v2611 = vpop.f32.mrb[0].mxu0
      %2612 = vmatprep.mubr.bf16.mxu0 0
      %2613 = vmatmul.mubr.bf16.gmra.mrb[0].mxu0 %v2495
      %v2614 = vpop.f32.mrb[0].mxu0
      %v2615 = vadd.f32 0.0, %v2614
      %v2616 = vpop.f32.mrb[0].mxu0
      %v2617 = vpop.f32.mrb[0].mxu0
      %v2618 = vadd.f32 0.0, %v2617
      %v2619 = vpop.f32.mrb[0].mxu0
      %2620 = vmatprep.mubr.bf16.mxu0 0
      %2621 = vmatmul.mubr.bf16.gmra.mrb[0].mxu0 %v2498
      %v2622 = vpop.f32.mrb[0].mxu0
      %v2623 = vadd.f32 0.0, %v2622
      %v2624 = vpop.f32.mrb[0].mxu0
      %v2625 = vpop.f32.mrb[0].mxu0
      %v2626 = vadd.f32 0.0, %v2625
      %v2627 = vpop.f32.mrb[0].mxu0
      %2628 = vmatprep.mubr.bf16.mxu0 0
      %2629 = vmatmul.mubr.bf16.gmra.mrb[0].mxu0 %v2501
      %v2630 = vpop.f32.mrb[0].mxu0
      %v2631 = vadd.f32 0.0, %v2630
      %v2632 = vpop.f32.mrb[0].mxu0
      %v2633 = vpop.f32.mrb[0].mxu0
      %v2634 = vadd.f32 0.0, %v2633
      %v2635 = vpop.f32.mrb[0].mxu0
      %2636 = vmatprep.mubr.bf16.mxu0 0
      %2637 = vmatmul.mubr.bf16.gmra.mrb[0].mxu0 %v2504
      %v2638 = vpop.f32.mrb[0].mxu0
      %v2639 = vadd.f32 0.0, %v2638
      %v2640 = vpop.f32.mrb[0].mxu0
      %v2641 = vpop.f32.mrb[0].mxu0
      %v2642 = vadd.f32 0.0, %v2641
      %v2643 = vpop.f32.mrb[0].mxu0
      %2644 = vmatprep.mubr.bf16.mxu0 0
      %2645 = vmatmul.mubr.bf16.gmra.mrb[0].mxu0 %v2507
      %v2646 = vpop.f32.mrb[0].mxu0
      %v2647 = vadd.f32 0.0, %v2646
      %v2648 = vpop.f32.mrb[0].mxu0
      %v2649 = vpop.f32.mrb[0].mxu0
      %v2650 = vadd.f32 0.0, %v2649
      %v2651 = vpop.f32.mrb[0].mxu0
      %2652 = vmatprep.mubr.bf16.mxu0 0
      %2653 = vmatmul.mubr.bf16.gmra.mrb[0].mxu0 %v2510
      %v2654 = vpop.f32.mrb[0].mxu0
      %v2655 = vadd.f32 0.0, %v2654
      %v2656 = vpop.f32.mrb[0].mxu0
      %v2657 = vpop.f32.mrb[0].mxu0
      %v2658 = vadd.f32 0.0, %v2657
      %v2659 = vpop.f32.mrb[0].mxu0
      %2660 = vmatprep.mubr.bf16.mxu0 0
      %2661 = vmatmul.mubr.bf16.gmra.mrb[0].mxu0 %v2513
      %v2662 = vpop.f32.mrb[0].mxu0
      %v2663 = vadd.f32 0.0, %v2662
      %v2664 = vpop.f32.mrb[0].mxu0
      %v2665 = vpop.f32.mrb[0].mxu0
      %v2666 = vadd.f32 0.0, %v2665
      %v2667 = vpop.f32.mrb[0].mxu0
      %2668 = vmatprep.mubr.bf16.mxu0 0
      %2669 = vmatmul.mubr.bf16.gmra.mrb[0].mxu0 %v2516
      %v2670 = vpop.f32.mrb[0].mxu0
      %v2671 = vadd.f32 0.0, %v2670
      %v2672 = vpop.f32.mrb[0].mxu0
      %v2673 = vpop.f32.mrb[0].mxu0
      %v2674 = vadd.f32 0.0, %v2673
      %v2675 = vpop.f32.mrb[0].mxu0
      %2676 = vmatprep.mubr.bf16.mxu0 0
      %2677 = vmatmul.mubr.bf16.gmra.mrb[0].mxu0 %v2519
      %v2678 = vpop.f32.mrb[0].mxu0
      %v2679 = vadd.f32 0.0, %v2678
      %v2680 = vpop.f32.mrb[0].mxu0
      %v2681 = vpop.f32.mrb[0].mxu0
      %v2682 = vadd.f32 0.0, %v2681
      %v2683 = vpop.f32.mrb[0].mxu0
      %2684 = vdwg.mxu0
      %v2685 = vadd.f32 %v1959, %v2559
      %v2686 = vadd.f32 %v1960, %v2562
      %v2687 = vadd.f32 %v1961, %v2567
      %v2688 = vadd.f32 %v1962, %v2570
      %v2689 = vadd.f32 %v1963, %v2575
      %v2690 = vadd.f32 %v1964, %v2578
      %v2691 = vadd.f32 %v1965, %v2583
      %v2692 = vadd.f32 %v1966, %v2586
      %v2693 = vadd.f32 %v1967, %v2591
      %v2694 = vadd.f32 %v1968, %v2594
      %v2695 = vadd.f32 %v1969, %v2599
      %v2696 = vadd.f32 %v1970, %v2602
      %v2697 = vadd.f32 %v1971, %v2607
      %v2698 = vadd.f32 %v1972, %v2610
      %v2699 = vadd.f32 %v1973, %v2615
      %v2700 = vadd.f32 %v1974, %v2618
      %v2701 = vadd.f32 %v1975, %v2623
      %v2702 = vadd.f32 %v1976, %v2626
      %v2703 = vadd.f32 %v1977, %v2631
      %v2704 = vadd.f32 %v1978, %v2634
      %v2705 = vadd.f32 %v1979, %v2639
      %v2706 = vadd.f32 %v1980, %v2642
      %v2707 = vadd.f32 %v1981, %v2647
      %v2708 = vadd.f32 %v1982, %v2650
      %v2709 = vadd.f32 %v1983, %v2655
      %v2710 = vadd.f32 %v1984, %v2658
      %v2711 = vadd.f32 %v1985, %v2663
      %v2712 = vadd.f32 %v1986, %v2666
      %v2713 = vadd.f32 %v1987, %v2671
      %v2714 = vadd.f32 %v1988, %v2674
      %v2715 = vadd.f32 %v1989, %v2679
      %v2716 = vadd.f32 %v1990, %v2682
      %v2717 = vld [vmem:[%s1632] sm:$0xe]
      %v2718 = vld [vmem:[%s1632 + $0xc] sm:$0xe]
      %v2719 = vld [vmem:[%s1632 + $0x18] sm:$0xe]
      %v2720 = vld [vmem:[%s1632 + $0x24] sm:$0xe]
      %v2721 = vld [vmem:[%s1632 + $0x30] sm:$0xe]
      %v2722 = vld [vmem:[%s1632 + $0x3c] sm:$0xe]
      %v2723 = vld [vmem:[%s1632 + $0x48] sm:$0xe]
      %v2724 = vld [vmem:[%s1632 + $0x54] sm:$0xe]
      %v2725 = vld [vmem:[%s1632 + $0x60] sm:$0xe]
      %v2726 = vld [vmem:[%s1632 + $0x6c] sm:$0xe]
      %v2727 = vld [vmem:[%s1632 + $0x78] sm:$0xe]
      %v2728 = vld [vmem:[%s1632 + $0x84] sm:$0xe]
      %v2729 = vld [vmem:[%s1632 + $0x90] sm:$0xe]
      %v2730 = vld [vmem:[%s1632 + $0x9c] sm:$0xe]
      %v2731 = vld [vmem:[%s1632 + $0xa8] sm:$0xe]
      %v2732 = vld [vmem:[%s1632 + $0xb4] sm:$0xe]
      %v2781 = vrot.slane %v2717, 5
      %v2782 = vrot.slane %v2781, 4
      %v2783 = vrot.slane %v1992, 5
      %v2784 = vsel %vm1225, %v2782, %v2783
      %v2785 = vrot.slane %v2783, 4
      %v2786 = vrot.slane %v1993, 5
      %v2787 = vsel %vm1225, %v2785, %v2786
      %v2788 = vrot.slane %v2718, 5
      %v2789 = vrot.slane %v2788, 4
      %v2790 = vrot.slane %v1995, 5
      %v2791 = vsel %vm1225, %v2789, %v2790
      %v2792 = vrot.slane %v2790, 4
      %v2793 = vrot.slane %v1996, 5
      %v2794 = vsel %vm1225, %v2792, %v2793
      %v2795 = vrot.slane %v2719, 5
      %v2796 = vrot.slane %v2795, 4
      %v2797 = vrot.slane %v1998, 5
      %v2798 = vsel %vm1225, %v2796, %v2797
      %v2799 = vrot.slane %v2797, 4
      %v2800 = vrot.slane %v1999, 5
      %v2801 = vsel %vm1225, %v2799, %v2800
      %v2802 = vrot.slane %v2720, 5
      %v2803 = vrot.slane %v2802, 4
      %v2804 = vrot.slane %v2001, 5
      %v2805 = vsel %vm1225, %v2803, %v2804
      %v2806 = vrot.slane %v2804, 4
      %v2807 = vrot.slane %v2002, 5
      %v2808 = vsel %vm1225, %v2806, %v2807
      %v2809 = vrot.slane %v2721, 5
      %v2810 = vrot.slane %v2809, 4
      %v2811 = vrot.slane %v2004, 5
      %v2812 = vsel %vm1225, %v2810, %v2811
      %v2813 = vrot.slane %v2811, 4
      %v2814 = vrot.slane %v2005, 5
      %v2815 = vsel %vm1225, %v2813, %v2814
      %v2816 = vrot.slane %v2722, 5
      %v2817 = vrot.slane %v2816, 4
      %v2818 = vrot.slane %v2007, 5
      %v2819 = vsel %vm1225, %v2817, %v2818
      %v2820 = vrot.slane %v2818, 4
      %v2821 = vrot.slane %v2008, 5
      %v2822 = vsel %vm1225, %v2820, %v2821
      %v2823 = vrot.slane %v2723, 5
      %v2824 = vrot.slane %v2823, 4
      %v2825 = vrot.slane %v2010, 5
      %v2826 = vsel %vm1225, %v2824, %v2825
      %v2827 = vrot.slane %v2825, 4
      %v2828 = vrot.slane %v2011, 5
      %v2829 = vsel %vm1225, %v2827, %v2828
      %v2830 = vrot.slane %v2724, 5
      %v2831 = vrot.slane %v2830, 4
      %v2832 = vrot.slane %v2013, 5
      %v2833 = vsel %vm1225, %v2831, %v2832
      %v2834 = vrot.slane %v2832, 4
      %v2835 = vrot.slane %v2014, 5
      %v2836 = vsel %vm1225, %v2834, %v2835
      %v2837 = vrot.slane %v2725, 5
      %v2838 = vrot.slane %v2837, 4
      %v2839 = vrot.slane %v2016, 5
      %v2840 = vsel %vm1225, %v2838, %v2839
      %v2841 = vrot.slane %v2839, 4
      %v2842 = vrot.slane %v2017, 5
      %v2843 = vsel %vm1225, %v2841, %v2842
      %v2844 = vrot.slane %v2726, 5
      %v2845 = vrot.slane %v2844, 4
      %v2846 = vrot.slane %v2019, 5
      %v2847 = vsel %vm1225, %v2845, %v2846
      %v2848 = vrot.slane %v2846, 4
      %v2849 = vrot.slane %v2020, 5
      %v2850 = vsel %vm1225, %v2848, %v2849
      %v2851 = vrot.slane %v2727, 5
      %v2852 = vrot.slane %v2851, 4
      %v2853 = vrot.slane %v2022, 5
      %v2854 = vsel %vm1225, %v2852, %v2853
      %v2855 = vrot.slane %v2853, 4
      %v2856 = vrot.slane %v2023, 5
      %v2857 = vsel %vm1225, %v2855, %v2856
      %v2858 = vrot.slane %v2728, 5
      %v2859 = vrot.slane %v2858, 4
      %v2860 = vrot.slane %v2025, 5
      %v2861 = vsel %vm1225, %v2859, %v2860
      %v2862 = vrot.slane %v2860, 4
      %v2863 = vrot.slane %v2026, 5
      %v2864 = vsel %vm1225, %v2862, %v2863
      %v2865 = vrot.slane %v2729, 5
      %v2866 = vrot.slane %v2865, 4
      %v2867 = vrot.slane %v2028, 5
      %v2868 = vsel %vm1225, %v2866, %v2867
      %v2869 = vrot.slane %v2867, 4
      %v2870 = vrot.slane %v2029, 5
      %v2871 = vsel %vm1225, %v2869, %v2870
      %v2872 = vrot.slane %v2730, 5
      %v2873 = vrot.slane %v2872, 4
      %v2874 = vrot.slane %v2031, 5
      %v2875 = vsel %vm1225, %v2873, %v2874
      %v2876 = vrot.slane %v2874, 4
      %v2877 = vrot.slane %v2032, 5
      %v2878 = vsel %vm1225, %v2876, %v2877
      %v2879 = vrot.slane %v2731, 5
      %v2880 = vrot.slane %v2879, 4
      %v2881 = vrot.slane %v2034, 5
      %v2882 = vsel %vm1225, %v2880, %v2881
      %v2883 = vrot.slane %v2881, 4
      %v2884 = vrot.slane %v2035, 5
      %v2885 = vsel %vm1225, %v2883, %v2884
      %v2886 = vrot.slane %v2732, 5
      %v2887 = vrot.slane %v2886, 4
      %v2888 = vrot.slane %v2037, 5
      %v2889 = vsel %vm1225, %v2887, %v2888
      %v2890 = vrot.slane %v2888, 4
      %v2891 = vrot.slane %v2038, 5
      %v2892 = vsel %vm1225, %v2890, %v2891
      %s2893 = scalar_lea.vmem %s1, 20
      %v2894 = vld [vmem:[%s2893] sm:$0xf]
      %v2895 = vunpack.c.l.b16 %v2784
      %v2896 = vunpack.c.l.b16 %v2787
      %v2897 = vunpack.c.l.b16 %v2791
      %v2898 = vunpack.c.l.b16 %v2794
      %v2899 = vunpack.c.l.b16 %v2798
      %v2900 = vunpack.c.l.b16 %v2801
      %v2901 = vunpack.c.l.b16 %v2805
      %v2902 = vunpack.c.l.b16 %v2808
      %v2903 = vunpack.c.l.b16 %v2812
      %v2904 = vunpack.c.l.b16 %v2815
      %v2905 = vunpack.c.l.b16 %v2819
      %v2906 = vunpack.c.l.b16 %v2822
      %v2907 = vunpack.c.l.b16 %v2826
      %v2908 = vunpack.c.l.b16 %v2829
      %v2909 = vunpack.c.l.b16 %v2833
      %v2910 = vunpack.c.l.b16 %v2836
      %v2911 = vunpack.c.l.b16 %v2840
      %v2912 = vunpack.c.l.b16 %v2843
      %v2913 = vunpack.c.l.b16 %v2847
      %v2914 = vunpack.c.l.b16 %v2850
      %v2915 = vunpack.c.l.b16 %v2854
      %v2916 = vunpack.c.l.b16 %v2857
      %v2917 = vunpack.c.l.b16 %v2861
      %v2918 = vunpack.c.l.b16 %v2864
      %v2919 = vunpack.c.l.b16 %v2868
      %v2920 = vunpack.c.l.b16 %v2871
      %v2921 = vunpack.c.l.b16 %v2875
      %v2922 = vunpack.c.l.b16 %v2878
      %v2923 = vunpack.c.l.b16 %v2882
      %v2924 = vunpack.c.l.b16 %v2885
      %v2925 = vunpack.c.l.b16 %v2889
      %v2926 = vunpack.c.l.b16 %v2892
      %v2927 = vpack.c.b16 %v2896, %v2895
      %v2928 = vpack.c.b16 %v2898, %v2897
      %v2929 = vpack.c.b16 %v2900, %v2899
      %v2930 = vpack.c.b16 %v2902, %v2901
      %v2931 = vpack.c.b16 %v2904, %v2903
      %v2932 = vpack.c.b16 %v2906, %v2905
      %v2933 = vpack.c.b16 %v2908, %v2907
      %v2934 = vpack.c.b16 %v2910, %v2909
      %v2935 = vpack.c.b16 %v2912, %v2911
      %v2936 = vpack.c.b16 %v2914, %v2913
      %v2937 = vpack.c.b16 %v2916, %v2915
      %v2938 = vpack.c.b16 %v2918, %v2917
      %v2939 = vpack.c.b16 %v2920, %v2919
      %v2940 = vpack.c.b16 %v2922, %v2921
      %v2941 = vpack.c.b16 %v2924, %v2923
      %v2942 = vpack.c.b16 %v2926, %v2925
      %v2944 = vsel %vm669, %v2927, 0
      %v2947 = vsel %vm669, %v2928, 0
      %v2950 = vsel %vm669, %v2929, 0
      %v2953 = vsel %vm669, %v2930, 0
      %v2956 = vsel %vm669, %v2931, 0
      %v2959 = vsel %vm669, %v2932, 0
      %v2962 = vsel %vm669, %v2933, 0
      %v2965 = vsel %vm669, %v2934, 0
      %v2968 = vsel %vm669, %v2935, 0
      %v2971 = vsel %vm669, %v2936, 0
      %v2974 = vsel %vm669, %v2937, 0
      %v2977 = vsel %vm669, %v2938, 0
      %v2980 = vsel %vm669, %v2939, 0
      %v2983 = vsel %vm669, %v2940, 0
      %v2986 = vsel %vm669, %v2941, 0
      %v2989 = vsel %vm669, %v2942, 0
      %v2992 = vsel %vm718, %v2894, 0
      %2994 = vmatprep.subr.bf16.mxu0 0
      %2995 = vmatpush1.bf16.msra.mxu0 %v2992
      %2996 = vmatprep.subr.bf16.mxu0 0
      %2997 = vmatpush1.bf16.msra.mxu0 0
      %2998 = vmatprep.subr.bf16.mxu0 0
      %2999 = vmatpush1.bf16.msra.mxu0 0
      %3000 = vmatprep.subr.bf16.mxu0 0
      %3001 = vmatpush1.bf16.msra.mxu0 0
      %3002 = vmatprep.subr.bf16.mxu0 0
      %3003 = vmatpush1.bf16.msra.mxu0 0
      %3004 = vmatprep.subr.bf16.mxu0 0
      %3005 = vmatpush1.bf16.msra.mxu0 0
      %3006 = vmatprep.subr.bf16.mxu0 0
      %3007 = vmatpush1.bf16.msra.mxu0 0
      %3008 = vmatprep.subr.bf16.mxu0 0
      %3009 = vmatpush1.bf16.msra.mxu0 0
      %3010 = vmatprep.subr.bf16.mxu0 0
      %3011 = vmatpush1.bf16.msra.mxu0 0
      %3012 = vmatprep.subr.bf16.mxu0 0
      %3013 = vmatpush1.bf16.msra.mxu0 0
      %3014 = vmatprep.subr.bf16.mxu0 0
      %3015 = vmatpush1.bf16.msra.mxu0 0
      %3016 = vmatprep.subr.bf16.mxu0 0
      %3017 = vmatpush1.bf16.msra.mxu0 0
      %3018 = vmatprep.subr.bf16.mxu0 0
      %3019 = vmatpush1.bf16.msra.mxu0 0
      %3020 = vmatprep.subr.bf16.mxu0 0
      %3021 = vmatpush1.bf16.msra.mxu0 0
      %3022 = vmatprep.subr.bf16.mxu0 0
      %3023 = vmatpush1.bf16.msra.mxu0 0
      %3024 = vmatprep.subr.bf16.mxu0 0
      %3025 = vmatpush1.bf16.msra.mxu0 0
      %3026 = vmatprep.mubr.bf16.mxu0 0
      %3027 = vmatmul.mubr.bf16.gmra.mrb[0].mxu0 %v2944
      %v3028 = vpop.f32.mrb[0].mxu0
      %v3029 = vadd.f32 0.0, %v3028
      %v3030 = vpop.f32.mrb[0].mxu0
      %v3031 = vpop.f32.mrb[0].mxu0
      %v3032 = vadd.f32 0.0, %v3031
      %v3033 = vpop.f32.mrb[0].mxu0
      %3034 = vmatprep.mubr.bf16.mxu0 0
      %3035 = vmatmul.mubr.bf16.gmra.mrb[0].mxu0 %v2947
      %v3036 = vpop.f32.mrb[0].mxu0
      %v3037 = vadd.f32 0.0, %v3036
      %v3038 = vpop.f32.mrb[0].mxu0
      %v3039 = vpop.f32.mrb[0].mxu0
      %v3040 = vadd.f32 0.0, %v3039
      %v3041 = vpop.f32.mrb[0].mxu0
      %3042 = vmatprep.mubr.bf16.mxu0 0
      %3043 = vmatmul.mubr.bf16.gmra.mrb[0].mxu0 %v2950
      %v3044 = vpop.f32.mrb[0].mxu0
      %v3045 = vadd.f32 0.0, %v3044
      %v3046 = vpop.f32.mrb[0].mxu0
      %v3047 = vpop.f32.mrb[0].mxu0
      %v3048 = vadd.f32 0.0, %v3047
      %v3049 = vpop.f32.mrb[0].mxu0
      %3050 = vmatprep.mubr.bf16.mxu0 0
      %3051 = vmatmul.mubr.bf16.gmra.mrb[0].mxu0 %v2953
      %v3052 = vpop.f32.mrb[0].mxu0
      %v3053 = vadd.f32 0.0, %v3052
      %v3054 = vpop.f32.mrb[0].mxu0
      %v3055 = vpop.f32.mrb[0].mxu0
      %v3056 = vadd.f32 0.0, %v3055
      %v3057 = vpop.f32.mrb[0].mxu0
      %3058 = vmatprep.mubr.bf16.mxu0 0
      %3059 = vmatmul.mubr.bf16.gmra.mrb[0].mxu0 %v2956
      %v3060 = vpop.f32.mrb[0].mxu0
      %v3061 = vadd.f32 0.0, %v3060
      %v3062 = vpop.f32.mrb[0].mxu0
      %v3063 = vpop.f32.mrb[0].mxu0
      %v3064 = vadd.f32 0.0, %v3063
      %v3065 = vpop.f32.mrb[0].mxu0
      %3066 = vmatprep.mubr.bf16.mxu0 0
      %3067 = vmatmul.mubr.bf16.gmra.mrb[0].mxu0 %v2959
      %v3068 = vpop.f32.mrb[0].mxu0
      %v3069 = vadd.f32 0.0, %v3068
      %v3070 = vpop.f32.mrb[0].mxu0
      %v3071 = vpop.f32.mrb[0].mxu0
      %v3072 = vadd.f32 0.0, %v3071
      %v3073 = vpop.f32.mrb[0].mxu0
      %3074 = vmatprep.mubr.bf16.mxu0 0
      %3075 = vmatmul.mubr.bf16.gmra.mrb[0].mxu0 %v2962
      %v3076 = vpop.f32.mrb[0].mxu0
      %v3077 = vadd.f32 0.0, %v3076
      %v3078 = vpop.f32.mrb[0].mxu0
      %v3079 = vpop.f32.mrb[0].mxu0
      %v3080 = vadd.f32 0.0, %v3079
      %v3081 = vpop.f32.mrb[0].mxu0
      %3082 = vmatprep.mubr.bf16.mxu0 0
      %3083 = vmatmul.mubr.bf16.gmra.mrb[0].mxu0 %v2965
      %v3084 = vpop.f32.mrb[0].mxu0
      %v3085 = vadd.f32 0.0, %v3084
      %v3086 = vpop.f32.mrb[0].mxu0
      %v3087 = vpop.f32.mrb[0].mxu0
      %v3088 = vadd.f32 0.0, %v3087
      %v3089 = vpop.f32.mrb[0].mxu0
      %3090 = vmatprep.mubr.bf16.mxu0 0
      %3091 = vmatmul.mubr.bf16.gmra.mrb[0].mxu0 %v2968
      %v3092 = vpop.f32.mrb[0].mxu0
      %v3093 = vadd.f32 0.0, %v3092
      %v3094 = vpop.f32.mrb[0].mxu0
      %v3095 = vpop.f32.mrb[0].mxu0
      %v3096 = vadd.f32 0.0, %v3095
      %v3097 = vpop.f32.mrb[0].mxu0
      %3098 = vmatprep.mubr.bf16.mxu0 0
      %3099 = vmatmul.mubr.bf16.gmra.mrb[0].mxu0 %v2971
      %v3100 = vpop.f32.mrb[0].mxu0
      %v3101 = vadd.f32 0.0, %v3100
      %v3102 = vpop.f32.mrb[0].mxu0
      %v3103 = vpop.f32.mrb[0].mxu0
      %v3104 = vadd.f32 0.0, %v3103
      %v3105 = vpop.f32.mrb[0].mxu0
      %3106 = vmatprep.mubr.bf16.mxu0 0
      %3107 = vmatmul.mubr.bf16.gmra.mrb[0].mxu0 %v2974
      %v3108 = vpop.f32.mrb[0].mxu0
      %v3109 = vadd.f32 0.0, %v3108
      %v3110 = vpop.f32.mrb[0].mxu0
      %v3111 = vpop.f32.mrb[0].mxu0
      %v3112 = vadd.f32 0.0, %v3111
      %v3113 = vpop.f32.mrb[0].mxu0
      %3114 = vmatprep.mubr.bf16.mxu0 0
      %3115 = vmatmul.mubr.bf16.gmra.mrb[0].mxu0 %v2977
      %v3116 = vpop.f32.mrb[0].mxu0
      %v3117 = vadd.f32 0.0, %v3116
      %v3118 = vpop.f32.mrb[0].mxu0
      %v3119 = vpop.f32.mrb[0].mxu0
      %v3120 = vadd.f32 0.0, %v3119
      %v3121 = vpop.f32.mrb[0].mxu0
      %3122 = vmatprep.mubr.bf16.mxu0 0
      %3123 = vmatmul.mubr.bf16.gmra.mrb[0].mxu0 %v2980
      %v3124 = vpop.f32.mrb[0].mxu0
      %v3125 = vadd.f32 0.0, %v3124
      %v3126 = vpop.f32.mrb[0].mxu0
      %v3127 = vpop.f32.mrb[0].mxu0
      %v3128 = vadd.f32 0.0, %v3127
      %v3129 = vpop.f32.mrb[0].mxu0
      %3130 = vmatprep.mubr.bf16.mxu0 0
      %3131 = vmatmul.mubr.bf16.gmra.mrb[0].mxu0 %v2983
      %v3132 = vpop.f32.mrb[0].mxu0
      %v3133 = vadd.f32 0.0, %v3132
      %v3134 = vpop.f32.mrb[0].mxu0
      %v3135 = vpop.f32.mrb[0].mxu0
      %v3136 = vadd.f32 0.0, %v3135
      %v3137 = vpop.f32.mrb[0].mxu0
      %3138 = vmatprep.mubr.bf16.mxu0 0
      %3139 = vmatmul.mubr.bf16.gmra.mrb[0].mxu0 %v2986
      %v3140 = vpop.f32.mrb[0].mxu0
      %v3141 = vadd.f32 0.0, %v3140
      %v3142 = vpop.f32.mrb[0].mxu0
      %v3143 = vpop.f32.mrb[0].mxu0
      %v3144 = vadd.f32 0.0, %v3143
      %v3145 = vpop.f32.mrb[0].mxu0
      %3146 = vmatprep.mubr.bf16.mxu0 0
      %3147 = vmatmul.mubr.bf16.gmra.mrb[0].mxu0 %v2989
      %v3148 = vpop.f32.mrb[0].mxu0
      %v3149 = vadd.f32 0.0, %v3148
      %v3150 = vpop.f32.mrb[0].mxu0
      %v3151 = vpop.f32.mrb[0].mxu0
      %v3152 = vadd.f32 0.0, %v3151
      %v3153 = vpop.f32.mrb[0].mxu0
      %3154 = vdwg.mxu0
      %v3155 = vadd.f32 %v2685, %v3029
      %v3156 = vadd.f32 %v2686, %v3032
      %v3157 = vadd.f32 %v2687, %v3037
      %v3158 = vadd.f32 %v2688, %v3040
      %v3159 = vadd.f32 %v2689, %v3045
      %v3160 = vadd.f32 %v2690, %v3048
      %v3161 = vadd.f32 %v2691, %v3053
      %v3162 = vadd.f32 %v2692, %v3056
      %v3163 = vadd.f32 %v2693, %v3061
      %v3164 = vadd.f32 %v2694, %v3064
      %v3165 = vadd.f32 %v2695, %v3069
      %v3166 = vadd.f32 %v2696, %v3072
      %v3167 = vadd.f32 %v2697, %v3077
      %v3168 = vadd.f32 %v2698, %v3080
      %v3169 = vadd.f32 %v2699, %v3085
      %v3170 = vadd.f32 %v2700, %v3088
      %v3171 = vadd.f32 %v2701, %v3093
      %v3172 = vadd.f32 %v2702, %v3096
      %v3173 = vadd.f32 %v2703, %v3101
      %v3174 = vadd.f32 %v2704, %v3104
      %v3175 = vadd.f32 %v2705, %v3109
      %v3176 = vadd.f32 %v2706, %v3112
      %v3177 = vadd.f32 %v2707, %v3117
      %v3178 = vadd.f32 %v2708, %v3120
      %v3179 = vadd.f32 %v2709, %v3125
      %v3180 = vadd.f32 %v2710, %v3128
      %v3181 = vadd.f32 %v2711, %v3133
      %v3182 = vadd.f32 %v2712, %v3136
      %v3183 = vadd.f32 %v2713, %v3141
      %v3184 = vadd.f32 %v2714, %v3144
      %v3185 = vadd.f32 %v2715, %v3149
      %v3186 = vadd.f32 %v2716, %v3152
      %s3187 = scalar_lea.vmem %s172, 24
      %v3188 = vld [vmem:[%s3187] sm:$0xf]
      %v3189 = vld [vmem:[%s3187 + $0x4] sm:$0xf]
      %v3190 = vld [vmem:[%s3187 + $0xc] sm:$0xf]
      %v3191 = vld [vmem:[%s3187 + $0x10] sm:$0xf]
      %v3192 = vld [vmem:[%s3187 + $0x18] sm:$0xf]
      %v3193 = vld [vmem:[%s3187 + $0x1c] sm:$0xf]
      %v3194 = vld [vmem:[%s3187 + $0x24] sm:$0xf]
      %v3195 = vld [vmem:[%s3187 + $0x28] sm:$0xf]
      %v3196 = vld [vmem:[%s3187 + $0x30] sm:$0xf]
      %v3197 = vld [vmem:[%s3187 + $0x34] sm:$0xf]
      %v3198 = vld [vmem:[%s3187 + $0x3c] sm:$0xf]
      %v3199 = vld [vmem:[%s3187 + $0x40] sm:$0xf]
      %v3200 = vld [vmem:[%s3187 + $0x48] sm:$0xf]
      %v3201 = vld [vmem:[%s3187 + $0x4c] sm:$0xf]
      %v3202 = vld [vmem:[%s3187 + $0x54] sm:$0xf]
      %v3203 = vld [vmem:[%s3187 + $0x58] sm:$0xf]
      %v3204 = vld [vmem:[%s3187 + $0x60] sm:$0xf]
      %v3205 = vld [vmem:[%s3187 + $0x64] sm:$0xf]
      %v3206 = vld [vmem:[%s3187 + $0x6c] sm:$0xf]
      %v3207 = vld [vmem:[%s3187 + $0x70] sm:$0xf]
      %v3208 = vld [vmem:[%s3187 + $0x78] sm:$0xf]
      %v3209 = vld [vmem:[%s3187 + $0x7c] sm:$0xf]
      %v3210 = vld [vmem:[%s3187 + $0x84] sm:$0xf]
      %v3211 = vld [vmem:[%s3187 + $0x88] sm:$0xf]
      %v3212 = vld [vmem:[%s3187 + $0x90] sm:$0xf]
      %v3213 = vld [vmem:[%s3187 + $0x94] sm:$0xf]
      %v3214 = vld [vmem:[%s3187 + $0x9c] sm:$0xf]
      %v3215 = vld [vmem:[%s3187 + $0xa0] sm:$0xf]
      %v3216 = vld [vmem:[%s3187 + $0xa8] sm:$0xf]
      %v3217 = vld [vmem:[%s3187 + $0xac] sm:$0xf]
      %v3218 = vld [vmem:[%s3187 + $0xb4] sm:$0xf]
      %v3219 = vld [vmem:[%s3187 + $0xb8] sm:$0xf]
      %s3220 = scalar_lea.vmem %s1, 24
      %v3221 = vld [vmem:[%s3220] sm:$0xf]
      %v3254 = vunpack.c.l.b16 %v3188
      %v3255 = vunpack.c.l.b16 %v3189
      %v3256 = vunpack.c.l.b16 %v3190
      %v3257 = vunpack.c.l.b16 %v3191
      %v3258 = vunpack.c.l.b16 %v3192
      %v3259 = vunpack.c.l.b16 %v3193
      %v3260 = vunpack.c.l.b16 %v3194
      %v3261 = vunpack.c.l.b16 %v3195
      %v3262 = vunpack.c.l.b16 %v3196
      %v3263 = vunpack.c.l.b16 %v3197
      %v3264 = vunpack.c.l.b16 %v3198
      %v3265 = vunpack.c.l.b16 %v3199
      %v3266 = vunpack.c.l.b16 %v3200
      %v3267 = vunpack.c.l.b16 %v3201
      %v3268 = vunpack.c.l.b16 %v3202
      %v3269 = vunpack.c.l.b16 %v3203
      %v3270 = vunpack.c.l.b16 %v3204
      %v3271 = vunpack.c.l.b16 %v3205
      %v3272 = vunpack.c.l.b16 %v3206
      %v3273 = vunpack.c.l.b16 %v3207
      %v3274 = vunpack.c.l.b16 %v3208
      %v3275 = vunpack.c.l.b16 %v3209
      %v3276 = vunpack.c.l.b16 %v3210
      %v3277 = vunpack.c.l.b16 %v3211
      %v3278 = vunpack.c.l.b16 %v3212
      %v3279 = vunpack.c.l.b16 %v3213
      %v3280 = vunpack.c.l.b16 %v3214
      %v3281 = vunpack.c.l.b16 %v3215
      %v3282 = vunpack.c.l.b16 %v3216
      %v3283 = vunpack.c.l.b16 %v3217
      %v3284 = vunpack.c.l.b16 %v3218
      %v3285 = vunpack.c.l.b16 %v3219
      %v3286 = vpack.c.b16 %v3255, %v3254
      %v3287 = vpack.c.b16 %v3257, %v3256
      %v3288 = vpack.c.b16 %v3259, %v3258
      %v3289 = vpack.c.b16 %v3261, %v3260
      %v3290 = vpack.c.b16 %v3263, %v3262
      %v3291 = vpack.c.b16 %v3265, %v3264
      %v3292 = vpack.c.b16 %v3267, %v3266
      %v3293 = vpack.c.b16 %v3269, %v3268
      %v3294 = vpack.c.b16 %v3271, %v3270
      %v3295 = vpack.c.b16 %v3273, %v3272
      %v3296 = vpack.c.b16 %v3275, %v3274
      %v3297 = vpack.c.b16 %v3277, %v3276
      %v3298 = vpack.c.b16 %v3279, %v3278
      %v3299 = vpack.c.b16 %v3281, %v3280
      %v3300 = vpack.c.b16 %v3283, %v3282
      %v3301 = vpack.c.b16 %v3285, %v3284
      %v3303 = vsel %vm669, %v3286, 0
      %v3306 = vsel %vm669, %v3287, 0
      %v3309 = vsel %vm669, %v3288, 0
      %v3312 = vsel %vm669, %v3289, 0
      %v3315 = vsel %vm669, %v3290, 0
      %v3318 = vsel %vm669, %v3291, 0
      %v3321 = vsel %vm669, %v3292, 0
      %v3324 = vsel %vm669, %v3293, 0
      %v3327 = vsel %vm669, %v3294, 0
      %v3330 = vsel %vm669, %v3295, 0
      %v3333 = vsel %vm669, %v3296, 0
      %v3336 = vsel %vm669, %v3297, 0
      %v3339 = vsel %vm669, %v3298, 0
      %v3342 = vsel %vm669, %v3299, 0
      %v3345 = vsel %vm669, %v3300, 0
      %v3348 = vsel %vm669, %v3301, 0
      %v3351 = vsel %vm718, %v3221, 0
      %3353 = vmatprep.subr.bf16.mxu0 0
      %3354 = vmatpush1.bf16.msra.mxu0 %v3351
      %3355 = vmatprep.subr.bf16.mxu0 0
      %3356 = vmatpush1.bf16.msra.mxu0 0
      %3357 = vmatprep.subr.bf16.mxu0 0
      %3358 = vmatpush1.bf16.msra.mxu0 0
      %3359 = vmatprep.subr.bf16.mxu0 0
      %3360 = vmatpush1.bf16.msra.mxu0 0
      %3361 = vmatprep.subr.bf16.mxu0 0
      %3362 = vmatpush1.bf16.msra.mxu0 0
      %3363 = vmatprep.subr.bf16.mxu0 0
      %3364 = vmatpush1.bf16.msra.mxu0 0
      %3365 = vmatprep.subr.bf16.mxu0 0
      %3366 = vmatpush1.bf16.msra.mxu0 0
      %3367 = vmatprep.subr.bf16.mxu0 0
      %3368 = vmatpush1.bf16.msra.mxu0 0
      %3369 = vmatprep.subr.bf16.mxu0 0
      %3370 = vmatpush1.bf16.msra.mxu0 0
      %3371 = vmatprep.subr.bf16.mxu0 0
      %3372 = vmatpush1.bf16.msra.mxu0 0
      %3373 = vmatprep.subr.bf16.mxu0 0
      %3374 = vmatpush1.bf16.msra.mxu0 0
      %3375 = vmatprep.subr.bf16.mxu0 0
      %3376 = vmatpush1.bf16.msra.mxu0 0
      %3377 = vmatprep.subr.bf16.mxu0 0
      %3378 = vmatpush1.bf16.msra.mxu0 0
      %3379 = vmatprep.subr.bf16.mxu0 0
      %3380 = vmatpush1.bf16.msra.mxu0 0
      %3381 = vmatprep.subr.bf16.mxu0 0
      %3382 = vmatpush1.bf16.msra.mxu0 0
      %3383 = vmatprep.subr.bf16.mxu0 0
      %3384 = vmatpush1.bf16.msra.mxu0 0
      %3385 = vmatprep.mubr.bf16.mxu0 0
      %3386 = vmatmul.mubr.bf16.gmra.mrb[0].mxu0 %v3303
      %v3387 = vpop.f32.mrb[0].mxu0
      %v3388 = vadd.f32 0.0, %v3387
      %v3389 = vpop.f32.mrb[0].mxu0
      %v3390 = vpop.f32.mrb[0].mxu0
      %v3391 = vadd.f32 0.0, %v3390
      %v3392 = vpop.f32.mrb[0].mxu0
      %3393 = vmatprep.mubr.bf16.mxu0 0
      %3394 = vmatmul.mubr.bf16.gmra.mrb[0].mxu0 %v3306
      %v3395 = vpop.f32.mrb[0].mxu0
      %v3396 = vadd.f32 0.0, %v3395
      %v3397 = vpop.f32.mrb[0].mxu0
      %v3398 = vpop.f32.mrb[0].mxu0
      %v3399 = vadd.f32 0.0, %v3398
      %v3400 = vpop.f32.mrb[0].mxu0
      %3401 = vmatprep.mubr.bf16.mxu0 0
      %3402 = vmatmul.mubr.bf16.gmra.mrb[0].mxu0 %v3309
      %v3403 = vpop.f32.mrb[0].mxu0
      %v3404 = vadd.f32 0.0, %v3403
      %v3405 = vpop.f32.mrb[0].mxu0
      %v3406 = vpop.f32.mrb[0].mxu0
      %v3407 = vadd.f32 0.0, %v3406
      %v3408 = vpop.f32.mrb[0].mxu0
      %3409 = vmatprep.mubr.bf16.mxu0 0
      %3410 = vmatmul.mubr.bf16.gmra.mrb[0].mxu0 %v3312
      %v3411 = vpop.f32.mrb[0].mxu0
      %v3412 = vadd.f32 0.0, %v3411
      %v3413 = vpop.f32.mrb[0].mxu0
      %v3414 = vpop.f32.mrb[0].mxu0
      %v3415 = vadd.f32 0.0, %v3414
      %v3416 = vpop.f32.mrb[0].mxu0
      %3417 = vmatprep.mubr.bf16.mxu0 0
      %3418 = vmatmul.mubr.bf16.gmra.mrb[0].mxu0 %v3315
      %v3419 = vpop.f32.mrb[0].mxu0
      %v3420 = vadd.f32 0.0, %v3419
      %v3421 = vpop.f32.mrb[0].mxu0
      %v3422 = vpop.f32.mrb[0].mxu0
      %v3423 = vadd.f32 0.0, %v3422
      %v3424 = vpop.f32.mrb[0].mxu0
      %3425 = vmatprep.mubr.bf16.mxu0 0
      %3426 = vmatmul.mubr.bf16.gmra.mrb[0].mxu0 %v3318
      %v3427 = vpop.f32.mrb[0].mxu0
      %v3428 = vadd.f32 0.0, %v3427
      %v3429 = vpop.f32.mrb[0].mxu0
      %v3430 = vpop.f32.mrb[0].mxu0
      %v3431 = vadd.f32 0.0, %v3430
      %v3432 = vpop.f32.mrb[0].mxu0
      %3433 = vmatprep.mubr.bf16.mxu0 0
      %3434 = vmatmul.mubr.bf16.gmra.mrb[0].mxu0 %v3321
      %v3435 = vpop.f32.mrb[0].mxu0
      %v3436 = vadd.f32 0.0, %v3435
      %v3437 = vpop.f32.mrb[0].mxu0
      %v3438 = vpop.f32.mrb[0].mxu0
      %v3439 = vadd.f32 0.0, %v3438
      %v3440 = vpop.f32.mrb[0].mxu0
      %3441 = vmatprep.mubr.bf16.mxu0 0
      %3442 = vmatmul.mubr.bf16.gmra.mrb[0].mxu0 %v3324
      %v3443 = vpop.f32.mrb[0].mxu0
      %v3444 = vadd.f32 0.0, %v3443
      %v3445 = vpop.f32.mrb[0].mxu0
      %v3446 = vpop.f32.mrb[0].mxu0
      %v3447 = vadd.f32 0.0, %v3446
      %v3448 = vpop.f32.mrb[0].mxu0
      %3449 = vmatprep.mubr.bf16.mxu0 0
      %3450 = vmatmul.mubr.bf16.gmra.mrb[0].mxu0 %v3327
      %v3451 = vpop.f32.mrb[0].mxu0
      %v3452 = vadd.f32 0.0, %v3451
      %v3453 = vpop.f32.mrb[0].mxu0
      %v3454 = vpop.f32.mrb[0].mxu0
      %v3455 = vadd.f32 0.0, %v3454
      %v3456 = vpop.f32.mrb[0].mxu0
      %3457 = vmatprep.mubr.bf16.mxu0 0
      %3458 = vmatmul.mubr.bf16.gmra.mrb[0].mxu0 %v3330
      %v3459 = vpop.f32.mrb[0].mxu0
      %v3460 = vadd.f32 0.0, %v3459
      %v3461 = vpop.f32.mrb[0].mxu0
      %v3462 = vpop.f32.mrb[0].mxu0
      %v3463 = vadd.f32 0.0, %v3462
      %v3464 = vpop.f32.mrb[0].mxu0
      %3465 = vmatprep.mubr.bf16.mxu0 0
      %3466 = vmatmul.mubr.bf16.gmra.mrb[0].mxu0 %v3333
      %v3467 = vpop.f32.mrb[0].mxu0
      %v3468 = vadd.f32 0.0, %v3467
      %v3469 = vpop.f32.mrb[0].mxu0
      %v3470 = vpop.f32.mrb[0].mxu0
      %v3471 = vadd.f32 0.0, %v3470
      %v3472 = vpop.f32.mrb[0].mxu0
      %3473 = vmatprep.mubr.bf16.mxu0 0
      %3474 = vmatmul.mubr.bf16.gmra.mrb[0].mxu0 %v3336
      %v3475 = vpop.f32.mrb[0].mxu0
      %v3476 = vadd.f32 0.0, %v3475
      %v3477 = vpop.f32.mrb[0].mxu0
      %v3478 = vpop.f32.mrb[0].mxu0
      %v3479 = vadd.f32 0.0, %v3478
      %v3480 = vpop.f32.mrb[0].mxu0
      %3481 = vmatprep.mubr.bf16.mxu0 0
      %3482 = vmatmul.mubr.bf16.gmra.mrb[0].mxu0 %v3339
      %v3483 = vpop.f32.mrb[0].mxu0
      %v3484 = vadd.f32 0.0, %v3483
      %v3485 = vpop.f32.mrb[0].mxu0
      %v3486 = vpop.f32.mrb[0].mxu0
      %v3487 = vadd.f32 0.0, %v3486
      %v3488 = vpop.f32.mrb[0].mxu0
      %3489 = vmatprep.mubr.bf16.mxu0 0
      %3490 = vmatmul.mubr.bf16.gmra.mrb[0].mxu0 %v3342
      %v3491 = vpop.f32.mrb[0].mxu0
      %v3492 = vadd.f32 0.0, %v3491
      %v3493 = vpop.f32.mrb[0].mxu0
      %v3494 = vpop.f32.mrb[0].mxu0
      %v3495 = vadd.f32 0.0, %v3494
      %v3496 = vpop.f32.mrb[0].mxu0
      %3497 = vmatprep.mubr.bf16.mxu0 0
      %3498 = vmatmul.mubr.bf16.gmra.mrb[0].mxu0 %v3345
      %v3499 = vpop.f32.mrb[0].mxu0
      %v3500 = vadd.f32 0.0, %v3499
      %v3501 = vpop.f32.mrb[0].mxu0
      %v3502 = vpop.f32.mrb[0].mxu0
      %v3503 = vadd.f32 0.0, %v3502
      %v3504 = vpop.f32.mrb[0].mxu0
      %3505 = vmatprep.mubr.bf16.mxu0 0
      %3506 = vmatmul.mubr.bf16.gmra.mrb[0].mxu0 %v3348
      %v3507 = vpop.f32.mrb[0].mxu0
      %v3508 = vadd.f32 0.0, %v3507
      %v3509 = vpop.f32.mrb[0].mxu0
      %v3510 = vpop.f32.mrb[0].mxu0
      %v3511 = vadd.f32 0.0, %v3510
      %v3512 = vpop.f32.mrb[0].mxu0
      %3513 = vdwg.mxu0
      %v3514 = vadd.f32 %v3155, %v3388
      %v3515 = vadd.f32 %v3156, %v3391
      %v3516 = vadd.f32 %v3157, %v3396
      %v3517 = vadd.f32 %v3158, %v3399
      %v3518 = vadd.f32 %v3159, %v3404
      %v3519 = vadd.f32 %v3160, %v3407
      %v3520 = vadd.f32 %v3161, %v3412
      %v3521 = vadd.f32 %v3162, %v3415
      %v3522 = vadd.f32 %v3163, %v3420
      %v3523 = vadd.f32 %v3164, %v3423
      %v3524 = vadd.f32 %v3165, %v3428
      %v3525 = vadd.f32 %v3166, %v3431
      %v3526 = vadd.f32 %v3167, %v3436
      %v3527 = vadd.f32 %v3168, %v3439
      %v3528 = vadd.f32 %v3169, %v3444
      %v3529 = vadd.f32 %v3170, %v3447
      %v3530 = vadd.f32 %v3171, %v3452
      %v3531 = vadd.f32 %v3172, %v3455
      %v3532 = vadd.f32 %v3173, %v3460
      %v3533 = vadd.f32 %v3174, %v3463
      %v3534 = vadd.f32 %v3175, %v3468
      %v3535 = vadd.f32 %v3176, %v3471
      %v3536 = vadd.f32 %v3177, %v3476
      %v3537 = vadd.f32 %v3178, %v3479
      %v3538 = vadd.f32 %v3179, %v3484
      %v3539 = vadd.f32 %v3180, %v3487
      %v3540 = vadd.f32 %v3181, %v3492
      %v3541 = vadd.f32 %v3182, %v3495
      %v3542 = vadd.f32 %v3183, %v3500
      %v3543 = vadd.f32 %v3184, %v3503
      %v3544 = vadd.f32 %v3185, %v3508
      %v3545 = vadd.f32 %v3186, %v3511
      %v3546 = vld [vmem:[%s3187] sm:$0xf]
      %v3547 = vld [vmem:[%s3187 + $0x4] sm:$0xf]
      %v3548 = vld [vmem:[%s3187 + $0x8] sm:$0x1]
      %v3549 = vld [vmem:[%s3187 + $0xc] sm:$0xf]
      %v3550 = vld [vmem:[%s3187 + $0x10] sm:$0xf]
      %v3551 = vld [vmem:[%s3187 + $0x14] sm:$0x1]
      %v3552 = vld [vmem:[%s3187 + $0x18] sm:$0xf]
      %v3553 = vld [vmem:[%s3187 + $0x1c] sm:$0xf]
      %v3554 = vld [vmem:[%s3187 + $0x20] sm:$0x1]
      %v3555 = vld [vmem:[%s3187 + $0x24] sm:$0xf]
      %v3556 = vld [vmem:[%s3187 + $0x28] sm:$0xf]
      %v3557 = vld [vmem:[%s3187 + $0x2c] sm:$0x1]
      %v3558 = vld [vmem:[%s3187 + $0x30] sm:$0xf]
      %v3559 = vld [vmem:[%s3187 + $0x34] sm:$0xf]
      %v3560 = vld [vmem:[%s3187 + $0x38] sm:$0x1]
      %v3561 = vld [vmem:[%s3187 + $0x3c] sm:$0xf]
      %v3562 = vld [vmem:[%s3187 + $0x40] sm:$0xf]
      %v3563 = vld [vmem:[%s3187 + $0x44] sm:$0x1]
      %v3564 = vld [vmem:[%s3187 + $0x48] sm:$0xf]
      %v3565 = vld [vmem:[%s3187 + $0x4c] sm:$0xf]
      %v3566 = vld [vmem:[%s3187 + $0x50] sm:$0x1]
      %v3567 = vld [vmem:[%s3187 + $0x54] sm:$0xf]
      %v3568 = vld [vmem:[%s3187 + $0x58] sm:$0xf]
      %v3569 = vld [vmem:[%s3187 + $0x5c] sm:$0x1]
      %v3570 = vld [vmem:[%s3187 + $0x60] sm:$0xf]
      %v3571 = vld [vmem:[%s3187 + $0x64] sm:$0xf]
      %v3572 = vld [vmem:[%s3187 + $0x68] sm:$0x1]
      %v3573 = vld [vmem:[%s3187 + $0x6c] sm:$0xf]
      %v3574 = vld [vmem:[%s3187 + $0x70] sm:$0xf]
      %v3575 = vld [vmem:[%s3187 + $0x74] sm:$0x1]
      %v3576 = vld [vmem:[%s3187 + $0x78] sm:$0xf]
      %v3577 = vld [vmem:[%s3187 + $0x7c] sm:$0xf]
      %v3578 = vld [vmem:[%s3187 + $0x80] sm:$0x1]
      %v3579 = vld [vmem:[%s3187 + $0x84] sm:$0xf]
      %v3580 = vld [vmem:[%s3187 + $0x88] sm:$0xf]
      %v3581 = vld [vmem:[%s3187 + $0x8c] sm:$0x1]
      %v3582 = vld [vmem:[%s3187 + $0x90] sm:$0xf]
      %v3583 = vld [vmem:[%s3187 + $0x94] sm:$0xf]
      %v3584 = vld [vmem:[%s3187 + $0x98] sm:$0x1]
      %v3585 = vld [vmem:[%s3187 + $0x9c] sm:$0xf]
      %v3586 = vld [vmem:[%s3187 + $0xa0] sm:$0xf]
      %v3587 = vld [vmem:[%s3187 + $0xa4] sm:$0x1]
      %v3588 = vld [vmem:[%s3187 + $0xa8] sm:$0xf]
      %v3589 = vld [vmem:[%s3187 + $0xac] sm:$0xf]
      %v3590 = vld [vmem:[%s3187 + $0xb0] sm:$0x1]
      %v3591 = vld [vmem:[%s3187 + $0xb4] sm:$0xf]
      %v3592 = vld [vmem:[%s3187 + $0xb8] sm:$0xf]
      %v3593 = vld [vmem:[%s3187 + $0xbc] sm:$0x1]
      %v3595 = vshrl.u32 %v3546, 16
      %v3597 = vrot.slane %v3595, 4
      %v3598 = vshll.u32 %v3546, 16
      %v3600 = vrot.slane %v3598, 5
      %v3601 = vor.u32 %v3597, %v3600
      %v3602 = vrot.slane %v3601, 4
      %v3604 = vshll.u32 %v3547, 16
      %v3606 = vrot.slane %v3604, 5
      %v3607 = vsel %vm234, %v3602, %v3606
      %v3608 = vshrl.u32 %v3547, 16
      %v3610 = vrot.slane %v3608, 4
      %v3611 = vor.u32 %v3610, %v3606
      %v3612 = vrot.slane %v3611, 4
      %v3614 = vshll.u32 %v3548, 16
      %v3616 = vrot.slane %v3614, 5
      %v3617 = vsel %vm234, %v3612, %v3616
      %v3619 = vshrl.u32 %v3549, 16
      %v3621 = vrot.slane %v3619, 4
      %v3622 = vshll.u32 %v3549, 16
      %v3624 = vrot.slane %v3622, 5
      %v3625 = vor.u32 %v3621, %v3624
      %v3626 = vrot.slane %v3625, 4
      %v3628 = vshll.u32 %v3550, 16
      %v3630 = vrot.slane %v3628, 5
      %v3631 = vsel %vm234, %v3626, %v3630
      %v3632 = vshrl.u32 %v3550, 16
      %v3634 = vrot.slane %v3632, 4
      %v3635 = vor.u32 %v3634, %v3630
      %v3636 = vrot.slane %v3635, 4
      %v3638 = vshll.u32 %v3551, 16
      %v3640 = vrot.slane %v3638, 5
      %v3641 = vsel %vm234, %v3636, %v3640
      %v3643 = vshrl.u32 %v3552, 16
      %v3645 = vrot.slane %v3643, 4
      %v3646 = vshll.u32 %v3552, 16
      %v3648 = vrot.slane %v3646, 5
      %v3649 = vor.u32 %v3645, %v3648
      %v3650 = vrot.slane %v3649, 4
      %v3652 = vshll.u32 %v3553, 16
      %v3654 = vrot.slane %v3652, 5
      %v3655 = vsel %vm234, %v3650, %v3654
      %v3656 = vshrl.u32 %v3553, 16
      %v3658 = vrot.slane %v3656, 4
      %v3659 = vor.u32 %v3658, %v3654
      %v3660 = vrot.slane %v3659, 4
      %v3662 = vshll.u32 %v3554, 16
      %v3664 = vrot.slane %v3662, 5
      %v3665 = vsel %vm234, %v3660, %v3664
      %v3667 = vshrl.u32 %v3555, 16
      %v3669 = vrot.slane %v3667, 4
      %v3670 = vshll.u32 %v3555, 16
      %v3672 = vrot.slane %v3670, 5
      %v3673 = vor.u32 %v3669, %v3672
      %v3674 = vrot.slane %v3673, 4
      %v3676 = vshll.u32 %v3556, 16
      %v3678 = vrot.slane %v3676, 5
      %v3679 = vsel %vm234, %v3674, %v3678
      %v3680 = vshrl.u32 %v3556, 16
      %v3682 = vrot.slane %v3680, 4
      %v3683 = vor.u32 %v3682, %v3678
      %v3684 = vrot.slane %v3683, 4
      %v3686 = vshll.u32 %v3557, 16
      %v3688 = vrot.slane %v3686, 5
      %v3689 = vsel %vm234, %v3684, %v3688
      %v3691 = vshrl.u32 %v3558, 16
      %v3693 = vrot.slane %v3691, 4
      %v3694 = vshll.u32 %v3558, 16
      %v3696 = vrot.slane %v3694, 5
      %v3697 = vor.u32 %v3693, %v3696
      %v3698 = vrot.slane %v3697, 4
      %v3700 = vshll.u32 %v3559, 16
      %v3702 = vrot.slane %v3700, 5
      %v3703 = vsel %vm234, %v3698, %v3702
      %v3704 = vshrl.u32 %v3559, 16
      %v3706 = vrot.slane %v3704, 4
      %v3707 = vor.u32 %v3706, %v3702
      %v3708 = vrot.slane %v3707, 4
      %v3710 = vshll.u32 %v3560, 16
      %v3712 = vrot.slane %v3710, 5
      %v3713 = vsel %vm234, %v3708, %v3712
      %v3715 = vshrl.u32 %v3561, 16
      %v3717 = vrot.slane %v3715, 4
      %v3718 = vshll.u32 %v3561, 16
      %v3720 = vrot.slane %v3718, 5
      %v3721 = vor.u32 %v3717, %v3720
      %v3722 = vrot.slane %v3721, 4
      %v3724 = vshll.u32 %v3562, 16
      %v3726 = vrot.slane %v3724, 5
      %v3727 = vsel %vm234, %v3722, %v3726
      %v3728 = vshrl.u32 %v3562, 16
      %v3730 = vrot.slane %v3728, 4
      %v3731 = vor.u32 %v3730, %v3726
      %v3732 = vrot.slane %v3731, 4
      %v3734 = vshll.u32 %v3563, 16
      %v3736 = vrot.slane %v3734, 5
      %v3737 = vsel %vm234, %v3732, %v3736
      %v3739 = vshrl.u32 %v3564, 16
      %v3741 = vrot.slane %v3739, 4
      %v3742 = vshll.u32 %v3564, 16
      %v3744 = vrot.slane %v3742, 5
      %v3745 = vor.u32 %v3741, %v3744
      %v3746 = vrot.slane %v3745, 4
      %v3748 = vshll.u32 %v3565, 16
      %v3750 = vrot.slane %v3748, 5
      %v3751 = vsel %vm234, %v3746, %v3750
      %v3752 = vshrl.u32 %v3565, 16
      %v3754 = vrot.slane %v3752, 4
      %v3755 = vor.u32 %v3754, %v3750
      %v3756 = vrot.slane %v3755, 4
      %v3758 = vshll.u32 %v3566, 16
      %v3760 = vrot.slane %v3758, 5
      %v3761 = vsel %vm234, %v3756, %v3760
      %v3763 = vshrl.u32 %v3567, 16
      %v3765 = vrot.slane %v3763, 4
      %v3766 = vshll.u32 %v3567, 16
      %v3768 = vrot.slane %v3766, 5
      %v3769 = vor.u32 %v3765, %v3768
      %v3770 = vrot.slane %v3769, 4
      %v3772 = vshll.u32 %v3568, 16
      %v3774 = vrot.slane %v3772, 5
      %v3775 = vsel %vm234, %v3770, %v3774
      %v3776 = vshrl.u32 %v3568, 16
      %v3778 = vrot.slane %v3776, 4
      %v3779 = vor.u32 %v3778, %v3774
      %v3780 = vrot.slane %v3779, 4
      %v3782 = vshll.u32 %v3569, 16
      %v3784 = vrot.slane %v3782, 5
      %v3785 = vsel %vm234, %v3780, %v3784
      %v3787 = vshrl.u32 %v3570, 16
      %v3789 = vrot.slane %v3787, 4
      %v3790 = vshll.u32 %v3570, 16
      %v3792 = vrot.slane %v3790, 5
      %v3793 = vor.u32 %v3789, %v3792
      %v3794 = vrot.slane %v3793, 4
      %v3796 = vshll.u32 %v3571, 16
      %v3798 = vrot.slane %v3796, 5
      %v3799 = vsel %vm234, %v3794, %v3798
      %v3800 = vshrl.u32 %v3571, 16
      %v3802 = vrot.slane %v3800, 4
      %v3803 = vor.u32 %v3802, %v3798
      %v3804 = vrot.slane %v3803, 4
      %v3806 = vshll.u32 %v3572, 16
      %v3808 = vrot.slane %v3806, 5
      %v3809 = vsel %vm234, %v3804, %v3808
      %v3811 = vshrl.u32 %v3573, 16
      %v3813 = vrot.slane %v3811, 4
      %v3814 = vshll.u32 %v3573, 16
      %v3816 = vrot.slane %v3814, 5
      %v3817 = vor.u32 %v3813, %v3816
      %v3818 = vrot.slane %v3817, 4
      %v3820 = vshll.u32 %v3574, 16
      %v3822 = vrot.slane %v3820, 5
      %v3823 = vsel %vm234, %v3818, %v3822
      %v3824 = vshrl.u32 %v3574, 16
      %v3826 = vrot.slane %v3824, 4
      %v3827 = vor.u32 %v3826, %v3822
      %v3828 = vrot.slane %v3827, 4
      %v3830 = vshll.u32 %v3575, 16
      %v3832 = vrot.slane %v3830, 5
      %v3833 = vsel %vm234, %v3828, %v3832
      %v3835 = vshrl.u32 %v3576, 16
      %v3837 = vrot.slane %v3835, 4
      %v3838 = vshll.u32 %v3576, 16
      %v3840 = vrot.slane %v3838, 5
      %v3841 = vor.u32 %v3837, %v3840
      %v3842 = vrot.slane %v3841, 4
      %v3844 = vshll.u32 %v3577, 16
      %v3846 = vrot.slane %v3844, 5
      %v3847 = vsel %vm234, %v3842, %v3846
      %v3848 = vshrl.u32 %v3577, 16
      %v3850 = vrot.slane %v3848, 4
      %v3851 = vor.u32 %v3850, %v3846
      %v3852 = vrot.slane %v3851, 4
      %v3854 = vshll.u32 %v3578, 16
      %v3856 = vrot.slane %v3854, 5
      %v3857 = vsel %vm234, %v3852, %v3856
      %v3859 = vshrl.u32 %v3579, 16
      %v3861 = vrot.slane %v3859, 4
      %v3862 = vshll.u32 %v3579, 16
      %v3864 = vrot.slane %v3862, 5
      %v3865 = vor.u32 %v3861, %v3864
      %v3866 = vrot.slane %v3865, 4
      %v3868 = vshll.u32 %v3580, 16
      %v3870 = vrot.slane %v3868, 5
      %v3871 = vsel %vm234, %v3866, %v3870
      %v3872 = vshrl.u32 %v3580, 16
      %v3874 = vrot.slane %v3872, 4
      %v3875 = vor.u32 %v3874, %v3870
      %v3876 = vrot.slane %v3875, 4
      %v3878 = vshll.u32 %v3581, 16
      %v3880 = vrot.slane %v3878, 5
      %v3881 = vsel %vm234, %v3876, %v3880
      %v3883 = vshrl.u32 %v3582, 16
      %v3885 = vrot.slane %v3883, 4
      %v3886 = vshll.u32 %v3582, 16
      %v3888 = vrot.slane %v3886, 5
      %v3889 = vor.u32 %v3885, %v3888
      %v3890 = vrot.slane %v3889, 4
      %v3892 = vshll.u32 %v3583, 16
      %v3894 = vrot.slane %v3892, 5
      %v3895 = vsel %vm234, %v3890, %v3894
      %v3896 = vshrl.u32 %v3583, 16
      %v3898 = vrot.slane %v3896, 4
      %v3899 = vor.u32 %v3898, %v3894
      %v3900 = vrot.slane %v3899, 4
      %v3902 = vshll.u32 %v3584, 16
      %v3904 = vrot.slane %v3902, 5
      %v3905 = vsel %vm234, %v3900, %v3904
      %v3907 = vshrl.u32 %v3585, 16
      %v3909 = vrot.slane %v3907, 4
      %v3910 = vshll.u32 %v3585, 16
      %v3912 = vrot.slane %v3910, 5
      %v3913 = vor.u32 %v3909, %v3912
      %v3914 = vrot.slane %v3913, 4
      %v3916 = vshll.u32 %v3586, 16
      %v3918 = vrot.slane %v3916, 5
      %v3919 = vsel %vm234, %v3914, %v3918
      %v3920 = vshrl.u32 %v3586, 16
      %v3922 = vrot.slane %v3920, 4
      %v3923 = vor.u32 %v3922, %v3918
      %v3924 = vrot.slane %v3923, 4
      %v3926 = vshll.u32 %v3587, 16
      %v3928 = vrot.slane %v3926, 5
      %v3929 = vsel %vm234, %v3924, %v3928
      %v3931 = vshrl.u32 %v3588, 16
      %v3933 = vrot.slane %v3931, 4
      %v3934 = vshll.u32 %v3588, 16
      %v3936 = vrot.slane %v3934, 5
      %v3937 = vor.u32 %v3933, %v3936
      %v3938 = vrot.slane %v3937, 4
      %v3940 = vshll.u32 %v3589, 16
      %v3942 = vrot.slane %v3940, 5
      %v3943 = vsel %vm234, %v3938, %v3942
      %v3944 = vshrl.u32 %v3589, 16
      %v3946 = vrot.slane %v3944, 4
      %v3947 = vor.u32 %v3946, %v3942
      %v3948 = vrot.slane %v3947, 4
      %v3950 = vshll.u32 %v3590, 16
      %v3952 = vrot.slane %v3950, 5
      %v3953 = vsel %vm234, %v3948, %v3952
      %v3955 = vshrl.u32 %v3591, 16
      %v3957 = vrot.slane %v3955, 4
      %v3958 = vshll.u32 %v3591, 16
      %v3960 = vrot.slane %v3958, 5
      %v3961 = vor.u32 %v3957, %v3960
      %v3962 = vrot.slane %v3961, 4
      %v3964 = vshll.u32 %v3592, 16
      %v3966 = vrot.slane %v3964, 5
      %v3967 = vsel %vm234, %v3962, %v3966
      %v3968 = vshrl.u32 %v3592, 16
      %v3970 = vrot.slane %v3968, 4
      %v3971 = vor.u32 %v3970, %v3966
      %v3972 = vrot.slane %v3971, 4
      %v3974 = vshll.u32 %v3593, 16
      %v3976 = vrot.slane %v3974, 5
      %v3977 = vsel %vm234, %v3972, %v3976
      %s3978 = scalar_lea.vmem %s1, 28
      %v3979 = vld [vmem:[%s3978] sm:$0xf]
      %v3980 = vunpack.c.l.b16 %v3607
      %v3981 = vunpack.c.l.b16 %v3617
      %v3982 = vunpack.c.l.b16 %v3631
      %v3983 = vunpack.c.l.b16 %v3641
      %v3984 = vunpack.c.l.b16 %v3655
      %v3985 = vunpack.c.l.b16 %v3665
      %v3986 = vunpack.c.l.b16 %v3679
      %v3987 = vunpack.c.l.b16 %v3689
      %v3988 = vunpack.c.l.b16 %v3703
      %v3989 = vunpack.c.l.b16 %v3713
      %v3990 = vunpack.c.l.b16 %v3727
      %v3991 = vunpack.c.l.b16 %v3737
      %v3992 = vunpack.c.l.b16 %v3751
      %v3993 = vunpack.c.l.b16 %v3761
      %v3994 = vunpack.c.l.b16 %v3775
      %v3995 = vunpack.c.l.b16 %v3785
      %v3996 = vunpack.c.l.b16 %v3799
      %v3997 = vunpack.c.l.b16 %v3809
      %v3998 = vunpack.c.l.b16 %v3823
      %v3999 = vunpack.c.l.b16 %v3833
      %v4000 = vunpack.c.l.b16 %v3847
      %v4001 = vunpack.c.l.b16 %v3857
      %v4002 = vunpack.c.l.b16 %v3871
      %v4003 = vunpack.c.l.b16 %v3881
      %v4004 = vunpack.c.l.b16 %v3895
      %v4005 = vunpack.c.l.b16 %v3905
      %v4006 = vunpack.c.l.b16 %v3919
      %v4007 = vunpack.c.l.b16 %v3929
      %v4008 = vunpack.c.l.b16 %v3943
      %v4009 = vunpack.c.l.b16 %v3953
      %v4010 = vunpack.c.l.b16 %v3967
      %v4011 = vunpack.c.l.b16 %v3977
      %v4012 = vpack.c.b16 %v3981, %v3980
      %v4013 = vpack.c.b16 %v3983, %v3982
      %v4014 = vpack.c.b16 %v3985, %v3984
      %v4015 = vpack.c.b16 %v3987, %v3986
      %v4016 = vpack.c.b16 %v3989, %v3988
      %v4017 = vpack.c.b16 %v3991, %v3990
      %v4018 = vpack.c.b16 %v3993, %v3992
      %v4019 = vpack.c.b16 %v3995, %v3994
      %v4020 = vpack.c.b16 %v3997, %v3996
      %v4021 = vpack.c.b16 %v3999, %v3998
      %v4022 = vpack.c.b16 %v4001, %v4000
      %v4023 = vpack.c.b16 %v4003, %v4002
      %v4024 = vpack.c.b16 %v4005, %v4004
      %v4025 = vpack.c.b16 %v4007, %v4006
      %v4026 = vpack.c.b16 %v4009, %v4008
      %v4027 = vpack.c.b16 %v4011, %v4010
      %v4029 = vsel %vm669, %v4012, 0
      %v4032 = vsel %vm669, %v4013, 0
      %v4035 = vsel %vm669, %v4014, 0
      %v4038 = vsel %vm669, %v4015, 0
      %v4041 = vsel %vm669, %v4016, 0
      %v4044 = vsel %vm669, %v4017, 0
      %v4047 = vsel %vm669, %v4018, 0
      %v4050 = vsel %vm669, %v4019, 0
      %v4053 = vsel %vm669, %v4020, 0
      %v4056 = vsel %vm669, %v4021, 0
      %v4059 = vsel %vm669, %v4022, 0
      %v4062 = vsel %vm669, %v4023, 0
      %v4065 = vsel %vm669, %v4024, 0
      %v4068 = vsel %vm669, %v4025, 0
      %v4071 = vsel %vm669, %v4026, 0
      %v4074 = vsel %vm669, %v4027, 0
      %v4077 = vsel %vm718, %v3979, 0
      %4079 = vmatprep.subr.bf16.mxu0 0
      %4080 = vmatpush1.bf16.msra.mxu0 %v4077
      %4081 = vmatprep.subr.bf16.mxu0 0
      %4082 = vmatpush1.bf16.msra.mxu0 0
      %4083 = vmatprep.subr.bf16.mxu0 0
      %4084 = vmatpush1.bf16.msra.mxu0 0
      %4085 = vmatprep.subr.bf16.mxu0 0
      %4086 = vmatpush1.bf16.msra.mxu0 0
      %4087 = vmatprep.subr.bf16.mxu0 0
      %4088 = vmatpush1.bf16.msra.mxu0 0
      %4089 = vmatprep.subr.bf16.mxu0 0
      %4090 = vmatpush1.bf16.msra.mxu0 0
      %4091 = vmatprep.subr.bf16.mxu0 0
      %4092 = vmatpush1.bf16.msra.mxu0 0
      %4093 = vmatprep.subr.bf16.mxu0 0
      %4094 = vmatpush1.bf16.msra.mxu0 0
      %4095 = vmatprep.subr.bf16.mxu0 0
      %4096 = vmatpush1.bf16.msra.mxu0 0
      %4097 = vmatprep.subr.bf16.mxu0 0
      %4098 = vmatpush1.bf16.msra.mxu0 0
      %4099 = vmatprep.subr.bf16.mxu0 0
      %4100 = vmatpush1.bf16.msra.mxu0 0
      %4101 = vmatprep.subr.bf16.mxu0 0
      %4102 = vmatpush1.bf16.msra.mxu0 0
      %4103 = vmatprep.subr.bf16.mxu0 0
      %4104 = vmatpush1.bf16.msra.mxu0 0
      %4105 = vmatprep.subr.bf16.mxu0 0
      %4106 = vmatpush1.bf16.msra.mxu0 0
      %4107 = vmatprep.subr.bf16.mxu0 0
      %4108 = vmatpush1.bf16.msra.mxu0 0
      %4109 = vmatprep.subr.bf16.mxu0 0
      %4110 = vmatpush1.bf16.msra.mxu0 0
      %4111 = vmatprep.mubr.bf16.mxu0 0
      %4112 = vmatmul.mubr.bf16.gmra.mrb[0].mxu0 %v4029
      %v4113 = vpop.f32.mrb[0].mxu0
      %v4114 = vadd.f32 0.0, %v4113
      %v4115 = vpop.f32.mrb[0].mxu0
      %v4116 = vpop.f32.mrb[0].mxu0
      %v4117 = vadd.f32 0.0, %v4116
      %v4118 = vpop.f32.mrb[0].mxu0
      %4119 = vmatprep.mubr.bf16.mxu0 0
      %4120 = vmatmul.mubr.bf16.gmra.mrb[0].mxu0 %v4032
      %v4121 = vpop.f32.mrb[0].mxu0
      %v4122 = vadd.f32 0.0, %v4121
      %v4123 = vpop.f32.mrb[0].mxu0
      %v4124 = vpop.f32.mrb[0].mxu0
      %v4125 = vadd.f32 0.0, %v4124
      %v4126 = vpop.f32.mrb[0].mxu0
      %4127 = vmatprep.mubr.bf16.mxu0 0
      %4128 = vmatmul.mubr.bf16.gmra.mrb[0].mxu0 %v4035
      %v4129 = vpop.f32.mrb[0].mxu0
      %v4130 = vadd.f32 0.0, %v4129
      %v4131 = vpop.f32.mrb[0].mxu0
      %v4132 = vpop.f32.mrb[0].mxu0
      %v4133 = vadd.f32 0.0, %v4132
      %v4134 = vpop.f32.mrb[0].mxu0
      %4135 = vmatprep.mubr.bf16.mxu0 0
      %4136 = vmatmul.mubr.bf16.gmra.mrb[0].mxu0 %v4038
      %v4137 = vpop.f32.mrb[0].mxu0
      %v4138 = vadd.f32 0.0, %v4137
      %v4139 = vpop.f32.mrb[0].mxu0
      %v4140 = vpop.f32.mrb[0].mxu0
      %v4141 = vadd.f32 0.0, %v4140
      %v4142 = vpop.f32.mrb[0].mxu0
      %4143 = vmatprep.mubr.bf16.mxu0 0
      %4144 = vmatmul.mubr.bf16.gmra.mrb[0].mxu0 %v4041
      %v4145 = vpop.f32.mrb[0].mxu0
      %v4146 = vadd.f32 0.0, %v4145
      %v4147 = vpop.f32.mrb[0].mxu0
      %v4148 = vpop.f32.mrb[0].mxu0
      %v4149 = vadd.f32 0.0, %v4148
      %v4150 = vpop.f32.mrb[0].mxu0
      %4151 = vmatprep.mubr.bf16.mxu0 0
      %4152 = vmatmul.mubr.bf16.gmra.mrb[0].mxu0 %v4044
      %v4153 = vpop.f32.mrb[0].mxu0
      %v4154 = vadd.f32 0.0, %v4153
      %v4155 = vpop.f32.mrb[0].mxu0
      %v4156 = vpop.f32.mrb[0].mxu0
      %v4157 = vadd.f32 0.0, %v4156
      %v4158 = vpop.f32.mrb[0].mxu0
      %4159 = vmatprep.mubr.bf16.mxu0 0
      %4160 = vmatmul.mubr.bf16.gmra.mrb[0].mxu0 %v4047
      %v4161 = vpop.f32.mrb[0].mxu0
      %v4162 = vadd.f32 0.0, %v4161
      %v4163 = vpop.f32.mrb[0].mxu0
      %v4164 = vpop.f32.mrb[0].mxu0
      %v4165 = vadd.f32 0.0, %v4164
      %v4166 = vpop.f32.mrb[0].mxu0
      %4167 = vmatprep.mubr.bf16.mxu0 0
      %4168 = vmatmul.mubr.bf16.gmra.mrb[0].mxu0 %v4050
      %v4169 = vpop.f32.mrb[0].mxu0
      %v4170 = vadd.f32 0.0, %v4169
      %v4171 = vpop.f32.mrb[0].mxu0
      %v4172 = vpop.f32.mrb[0].mxu0
      %v4173 = vadd.f32 0.0, %v4172
      %v4174 = vpop.f32.mrb[0].mxu0
      %4175 = vmatprep.mubr.bf16.mxu0 0
      %4176 = vmatmul.mubr.bf16.gmra.mrb[0].mxu0 %v4053
      %v4177 = vpop.f32.mrb[0].mxu0
      %v4178 = vadd.f32 0.0, %v4177
      %v4179 = vpop.f32.mrb[0].mxu0
      %v4180 = vpop.f32.mrb[0].mxu0
      %v4181 = vadd.f32 0.0, %v4180
      %v4182 = vpop.f32.mrb[0].mxu0
      %4183 = vmatprep.mubr.bf16.mxu0 0
      %4184 = vmatmul.mubr.bf16.gmra.mrb[0].mxu0 %v4056
      %v4185 = vpop.f32.mrb[0].mxu0
      %v4186 = vadd.f32 0.0, %v4185
      %v4187 = vpop.f32.mrb[0].mxu0
      %v4188 = vpop.f32.mrb[0].mxu0
      %v4189 = vadd.f32 0.0, %v4188
      %v4190 = vpop.f32.mrb[0].mxu0
      %4191 = vmatprep.mubr.bf16.mxu0 0
      %4192 = vmatmul.mubr.bf16.gmra.mrb[0].mxu0 %v4059
      %v4193 = vpop.f32.mrb[0].mxu0
      %v4194 = vadd.f32 0.0, %v4193
      %v4195 = vpop.f32.mrb[0].mxu0
      %v4196 = vpop.f32.mrb[0].mxu0
      %v4197 = vadd.f32 0.0, %v4196
      %v4198 = vpop.f32.mrb[0].mxu0
      %4199 = vmatprep.mubr.bf16.mxu0 0
      %4200 = vmatmul.mubr.bf16.gmra.mrb[0].mxu0 %v4062
      %v4201 = vpop.f32.mrb[0].mxu0
      %v4202 = vadd.f32 0.0, %v4201
      %v4203 = vpop.f32.mrb[0].mxu0
      %v4204 = vpop.f32.mrb[0].mxu0
      %v4205 = vadd.f32 0.0, %v4204
      %v4206 = vpop.f32.mrb[0].mxu0
      %4207 = vmatprep.mubr.bf16.mxu0 0
      %4208 = vmatmul.mubr.bf16.gmra.mrb[0].mxu0 %v4065
      %v4209 = vpop.f32.mrb[0].mxu0
      %v4210 = vadd.f32 0.0, %v4209
      %v4211 = vpop.f32.mrb[0].mxu0
      %v4212 = vpop.f32.mrb[0].mxu0
      %v4213 = vadd.f32 0.0, %v4212
      %v4214 = vpop.f32.mrb[0].mxu0
      %4215 = vmatprep.mubr.bf16.mxu0 0
      %4216 = vmatmul.mubr.bf16.gmra.mrb[0].mxu0 %v4068
      %v4217 = vpop.f32.mrb[0].mxu0
      %v4218 = vadd.f32 0.0, %v4217
      %v4219 = vpop.f32.mrb[0].mxu0
      %v4220 = vpop.f32.mrb[0].mxu0
      %v4221 = vadd.f32 0.0, %v4220
      %v4222 = vpop.f32.mrb[0].mxu0
      %4223 = vmatprep.mubr.bf16.mxu0 0
      %4224 = vmatmul.mubr.bf16.gmra.mrb[0].mxu0 %v4071
      %v4225 = vpop.f32.mrb[0].mxu0
      %v4226 = vadd.f32 0.0, %v4225
      %v4227 = vpop.f32.mrb[0].mxu0
      %v4228 = vpop.f32.mrb[0].mxu0
      %v4229 = vadd.f32 0.0, %v4228
      %v4230 = vpop.f32.mrb[0].mxu0
      %4231 = vmatprep.mubr.bf16.mxu0 0
      %4232 = vmatmul.mubr.bf16.gmra.mrb[0].mxu0 %v4074
      %v4233 = vpop.f32.mrb[0].mxu0
      %v4234 = vadd.f32 0.0, %v4233
      %v4235 = vpop.f32.mrb[0].mxu0
      %v4236 = vpop.f32.mrb[0].mxu0
      %v4237 = vadd.f32 0.0, %v4236
      %v4238 = vpop.f32.mrb[0].mxu0
      %4239 = vdwg.mxu0
      %v4240 = vadd.f32 %v3514, %v4114
      %v4241 = vadd.f32 %v3515, %v4117
      %v4242 = vadd.f32 %v3516, %v4122
      %v4243 = vadd.f32 %v3517, %v4125
      %v4244 = vadd.f32 %v3518, %v4130
      %v4245 = vadd.f32 %v3519, %v4133
      %v4246 = vadd.f32 %v3520, %v4138
      %v4247 = vadd.f32 %v3521, %v4141
      %v4248 = vadd.f32 %v3522, %v4146
      %v4249 = vadd.f32 %v3523, %v4149
      %v4250 = vadd.f32 %v3524, %v4154
      %v4251 = vadd.f32 %v3525, %v4157
      %v4252 = vadd.f32 %v3526, %v4162
      %v4253 = vadd.f32 %v3527, %v4165
      %v4254 = vadd.f32 %v3528, %v4170
      %v4255 = vadd.f32 %v3529, %v4173
      %v4256 = vadd.f32 %v3530, %v4178
      %v4257 = vadd.f32 %v3531, %v4181
      %v4258 = vadd.f32 %v3532, %v4186
      %v4259 = vadd.f32 %v3533, %v4189
      %v4260 = vadd.f32 %v3534, %v4194
      %v4261 = vadd.f32 %v3535, %v4197
      %v4262 = vadd.f32 %v3536, %v4202
      %v4263 = vadd.f32 %v3537, %v4205
      %v4264 = vadd.f32 %v3538, %v4210
      %v4265 = vadd.f32 %v3539, %v4213
      %v4266 = vadd.f32 %v3540, %v4218
      %v4267 = vadd.f32 %v3541, %v4221
      %v4268 = vadd.f32 %v3542, %v4226
      %v4269 = vadd.f32 %v3543, %v4229
      %v4270 = vadd.f32 %v3544, %v4234
      %v4271 = vadd.f32 %v3545, %v4237
      %v4272 = vld [vmem:[%s3187] sm:$0xe]
      %v4273 = vld [vmem:[%s3187 + $0xc] sm:$0xe]
      %v4274 = vld [vmem:[%s3187 + $0x18] sm:$0xe]
      %v4275 = vld [vmem:[%s3187 + $0x24] sm:$0xe]
      %v4276 = vld [vmem:[%s3187 + $0x30] sm:$0xe]
      %v4277 = vld [vmem:[%s3187 + $0x3c] sm:$0xe]
      %v4278 = vld [vmem:[%s3187 + $0x48] sm:$0xe]
      %v4279 = vld [vmem:[%s3187 + $0x54] sm:$0xe]
      %v4280 = vld [vmem:[%s3187 + $0x60] sm:$0xe]
      %v4281 = vld [vmem:[%s3187 + $0x6c] sm:$0xe]
      %v4282 = vld [vmem:[%s3187 + $0x78] sm:$0xe]
      %v4283 = vld [vmem:[%s3187 + $0x84] sm:$0xe]
      %v4284 = vld [vmem:[%s3187 + $0x90] sm:$0xe]
      %v4285 = vld [vmem:[%s3187 + $0x9c] sm:$0xe]
      %v4286 = vld [vmem:[%s3187 + $0xa8] sm:$0xe]
      %v4287 = vld [vmem:[%s3187 + $0xb4] sm:$0xe]
      %v4336 = vrot.slane %v4272, 5
      %v4337 = vrot.slane %v4336, 4
      %v4338 = vrot.slane %v3547, 5
      %v4339 = vsel %vm1225, %v4337, %v4338
      %v4340 = vrot.slane %v4338, 4
      %v4341 = vrot.slane %v3548, 5
      %v4342 = vsel %vm1225, %v4340, %v4341
      %v4343 = vrot.slane %v4273, 5
      %v4344 = vrot.slane %v4343, 4
      %v4345 = vrot.slane %v3550, 5
      %v4346 = vsel %vm1225, %v4344, %v4345
      %v4347 = vrot.slane %v4345, 4
      %v4348 = vrot.slane %v3551, 5
      %v4349 = vsel %vm1225, %v4347, %v4348
      %v4350 = vrot.slane %v4274, 5
      %v4351 = vrot.slane %v4350, 4
      %v4352 = vrot.slane %v3553, 5
      %v4353 = vsel %vm1225, %v4351, %v4352
      %v4354 = vrot.slane %v4352, 4
      %v4355 = vrot.slane %v3554, 5
      %v4356 = vsel %vm1225, %v4354, %v4355
      %v4357 = vrot.slane %v4275, 5
      %v4358 = vrot.slane %v4357, 4
      %v4359 = vrot.slane %v3556, 5
      %v4360 = vsel %vm1225, %v4358, %v4359
      %v4361 = vrot.slane %v4359, 4
      %v4362 = vrot.slane %v3557, 5
      %v4363 = vsel %vm1225, %v4361, %v4362
      %v4364 = vrot.slane %v4276, 5
      %v4365 = vrot.slane %v4364, 4
      %v4366 = vrot.slane %v3559, 5
      %v4367 = vsel %vm1225, %v4365, %v4366
      %v4368 = vrot.slane %v4366, 4
      %v4369 = vrot.slane %v3560, 5
      %v4370 = vsel %vm1225, %v4368, %v4369
      %v4371 = vrot.slane %v4277, 5
      %v4372 = vrot.slane %v4371, 4
      %v4373 = vrot.slane %v3562, 5
      %v4374 = vsel %vm1225, %v4372, %v4373
      %v4375 = vrot.slane %v4373, 4
      %v4376 = vrot.slane %v3563, 5
      %v4377 = vsel %vm1225, %v4375, %v4376
      %v4378 = vrot.slane %v4278, 5
      %v4379 = vrot.slane %v4378, 4
      %v4380 = vrot.slane %v3565, 5
      %v4381 = vsel %vm1225, %v4379, %v4380
      %v4382 = vrot.slane %v4380, 4
      %v4383 = vrot.slane %v3566, 5
      %v4384 = vsel %vm1225, %v4382, %v4383
      %v4385 = vrot.slane %v4279, 5
      %v4386 = vrot.slane %v4385, 4
      %v4387 = vrot.slane %v3568, 5
      %v4388 = vsel %vm1225, %v4386, %v4387
      %v4389 = vrot.slane %v4387, 4
      %v4390 = vrot.slane %v3569, 5
      %v4391 = vsel %vm1225, %v4389, %v4390
      %v4392 = vrot.slane %v4280, 5
      %v4393 = vrot.slane %v4392, 4
      %v4394 = vrot.slane %v3571, 5
      %v4395 = vsel %vm1225, %v4393, %v4394
      %v4396 = vrot.slane %v4394, 4
      %v4397 = vrot.slane %v3572, 5
      %v4398 = vsel %vm1225, %v4396, %v4397
      %v4399 = vrot.slane %v4281, 5
      %v4400 = vrot.slane %v4399, 4
      %v4401 = vrot.slane %v3574, 5
      %v4402 = vsel %vm1225, %v4400, %v4401
      %v4403 = vrot.slane %v4401, 4
      %v4404 = vrot.slane %v3575, 5
      %v4405 = vsel %vm1225, %v4403, %v4404
      %v4406 = vrot.slane %v4282, 5
      %v4407 = vrot.slane %v4406, 4
      %v4408 = vrot.slane %v3577, 5
      %v4409 = vsel %vm1225, %v4407, %v4408
      %v4410 = vrot.slane %v4408, 4
      %v4411 = vrot.slane %v3578, 5
      %v4412 = vsel %vm1225, %v4410, %v4411
      %v4413 = vrot.slane %v4283, 5
      %v4414 = vrot.slane %v4413, 4
      %v4415 = vrot.slane %v3580, 5
      %v4416 = vsel %vm1225, %v4414, %v4415
      %v4417 = vrot.slane %v4415, 4
      %v4418 = vrot.slane %v3581, 5
      %v4419 = vsel %vm1225, %v4417, %v4418
      %v4420 = vrot.slane %v4284, 5
      %v4421 = vrot.slane %v4420, 4
      %v4422 = vrot.slane %v3583, 5
      %v4423 = vsel %vm1225, %v4421, %v4422
      %v4424 = vrot.slane %v4422, 4
      %v4425 = vrot.slane %v3584, 5
      %v4426 = vsel %vm1225, %v4424, %v4425
      %v4427 = vrot.slane %v4285, 5
      %v4428 = vrot.slane %v4427, 4
      %v4429 = vrot.slane %v3586, 5
      %v4430 = vsel %vm1225, %v4428, %v4429
      %v4431 = vrot.slane %v4429, 4
      %v4432 = vrot.slane %v3587, 5
      %v4433 = vsel %vm1225, %v4431, %v4432
      %v4434 = vrot.slane %v4286, 5
      %v4435 = vrot.slane %v4434, 4
      %v4436 = vrot.slane %v3589, 5
      %v4437 = vsel %vm1225, %v4435, %v4436
      %v4438 = vrot.slane %v4436, 4
      %v4439 = vrot.slane %v3590, 5
      %v4440 = vsel %vm1225, %v4438, %v4439
      %v4441 = vrot.slane %v4287, 5
      %v4442 = vrot.slane %v4441, 4
      %v4443 = vrot.slane %v3592, 5
      %v4444 = vsel %vm1225, %v4442, %v4443
      %v4445 = vrot.slane %v4443, 4
      %v4446 = vrot.slane %v3593, 5
      %v4447 = vsel %vm1225, %v4445, %v4446
      %s4448 = scalar_lea.vmem %s1, 32
      %v4449 = vld [vmem:[%s4448] sm:$0xf]
      %v4450 = vunpack.c.l.b16 %v4339
      %v4451 = vunpack.c.l.b16 %v4342
      %v4452 = vunpack.c.l.b16 %v4346
      %v4453 = vunpack.c.l.b16 %v4349
      %v4454 = vunpack.c.l.b16 %v4353
      %v4455 = vunpack.c.l.b16 %v4356
      %v4456 = vunpack.c.l.b16 %v4360
      %v4457 = vunpack.c.l.b16 %v4363
      %v4458 = vunpack.c.l.b16 %v4367
      %v4459 = vunpack.c.l.b16 %v4370
      %v4460 = vunpack.c.l.b16 %v4374
      %v4461 = vunpack.c.l.b16 %v4377
      %v4462 = vunpack.c.l.b16 %v4381
      %v4463 = vunpack.c.l.b16 %v4384
      %v4464 = vunpack.c.l.b16 %v4388
      %v4465 = vunpack.c.l.b16 %v4391
      %v4466 = vunpack.c.l.b16 %v4395
      %v4467 = vunpack.c.l.b16 %v4398
      %v4468 = vunpack.c.l.b16 %v4402
      %v4469 = vunpack.c.l.b16 %v4405
      %v4470 = vunpack.c.l.b16 %v4409
      %v4471 = vunpack.c.l.b16 %v4412
      %v4472 = vunpack.c.l.b16 %v4416
      %v4473 = vunpack.c.l.b16 %v4419
      %v4474 = vunpack.c.l.b16 %v4423
      %v4475 = vunpack.c.l.b16 %v4426
      %v4476 = vunpack.c.l.b16 %v4430
      %v4477 = vunpack.c.l.b16 %v4433
      %v4478 = vunpack.c.l.b16 %v4437
      %v4479 = vunpack.c.l.b16 %v4440
      %v4480 = vunpack.c.l.b16 %v4444
      %v4481 = vunpack.c.l.b16 %v4447
      %v4482 = vpack.c.b16 %v4451, %v4450
      %v4483 = vpack.c.b16 %v4453, %v4452
      %v4484 = vpack.c.b16 %v4455, %v4454
      %v4485 = vpack.c.b16 %v4457, %v4456
      %v4486 = vpack.c.b16 %v4459, %v4458
      %v4487 = vpack.c.b16 %v4461, %v4460
      %v4488 = vpack.c.b16 %v4463, %v4462
      %v4489 = vpack.c.b16 %v4465, %v4464
      %v4490 = vpack.c.b16 %v4467, %v4466
      %v4491 = vpack.c.b16 %v4469, %v4468
      %v4492 = vpack.c.b16 %v4471, %v4470
      %v4493 = vpack.c.b16 %v4473, %v4472
      %v4494 = vpack.c.b16 %v4475, %v4474
      %v4495 = vpack.c.b16 %v4477, %v4476
      %v4496 = vpack.c.b16 %v4479, %v4478
      %v4497 = vpack.c.b16 %v4481, %v4480
      %v4499 = vsel %vm669, %v4482, 0
      %v4502 = vsel %vm669, %v4483, 0
      %v4505 = vsel %vm669, %v4484, 0
      %v4508 = vsel %vm669, %v4485, 0
      %v4511 = vsel %vm669, %v4486, 0
      %v4514 = vsel %vm669, %v4487, 0
      %v4517 = vsel %vm669, %v4488, 0
      %v4520 = vsel %vm669, %v4489, 0
      %v4523 = vsel %vm669, %v4490, 0
      %v4526 = vsel %vm669, %v4491, 0
      %v4529 = vsel %vm669, %v4492, 0
      %v4532 = vsel %vm669, %v4493, 0
      %v4535 = vsel %vm669, %v4494, 0
      %v4538 = vsel %vm669, %v4495, 0
      %v4541 = vsel %vm669, %v4496, 0
      %v4544 = vsel %vm669, %v4497, 0
      %v4547 = vsel %vm718, %v4449, 0
      %4549 = vmatprep.subr.bf16.mxu0 0
      %4550 = vmatpush1.bf16.msra.mxu0 %v4547
      %4551 = vmatprep.subr.bf16.mxu0 0
      %4552 = vmatpush1.bf16.msra.mxu0 0
      %4553 = vmatprep.subr.bf16.mxu0 0
      %4554 = vmatpush1.bf16.msra.mxu0 0
      %4555 = vmatprep.subr.bf16.mxu0 0
      %4556 = vmatpush1.bf16.msra.mxu0 0
      %4557 = vmatprep.subr.bf16.mxu0 0
      %4558 = vmatpush1.bf16.msra.mxu0 0
      %4559 = vmatprep.subr.bf16.mxu0 0
      %4560 = vmatpush1.bf16.msra.mxu0 0
      %4561 = vmatprep.subr.bf16.mxu0 0
      %4562 = vmatpush1.bf16.msra.mxu0 0
      %4563 = vmatprep.subr.bf16.mxu0 0
      %4564 = vmatpush1.bf16.msra.mxu0 0
      %4565 = vmatprep.subr.bf16.mxu0 0
      %4566 = vmatpush1.bf16.msra.mxu0 0
      %4567 = vmatprep.subr.bf16.mxu0 0
      %4568 = vmatpush1.bf16.msra.mxu0 0
      %4569 = vmatprep.subr.bf16.mxu0 0
      %4570 = vmatpush1.bf16.msra.mxu0 0
      %4571 = vmatprep.subr.bf16.mxu0 0
      %4572 = vmatpush1.bf16.msra.mxu0 0
      %4573 = vmatprep.subr.bf16.mxu0 0
      %4574 = vmatpush1.bf16.msra.mxu0 0
      %4575 = vmatprep.subr.bf16.mxu0 0
      %4576 = vmatpush1.bf16.msra.mxu0 0
      %4577 = vmatprep.subr.bf16.mxu0 0
      %4578 = vmatpush1.bf16.msra.mxu0 0
      %4579 = vmatprep.subr.bf16.mxu0 0
      %4580 = vmatpush1.bf16.msra.mxu0 0
      %4581 = vmatprep.mubr.bf16.mxu0 0
      %4582 = vmatmul.mubr.bf16.gmra.mrb[0].mxu0 %v4499
      %v4583 = vpop.f32.mrb[0].mxu0
      %v4584 = vadd.f32 0.0, %v4583
      %v4585 = vpop.f32.mrb[0].mxu0
      %v4586 = vpop.f32.mrb[0].mxu0
      %v4587 = vadd.f32 0.0, %v4586
      %v4588 = vpop.f32.mrb[0].mxu0
      %4589 = vmatprep.mubr.bf16.mxu0 0
      %4590 = vmatmul.mubr.bf16.gmra.mrb[0].mxu0 %v4502
      %v4591 = vpop.f32.mrb[0].mxu0
      %v4592 = vadd.f32 0.0, %v4591
      %v4593 = vpop.f32.mrb[0].mxu0
      %v4594 = vpop.f32.mrb[0].mxu0
      %v4595 = vadd.f32 0.0, %v4594
      %v4596 = vpop.f32.mrb[0].mxu0
      %4597 = vmatprep.mubr.bf16.mxu0 0
      %4598 = vmatmul.mubr.bf16.gmra.mrb[0].mxu0 %v4505
      %v4599 = vpop.f32.mrb[0].mxu0
      %v4600 = vadd.f32 0.0, %v4599
      %v4601 = vpop.f32.mrb[0].mxu0
      %v4602 = vpop.f32.mrb[0].mxu0
      %v4603 = vadd.f32 0.0, %v4602
      %v4604 = vpop.f32.mrb[0].mxu0
      %4605 = vmatprep.mubr.bf16.mxu0 0
      %4606 = vmatmul.mubr.bf16.gmra.mrb[0].mxu0 %v4508
      %v4607 = vpop.f32.mrb[0].mxu0
      %v4608 = vadd.f32 0.0, %v4607
      %v4609 = vpop.f32.mrb[0].mxu0
      %v4610 = vpop.f32.mrb[0].mxu0
      %v4611 = vadd.f32 0.0, %v4610
      %v4612 = vpop.f32.mrb[0].mxu0
      %4613 = vmatprep.mubr.bf16.mxu0 0
      %4614 = vmatmul.mubr.bf16.gmra.mrb[0].mxu0 %v4511
      %v4615 = vpop.f32.mrb[0].mxu0
      %v4616 = vadd.f32 0.0, %v4615
      %v4617 = vpop.f32.mrb[0].mxu0
      %v4618 = vpop.f32.mrb[0].mxu0
      %v4619 = vadd.f32 0.0, %v4618
      %v4620 = vpop.f32.mrb[0].mxu0
      %4621 = vmatprep.mubr.bf16.mxu0 0
      %4622 = vmatmul.mubr.bf16.gmra.mrb[0].mxu0 %v4514
      %v4623 = vpop.f32.mrb[0].mxu0
      %v4624 = vadd.f32 0.0, %v4623
      %v4625 = vpop.f32.mrb[0].mxu0
      %v4626 = vpop.f32.mrb[0].mxu0
      %v4627 = vadd.f32 0.0, %v4626
      %v4628 = vpop.f32.mrb[0].mxu0
      %4629 = vmatprep.mubr.bf16.mxu0 0
      %4630 = vmatmul.mubr.bf16.gmra.mrb[0].mxu0 %v4517
      %v4631 = vpop.f32.mrb[0].mxu0
      %v4632 = vadd.f32 0.0, %v4631
      %v4633 = vpop.f32.mrb[0].mxu0
      %v4634 = vpop.f32.mrb[0].mxu0
      %v4635 = vadd.f32 0.0, %v4634
      %v4636 = vpop.f32.mrb[0].mxu0
      %4637 = vmatprep.mubr.bf16.mxu0 0
      %4638 = vmatmul.mubr.bf16.gmra.mrb[0].mxu0 %v4520
      %v4639 = vpop.f32.mrb[0].mxu0
      %v4640 = vadd.f32 0.0, %v4639
      %v4641 = vpop.f32.mrb[0].mxu0
      %v4642 = vpop.f32.mrb[0].mxu0
      %v4643 = vadd.f32 0.0, %v4642
      %v4644 = vpop.f32.mrb[0].mxu0
      %4645 = vmatprep.mubr.bf16.mxu0 0
      %4646 = vmatmul.mubr.bf16.gmra.mrb[0].mxu0 %v4523
      %v4647 = vpop.f32.mrb[0].mxu0
      %v4648 = vadd.f32 0.0, %v4647
      %v4649 = vpop.f32.mrb[0].mxu0
      %v4650 = vpop.f32.mrb[0].mxu0
      %v4651 = vadd.f32 0.0, %v4650
      %v4652 = vpop.f32.mrb[0].mxu0
      %4653 = vmatprep.mubr.bf16.mxu0 0
      %4654 = vmatmul.mubr.bf16.gmra.mrb[0].mxu0 %v4526
      %v4655 = vpop.f32.mrb[0].mxu0
      %v4656 = vadd.f32 0.0, %v4655
      %v4657 = vpop.f32.mrb[0].mxu0
      %v4658 = vpop.f32.mrb[0].mxu0
      %v4659 = vadd.f32 0.0, %v4658
      %v4660 = vpop.f32.mrb[0].mxu0
      %4661 = vmatprep.mubr.bf16.mxu0 0
      %4662 = vmatmul.mubr.bf16.gmra.mrb[0].mxu0 %v4529
      %v4663 = vpop.f32.mrb[0].mxu0
      %v4664 = vadd.f32 0.0, %v4663
      %v4665 = vpop.f32.mrb[0].mxu0
      %v4666 = vpop.f32.mrb[0].mxu0
      %v4667 = vadd.f32 0.0, %v4666
      %v4668 = vpop.f32.mrb[0].mxu0
      %4669 = vmatprep.mubr.bf16.mxu0 0
      %4670 = vmatmul.mubr.bf16.gmra.mrb[0].mxu0 %v4532
      %v4671 = vpop.f32.mrb[0].mxu0
      %v4672 = vadd.f32 0.0, %v4671
      %v4673 = vpop.f32.mrb[0].mxu0
      %v4674 = vpop.f32.mrb[0].mxu0
      %v4675 = vadd.f32 0.0, %v4674
      %v4676 = vpop.f32.mrb[0].mxu0
      %4677 = vmatprep.mubr.bf16.mxu0 0
      %4678 = vmatmul.mubr.bf16.gmra.mrb[0].mxu0 %v4535
      %v4679 = vpop.f32.mrb[0].mxu0
      %v4680 = vadd.f32 0.0, %v4679
      %v4681 = vpop.f32.mrb[0].mxu0
      %v4682 = vpop.f32.mrb[0].mxu0
      %v4683 = vadd.f32 0.0, %v4682
      %v4684 = vpop.f32.mrb[0].mxu0
      %4685 = vmatprep.mubr.bf16.mxu0 0
      %4686 = vmatmul.mubr.bf16.gmra.mrb[0].mxu0 %v4538
      %v4687 = vpop.f32.mrb[0].mxu0
      %v4688 = vadd.f32 0.0, %v4687
      %v4689 = vpop.f32.mrb[0].mxu0
      %v4690 = vpop.f32.mrb[0].mxu0
      %v4691 = vadd.f32 0.0, %v4690
      %v4692 = vpop.f32.mrb[0].mxu0
      %4693 = vmatprep.mubr.bf16.mxu0 0
      %4694 = vmatmul.mubr.bf16.gmra.mrb[0].mxu0 %v4541
      %v4695 = vpop.f32.mrb[0].mxu0
      %v4696 = vadd.f32 0.0, %v4695
      %v4697 = vpop.f32.mrb[0].mxu0
      %v4698 = vpop.f32.mrb[0].mxu0
      %v4699 = vadd.f32 0.0, %v4698
      %v4700 = vpop.f32.mrb[0].mxu0
      %4701 = vmatprep.mubr.bf16.mxu0 0
      %4702 = vmatmul.mubr.bf16.gmra.mrb[0].mxu0 %v4544
      %v4703 = vpop.f32.mrb[0].mxu0
      %v4704 = vadd.f32 0.0, %v4703
      %v4705 = vpop.f32.mrb[0].mxu0
      %v4706 = vpop.f32.mrb[0].mxu0
      %v4707 = vadd.f32 0.0, %v4706
      %v4708 = vpop.f32.mrb[0].mxu0
      %4709 = vdwg.mxu0
      %v4710 = vadd.f32 %v4240, %v4584
      %v4711 = vadd.f32 %v4241, %v4587
      %v4712 = vadd.f32 %v4242, %v4592
      %v4713 = vadd.f32 %v4243, %v4595
      %v4714 = vadd.f32 %v4244, %v4600
      %v4715 = vadd.f32 %v4245, %v4603
      %v4716 = vadd.f32 %v4246, %v4608
      %v4717 = vadd.f32 %v4247, %v4611
      %v4718 = vadd.f32 %v4248, %v4616
      %v4719 = vadd.f32 %v4249, %v4619
      %v4720 = vadd.f32 %v4250, %v4624
      %v4721 = vadd.f32 %v4251, %v4627
      %v4722 = vadd.f32 %v4252, %v4632
      %v4723 = vadd.f32 %v4253, %v4635
      %v4724 = vadd.f32 %v4254, %v4640
      %v4725 = vadd.f32 %v4255, %v4643
      %v4726 = vadd.f32 %v4256, %v4648
      %v4727 = vadd.f32 %v4257, %v4651
      %v4728 = vadd.f32 %v4258, %v4656
      %v4729 = vadd.f32 %v4259, %v4659
      %v4730 = vadd.f32 %v4260, %v4664
      %v4731 = vadd.f32 %v4261, %v4667
      %v4732 = vadd.f32 %v4262, %v4672
      %v4733 = vadd.f32 %v4263, %v4675
      %v4734 = vadd.f32 %v4264, %v4680
      %v4735 = vadd.f32 %v4265, %v4683
      %v4736 = vadd.f32 %v4266, %v4688
      %v4737 = vadd.f32 %v4267, %v4691
      %v4738 = vadd.f32 %v4268, %v4696
      %v4739 = vadd.f32 %v4269, %v4699
      %v4740 = vadd.f32 %v4270, %v4704
      %v4741 = vadd.f32 %v4271, %v4707
      %4742 = vst.msk [vmem:[%s177] sm:$0xff] %vm669, %v4710
      %4743 = vst.msk [vmem:[%s177 + $0x8] sm:$0xff] %vm669, %v4711
      %4744 = vst.msk [vmem:[%s177 + $0x10] sm:$0xff] %vm669, %v4712
      %4745 = vst.msk [vmem:[%s177 + $0x18] sm:$0xff] %vm669, %v4713
      %4746 = vst.msk [vmem:[%s177 + $0x20] sm:$0xff] %vm669, %v4714
      %4747 = vst.msk [vmem:[%s177 + $0x28] sm:$0xff] %vm669, %v4715
      %4748 = vst.msk [vmem:[%s177 + $0x30] sm:$0xff] %vm669, %v4716
      %4749 = vst.msk [vmem:[%s177 + $0x38] sm:$0xff] %vm669, %v4717
      %4750 = vst.msk [vmem:[%s177 + $0x40] sm:$0xff] %vm669, %v4718
      %4751 = vst.msk [vmem:[%s177 + $0x48] sm:$0xff] %vm669, %v4719
      %4752 = vst.msk [vmem:[%s177 + $0x50] sm:$0xff] %vm669, %v4720
      %4753 = vst.msk [vmem:[%s177 + $0x58] sm:$0xff] %vm669, %v4721
      %4754 = vst.msk [vmem:[%s177 + $0x60] sm:$0xff] %vm669, %v4722
      %4755 = vst.msk [vmem:[%s177 + $0x68] sm:$0xff] %vm669, %v4723
      %4756 = vst.msk [vmem:[%s177 + $0x70] sm:$0xff] %vm669, %v4724
      %4757 = vst.msk [vmem:[%s177 + $0x78] sm:$0xff] %vm669, %v4725
      %4758 = vst.msk [vmem:[%s177 + $0x80] sm:$0xff] %vm669, %v4726
      %4759 = vst.msk [vmem:[%s177 + $0x88] sm:$0xff] %vm669, %v4727
      %4760 = vst.msk [vmem:[%s177 + $0x90] sm:$0xff] %vm669, %v4728
      %4761 = vst.msk [vmem:[%s177 + $0x98] sm:$0xff] %vm669, %v4729
      %4762 = vst.msk [vmem:[%s177 + $0xa0] sm:$0xff] %vm669, %v4730
      %4763 = vst.msk [vmem:[%s177 + $0xa8] sm:$0xff] %vm669, %v4731
      %4764 = vst.msk [vmem:[%s177 + $0xb0] sm:$0xff] %vm669, %v4732
      %4765 = vst.msk [vmem:[%s177 + $0xb8] sm:$0xff] %vm669, %v4733
      %4766 = vst.msk [vmem:[%s177 + $0xc0] sm:$0xff] %vm669, %v4734
      %4767 = vst.msk [vmem:[%s177 + $0xc8] sm:$0xff] %vm669, %v4735
      %4768 = vst.msk [vmem:[%s177 + $0xd0] sm:$0xff] %vm669, %v4736
      %4769 = vst.msk [vmem:[%s177 + $0xd8] sm:$0xff] %vm669, %v4737
      %4770 = vst.msk [vmem:[%s177 + $0xe0] sm:$0xff] %vm669, %v4738
      %4771 = vst.msk [vmem:[%s177 + $0xe8] sm:$0xff] %vm669, %v4739
      %4772 = vst.msk [vmem:[%s177 + $0xf0] sm:$0xff] %vm669, %v4740
      %4773 = vst.msk [vmem:[%s177 + $0xf8] sm:$0xff] %vm669, %v4741
      %v4774 = vsel %vm669, %v4710, 0.0
      %v4775 = vsel %vm669, %v4711, 0.0
      %v4776 = vadd.f32 %v4774, %v4775
      %v4777 = vsel %vm669, %v4712, 0.0
      %v4778 = vadd.f32 %v4776, %v4777
      %v4779 = vsel %vm669, %v4713, 0.0
      %v4780 = vadd.f32 %v4778, %v4779
      %v4781 = vsel %vm669, %v4714, 0.0
      %v4782 = vadd.f32 %v4780, %v4781
      %v4783 = vsel %vm669, %v4715, 0.0
      %v4784 = vadd.f32 %v4782, %v4783
      %v4785 = vsel %vm669, %v4716, 0.0
      %v4786 = vadd.f32 %v4784, %v4785
      %v4787 = vsel %vm669, %v4717, 0.0
      %v4788 = vadd.f32 %v4786, %v4787
      %v4789 = vsel %vm669, %v4718, 0.0
      %v4790 = vadd.f32 %v4788, %v4789
      %v4791 = vsel %vm669, %v4719, 0.0
      %v4792 = vadd.f32 %v4790, %v4791
      %v4793 = vsel %vm669, %v4720, 0.0
      %v4794 = vadd.f32 %v4792, %v4793
      %v4795 = vsel %vm669, %v4721, 0.0
      %v4796 = vadd.f32 %v4794, %v4795
      %v4797 = vsel %vm669, %v4722, 0.0
      %v4798 = vadd.f32 %v4796, %v4797
      %v4799 = vsel %vm669, %v4723, 0.0
      %v4800 = vadd.f32 %v4798, %v4799
      %v4801 = vsel %vm669, %v4724, 0.0
      %v4802 = vadd.f32 %v4800, %v4801
      %v4803 = vsel %vm669, %v4725, 0.0
      %v4804 = vadd.f32 %v4802, %v4803
      %v4805 = vsel %vm669, %v4726, 0.0
      %v4806 = vadd.f32 %v4804, %v4805
      %v4807 = vsel %vm669, %v4727, 0.0
      %v4808 = vadd.f32 %v4806, %v4807
      %v4809 = vsel %vm669, %v4728, 0.0
      %v4810 = vadd.f32 %v4808, %v4809
      %v4811 = vsel %vm669, %v4729, 0.0
      %v4812 = vadd.f32 %v4810, %v4811
      %v4813 = vsel %vm669, %v4730, 0.0
      %v4814 = vadd.f32 %v4812, %v4813
      %v4815 = vsel %vm669, %v4731, 0.0
      %v4816 = vadd.f32 %v4814, %v4815
      %v4817 = vsel %vm669, %v4732, 0.0
      %v4818 = vadd.f32 %v4816, %v4817
      %v4819 = vsel %vm669, %v4733, 0.0
      %v4820 = vadd.f32 %v4818, %v4819
      %v4821 = vsel %vm669, %v4734, 0.0
      %v4822 = vadd.f32 %v4820, %v4821
      %v4823 = vsel %vm669, %v4735, 0.0
      %v4824 = vadd.f32 %v4822, %v4823
      %v4825 = vsel %vm669, %v4736, 0.0
      %v4826 = vadd.f32 %v4824, %v4825
      %v4827 = vsel %vm669, %v4737, 0.0
      %v4828 = vadd.f32 %v4826, %v4827
      %v4829 = vsel %vm669, %v4738, 0.0
      %v4830 = vadd.f32 %v4828, %v4829
      %v4831 = vsel %vm669, %v4739, 0.0
      %v4832 = vadd.f32 %v4830, %v4831
      %v4833 = vsel %vm669, %v4740, 0.0
      %v4834 = vadd.f32 %v4832, %v4833
      %v4835 = vsel %vm669, %v4741, 0.0
      %v4836 = vadd.f32 %v4834, %v4835
      %v4837 = vrot.slane %v4836, 4
      %v4838 = vadd.f32 %v4836, %v4837
      %v4839 = vrot.slane %v4838, 2
      %v4840 = vadd.f32 %v4838, %v4839
      %v4841 = vrot.slane %v4840, 1
      %v4842 = vadd.f32 %v4840, %v4841
      %vm4843 = vcmask 57344
      %4844 = vst.msk [vmem:[%s181] sm:$0x1] %vm4843, %v4842
      %v4845 = vmul.f32 %v4710, %v4710
      %v4846 = vmul.f32 %v4711, %v4711
      %v4847 = vmul.f32 %v4712, %v4712
      %v4848 = vmul.f32 %v4713, %v4713
      %v4849 = vmul.f32 %v4714, %v4714
      %v4850 = vmul.f32 %v4715, %v4715
      %v4851 = vmul.f32 %v4716, %v4716
      %v4852 = vmul.f32 %v4717, %v4717
      %v4853 = vmul.f32 %v4718, %v4718
      %v4854 = vmul.f32 %v4719, %v4719
      %v4855 = vmul.f32 %v4720, %v4720
      %v4856 = vmul.f32 %v4721, %v4721
      %v4857 = vmul.f32 %v4722, %v4722
      %v4858 = vmul.f32 %v4723, %v4723
      %v4859 = vmul.f32 %v4724, %v4724
      %v4860 = vmul.f32 %v4725, %v4725
      %v4861 = vmul.f32 %v4726, %v4726
      %v4862 = vmul.f32 %v4727, %v4727
      %v4863 = vmul.f32 %v4728, %v4728
      %v4864 = vmul.f32 %v4729, %v4729
      %v4865 = vmul.f32 %v4730, %v4730
      %v4866 = vmul.f32 %v4731, %v4731
      %v4867 = vmul.f32 %v4732, %v4732
      %v4868 = vmul.f32 %v4733, %v4733
      %v4869 = vmul.f32 %v4734, %v4734
      %v4870 = vmul.f32 %v4735, %v4735
      %v4871 = vmul.f32 %v4736, %v4736
      %v4872 = vmul.f32 %v4737, %v4737
      %v4873 = vmul.f32 %v4738, %v4738
      %v4874 = vmul.f32 %v4739, %v4739
      %v4875 = vmul.f32 %v4740, %v4740
      %v4876 = vmul.f32 %v4741, %v4741
      %v4877 = vsel %vm669, %v4845, 0.0
      %v4878 = vsel %vm669, %v4846, 0.0
      %v4879 = vadd.f32 %v4877, %v4878
      %v4880 = vsel %vm669, %v4847, 0.0
      %v4881 = vadd.f32 %v4879, %v4880
      %v4882 = vsel %vm669, %v4848, 0.0
      %v4883 = vadd.f32 %v4881, %v4882
      %v4884 = vsel %vm669, %v4849, 0.0
      %v4885 = vadd.f32 %v4883, %v4884
      %v4886 = vsel %vm669, %v4850, 0.0
      %v4887 = vadd.f32 %v4885, %v4886
      %v4888 = vsel %vm669, %v4851, 0.0
      %v4889 = vadd.f32 %v4887, %v4888
      %v4890 = vsel %vm669, %v4852, 0.0
      %v4891 = vadd.f32 %v4889, %v4890
      %v4892 = vsel %vm669, %v4853, 0.0
      %v4893 = vadd.f32 %v4891, %v4892
      %v4894 = vsel %vm669, %v4854, 0.0
      %v4895 = vadd.f32 %v4893, %v4894
      %v4896 = vsel %vm669, %v4855, 0.0
      %v4897 = vadd.f32 %v4895, %v4896
      %v4898 = vsel %vm669, %v4856, 0.0
      %v4899 = vadd.f32 %v4897, %v4898
      %v4900 = vsel %vm669, %v4857, 0.0
      %v4901 = vadd.f32 %v4899, %v4900
      %v4902 = vsel %vm669, %v4858, 0.0
      %v4903 = vadd.f32 %v4901, %v4902
      %v4904 = vsel %vm669, %v4859, 0.0
      %v4905 = vadd.f32 %v4903, %v4904
      %v4906 = vsel %vm669, %v4860, 0.0
      %v4907 = vadd.f32 %v4905, %v4906
      %v4908 = vsel %vm669, %v4861, 0.0
      %v4909 = vadd.f32 %v4907, %v4908
      %v4910 = vsel %vm669, %v4862, 0.0
      %v4911 = vadd.f32 %v4909, %v4910
      %v4912 = vsel %vm669, %v4863, 0.0
      %v4913 = vadd.f32 %v4911, %v4912
      %v4914 = vsel %vm669, %v4864, 0.0
      %v4915 = vadd.f32 %v4913, %v4914
      %v4916 = vsel %vm669, %v4865, 0.0
      %v4917 = vadd.f32 %v4915, %v4916
      %v4918 = vsel %vm669, %v4866, 0.0
      %v4919 = vadd.f32 %v4917, %v4918
      %v4920 = vsel %vm669, %v4867, 0.0
      %v4921 = vadd.f32 %v4919, %v4920
      %v4922 = vsel %vm669, %v4868, 0.0
      %v4923 = vadd.f32 %v4921, %v4922
      %v4924 = vsel %vm669, %v4869, 0.0
      %v4925 = vadd.f32 %v4923, %v4924
      %v4926 = vsel %vm669, %v4870, 0.0
      %v4927 = vadd.f32 %v4925, %v4926
      %v4928 = vsel %vm669, %v4871, 0.0
      %v4929 = vadd.f32 %v4927, %v4928
      %v4930 = vsel %vm669, %v4872, 0.0
      %v4931 = vadd.f32 %v4929, %v4930
      %v4932 = vsel %vm669, %v4873, 0.0
      %v4933 = vadd.f32 %v4931, %v4932
      %v4934 = vsel %vm669, %v4874, 0.0
      %v4935 = vadd.f32 %v4933, %v4934
      %v4936 = vsel %vm669, %v4875, 0.0
      %v4937 = vadd.f32 %v4935, %v4936
      %v4938 = vsel %vm669, %v4876, 0.0
      %v4939 = vadd.f32 %v4937, %v4938
      %v4940 = vrot.slane %v4939, 4
      %v4941 = vadd.f32 %v4939, %v4940
      %v4942 = vrot.slane %v4941, 2
      %v4943 = vadd.f32 %v4941, %v4942
      %v4944 = vrot.slane %v4943, 1
      %v4945 = vadd.f32 %v4943, %v4944
      %4946 = vst.msk [vmem:[%s181 + $0x1] sm:$0x1] %vm4843, %v4945
      %p4947 = scmp.lt.s32.totalorder %s15, 1
      %s4948 = scalar_select %p4947, %s15, 1
      %s4949 = smul.addr %s4948, 32
      %s4950 = smul.addr %s4949, 8
      %s4951 = scalar_lea.vmem %s2, %s4950
      %p4952 = scmp.lt.s32.totalorder %s15, 1
      %s4953 = scalar_select %p4952, %s15, 1
      %s4954 = smul.addr %s4953, 2
      %s4955 = scalar_lea.vmem %s3, %s4954
      // Predicated region
      $region29: #{fwd.9} parent=27 // pred_check
        %p4956 = pneg %p80
      $region30: #{fwd.9} parent=27 // pred_check_branch
        %4958 = sbr.rel (%p4956) target = $region32
      $region31: #{fwd.9} parent=27 // pred_region
        _
      $region32: #{fwd.9} parent=27 // pred_fallthru
        _
      // Predicated region
      $region33: #{fwd.9} parent=27 // pred_check
        %p4959 = pneg %p106
      $region34: #{fwd.9} parent=27 // pred_check_branch
        %4961 = sbr.rel (%p4959) target = $region36
      $region35: #{fwd.9} parent=27 // pred_region
        _
      $region36: #{fwd.9} parent=27 // pred_fallthru
        _
    $region28: #{fwd.9} parent=5 // pred_fallthru
      _
    %p4962 = scmp.le.s32.totalorder 2, %s10
    // Predicated region
    $region37: #{fwd.9} parent=5 // pred_check
      %p4963 = pneg %p4962
    $region38: #{fwd.9} parent=5 // pred_check_branch
      %4965 = sbr.rel (%p4963) target = $region40
    $region39: #{fwd.9} parent=5 // pred_region
      %s4966 = ssub.s32 %s10, 2
      // Predicated region
      $region41: #{fwd.9} parent=39 // pred_check
        %p4967 = pneg %p86
      $region42: #{fwd.9} parent=39 // pred_check_branch
        %4969 = sbr.rel (%p4967) target = $region44
      $region43: #{fwd.9} parent=39 // pred_region
        %p4970 = scmp.lt.s32.totalorder %s16, 1
        %s4971 = scalar_select %p4970, %s16, 1
        %s4972 = smul.addr %s4971, 32
        %s4973 = smul.addr %s4972, 8
        %s4974 = scalar_lea.vmem %s2, %s4973
      $region44: #{fwd.9} parent=39 // pred_fallthru
        _
      // Predicated region
      $region45: #{fwd.9} parent=39 // pred_check
        %p4975 = pneg %p112
      $region46: #{fwd.9} parent=39 // pred_check_branch
        %4977 = sbr.rel (%p4975) target = $region48
      $region47: #{fwd.9} parent=39 // pred_region
        %p4978 = scmp.lt.s32.totalorder %s16, 1
        %s4979 = scalar_select %p4978, %s16, 1
        %s4980 = smul.addr %s4979, 2
        %s4981 = scalar_lea.vmem %s3, %s4980
      $region48: #{fwd.9} parent=39 // pred_fallthru
        _
    $region40: #{fwd.9} parent=5 // pred_fallthru
      _
  $region6: #{fwd.9} parent=0 // loop_footer
    %s14 = sadd.s32 1, %s10
  $region7: #{fwd.9} parent=0 // loop_footer_branch
    %9 = sbr.rel target = $region3
  $region8: #{fwd.9} parent=0 // loop_exit
    _

// kernel: fwd.15
$region0: #{fwd.15}
  #allocation0 [shape = 'u32[]', space=smem, size = 0x4, offset = 0x4, fixed_abs, tag = 'smem constant byte address 0x4 - core index']
  #allocation1 [shape = 'u32[144,128]{1,0:T(1,128)}', space=vmem, size = 0x12000, scoped, tag = 'internal scratch']
  %s0 = inlined_call_operand.vmem [shape: bf16[1,2,10,10,8], index: 0, kind: input, shape index: {}]
  %s1 = inlined_call_operand.vmem [shape: bf16[9,8,16], index: 1, kind: input, shape index: {}]
  %s2 = inlined_call_operand.vmem [shape: f32[2,64,16], index: 2, kind: output, shape index: {0}]
  %s3 = inlined_call_operand.vmem [shape: f32[2,2,16], index: 3, kind: output, shape index: {1}]
  %4 = xla_tuple %s2, %s3
  %s5 = sld [smem:[#allocation0]]
  $region49: #{fwd.15} parent=0
    _
  %s7 = ssub.s32 1, %s5
  %s8 = scalar_select 0, %s7, %s5
  loop: start=0, step=1, limit=4
  $region2: #{fwd.15} parent=0 // loop_pre_header
    _
  $region3: #{fwd.15} parent=0 // loop_header
    %s10 = sphi 0, %s14
    %p11 = scmp.ge.s32.totalorder %s10, 4
    %s20 = sphi 0, %s22
    %s23 = sphi 0, %s20
    %s24 = sphi 0, %s23
    %s40 = sphi 0, %s24
    %s44 = sphi 0, %s44
    %s46 = sphi 0, %s44
    %s47 = sphi 0, %s46
    %s61 = sphi 0, %s47
    %s67 = sphi 0, %s69
    %s70 = sphi 0, %s67
    %s71 = sphi 0, %s70
    %s87 = sphi 0, %s71
    %s93 = sphi 0, %s95
    %s96 = sphi 0, %s93
    %s97 = sphi 0, %s96
    %s113 = sphi 0, %s97
  $region4: #{fwd.15} parent=0 // loop_header_branch
    %13 = sbr.rel (%p11) target = $region8
  $region5: #{fwd.15} parent=0 // loop_body
    %s15 = ssub.s32 %s10, 1
    %s16 = ssub.s32 %s10, 2
    %s17 = sadd.s32 %s10, 1
    %s18 = ssub.s32 %s10, %s17
    %p19 = scmp.eq.s32.totalorder %s18, 0
    %s21 = sadd.s32 %s20, 1
    %s22 = scalar_select %p19, %s20, %s21
    %p25 = pneg %p19
    %p26 = scmp.eq.s32.totalorder %s10, 1
    %p27 = por %p25, %p26
    %p28 = scmp.ne.s32.totalorder %s20, %s23
    %p29 = scmp.eq.s32.totalorder %s10, 0
    %p30 = por %p28, %p29
    %p31 = scmp.ne.s32.totalorder %s20, %s23
    %p32 = scmp.eq.s32.totalorder %s15, 1
    %p33 = por %p31, %p32
    %p34 = scmp.ne.s32.totalorder %s23, %s24
    %p35 = scmp.eq.s32.totalorder %s15, 0
    %p36 = por %p34, %p35
    %p37 = scmp.ne.s32.totalorder %s23, %s24
    %p38 = scmp.eq.s32.totalorder %s16, 1
    %p39 = por %p37, %p38
    %p41 = scmp.ne.s32.totalorder %s24, %s40
    %p42 = scmp.eq.s32.totalorder %s16, 0
    %p43 = por %p41, %p42
    %s45 = sadd.s32 %s44, 1
    %p48 = scmp.eq.s32.totalorder %s10, 1
    %p49 = scmp.ne.s32.totalorder %s44, %s46
    %p50 = scmp.eq.s32.totalorder %s10, 0
    %p51 = por %p49, %p50
    %p52 = scmp.ne.s32.totalorder %s44, %s46
    %p53 = scmp.eq.s32.totalorder %s15, 1
    %p54 = por %p52, %p53
    %p55 = scmp.ne.s32.totalorder %s46, %s47
    %p56 = scmp.eq.s32.totalorder %s15, 0
    %p57 = por %p55, %p56
    %p58 = scmp.ne.s32.totalorder %s46, %s47
    %p59 = scmp.eq.s32.totalorder %s16, 1
    %p60 = por %p58, %p59
    %p62 = scmp.ne.s32.totalorder %s47, %s61
    %p63 = scmp.eq.s32.totalorder %s16, 0
    %p64 = por %p62, %p63
    %s65 = ssub.s32 %s10, %s17
    %p66 = scmp.eq.s32.totalorder %s65, 0
    %s68 = sadd.s32 %s67, 1
    %s69 = scalar_select %p66, %s67, %s68
    %p72 = pneg %p66
    %p73 = scmp.eq.s32.totalorder %s10, 1
    %p74 = por %p72, %p73
    %p75 = scmp.ne.s32.totalorder %s67, %s70
    %p76 = scmp.eq.s32.totalorder %s10, 0
    %p77 = por %p75, %p76
    %p78 = scmp.ne.s32.totalorder %s67, %s70
    %p79 = scmp.eq.s32.totalorder %s15, 1
    %p80 = por %p78, %p79
    %p81 = scmp.ne.s32.totalorder %s70, %s71
    %p82 = scmp.eq.s32.totalorder %s15, 0
    %p83 = por %p81, %p82
    %p84 = scmp.ne.s32.totalorder %s70, %s71
    %p85 = scmp.eq.s32.totalorder %s16, 1
    %p86 = por %p84, %p85
    %p88 = scmp.ne.s32.totalorder %s71, %s87
    %p89 = scmp.eq.s32.totalorder %s16, 0
    %p90 = por %p88, %p89
    %s91 = ssub.s32 %s10, %s17
    %p92 = scmp.eq.s32.totalorder %s91, 0
    %s94 = sadd.s32 %s93, 1
    %s95 = scalar_select %p92, %s93, %s94
    %p98 = pneg %p92
    %p99 = scmp.eq.s32.totalorder %s10, 1
    %p100 = por %p98, %p99
    %p101 = scmp.ne.s32.totalorder %s93, %s96
    %p102 = scmp.eq.s32.totalorder %s10, 0
    %p103 = por %p101, %p102
    %p104 = scmp.ne.s32.totalorder %s93, %s96
    %p105 = scmp.eq.s32.totalorder %s15, 1
    %p106 = por %p104, %p105
    %p107 = scmp.ne.s32.totalorder %s96, %s97
    %p108 = scmp.eq.s32.totalorder %s15, 0
    %p109 = por %p107, %p108
    %p110 = scmp.ne.s32.totalorder %s96, %s97
    %p111 = scmp.eq.s32.totalorder %s16, 1
    %p112 = por %p110, %p111
    %p114 = scmp.ne.s32.totalorder %s97, %s113
    %p115 = scmp.eq.s32.totalorder %s16, 0
    %p116 = por %p114, %p115
    %p117 = scmp.le.s32.totalorder 1, %s10
    %p118 = scmp.lt.s32.totalorder %s10, 3
    %p119 = pnand %p117, %p118
    %p120 = pneg %p119
    // Predicated region
    $region9: #{fwd.15} parent=5 // pred_check
      _
    $region10: #{fwd.15} parent=5 // pred_check_branch
      %122 = sbr.rel (%p119) target = $region12
    $region11: #{fwd.15} parent=5 // pred_region
      %s123 = ssub.s32 %s10, 1
      // Predicated region
      $region13: #{fwd.15} parent=11 // pred_check
        %p124 = pneg %p57
      $region14: #{fwd.15} parent=11 // pred_check_branch
        %126 = sbr.rel (%p124) target = $region16
      $region15: #{fwd.15} parent=11 // pred_region
        _
      $region16: #{fwd.15} parent=11 // pred_fallthru
        _
    $region12: #{fwd.15} parent=5 // pred_fallthru
      _
    %p127 = scmp.lt.s32.totalorder %s10, 2
    // Predicated region
    $region17: #{fwd.15} parent=5 // pred_check
      %p128 = pneg %p127
    $region18: #{fwd.15} parent=5 // pred_check_branch
      %130 = sbr.rel (%p128) target = $region20
    $region19: #{fwd.15} parent=5 // pred_region
      // Predicated region
      $region21: #{fwd.15} parent=19 // pred_check
        %p131 = pneg %p30
      $region22: #{fwd.15} parent=19 // pred_check_branch
        %133 = sbr.rel (%p131) target = $region24
      $region23: #{fwd.15} parent=19 // pred_region
        %p134 = scmp.lt.s32.totalorder %s10, 1
        %s135 = scalar_select %p134, %s10, 1
        %s136 = smul.addr %s135, 20
        %s137 = smul.addr %s136, 4
        %s138 = scalar_lea.vmem %s0, %s137
      $region24: #{fwd.15} parent=19 // pred_fallthru
        _
    $region20: #{fwd.15} parent=5 // pred_fallthru
      _
    %p139 = scmp.le.s32.totalorder 1, %s10
    %p140 = scmp.lt.s32.totalorder %s10, 3
    %p141 = pnand %p139, %p140
    %p142 = pneg %p141
    // Predicated region
    $region25: #{fwd.15} parent=5 // pred_check
      _
    $region26: #{fwd.15} parent=5 // pred_check_branch
      %144 = sbr.rel (%p141) target = $region28
    $region27: #{fwd.15} parent=5 // pred_region
      %s145 = ssub.s32 %s10, 1
      %p146 = scmp.lt.s32.totalorder %s15, 1
      %s147 = scalar_select %p146, %s15, 1
      %s148 = smul.addr %s147, 20
      %s149 = smul.addr %s148, 4
      %s150 = scalar_lea.vmem %s0, %s149
      %p151 = pneg %p36
      %p152 = pneg %p33
      %p153 = pneg %p57
      %p154 = pneg %p54
      %p155 = pneg %p83
      %p156 = pneg %p80
      %p157 = scmp.lt.s32.totalorder %s15, 1
      %s158 = scalar_select %p157, %s15, 1
      %s159 = smul.addr %s158, 8
      %s160 = smul.addr %s159, 8
      %s161 = scalar_lea.vmem %s2, %s160
      %p162 = pneg %p109
      %p163 = pneg %p106
      %p164 = scmp.lt.s32.totalorder %s15, 1
      %s165 = scalar_select %p164, %s15, 1
      %s166 = smul.addr %s165, 2
      %s167 = scalar_lea.vmem %s3, %s166
      %p168 = scmp.lt.s32.totalorder %s15, 1
      %s169 = scalar_select %p168, %s15, 1
      %s170 = smul.addr %s169, 20
      %s171 = smul.addr %s170, 4
      %s172 = scalar_lea.vmem %s0, %s171
      %p173 = scmp.lt.s32.totalorder %s15, 1
      %s174 = scalar_select %p173, %s15, 1
      %s175 = smul.addr %s174, 8
      %s176 = smul.addr %s175, 8
      %s177 = scalar_lea.vmem %s2, %s176
      %p178 = scmp.lt.s32.totalorder %s15, 1
      %s179 = scalar_select %p178, %s15, 1
      %s180 = smul.addr %s179, 2
      %s181 = scalar_lea.vmem %s3, %s180
      %v183 = vld [vmem:[%s172] sm:$0xf]
      %v184 = vld [vmem:[%s172 + $0x8] sm:$0xf]
      %v185 = vld [vmem:[%s172 + $0x10] sm:$0xf]
      %v186 = vld [vmem:[%s172 + $0x18] sm:$0xf]
      %v187 = vld [vmem:[%s172 + $0x20] sm:$0xf]
      %v188 = vld [vmem:[%s172 + $0x28] sm:$0xf]
      %v189 = vld [vmem:[%s172 + $0x30] sm:$0xf]
      %v190 = vld [vmem:[%s172 + $0x38] sm:$0xf]
      %v191 = vld [vmem:[%s1] sm:$0xf]
      %v192 = vld [vmem:[%s172 + $0x4] sm:$0x1]
      %v193 = vld [vmem:[%s172 + $0xc] sm:$0x1]
      %v194 = vld [vmem:[%s172 + $0x14] sm:$0x1]
      %v195 = vld [vmem:[%s172 + $0x1c] sm:$0x1]
      %v196 = vld [vmem:[%s172 + $0x24] sm:$0x1]
      %v197 = vld [vmem:[%s172 + $0x2c] sm:$0x1]
      %v198 = vld [vmem:[%s172 + $0x34] sm:$0x1]
      %v199 = vld [vmem:[%s172 + $0x3c] sm:$0x1]
      %vm200 = vsmask.f32 3328
      %vm201 = vsmask.f32 7440
      %vm202 = vmor %vm200, %vm201
      %v204 = vshrl.u32 %v183, 16
      %v206 = vrot.slane %v204, 4
      %v207 = vshll.u32 %v183, 16
      %v209 = vrot.slane %v207, 5
      %v210 = vor.u32 %v206, %v209
      %v211 = vrot.slane %v210, 4
      %v213 = vshll.u32 %v192, 16
      %v215 = vrot.slane %v213, 5
      %v216 = vsel %vm202, %v211, %v215
      %v218 = vshrl.u32 %v184, 16
      %v220 = vrot.slane %v218, 4
      %v221 = vshll.u32 %v184, 16
      %v223 = vrot.slane %v221, 5
      %v224 = vor.u32 %v220, %v223
      %v225 = vrot.slane %v224, 4
      %v227 = vshll.u32 %v193, 16
      %v229 = vrot.slane %v227, 5
      %v230 = vsel %vm202, %v225, %v229
      %v232 = vshrl.u32 %v185, 16
      %v234 = vrot.slane %v232, 4
      %v235 = vshll.u32 %v185, 16
      %v237 = vrot.slane %v235, 5
      %v238 = vor.u32 %v234, %v237
      %v239 = vrot.slane %v238, 4
      %v241 = vshll.u32 %v194, 16
      %v243 = vrot.slane %v241, 5
      %v244 = vsel %vm202, %v239, %v243
      %v246 = vshrl.u32 %v186, 16
      %v248 = vrot.slane %v246, 4
      %v249 = vshll.u32 %v186, 16
      %v251 = vrot.slane %v249, 5
      %v252 = vor.u32 %v248, %v251
      %v253 = vrot.slane %v252, 4
      %v255 = vshll.u32 %v195, 16
      %v257 = vrot.slane %v255, 5
      %v258 = vsel %vm202, %v253, %v257
      %v260 = vshrl.u32 %v187, 16
      %v262 = vrot.slane %v260, 4
      %v263 = vshll.u32 %v187, 16
      %v265 = vrot.slane %v263, 5
      %v266 = vor.u32 %v262, %v265
      %v267 = vrot.slane %v266, 4
      %v269 = vshll.u32 %v196, 16
      %v271 = vrot.slane %v269, 5
      %v272 = vsel %vm202, %v267, %v271
      %v274 = vshrl.u32 %v188, 16
      %v276 = vrot.slane %v274, 4
      %v277 = vshll.u32 %v188, 16
      %v279 = vrot.slane %v277, 5
      %v280 = vor.u32 %v276, %v279
      %v281 = vrot.slane %v280, 4
      %v283 = vshll.u32 %v197, 16
      %v285 = vrot.slane %v283, 5
      %v286 = vsel %vm202, %v281, %v285
      %v288 = vshrl.u32 %v189, 16
      %v290 = vrot.slane %v288, 4
      %v291 = vshll.u32 %v189, 16
      %v293 = vrot.slane %v291, 5
      %v294 = vor.u32 %v290, %v293
      %v295 = vrot.slane %v294, 4
      %v297 = vshll.u32 %v198, 16
      %v299 = vrot.slane %v297, 5
      %v300 = vsel %vm202, %v295, %v299
      %v302 = vshrl.u32 %v190, 16
      %v304 = vrot.slane %v302, 4
      %v305 = vshll.u32 %v190, 16
      %v307 = vrot.slane %v305, 5
      %v308 = vor.u32 %v304, %v307
      %v309 = vrot.slane %v308, 4
      %v311 = vshll.u32 %v199, 16
      %v313 = vrot.slane %v311, 5
      %v314 = vsel %vm202, %v309, %v313
      %s315 = scalar_lea.vmem %s1, 4
      %v316 = vld [vmem:[%s315] sm:$0xf]
      %v317 = vunpack.c.l.b16 %v216
      %v318 = vunpack.c.l.b16 %v230
      %v319 = vunpack.c.l.b16 %v244
      %v320 = vunpack.c.l.b16 %v258
      %v321 = vunpack.c.l.b16 %v272
      %v322 = vunpack.c.l.b16 %v286
      %v323 = vunpack.c.l.b16 %v300
      %v324 = vunpack.c.l.b16 %v314
      %v325 = vpack.c.b16 %v318, %v317
      %v326 = vpack.c.b16 %v320, %v319
      %v327 = vpack.c.b16 %v322, %v321
      %v328 = vpack.c.b16 %v324, %v323
      %vm329 = vcmask 64512
      %v331 = vsel %vm329, %v325, 0
      %v334 = vsel %vm329, %v326, 0
      %v337 = vsel %vm329, %v327, 0
      %v340 = vsel %vm329, %v328, 0
      %vm342 = vcmask 1043456
      %v344 = vsel %vm342, %v316, 0
      %346 = vmatprep.subr.bf16.mxu0 0
      %347 = vmatpush1.bf16.msra.mxu0 %v344
      %348 = vmatprep.subr.bf16.mxu0 0
      %349 = vmatpush1.bf16.msra.mxu0 0
      %350 = vmatprep.subr.bf16.mxu0 0
      %351 = vmatpush1.bf16.msra.mxu0 0
      %352 = vmatprep.subr.bf16.mxu0 0
      %353 = vmatpush1.bf16.msra.mxu0 0
      %354 = vmatprep.subr.bf16.mxu0 0
      %355 = vmatpush1.bf16.msra.mxu0 0
      %356 = vmatprep.subr.bf16.mxu0 0
      %357 = vmatpush1.bf16.msra.mxu0 0
      %358 = vmatprep.subr.bf16.mxu0 0
      %359 = vmatpush1.bf16.msra.mxu0 0
      %360 = vmatprep.subr.bf16.mxu0 0
      %361 = vmatpush1.bf16.msra.mxu0 0
      %362 = vmatprep.subr.bf16.mxu0 0
      %363 = vmatpush1.bf16.msra.mxu0 0
      %364 = vmatprep.subr.bf16.mxu0 0
      %365 = vmatpush1.bf16.msra.mxu0 0
      %366 = vmatprep.subr.bf16.mxu0 0
      %367 = vmatpush1.bf16.msra.mxu0 0
      %368 = vmatprep.subr.bf16.mxu0 0
      %369 = vmatpush1.bf16.msra.mxu0 0
      %370 = vmatprep.subr.bf16.mxu0 0
      %371 = vmatpush1.bf16.msra.mxu0 0
      %372 = vmatprep.subr.bf16.mxu0 0
      %373 = vmatpush1.bf16.msra.mxu0 0
      %374 = vmatprep.subr.bf16.mxu0 0
      %375 = vmatpush1.bf16.msra.mxu0 0
      %376 = vmatprep.subr.bf16.mxu0 0
      %377 = vmatpush1.bf16.msra.mxu0 0
      %378 = vmatprep.mubr.bf16.mxu0 0
      %379 = vmatmul.mubr.bf16.gmra.mrb[0].mxu0 %v331
      %v380 = vpop.f32.mrb[0].mxu0
      %v381 = vadd.f32 0.0, %v380
      %v382 = vpop.f32.mrb[0].mxu0
      %v383 = vpop.f32.mrb[0].mxu0
      %v384 = vadd.f32 0.0, %v383
      %v385 = vpop.f32.mrb[0].mxu0
      %386 = vmatprep.mubr.bf16.mxu0 0
      %387 = vmatmul.mubr.bf16.gmra.mrb[0].mxu0 %v334
      %v388 = vpop.f32.mrb[0].mxu0
      %v389 = vadd.f32 0.0, %v388
      %v390 = vpop.f32.mrb[0].mxu0
      %v391 = vpop.f32.mrb[0].mxu0
      %v392 = vadd.f32 0.0, %v391
      %v393 = vpop.f32.mrb[0].mxu0
      %394 = vmatprep.mubr.bf16.mxu0 0
      %395 = vmatmul.mubr.bf16.gmra.mrb[0].mxu0 %v337
      %v396 = vpop.f32.mrb[0].mxu0
      %v397 = vadd.f32 0.0, %v396
      %v398 = vpop.f32.mrb[0].mxu0
      %v399 = vpop.f32.mrb[0].mxu0
      %v400 = vadd.f32 0.0, %v399
      %v401 = vpop.f32.mrb[0].mxu0
      %402 = vmatprep.mubr.bf16.mxu0 0
      %403 = vmatmul.mubr.bf16.gmra.mrb[0].mxu0 %v340
      %v404 = vpop.f32.mrb[0].mxu0
      %v405 = vadd.f32 0.0, %v404
      %v406 = vpop.f32.mrb[0].mxu0
      %v407 = vpop.f32.mrb[0].mxu0
      %v408 = vadd.f32 0.0, %v407
      %v409 = vpop.f32.mrb[0].mxu0
      %410 = vdwg.mxu0
      %v419 = vunpack.c.l.b16 %v183
      %v420 = vunpack.c.l.b16 %v184
      %v421 = vunpack.c.l.b16 %v185
      %v422 = vunpack.c.l.b16 %v186
      %v423 = vunpack.c.l.b16 %v187
      %v424 = vunpack.c.l.b16 %v188
      %v425 = vunpack.c.l.b16 %v189
      %v426 = vunpack.c.l.b16 %v190
      %v427 = vpack.c.b16 %v420, %v419
      %v428 = vpack.c.b16 %v422, %v421
      %v429 = vpack.c.b16 %v424, %v423
      %v430 = vpack.c.b16 %v426, %v425
      %v432 = vsel %vm329, %v427, 0
      %v435 = vsel %vm329, %v428, 0
      %v438 = vsel %vm329, %v429, 0
      %v441 = vsel %vm329, %v430, 0
      %v444 = vsel %vm342, %v191, 0
      %446 = vmatprep.subr.bf16.mxu0 0
      %447 = vmatpush1.bf16.msra.mxu0 %v444
      %448 = vmatprep.subr.bf16.mxu0 0
      %449 = vmatpush1.bf16.msra.mxu0 0
      %450 = vmatprep.subr.bf16.mxu0 0
      %451 = vmatpush1.bf16.msra.mxu0 0
      %452 = vmatprep.subr.bf16.mxu0 0
      %453 = vmatpush1.bf16.msra.mxu0 0
      %454 = vmatprep.subr.bf16.mxu0 0
      %455 = vmatpush1.bf16.msra.mxu0 0
      %456 = vmatprep.subr.bf16.mxu0 0
      %457 = vmatpush1.bf16.msra.mxu0 0
      %458 = vmatprep.subr.bf16.mxu0 0
      %459 = vmatpush1.bf16.msra.mxu0 0
      %460 = vmatprep.subr.bf16.mxu0 0
      %461 = vmatpush1.bf16.msra.mxu0 0
      %462 = vmatprep.subr.bf16.mxu0 0
      %463 = vmatpush1.bf16.msra.mxu0 0
      %464 = vmatprep.subr.bf16.mxu0 0
      %465 = vmatpush1.bf16.msra.mxu0 0
      %466 = vmatprep.subr.bf16.mxu0 0
      %467 = vmatpush1.bf16.msra.mxu0 0
      %468 = vmatprep.subr.bf16.mxu0 0
      %469 = vmatpush1.bf16.msra.mxu0 0
      %470 = vmatprep.subr.bf16.mxu0 0
      %471 = vmatpush1.bf16.msra.mxu0 0
      %472 = vmatprep.subr.bf16.mxu0 0
      %473 = vmatpush1.bf16.msra.mxu0 0
      %474 = vmatprep.subr.bf16.mxu0 0
      %475 = vmatpush1.bf16.msra.mxu0 0
      %476 = vmatprep.subr.bf16.mxu0 0
      %477 = vmatpush1.bf16.msra.mxu0 0
      %478 = vmatprep.mubr.bf16.mxu0 0
      %479 = vmatmul.mubr.bf16.gmra.mrb[0].mxu0 %v432
      %v480 = vpop.f32.mrb[0].mxu0
      %v481 = vadd.f32 %v381, %v480
      %v482 = vpop.f32.mrb[0].mxu0
      %v483 = vpop.f32.mrb[0].mxu0
      %v484 = vadd.f32 %v384, %v483
      %v485 = vpop.f32.mrb[0].mxu0
      %486 = vmatprep.mubr.bf16.mxu0 0
      %487 = vmatmul.mubr.bf16.gmra.mrb[0].mxu0 %v435
      %v488 = vpop.f32.mrb[0].mxu0
      %v489 = vadd.f32 %v389, %v488
      %v490 = vpop.f32.mrb[0].mxu0
      %v491 = vpop.f32.mrb[0].mxu0
      %v492 = vadd.f32 %v392, %v491
      %v493 = vpop.f32.mrb[0].mxu0
      %494 = vmatprep.mubr.bf16.mxu0 0
      %495 = vmatmul.mubr.bf16.gmra.mrb[0].mxu0 %v438
      %v496 = vpop.f32.mrb[0].mxu0
      %v497 = vadd.f32 %v397, %v496
      %v498 = vpop.f32.mrb[0].mxu0
      %v499 = vpop.f32.mrb[0].mxu0
      %v500 = vadd.f32 %v400, %v499
      %v501 = vpop.f32.mrb[0].mxu0
      %502 = vmatprep.mubr.bf16.mxu0 0
      %503 = vmatmul.mubr.bf16.gmra.mrb[0].mxu0 %v441
      %v504 = vpop.f32.mrb[0].mxu0
      %v505 = vadd.f32 %v405, %v504
      %v506 = vpop.f32.mrb[0].mxu0
      %v507 = vpop.f32.mrb[0].mxu0
      %v508 = vadd.f32 %v408, %v507
      %v509 = vpop.f32.mrb[0].mxu0
      %510 = vdwg.mxu0
      %v511 = vld [vmem:[%s172] sm:$0xe]
      %v512 = vld [vmem:[%s172 + $0x8] sm:$0xe]
      %v513 = vld [vmem:[%s172 + $0x10] sm:$0xe]
      %v514 = vld [vmem:[%s172 + $0x18] sm:$0xe]
      %v515 = vld [vmem:[%s172 + $0x20] sm:$0xe]
      %v516 = vld [vmem:[%s172 + $0x28] sm:$0xe]
      %v517 = vld [vmem:[%s172 + $0x30] sm:$0xe]
      %v518 = vld [vmem:[%s172 + $0x38] sm:$0xe]
      %vm535 = vcmask 1042432
      %vm536 = vcmask 1046532
      %vm537 = vmor %vm535, %vm536
      %v538 = vrot.slane %v511, 5
      %v539 = vrot.slane %v538, 4
      %v540 = vrot.slane %v192, 5
      %v541 = vsel %vm537, %v539, %v540
      %v542 = vrot.slane %v512, 5
      %v543 = vrot.slane %v542, 4
      %v544 = vrot.slane %v193, 5
      %v545 = vsel %vm537, %v543, %v544
      %v546 = vrot.slane %v513, 5
      %v547 = vrot.slane %v546, 4
      %v548 = vrot.slane %v194, 5
      %v549 = vsel %vm537, %v547, %v548
      %v550 = vrot.slane %v514, 5
      %v551 = vrot.slane %v550, 4
      %v552 = vrot.slane %v195, 5
      %v553 = vsel %vm537, %v551, %v552
      %v554 = vrot.slane %v515, 5
      %v555 = vrot.slane %v554, 4
      %v556 = vrot.slane %v196, 5
      %v557 = vsel %vm537, %v555, %v556
      %v558 = vrot.slane %v516, 5
      %v559 = vrot.slane %v558, 4
      %v560 = vrot.slane %v197, 5
      %v561 = vsel %vm537, %v559, %v560
      %v562 = vrot.slane %v517, 5
      %v563 = vrot.slane %v562, 4
      %v564 = vrot.slane %v198, 5
      %v565 = vsel %vm537, %v563, %v564
      %v566 = vrot.slane %v518, 5
      %v567 = vrot.slane %v566, 4
      %v568 = vrot.slane %v199, 5
      %v569 = vsel %vm537, %v567, %v568
      %s570 = scalar_lea.vmem %s1, 8
      %v571 = vld [vmem:[%s570] sm:$0xf]
      %v572 = vunpack.c.l.b16 %v541
      %v573 = vunpack.c.l.b16 %v545
      %v574 = vunpack.c.l.b16 %v549
      %v575 = vunpack.c.l.b16 %v553
      %v576 = vunpack.c.l.b16 %v557
      %v577 = vunpack.c.l.b16 %v561
      %v578 = vunpack.c.l.b16 %v565
      %v579 = vunpack.c.l.b16 %v569
      %v580 = vpack.c.b16 %v573, %v572
      %v581 = vpack.c.b16 %v575, %v574
      %v582 = vpack.c.b16 %v577, %v576
      %v583 = vpack.c.b16 %v579, %v578
      %v585 = vsel %vm329, %v580, 0
      %v588 = vsel %vm329, %v581, 0
      %v591 = vsel %vm329, %v582, 0
      %v594 = vsel %vm329, %v583, 0
      %v597 = vsel %vm342, %v571, 0
      %599 = vmatprep.subr.bf16.mxu0 0
      %600 = vmatpush1.bf16.msra.mxu0 %v597
      %601 = vmatprep.subr.bf16.mxu0 0
      %602 = vmatpush1.bf16.msra.mxu0 0
      %603 = vmatprep.subr.bf16.mxu0 0
      %604 = vmatpush1.bf16.msra.mxu0 0
      %605 = vmatprep.subr.bf16.mxu0 0
      %606 = vmatpush1.bf16.msra.mxu0 0
      %607 = vmatprep.subr.bf16.mxu0 0
      %608 = vmatpush1.bf16.msra.mxu0 0
      %609 = vmatprep.subr.bf16.mxu0 0
      %610 = vmatpush1.bf16.msra.mxu0 0
      %611 = vmatprep.subr.bf16.mxu0 0
      %612 = vmatpush1.bf16.msra.mxu0 0
      %613 = vmatprep.subr.bf16.mxu0 0
      %614 = vmatpush1.bf16.msra.mxu0 0
      %615 = vmatprep.subr.bf16.mxu0 0
      %616 = vmatpush1.bf16.msra.mxu0 0
      %617 = vmatprep.subr.bf16.mxu0 0
      %618 = vmatpush1.bf16.msra.mxu0 0
      %619 = vmatprep.subr.bf16.mxu0 0
      %620 = vmatpush1.bf16.msra.mxu0 0
      %621 = vmatprep.subr.bf16.mxu0 0
      %622 = vmatpush1.bf16.msra.mxu0 0
      %623 = vmatprep.subr.bf16.mxu0 0
      %624 = vmatpush1.bf16.msra.mxu0 0
      %625 = vmatprep.subr.bf16.mxu0 0
      %626 = vmatpush1.bf16.msra.mxu0 0
      %627 = vmatprep.subr.bf16.mxu0 0
      %628 = vmatpush1.bf16.msra.mxu0 0
      %629 = vmatprep.subr.bf16.mxu0 0
      %630 = vmatpush1.bf16.msra.mxu0 0
      %631 = vmatprep.mubr.bf16.mxu0 0
      %632 = vmatmul.mubr.bf16.gmra.mrb[0].mxu0 %v585
      %v633 = vpop.f32.mrb[0].mxu0
      %v634 = vadd.f32 0.0, %v633
      %v635 = vpop.f32.mrb[0].mxu0
      %v636 = vpop.f32.mrb[0].mxu0
      %v637 = vadd.f32 0.0, %v636
      %v638 = vpop.f32.mrb[0].mxu0
      %639 = vmatprep.mubr.bf16.mxu0 0
      %640 = vmatmul.mubr.bf16.gmra.mrb[0].mxu0 %v588
      %v641 = vpop.f32.mrb[0].mxu0
      %v642 = vadd.f32 0.0, %v641
      %v643 = vpop.f32.mrb[0].mxu0
      %v644 = vpop.f32.mrb[0].mxu0
      %v645 = vadd.f32 0.0, %v644
      %v646 = vpop.f32.mrb[0].mxu0
      %647 = vmatprep.mubr.bf16.mxu0 0
      %648 = vmatmul.mubr.bf16.gmra.mrb[0].mxu0 %v591
      %v649 = vpop.f32.mrb[0].mxu0
      %v650 = vadd.f32 0.0, %v649
      %v651 = vpop.f32.mrb[0].mxu0
      %v652 = vpop.f32.mrb[0].mxu0
      %v653 = vadd.f32 0.0, %v652
      %v654 = vpop.f32.mrb[0].mxu0
      %655 = vmatprep.mubr.bf16.mxu0 0
      %656 = vmatmul.mubr.bf16.gmra.mrb[0].mxu0 %v594
      %v657 = vpop.f32.mrb[0].mxu0
      %v658 = vadd.f32 0.0, %v657
      %v659 = vpop.f32.mrb[0].mxu0
      %v660 = vpop.f32.mrb[0].mxu0
      %v661 = vadd.f32 0.0, %v660
      %v662 = vpop.f32.mrb[0].mxu0
      %663 = vdwg.mxu0
      %v664 = vadd.f32 %v481, %v634
      %v665 = vadd.f32 %v484, %v637
      %v666 = vadd.f32 %v489, %v642
      %v667 = vadd.f32 %v492, %v645
      %v668 = vadd.f32 %v497, %v650
      %v669 = vadd.f32 %v500, %v653
      %v670 = vadd.f32 %v505, %v658
      %v671 = vadd.f32 %v508, %v661
      %s672 = scalar_lea.vmem %s172, 8
      %v673 = vld [vmem:[%s672] sm:$0xf]
      %v674 = vld [vmem:[%s672 + $0x8] sm:$0xf]
      %v675 = vld [vmem:[%s672 + $0x10] sm:$0xf]
      %v676 = vld [vmem:[%s672 + $0x18] sm:$0xf]
      %v677 = vld [vmem:[%s672 + $0x20] sm:$0xf]
      %v678 = vld [vmem:[%s672 + $0x28] sm:$0xf]
      %v679 = vld [vmem:[%s672 + $0x30] sm:$0xf]
      %v680 = vld [vmem:[%s672 + $0x38] sm:$0xf]
      %s681 = scalar_lea.vmem %s1, 12
      %v682 = vld [vmem:[%s681] sm:$0xf]
      %v691 = vunpack.c.l.b16 %v673
      %v692 = vunpack.c.l.b16 %v674
      %v693 = vunpack.c.l.b16 %v675
      %v694 = vunpack.c.l.b16 %v676
      %v695 = vunpack.c.l.b16 %v677
      %v696 = vunpack.c.l.b16 %v678
      %v697 = vunpack.c.l.b16 %v679
      %v698 = vunpack.c.l.b16 %v680
      %v699 = vpack.c.b16 %v692, %v691
      %v700 = vpack.c.b16 %v694, %v693
      %v701 = vpack.c.b16 %v696, %v695
      %v702 = vpack.c.b16 %v698, %v697
      %v704 = vsel %vm329, %v699, 0
      %v707 = vsel %vm329, %v700, 0
      %v710 = vsel %vm329, %v701, 0
      %v713 = vsel %vm329, %v702, 0
      %v716 = vsel %vm342, %v682, 0
      %718 = vmatprep.subr.bf16.mxu0 0
      %719 = vmatpush1.bf16.msra.mxu0 %v716
      %720 = vmatprep.subr.bf16.mxu0 0
      %721 = vmatpush1.bf16.msra.mxu0 0
      %722 = vmatprep.subr.bf16.mxu0 0
      %723 = vmatpush1.bf16.msra.mxu0 0
      %724 = vmatprep.subr.bf16.mxu0 0
      %725 = vmatpush1.bf16.msra.mxu0 0
      %726 = vmatprep.subr.bf16.mxu0 0
      %727 = vmatpush1.bf16.msra.mxu0 0
      %728 = vmatprep.subr.bf16.mxu0 0
      %729 = vmatpush1.bf16.msra.mxu0 0
      %730 = vmatprep.subr.bf16.mxu0 0
      %731 = vmatpush1.bf16.msra.mxu0 0
      %732 = vmatprep.subr.bf16.mxu0 0
      %733 = vmatpush1.bf16.msra.mxu0 0
      %734 = vmatprep.subr.bf16.mxu0 0
      %735 = vmatpush1.bf16.msra.mxu0 0
      %736 = vmatprep.subr.bf16.mxu0 0
      %737 = vmatpush1.bf16.msra.mxu0 0
      %738 = vmatprep.subr.bf16.mxu0 0
      %739 = vmatpush1.bf16.msra.mxu0 0
      %740 = vmatprep.subr.bf16.mxu0 0
      %741 = vmatpush1.bf16.msra.mxu0 0
      %742 = vmatprep.subr.bf16.mxu0 0
      %743 = vmatpush1.bf16.msra.mxu0 0
      %744 = vmatprep.subr.bf16.mxu0 0
      %745 = vmatpush1.bf16.msra.mxu0 0
      %746 = vmatprep.subr.bf16.mxu0 0
      %747 = vmatpush1.bf16.msra.mxu0 0
      %748 = vmatprep.subr.bf16.mxu0 0
      %749 = vmatpush1.bf16.msra.mxu0 0
      %750 = vmatprep.mubr.bf16.mxu0 0
      %751 = vmatmul.mubr.bf16.gmra.mrb[0].mxu0 %v704
      %v752 = vpop.f32.mrb[0].mxu0
      %v753 = vadd.f32 0.0, %v752
      %v754 = vpop.f32.mrb[0].mxu0
      %v755 = vpop.f32.mrb[0].mxu0
      %v756 = vadd.f32 0.0, %v755
      %v757 = vpop.f32.mrb[0].mxu0
      %758 = vmatprep.mubr.bf16.mxu0 0
      %759 = vmatmul.mubr.bf16.gmra.mrb[0].mxu0 %v707
      %v760 = vpop.f32.mrb[0].mxu0
      %v761 = vadd.f32 0.0, %v760
      %v762 = vpop.f32.mrb[0].mxu0
      %v763 = vpop.f32.mrb[0].mxu0
      %v764 = vadd.f32 0.0, %v763
      %v765 = vpop.f32.mrb[0].mxu0
      %766 = vmatprep.mubr.bf16.mxu0 0
      %767 = vmatmul.mubr.bf16.gmra.mrb[0].mxu0 %v710
      %v768 = vpop.f32.mrb[0].mxu0
      %v769 = vadd.f32 0.0, %v768
      %v770 = vpop.f32.mrb[0].mxu0
      %v771 = vpop.f32.mrb[0].mxu0
      %v772 = vadd.f32 0.0, %v771
      %v773 = vpop.f32.mrb[0].mxu0
      %774 = vmatprep.mubr.bf16.mxu0 0
      %775 = vmatmul.mubr.bf16.gmra.mrb[0].mxu0 %v713
      %v776 = vpop.f32.mrb[0].mxu0
      %v777 = vadd.f32 0.0, %v776
      %v778 = vpop.f32.mrb[0].mxu0
      %v779 = vpop.f32.mrb[0].mxu0
      %v780 = vadd.f32 0.0, %v779
      %v781 = vpop.f32.mrb[0].mxu0
      %782 = vdwg.mxu0
      %v783 = vadd.f32 %v664, %v753
      %v784 = vadd.f32 %v665, %v756
      %v785 = vadd.f32 %v666, %v761
      %v786 = vadd.f32 %v667, %v764
      %v787 = vadd.f32 %v668, %v769
      %v788 = vadd.f32 %v669, %v772
      %v789 = vadd.f32 %v670, %v777
      %v790 = vadd.f32 %v671, %v780
      %v791 = vld [vmem:[%s672] sm:$0xf]
      %v792 = vld [vmem:[%s672 + $0x4] sm:$0x1]
      %v793 = vld [vmem:[%s672 + $0x8] sm:$0xf]
      %v794 = vld [vmem:[%s672 + $0xc] sm:$0x1]
      %v795 = vld [vmem:[%s672 + $0x10] sm:$0xf]
      %v796 = vld [vmem:[%s672 + $0x14] sm:$0x1]
      %v797 = vld [vmem:[%s672 + $0x18] sm:$0xf]
      %v798 = vld [vmem:[%s672 + $0x1c] sm:$0x1]
      %v799 = vld [vmem:[%s672 + $0x20] sm:$0xf]
      %v800 = vld [vmem:[%s672 + $0x24] sm:$0x1]
      %v801 = vld [vmem:[%s672 + $0x28] sm:$0xf]
      %v802 = vld [vmem:[%s672 + $0x2c] sm:$0x1]
      %v803 = vld [vmem:[%s672 + $0x30] sm:$0xf]
      %v804 = vld [vmem:[%s672 + $0x34] sm:$0x1]
      %v805 = vld [vmem:[%s672 + $0x38] sm:$0xf]
      %v806 = vld [vmem:[%s672 + $0x3c] sm:$0x1]
      %v808 = vshrl.u32 %v791, 16
      %v810 = vrot.slane %v808, 4
      %v811 = vshll.u32 %v791, 16
      %v813 = vrot.slane %v811, 5
      %v814 = vor.u32 %v810, %v813
      %v815 = vrot.slane %v814, 4
      %v817 = vshll.u32 %v792, 16
      %v819 = vrot.slane %v817, 5
      %v820 = vsel %vm202, %v815, %v819
      %v822 = vshrl.u32 %v793, 16
      %v824 = vrot.slane %v822, 4
      %v825 = vshll.u32 %v793, 16
      %v827 = vrot.slane %v825, 5
      %v828 = vor.u32 %v824, %v827
      %v829 = vrot.slane %v828, 4
      %v831 = vshll.u32 %v794, 16
      %v833 = vrot.slane %v831, 5
      %v834 = vsel %vm202, %v829, %v833
      %v836 = vshrl.u32 %v795, 16
      %v838 = vrot.slane %v836, 4
      %v839 = vshll.u32 %v795, 16
      %v841 = vrot.slane %v839, 5
      %v842 = vor.u32 %v838, %v841
      %v843 = vrot.slane %v842, 4
      %v845 = vshll.u32 %v796, 16
      %v847 = vrot.slane %v845, 5
      %v848 = vsel %vm202, %v843, %v847
      %v850 = vshrl.u32 %v797, 16
      %v852 = vrot.slane %v850, 4
      %v853 = vshll.u32 %v797, 16
      %v855 = vrot.slane %v853, 5
      %v856 = vor.u32 %v852, %v855
      %v857 = vrot.slane %v856, 4
      %v859 = vshll.u32 %v798, 16
      %v861 = vrot.slane %v859, 5
      %v862 = vsel %vm202, %v857, %v861
      %v864 = vshrl.u32 %v799, 16
      %v866 = vrot.slane %v864, 4
      %v867 = vshll.u32 %v799, 16
      %v869 = vrot.slane %v867, 5
      %v870 = vor.u32 %v866, %v869
      %v871 = vrot.slane %v870, 4
      %v873 = vshll.u32 %v800, 16
      %v875 = vrot.slane %v873, 5
      %v876 = vsel %vm202, %v871, %v875
      %v878 = vshrl.u32 %v801, 16
      %v880 = vrot.slane %v878, 4
      %v881 = vshll.u32 %v801, 16
      %v883 = vrot.slane %v881, 5
      %v884 = vor.u32 %v880, %v883
      %v885 = vrot.slane %v884, 4
      %v887 = vshll.u32 %v802, 16
      %v889 = vrot.slane %v887, 5
      %v890 = vsel %vm202, %v885, %v889
      %v892 = vshrl.u32 %v803, 16
      %v894 = vrot.slane %v892, 4
      %v895 = vshll.u32 %v803, 16
      %v897 = vrot.slane %v895, 5
      %v898 = vor.u32 %v894, %v897
      %v899 = vrot.slane %v898, 4
      %v901 = vshll.u32 %v804, 16
      %v903 = vrot.slane %v901, 5
      %v904 = vsel %vm202, %v899, %v903
      %v906 = vshrl.u32 %v805, 16
      %v908 = vrot.slane %v906, 4
      %v909 = vshll.u32 %v805, 16
      %v911 = vrot.slane %v909, 5
      %v912 = vor.u32 %v908, %v911
      %v913 = vrot.slane %v912, 4
      %v915 = vshll.u32 %v806, 16
      %v917 = vrot.slane %v915, 5
      %v918 = vsel %vm202, %v913, %v917
      %s919 = scalar_lea.vmem %s1, 16
      %v920 = vld [vmem:[%s919] sm:$0xf]
      %v921 = vunpack.c.l.b16 %v820
      %v922 = vunpack.c.l.b16 %v834
      %v923 = vunpack.c.l.b16 %v848
      %v924 = vunpack.c.l.b16 %v862
      %v925 = vunpack.c.l.b16 %v876
      %v926 = vunpack.c.l.b16 %v890
      %v927 = vunpack.c.l.b16 %v904
      %v928 = vunpack.c.l.b16 %v918
      %v929 = vpack.c.b16 %v922, %v921
      %v930 = vpack.c.b16 %v924, %v923
      %v931 = vpack.c.b16 %v926, %v925
      %v932 = vpack.c.b16 %v928, %v927
      %v934 = vsel %vm329, %v929, 0
      %v937 = vsel %vm329, %v930, 0
      %v940 = vsel %vm329, %v931, 0
      %v943 = vsel %vm329, %v932, 0
      %v946 = vsel %vm342, %v920, 0
      %948 = vmatprep.subr.bf16.mxu0 0
      %949 = vmatpush1.bf16.msra.mxu0 %v946
      %950 = vmatprep.subr.bf16.mxu0 0
      %951 = vmatpush1.bf16.msra.mxu0 0
      %952 = vmatprep.subr.bf16.mxu0 0
      %953 = vmatpush1.bf16.msra.mxu0 0
      %954 = vmatprep.subr.bf16.mxu0 0
      %955 = vmatpush1.bf16.msra.mxu0 0
      %956 = vmatprep.subr.bf16.mxu0 0
      %957 = vmatpush1.bf16.msra.mxu0 0
      %958 = vmatprep.subr.bf16.mxu0 0
      %959 = vmatpush1.bf16.msra.mxu0 0
      %960 = vmatprep.subr.bf16.mxu0 0
      %961 = vmatpush1.bf16.msra.mxu0 0
      %962 = vmatprep.subr.bf16.mxu0 0
      %963 = vmatpush1.bf16.msra.mxu0 0
      %964 = vmatprep.subr.bf16.mxu0 0
      %965 = vmatpush1.bf16.msra.mxu0 0
      %966 = vmatprep.subr.bf16.mxu0 0
      %967 = vmatpush1.bf16.msra.mxu0 0
      %968 = vmatprep.subr.bf16.mxu0 0
      %969 = vmatpush1.bf16.msra.mxu0 0
      %970 = vmatprep.subr.bf16.mxu0 0
      %971 = vmatpush1.bf16.msra.mxu0 0
      %972 = vmatprep.subr.bf16.mxu0 0
      %973 = vmatpush1.bf16.msra.mxu0 0
      %974 = vmatprep.subr.bf16.mxu0 0
      %975 = vmatpush1.bf16.msra.mxu0 0
      %976 = vmatprep.subr.bf16.mxu0 0
      %977 = vmatpush1.bf16.msra.mxu0 0
      %978 = vmatprep.subr.bf16.mxu0 0
      %979 = vmatpush1.bf16.msra.mxu0 0
      %980 = vmatprep.mubr.bf16.mxu0 0
      %981 = vmatmul.mubr.bf16.gmra.mrb[0].mxu0 %v934
      %v982 = vpop.f32.mrb[0].mxu0
      %v983 = vadd.f32 0.0, %v982
      %v984 = vpop.f32.mrb[0].mxu0
      %v985 = vpop.f32.mrb[0].mxu0
      %v986 = vadd.f32 0.0, %v985
      %v987 = vpop.f32.mrb[0].mxu0
      %988 = vmatprep.mubr.bf16.mxu0 0
      %989 = vmatmul.mubr.bf16.gmra.mrb[0].mxu0 %v937
      %v990 = vpop.f32.mrb[0].mxu0
      %v991 = vadd.f32 0.0, %v990
      %v992 = vpop.f32.mrb[0].mxu0
      %v993 = vpop.f32.mrb[0].mxu0
      %v994 = vadd.f32 0.0, %v993
      %v995 = vpop.f32.mrb[0].mxu0
      %996 = vmatprep.mubr.bf16.mxu0 0
      %997 = vmatmul.mubr.bf16.gmra.mrb[0].mxu0 %v940
      %v998 = vpop.f32.mrb[0].mxu0
      %v999 = vadd.f32 0.0, %v998
      %v1000 = vpop.f32.mrb[0].mxu0
      %v1001 = vpop.f32.mrb[0].mxu0
      %v1002 = vadd.f32 0.0, %v1001
      %v1003 = vpop.f32.mrb[0].mxu0
      %1004 = vmatprep.mubr.bf16.mxu0 0
      %1005 = vmatmul.mubr.bf16.gmra.mrb[0].mxu0 %v943
      %v1006 = vpop.f32.mrb[0].mxu0
      %v1007 = vadd.f32 0.0, %v1006
      %v1008 = vpop.f32.mrb[0].mxu0
      %v1009 = vpop.f32.mrb[0].mxu0
      %v1010 = vadd.f32 0.0, %v1009
      %v1011 = vpop.f32.mrb[0].mxu0
      %1012 = vdwg.mxu0
      %v1013 = vadd.f32 %v783, %v983
      %v1014 = vadd.f32 %v784, %v986
      %v1015 = vadd.f32 %v785, %v991
      %v1016 = vadd.f32 %v786, %v994
      %v1017 = vadd.f32 %v787, %v999
      %v1018 = vadd.f32 %v788, %v1002
      %v1019 = vadd.f32 %v789, %v1007
      %v1020 = vadd.f32 %v790, %v1010
      %v1021 = vld [vmem:[%s672] sm:$0xe]
      %v1022 = vld [vmem:[%s672 + $0x8] sm:$0xe]
      %v1023 = vld [vmem:[%s672 + $0x10] sm:$0xe]
      %v1024 = vld [vmem:[%s672 + $0x18] sm:$0xe]
      %v1025 = vld [vmem:[%s672 + $0x20] sm:$0xe]
      %v1026 = vld [vmem:[%s672 + $0x28] sm:$0xe]
      %v1027 = vld [vmem:[%s672 + $0x30] sm:$0xe]
      %v1028 = vld [vmem:[%s672 + $0x38] sm:$0xe]
      %v1045 = vrot.slane %v1021, 5
      %v1046 = vrot.slane %v1045, 4
      %v1047 = vrot.slane %v792, 5
      %v1048 = vsel %vm537, %v1046, %v1047
      %v1049 = vrot.slane %v1022, 5
      %v1050 = vrot.slane %v1049, 4
      %v1051 = vrot.slane %v794, 5
      %v1052 = vsel %vm537, %v1050, %v1051
      %v1053 = vrot.slane %v1023, 5
      %v1054 = vrot.slane %v1053, 4
      %v1055 = vrot.slane %v796, 5
      %v1056 = vsel %vm537, %v1054, %v1055
      %v1057 = vrot.slane %v1024, 5
      %v1058 = vrot.slane %v1057, 4
      %v1059 = vrot.slane %v798, 5
      %v1060 = vsel %vm537, %v1058, %v1059
      %v1061 = vrot.slane %v1025, 5
      %v1062 = vrot.slane %v1061, 4
      %v1063 = vrot.slane %v800, 5
      %v1064 = vsel %vm537, %v1062, %v1063
      %v1065 = vrot.slane %v1026, 5
      %v1066 = vrot.slane %v1065, 4
      %v1067 = vrot.slane %v802, 5
      %v1068 = vsel %vm537, %v1066, %v1067
      %v1069 = vrot.slane %v1027, 5
      %v1070 = vrot.slane %v1069, 4
      %v1071 = vrot.slane %v804, 5
      %v1072 = vsel %vm537, %v1070, %v1071
      %v1073 = vrot.slane %v1028, 5
      %v1074 = vrot.slane %v1073, 4
      %v1075 = vrot.slane %v806, 5
      %v1076 = vsel %vm537, %v1074, %v1075
      %s1077 = scalar_lea.vmem %s1, 20
      %v1078 = vld [vmem:[%s1077] sm:$0xf]
      %v1079 = vunpack.c.l.b16 %v1048
      %v1080 = vunpack.c.l.b16 %v1052
      %v1081 = vunpack.c.l.b16 %v1056
      %v1082 = vunpack.c.l.b16 %v1060
      %v1083 = vunpack.c.l.b16 %v1064
      %v1084 = vunpack.c.l.b16 %v1068
      %v1085 = vunpack.c.l.b16 %v1072
      %v1086 = vunpack.c.l.b16 %v1076
      %v1087 = vpack.c.b16 %v1080, %v1079
      %v1088 = vpack.c.b16 %v1082, %v1081
      %v1089 = vpack.c.b16 %v1084, %v1083
      %v1090 = vpack.c.b16 %v1086, %v1085
      %v1092 = vsel %vm329, %v1087, 0
      %v1095 = vsel %vm329, %v1088, 0
      %v1098 = vsel %vm329, %v1089, 0
      %v1101 = vsel %vm329, %v1090, 0
      %v1104 = vsel %vm342, %v1078, 0
      %1106 = vmatprep.subr.bf16.mxu0 0
      %1107 = vmatpush1.bf16.msra.mxu0 %v1104
      %1108 = vmatprep.subr.bf16.mxu0 0
      %1109 = vmatpush1.bf16.msra.mxu0 0
      %1110 = vmatprep.subr.bf16.mxu0 0
      %1111 = vmatpush1.bf16.msra.mxu0 0
      %1112 = vmatprep.subr.bf16.mxu0 0
      %1113 = vmatpush1.bf16.msra.mxu0 0
      %1114 = vmatprep.subr.bf16.mxu0 0
      %1115 = vmatpush1.bf16.msra.mxu0 0
      %1116 = vmatprep.subr.bf16.mxu0 0
      %1117 = vmatpush1.bf16.msra.mxu0 0
      %1118 = vmatprep.subr.bf16.mxu0 0
      %1119 = vmatpush1.bf16.msra.mxu0 0
      %1120 = vmatprep.subr.bf16.mxu0 0
      %1121 = vmatpush1.bf16.msra.mxu0 0
      %1122 = vmatprep.subr.bf16.mxu0 0
      %1123 = vmatpush1.bf16.msra.mxu0 0
      %1124 = vmatprep.subr.bf16.mxu0 0
      %1125 = vmatpush1.bf16.msra.mxu0 0
      %1126 = vmatprep.subr.bf16.mxu0 0
      %1127 = vmatpush1.bf16.msra.mxu0 0
      %1128 = vmatprep.subr.bf16.mxu0 0
      %1129 = vmatpush1.bf16.msra.mxu0 0
      %1130 = vmatprep.subr.bf16.mxu0 0
      %1131 = vmatpush1.bf16.msra.mxu0 0
      %1132 = vmatprep.subr.bf16.mxu0 0
      %1133 = vmatpush1.bf16.msra.mxu0 0
      %1134 = vmatprep.subr.bf16.mxu0 0
      %1135 = vmatpush1.bf16.msra.mxu0 0
      %1136 = vmatprep.subr.bf16.mxu0 0
      %1137 = vmatpush1.bf16.msra.mxu0 0
      %1138 = vmatprep.mubr.bf16.mxu0 0
      %1139 = vmatmul.mubr.bf16.gmra.mrb[0].mxu0 %v1092
      %v1140 = vpop.f32.mrb[0].mxu0
      %v1141 = vadd.f32 0.0, %v1140
      %v1142 = vpop.f32.mrb[0].mxu0
      %v1143 = vpop.f32.mrb[0].mxu0
      %v1144 = vadd.f32 0.0, %v1143
      %v1145 = vpop.f32.mrb[0].mxu0
      %1146 = vmatprep.mubr.bf16.mxu0 0
      %1147 = vmatmul.mubr.bf16.gmra.mrb[0].mxu0 %v1095
      %v1148 = vpop.f32.mrb[0].mxu0
      %v1149 = vadd.f32 0.0, %v1148
      %v1150 = vpop.f32.mrb[0].mxu0
      %v1151 = vpop.f32.mrb[0].mxu0
      %v1152 = vadd.f32 0.0, %v1151
      %v1153 = vpop.f32.mrb[0].mxu0
      %1154 = vmatprep.mubr.bf16.mxu0 0
      %1155 = vmatmul.mubr.bf16.gmra.mrb[0].mxu0 %v1098
      %v1156 = vpop.f32.mrb[0].mxu0
      %v1157 = vadd.f32 0.0, %v1156
      %v1158 = vpop.f32.mrb[0].mxu0
      %v1159 = vpop.f32.mrb[0].mxu0
      %v1160 = vadd.f32 0.0, %v1159
      %v1161 = vpop.f32.mrb[0].mxu0
      %1162 = vmatprep.mubr.bf16.mxu0 0
      %1163 = vmatmul.mubr.bf16.gmra.mrb[0].mxu0 %v1101
      %v1164 = vpop.f32.mrb[0].mxu0
      %v1165 = vadd.f32 0.0, %v1164
      %v1166 = vpop.f32.mrb[0].mxu0
      %v1167 = vpop.f32.mrb[0].mxu0
      %v1168 = vadd.f32 0.0, %v1167
      %v1169 = vpop.f32.mrb[0].mxu0
      %1170 = vdwg.mxu0
      %v1171 = vadd.f32 %v1013, %v1141
      %v1172 = vadd.f32 %v1014, %v1144
      %v1173 = vadd.f32 %v1015, %v1149
      %v1174 = vadd.f32 %v1016, %v1152
      %v1175 = vadd.f32 %v1017, %v1157
      %v1176 = vadd.f32 %v1018, %v1160
      %v1177 = vadd.f32 %v1019, %v1165
      %v1178 = vadd.f32 %v1020, %v1168
      %s1179 = scalar_lea.vmem %s172, 16
      %v1180 = vld [vmem:[%s1179] sm:$0xf]
      %v1181 = vld [vmem:[%s1179 + $0x8] sm:$0xf]
      %v1182 = vld [vmem:[%s1179 + $0x10] sm:$0xf]
      %v1183 = vld [vmem:[%s1179 + $0x18] sm:$0xf]
      %v1184 = vld [vmem:[%s1179 + $0x20] sm:$0xf]
      %v1185 = vld [vmem:[%s1179 + $0x28] sm:$0xf]
      %v1186 = vld [vmem:[%s1179 + $0x30] sm:$0xf]
      %v1187 = vld [vmem:[%s1179 + $0x38] sm:$0xf]
      %s1188 = scalar_lea.vmem %s1, 24
      %v1189 = vld [vmem:[%s1188] sm:$0xf]
      %v1198 = vunpack.c.l.b16 %v1180
      %v1199 = vunpack.c.l.b16 %v1181
      %v1200 = vunpack.c.l.b16 %v1182
      %v1201 = vunpack.c.l.b16 %v1183
      %v1202 = vunpack.c.l.b16 %v1184
      %v1203 = vunpack.c.l.b16 %v1185
      %v1204 = vunpack.c.l.b16 %v1186
      %v1205 = vunpack.c.l.b16 %v1187
      %v1206 = vpack.c.b16 %v1199, %v1198
      %v1207 = vpack.c.b16 %v1201, %v1200
      %v1208 = vpack.c.b16 %v1203, %v1202
      %v1209 = vpack.c.b16 %v1205, %v1204
      %v1211 = vsel %vm329, %v1206, 0
      %v1214 = vsel %vm329, %v1207, 0
      %v1217 = vsel %vm329, %v1208, 0
      %v1220 = vsel %vm329, %v1209, 0
      %v1223 = vsel %vm342, %v1189, 0
      %1225 = vmatprep.subr.bf16.mxu0 0
      %1226 = vmatpush1.bf16.msra.mxu0 %v1223
      %1227 = vmatprep.subr.bf16.mxu0 0
      %1228 = vmatpush1.bf16.msra.mxu0 0
      %1229 = vmatprep.subr.bf16.mxu0 0
      %1230 = vmatpush1.bf16.msra.mxu0 0
      %1231 = vmatprep.subr.bf16.mxu0 0
      %1232 = vmatpush1.bf16.msra.mxu0 0
      %1233 = vmatprep.subr.bf16.mxu0 0
      %1234 = vmatpush1.bf16.msra.mxu0 0
      %1235 = vmatprep.subr.bf16.mxu0 0
      %1236 = vmatpush1.bf16.msra.mxu0 0
      %1237 = vmatprep.subr.bf16.mxu0 0
      %1238 = vmatpush1.bf16.msra.mxu0 0
      %1239 = vmatprep.subr.bf16.mxu0 0
      %1240 = vmatpush1.bf16.msra.mxu0 0
      %1241 = vmatprep.subr.bf16.mxu0 0
      %1242 = vmatpush1.bf16.msra.mxu0 0
      %1243 = vmatprep.subr.bf16.mxu0 0
      %1244 = vmatpush1.bf16.msra.mxu0 0
      %1245 = vmatprep.subr.bf16.mxu0 0
      %1246 = vmatpush1.bf16.msra.mxu0 0
      %1247 = vmatprep.subr.bf16.mxu0 0
      %1248 = vmatpush1.bf16.msra.mxu0 0
      %1249 = vmatprep.subr.bf16.mxu0 0
      %1250 = vmatpush1.bf16.msra.mxu0 0
      %1251 = vmatprep.subr.bf16.mxu0 0
      %1252 = vmatpush1.bf16.msra.mxu0 0
      %1253 = vmatprep.subr.bf16.mxu0 0
      %1254 = vmatpush1.bf16.msra.mxu0 0
      %1255 = vmatprep.subr.bf16.mxu0 0
      %1256 = vmatpush1.bf16.msra.mxu0 0
      %1257 = vmatprep.mubr.bf16.mxu0 0
      %1258 = vmatmul.mubr.bf16.gmra.mrb[0].mxu0 %v1211
      %v1259 = vpop.f32.mrb[0].mxu0
      %v1260 = vadd.f32 0.0, %v1259
      %v1261 = vpop.f32.mrb[0].mxu0
      %v1262 = vpop.f32.mrb[0].mxu0
      %v1263 = vadd.f32 0.0, %v1262
      %v1264 = vpop.f32.mrb[0].mxu0
      %1265 = vmatprep.mubr.bf16.mxu0 0
      %1266 = vmatmul.mubr.bf16.gmra.mrb[0].mxu0 %v1214
      %v1267 = vpop.f32.mrb[0].mxu0
      %v1268 = vadd.f32 0.0, %v1267
      %v1269 = vpop.f32.mrb[0].mxu0
      %v1270 = vpop.f32.mrb[0].mxu0
      %v1271 = vadd.f32 0.0, %v1270
      %v1272 = vpop.f32.mrb[0].mxu0
      %1273 = vmatprep.mubr.bf16.mxu0 0
      %1274 = vmatmul.mubr.bf16.gmra.mrb[0].mxu0 %v1217
      %v1275 = vpop.f32.mrb[0].mxu0
      %v1276 = vadd.f32 0.0, %v1275
      %v1277 = vpop.f32.mrb[0].mxu0
      %v1278 = vpop.f32.mrb[0].mxu0
      %v1279 = vadd.f32 0.0, %v1278
      %v1280 = vpop.f32.mrb[0].mxu0
      %1281 = vmatprep.mubr.bf16.mxu0 0
      %1282 = vmatmul.mubr.bf16.gmra.mrb[0].mxu0 %v1220
      %v1283 = vpop.f32.mrb[0].mxu0
      %v1284 = vadd.f32 0.0, %v1283
      %v1285 = vpop.f32.mrb[0].mxu0
      %v1286 = vpop.f32.mrb[0].mxu0
      %v1287 = vadd.f32 0.0, %v1286
      %v1288 = vpop.f32.mrb[0].mxu0
      %1289 = vdwg.mxu0
      %v1290 = vadd.f32 %v1171, %v1260
      %v1291 = vadd.f32 %v1172, %v1263
      %v1292 = vadd.f32 %v1173, %v1268
      %v1293 = vadd.f32 %v1174, %v1271
      %v1294 = vadd.f32 %v1175, %v1276
      %v1295 = vadd.f32 %v1176, %v1279
      %v1296 = vadd.f32 %v1177, %v1284
      %v1297 = vadd.f32 %v1178, %v1287
      %v1298 = vld [vmem:[%s1179] sm:$0xf]
      %v1299 = vld [vmem:[%s1179 + $0x4] sm:$0x1]
      %v1300 = vld [vmem:[%s1179 + $0x8] sm:$0xf]
      %v1301 = vld [vmem:[%s1179 + $0xc] sm:$0x1]
      %v1302 = vld [vmem:[%s1179 + $0x10] sm:$0xf]
      %v1303 = vld [vmem:[%s1179 + $0x14] sm:$0x1]
      %v1304 = vld [vmem:[%s1179 + $0x18] sm:$0xf]
      %v1305 = vld [vmem:[%s1179 + $0x1c] sm:$0x1]
      %v1306 = vld [vmem:[%s1179 + $0x20] sm:$0xf]
      %v1307 = vld [vmem:[%s1179 + $0x24] sm:$0x1]
      %v1308 = vld [vmem:[%s1179 + $0x28] sm:$0xf]
      %v1309 = vld [vmem:[%s1179 + $0x2c] sm:$0x1]
      %v1310 = vld [vmem:[%s1179 + $0x30] sm:$0xf]
      %v1311 = vld [vmem:[%s1179 + $0x34] sm:$0x1]
      %v1312 = vld [vmem:[%s1179 + $0x38] sm:$0xf]
      %v1313 = vld [vmem:[%s1179 + $0x3c] sm:$0x1]
      %v1315 = vshrl.u32 %v1298, 16
      %v1317 = vrot.slane %v1315, 4
      %v1318 = vshll.u32 %v1298, 16
      %v1320 = vrot.slane %v1318, 5
      %v1321 = vor.u32 %v1317, %v1320
      %v1322 = vrot.slane %v1321, 4
      %v1324 = vshll.u32 %v1299, 16
      %v1326 = vrot.slane %v1324, 5
      %v1327 = vsel %vm202, %v1322, %v1326
      %v1329 = vshrl.u32 %v1300, 16
      %v1331 = vrot.slane %v1329, 4
      %v1332 = vshll.u32 %v1300, 16
      %v1334 = vrot.slane %v1332, 5
      %v1335 = vor.u32 %v1331, %v1334
      %v1336 = vrot.slane %v1335, 4
      %v1338 = vshll.u32 %v1301, 16
      %v1340 = vrot.slane %v1338, 5
      %v1341 = vsel %vm202, %v1336, %v1340
      %v1343 = vshrl.u32 %v1302, 16
      %v1345 = vrot.slane %v1343, 4
      %v1346 = vshll.u32 %v1302, 16
      %v1348 = vrot.slane %v1346, 5
      %v1349 = vor.u32 %v1345, %v1348
      %v1350 = vrot.slane %v1349, 4
      %v1352 = vshll.u32 %v1303, 16
      %v1354 = vrot.slane %v1352, 5
      %v1355 = vsel %vm202, %v1350, %v1354
      %v1357 = vshrl.u32 %v1304, 16
      %v1359 = vrot.slane %v1357, 4
      %v1360 = vshll.u32 %v1304, 16
      %v1362 = vrot.slane %v1360, 5
      %v1363 = vor.u32 %v1359, %v1362
      %v1364 = vrot.slane %v1363, 4
      %v1366 = vshll.u32 %v1305, 16
      %v1368 = vrot.slane %v1366, 5
      %v1369 = vsel %vm202, %v1364, %v1368
      %v1371 = vshrl.u32 %v1306, 16
      %v1373 = vrot.slane %v1371, 4
      %v1374 = vshll.u32 %v1306, 16
      %v1376 = vrot.slane %v1374, 5
      %v1377 = vor.u32 %v1373, %v1376
      %v1378 = vrot.slane %v1377, 4
      %v1380 = vshll.u32 %v1307, 16
      %v1382 = vrot.slane %v1380, 5
      %v1383 = vsel %vm202, %v1378, %v1382
      %v1385 = vshrl.u32 %v1308, 16
      %v1387 = vrot.slane %v1385, 4
      %v1388 = vshll.u32 %v1308, 16
      %v1390 = vrot.slane %v1388, 5
      %v1391 = vor.u32 %v1387, %v1390
      %v1392 = vrot.slane %v1391, 4
      %v1394 = vshll.u32 %v1309, 16
      %v1396 = vrot.slane %v1394, 5
      %v1397 = vsel %vm202, %v1392, %v1396
      %v1399 = vshrl.u32 %v1310, 16
      %v1401 = vrot.slane %v1399, 4
      %v1402 = vshll.u32 %v1310, 16
      %v1404 = vrot.slane %v1402, 5
      %v1405 = vor.u32 %v1401, %v1404
      %v1406 = vrot.slane %v1405, 4
      %v1408 = vshll.u32 %v1311, 16
      %v1410 = vrot.slane %v1408, 5
      %v1411 = vsel %vm202, %v1406, %v1410
      %v1413 = vshrl.u32 %v1312, 16
      %v1415 = vrot.slane %v1413, 4
      %v1416 = vshll.u32 %v1312, 16
      %v1418 = vrot.slane %v1416, 5
      %v1419 = vor.u32 %v1415, %v1418
      %v1420 = vrot.slane %v1419, 4
      %v1422 = vshll.u32 %v1313, 16
      %v1424 = vrot.slane %v1422, 5
      %v1425 = vsel %vm202, %v1420, %v1424
      %s1426 = scalar_lea.vmem %s1, 28
      %v1427 = vld [vmem:[%s1426] sm:$0xf]
      %v1428 = vunpack.c.l.b16 %v1327
      %v1429 = vunpack.c.l.b16 %v1341
      %v1430 = vunpack.c.l.b16 %v1355
      %v1431 = vunpack.c.l.b16 %v1369
      %v1432 = vunpack.c.l.b16 %v1383
      %v1433 = vunpack.c.l.b16 %v1397
      %v1434 = vunpack.c.l.b16 %v1411
      %v1435 = vunpack.c.l.b16 %v1425
      %v1436 = vpack.c.b16 %v1429, %v1428
      %v1437 = vpack.c.b16 %v1431, %v1430
      %v1438 = vpack.c.b16 %v1433, %v1432
      %v1439 = vpack.c.b16 %v1435, %v1434
      %v1441 = vsel %vm329, %v1436, 0
      %v1444 = vsel %vm329, %v1437, 0
      %v1447 = vsel %vm329, %v1438, 0
      %v1450 = vsel %vm329, %v1439, 0
      %v1453 = vsel %vm342, %v1427, 0
      %1455 = vmatprep.subr.bf16.mxu0 0
      %1456 = vmatpush1.bf16.msra.mxu0 %v1453
      %1457 = vmatprep.subr.bf16.mxu0 0
      %1458 = vmatpush1.bf16.msra.mxu0 0
      %1459 = vmatprep.subr.bf16.mxu0 0
      %1460 = vmatpush1.bf16.msra.mxu0 0
      %1461 = vmatprep.subr.bf16.mxu0 0
      %1462 = vmatpush1.bf16.msra.mxu0 0
      %1463 = vmatprep.subr.bf16.mxu0 0
      %1464 = vmatpush1.bf16.msra.mxu0 0
      %1465 = vmatprep.subr.bf16.mxu0 0
      %1466 = vmatpush1.bf16.msra.mxu0 0
      %1467 = vmatprep.subr.bf16.mxu0 0
      %1468 = vmatpush1.bf16.msra.mxu0 0
      %1469 = vmatprep.subr.bf16.mxu0 0
      %1470 = vmatpush1.bf16.msra.mxu0 0
      %1471 = vmatprep.subr.bf16.mxu0 0
      %1472 = vmatpush1.bf16.msra.mxu0 0
      %1473 = vmatprep.subr.bf16.mxu0 0
      %1474 = vmatpush1.bf16.msra.mxu0 0
      %1475 = vmatprep.subr.bf16.mxu0 0
      %1476 = vmatpush1.bf16.msra.mxu0 0
      %1477 = vmatprep.subr.bf16.mxu0 0
      %1478 = vmatpush1.bf16.msra.mxu0 0
      %1479 = vmatprep.subr.bf16.mxu0 0
      %1480 = vmatpush1.bf16.msra.mxu0 0
      %1481 = vmatprep.subr.bf16.mxu0 0
      %1482 = vmatpush1.bf16.msra.mxu0 0
      %1483 = vmatprep.subr.bf16.mxu0 0
      %1484 = vmatpush1.bf16.msra.mxu0 0
      %1485 = vmatprep.subr.bf16.mxu0 0
      %1486 = vmatpush1.bf16.msra.mxu0 0
      %1487 = vmatprep.mubr.bf16.mxu0 0
      %1488 = vmatmul.mubr.bf16.gmra.mrb[0].mxu0 %v1441
      %v1489 = vpop.f32.mrb[0].mxu0
      %v1490 = vadd.f32 0.0, %v1489
      %v1491 = vpop.f32.mrb[0].mxu0
      %v1492 = vpop.f32.mrb[0].mxu0
      %v1493 = vadd.f32 0.0, %v1492
      %v1494 = vpop.f32.mrb[0].mxu0
      %1495 = vmatprep.mubr.bf16.mxu0 0
      %1496 = vmatmul.mubr.bf16.gmra.mrb[0].mxu0 %v1444
      %v1497 = vpop.f32.mrb[0].mxu0
      %v1498 = vadd.f32 0.0, %v1497
      %v1499 = vpop.f32.mrb[0].mxu0
      %v1500 = vpop.f32.mrb[0].mxu0
      %v1501 = vadd.f32 0.0, %v1500
      %v1502 = vpop.f32.mrb[0].mxu0
      %1503 = vmatprep.mubr.bf16.mxu0 0
      %1504 = vmatmul.mubr.bf16.gmra.mrb[0].mxu0 %v1447
      %v1505 = vpop.f32.mrb[0].mxu0
      %v1506 = vadd.f32 0.0, %v1505
      %v1507 = vpop.f32.mrb[0].mxu0
      %v1508 = vpop.f32.mrb[0].mxu0
      %v1509 = vadd.f32 0.0, %v1508
      %v1510 = vpop.f32.mrb[0].mxu0
      %1511 = vmatprep.mubr.bf16.mxu0 0
      %1512 = vmatmul.mubr.bf16.gmra.mrb[0].mxu0 %v1450
      %v1513 = vpop.f32.mrb[0].mxu0
      %v1514 = vadd.f32 0.0, %v1513
      %v1515 = vpop.f32.mrb[0].mxu0
      %v1516 = vpop.f32.mrb[0].mxu0
      %v1517 = vadd.f32 0.0, %v1516
      %v1518 = vpop.f32.mrb[0].mxu0
      %1519 = vdwg.mxu0
      %v1520 = vadd.f32 %v1290, %v1490
      %v1521 = vadd.f32 %v1291, %v1493
      %v1522 = vadd.f32 %v1292, %v1498
      %v1523 = vadd.f32 %v1293, %v1501
      %v1524 = vadd.f32 %v1294, %v1506
      %v1525 = vadd.f32 %v1295, %v1509
      %v1526 = vadd.f32 %v1296, %v1514
      %v1527 = vadd.f32 %v1297, %v1517
      %v1528 = vld [vmem:[%s1179] sm:$0xe]
      %v1529 = vld [vmem:[%s1179 + $0x8] sm:$0xe]
      %v1530 = vld [vmem:[%s1179 + $0x10] sm:$0xe]
      %v1531 = vld [vmem:[%s1179 + $0x18] sm:$0xe]
      %v1532 = vld [vmem:[%s1179 + $0x20] sm:$0xe]
      %v1533 = vld [vmem:[%s1179 + $0x28] sm:$0xe]
      %v1534 = vld [vmem:[%s1179 + $0x30] sm:$0xe]
      %v1535 = vld [vmem:[%s1179 + $0x38] sm:$0xe]
      %v1552 = vrot.slane %v1528, 5
      %v1553 = vrot.slane %v1552, 4
      %v1554 = vrot.slane %v1299, 5
      %v1555 = vsel %vm537, %v1553, %v1554
      %v1556 = vrot.slane %v1529, 5
      %v1557 = vrot.slane %v1556, 4
      %v1558 = vrot.slane %v1301, 5
      %v1559 = vsel %vm537, %v1557, %v1558
      %v1560 = vrot.slane %v1530, 5
      %v1561 = vrot.slane %v1560, 4
      %v1562 = vrot.slane %v1303, 5
      %v1563 = vsel %vm537, %v1561, %v1562
      %v1564 = vrot.slane %v1531, 5
      %v1565 = vrot.slane %v1564, 4
      %v1566 = vrot.slane %v1305, 5
      %v1567 = vsel %vm537, %v1565, %v1566
      %v1568 = vrot.slane %v1532, 5
      %v1569 = vrot.slane %v1568, 4
      %v1570 = vrot.slane %v1307, 5
      %v1571 = vsel %vm537, %v1569, %v1570
      %v1572 = vrot.slane %v1533, 5
      %v1573 = vrot.slane %v1572, 4
      %v1574 = vrot.slane %v1309, 5
      %v1575 = vsel %vm537, %v1573, %v1574
      %v1576 = vrot.slane %v1534, 5
      %v1577 = vrot.slane %v1576, 4
      %v1578 = vrot.slane %v1311, 5
      %v1579 = vsel %vm537, %v1577, %v1578
      %v1580 = vrot.slane %v1535, 5
      %v1581 = vrot.slane %v1580, 4
      %v1582 = vrot.slane %v1313, 5
      %v1583 = vsel %vm537, %v1581, %v1582
      %s1584 = scalar_lea.vmem %s1, 32
      %v1585 = vld [vmem:[%s1584] sm:$0xf]
      %v1586 = vunpack.c.l.b16 %v1555
      %v1587 = vunpack.c.l.b16 %v1559
      %v1588 = vunpack.c.l.b16 %v1563
      %v1589 = vunpack.c.l.b16 %v1567
      %v1590 = vunpack.c.l.b16 %v1571
      %v1591 = vunpack.c.l.b16 %v1575
      %v1592 = vunpack.c.l.b16 %v1579
      %v1593 = vunpack.c.l.b16 %v1583
      %v1594 = vpack.c.b16 %v1587, %v1586
      %v1595 = vpack.c.b16 %v1589, %v1588
      %v1596 = vpack.c.b16 %v1591, %v1590
      %v1597 = vpack.c.b16 %v1593, %v1592
      %v1599 = vsel %vm329, %v1594, 0
      %v1602 = vsel %vm329, %v1595, 0
      %v1605 = vsel %vm329, %v1596, 0
      %v1608 = vsel %vm329, %v1597, 0
      %v1611 = vsel %vm342, %v1585, 0
      %1613 = vmatprep.subr.bf16.mxu0 0
      %1614 = vmatpush1.bf16.msra.mxu0 %v1611
      %1615 = vmatprep.subr.bf16.mxu0 0
      %1616 = vmatpush1.bf16.msra.mxu0 0
      %1617 = vmatprep.subr.bf16.mxu0 0
      %1618 = vmatpush1.bf16.msra.mxu0 0
      %1619 = vmatprep.subr.bf16.mxu0 0
      %1620 = vmatpush1.bf16.msra.mxu0 0
      %1621 = vmatprep.subr.bf16.mxu0 0
      %1622 = vmatpush1.bf16.msra.mxu0 0
      %1623 = vmatprep.subr.bf16.mxu0 0
      %1624 = vmatpush1.bf16.msra.mxu0 0
      %1625 = vmatprep.subr.bf16.mxu0 0
      %1626 = vmatpush1.bf16.msra.mxu0 0
      %1627 = vmatprep.subr.bf16.mxu0 0
      %1628 = vmatpush1.bf16.msra.mxu0 0
      %1629 = vmatprep.subr.bf16.mxu0 0
      %1630 = vmatpush1.bf16.msra.mxu0 0
      %1631 = vmatprep.subr.bf16.mxu0 0
      %1632 = vmatpush1.bf16.msra.mxu0 0
      %1633 = vmatprep.subr.bf16.mxu0 0
      %1634 = vmatpush1.bf16.msra.mxu0 0
      %1635 = vmatprep.subr.bf16.mxu0 0
      %1636 = vmatpush1.bf16.msra.mxu0 0
      %1637 = vmatprep.subr.bf16.mxu0 0
      %1638 = vmatpush1.bf16.msra.mxu0 0
      %1639 = vmatprep.subr.bf16.mxu0 0
      %1640 = vmatpush1.bf16.msra.mxu0 0
      %1641 = vmatprep.subr.bf16.mxu0 0
      %1642 = vmatpush1.bf16.msra.mxu0 0
      %1643 = vmatprep.subr.bf16.mxu0 0
      %1644 = vmatpush1.bf16.msra.mxu0 0
      %1645 = vmatprep.mubr.bf16.mxu0 0
      %1646 = vmatmul.mubr.bf16.gmra.mrb[0].mxu0 %v1599
      %v1647 = vpop.f32.mrb[0].mxu0
      %v1648 = vadd.f32 0.0, %v1647
      %v1649 = vpop.f32.mrb[0].mxu0
      %v1650 = vpop.f32.mrb[0].mxu0
      %v1651 = vadd.f32 0.0, %v1650
      %v1652 = vpop.f32.mrb[0].mxu0
      %1653 = vmatprep.mubr.bf16.mxu0 0
      %1654 = vmatmul.mubr.bf16.gmra.mrb[0].mxu0 %v1602
      %v1655 = vpop.f32.mrb[0].mxu0
      %v1656 = vadd.f32 0.0, %v1655
      %v1657 = vpop.f32.mrb[0].mxu0
      %v1658 = vpop.f32.mrb[0].mxu0
      %v1659 = vadd.f32 0.0, %v1658
      %v1660 = vpop.f32.mrb[0].mxu0
      %1661 = vmatprep.mubr.bf16.mxu0 0
      %1662 = vmatmul.mubr.bf16.gmra.mrb[0].mxu0 %v1605
      %v1663 = vpop.f32.mrb[0].mxu0
      %v1664 = vadd.f32 0.0, %v1663
      %v1665 = vpop.f32.mrb[0].mxu0
      %v1666 = vpop.f32.mrb[0].mxu0
      %v1667 = vadd.f32 0.0, %v1666
      %v1668 = vpop.f32.mrb[0].mxu0
      %1669 = vmatprep.mubr.bf16.mxu0 0
      %1670 = vmatmul.mubr.bf16.gmra.mrb[0].mxu0 %v1608
      %v1671 = vpop.f32.mrb[0].mxu0
      %v1672 = vadd.f32 0.0, %v1671
      %v1673 = vpop.f32.mrb[0].mxu0
      %v1674 = vpop.f32.mrb[0].mxu0
      %v1675 = vadd.f32 0.0, %v1674
      %v1676 = vpop.f32.mrb[0].mxu0
      %1677 = vdwg.mxu0
      %v1678 = vadd.f32 %v1520, %v1648
      %v1679 = vadd.f32 %v1521, %v1651
      %v1680 = vadd.f32 %v1522, %v1656
      %v1681 = vadd.f32 %v1523, %v1659
      %v1682 = vadd.f32 %v1524, %v1664
      %v1683 = vadd.f32 %v1525, %v1667
      %v1684 = vadd.f32 %v1526, %v1672
      %v1685 = vadd.f32 %v1527, %v1675
      %vm1686 = vcmask 130048
      %1687 = vst.msk [vmem:[%s177] sm:$0xff] %vm1686, %v1678
      %1688 = vst.msk [vmem:[%s177 + $0x8] sm:$0xff] %vm1686, %v1679
      %1689 = vst.msk [vmem:[%s177 + $0x10] sm:$0xff] %vm1686, %v1680
      %1690 = vst.msk [vmem:[%s177 + $0x18] sm:$0xff] %vm1686, %v1681
      %1691 = vst.msk [vmem:[%s177 + $0x20] sm:$0xff] %vm1686, %v1682
      %1692 = vst.msk [vmem:[%s177 + $0x28] sm:$0xff] %vm1686, %v1683
      %1693 = vst.msk [vmem:[%s177 + $0x30] sm:$0xff] %vm1686, %v1684
      %1694 = vst.msk [vmem:[%s177 + $0x38] sm:$0xff] %vm1686, %v1685
      %v1695 = vsel %vm1686, %v1678, 0.0
      %v1696 = vsel %vm1686, %v1679, 0.0
      %v1697 = vadd.f32 %v1695, %v1696
      %v1698 = vsel %vm1686, %v1680, 0.0
      %v1699 = vadd.f32 %v1697, %v1698
      %v1700 = vsel %vm1686, %v1681, 0.0
      %v1701 = vadd.f32 %v1699, %v1700
      %v1702 = vsel %vm1686, %v1682, 0.0
      %v1703 = vadd.f32 %v1701, %v1702
      %v1704 = vsel %vm1686, %v1683, 0.0
      %v1705 = vadd.f32 %v1703, %v1704
      %v1706 = vsel %vm1686, %v1684, 0.0
      %v1707 = vadd.f32 %v1705, %v1706
      %v1708 = vsel %vm1686, %v1685, 0.0
      %v1709 = vadd.f32 %v1707, %v1708
      %v1710 = vrot.slane %v1709, 4
      %v1711 = vadd.f32 %v1709, %v1710
      %v1712 = vrot.slane %v1711, 2
      %v1713 = vadd.f32 %v1711, %v1712
      %v1714 = vrot.slane %v1713, 1
      %v1715 = vadd.f32 %v1713, %v1714
      %vm1716 = vcmask 122880
      %1717 = vst.msk [vmem:[%s181] sm:$0x1] %vm1716, %v1715
      %v1718 = vmul.f32 %v1678, %v1678
      %v1719 = vmul.f32 %v1679, %v1679
      %v1720 = vmul.f32 %v1680, %v1680
      %v1721 = vmul.f32 %v1681, %v1681
      %v1722 = vmul.f32 %v1682, %v1682
      %v1723 = vmul.f32 %v1683, %v1683
      %v1724 = vmul.f32 %v1684, %v1684
      %v1725 = vmul.f32 %v1685, %v1685
      %v1726 = vsel %vm1686, %v1718, 0.0
      %v1727 = vsel %vm1686, %v1719, 0.0
      %v1728 = vadd.f32 %v1726, %v1727
      %v1729 = vsel %vm1686, %v1720, 0.0
      %v1730 = vadd.f32 %v1728, %v1729
      %v1731 = vsel %vm1686, %v1721, 0.0
      %v1732 = vadd.f32 %v1730, %v1731
      %v1733 = vsel %vm1686, %v1722, 0.0
      %v1734 = vadd.f32 %v1732, %v1733
      %v1735 = vsel %vm1686, %v1723, 0.0
      %v1736 = vadd.f32 %v1734, %v1735
      %v1737 = vsel %vm1686, %v1724, 0.0
      %v1738 = vadd.f32 %v1736, %v1737
      %v1739 = vsel %vm1686, %v1725, 0.0
      %v1740 = vadd.f32 %v1738, %v1739
      %v1741 = vrot.slane %v1740, 4
      %v1742 = vadd.f32 %v1740, %v1741
      %v1743 = vrot.slane %v1742, 2
      %v1744 = vadd.f32 %v1742, %v1743
      %v1745 = vrot.slane %v1744, 1
      %v1746 = vadd.f32 %v1744, %v1745
      %1747 = vst.msk [vmem:[%s181 + $0x1] sm:$0x1] %vm1716, %v1746
      %p1748 = scmp.lt.s32.totalorder %s15, 1
      %s1749 = scalar_select %p1748, %s15, 1
      %s1750 = smul.addr %s1749, 8
      %s1751 = smul.addr %s1750, 8
      %s1752 = scalar_lea.vmem %s2, %s1751
      %p1753 = scmp.lt.s32.totalorder %s15, 1
      %s1754 = scalar_select %p1753, %s15, 1
      %s1755 = smul.addr %s1754, 2
      %s1756 = scalar_lea.vmem %s3, %s1755
      // Predicated region
      $region29: #{fwd.15} parent=27 // pred_check
        %p1757 = pneg %p80
      $region30: #{fwd.15} parent=27 // pred_check_branch
        %1759 = sbr.rel (%p1757) target = $region32
      $region31: #{fwd.15} parent=27 // pred_region
        _
      $region32: #{fwd.15} parent=27 // pred_fallthru
        _
      // Predicated region
      $region33: #{fwd.15} parent=27 // pred_check
        %p1760 = pneg %p106
      $region34: #{fwd.15} parent=27 // pred_check_branch
        %1762 = sbr.rel (%p1760) target = $region36
      $region35: #{fwd.15} parent=27 // pred_region
        _
      $region36: #{fwd.15} parent=27 // pred_fallthru
        _
    $region28: #{fwd.15} parent=5 // pred_fallthru
      _
    %p1763 = scmp.le.s32.totalorder 2, %s10
    // Predicated region
    $region37: #{fwd.15} parent=5 // pred_check
      %p1764 = pneg %p1763
    $region38: #{fwd.15} parent=5 // pred_check_branch
      %1766 = sbr.rel (%p1764) target = $region40
    $region39: #{fwd.15} parent=5 // pred_region
      %s1767 = ssub.s32 %s10, 2
      // Predicated region
      $region41: #{fwd.15} parent=39 // pred_check
        %p1768 = pneg %p86
      $region42: #{fwd.15} parent=39 // pred_check_branch
        %1770 = sbr.rel (%p1768) target = $region44
      $region43: #{fwd.15} parent=39 // pred_region
        %p1771 = scmp.lt.s32.totalorder %s16, 1
        %s1772 = scalar_select %p1771, %s16, 1
        %s1773 = smul.addr %s1772, 8
        %s1774 = smul.addr %s1773, 8
        %s1775 = scalar_lea.vmem %s2, %s1774
      $region44: #{fwd.15} parent=39 // pred_fallthru
        _
      // Predicated region
      $region45: #{fwd.15} parent=39 // pred_check
        %p1776 = pneg %p112
      $region46: #{fwd.15} parent=39 // pred_check_branch
        %1778 = sbr.rel (%p1776) target = $region48
      $region47: #{fwd.15} parent=39 // pred_region
        %p1779 = scmp.lt.s32.totalorder %s16, 1
        %s1780 = scalar_select %p1779, %s16, 1
        %s1781 = smul.addr %s1780, 2
        %s1782 = scalar_lea.vmem %s3, %s1781
      $region48: #{fwd.15} parent=39 // pred_fallthru
        _
    $region40: #{fwd.15} parent=5 // pred_fallthru
      _
  $region6: #{fwd.15} parent=0 // loop_footer
    %s14 = sadd.s32 1, %s10
  $region7: #{fwd.15} parent=0 // loop_footer_branch
    %9 = sbr.rel target = $region3
  $region8: #{fwd.15} parent=0 // loop_exit
    _

// kernel: fwd.17
$region0: #{fwd.17}
  #allocation0 [shape = 'u32[]', space=smem, size = 0x4, offset = 0x4, fixed_abs, tag = 'smem constant byte address 0x4 - core index']
  #allocation1 [shape = 'u32[144,128]{1,0:T(1,128)}', space=vmem, size = 0x12000, scoped, tag = 'internal scratch']
  %s0 = inlined_call_operand.vmem [shape: bf16[1,2,8,8,32], index: 0, kind: input, shape index: {}]
  %s1 = inlined_call_operand.vmem [shape: bf16[1,32,21], index: 1, kind: input, shape index: {}]
  %s2 = inlined_call_operand.vmem [shape: f32[1,21], index: 2, kind: input, shape index: {}]
  %s3 = inlined_call_operand.vmem [shape: f32[2,64,21], index: 3, kind: output, shape index: {}]
  %s4 = sld [smem:[#allocation0]]
  $region45: #{fwd.17} parent=0
    _
  %s6 = ssub.s32 1, %s4
  %s7 = scalar_select 0, %s6, %s4
  loop: start=0, step=1, limit=4
  $region2: #{fwd.17} parent=0 // loop_pre_header
    _
  $region3: #{fwd.17} parent=0 // loop_header
    %s9 = sphi 0, %s13
    %p10 = scmp.ge.s32.totalorder %s9, 4
    %s19 = sphi 0, %s21
    %s22 = sphi 0, %s19
    %s23 = sphi 0, %s22
    %s39 = sphi 0, %s23
    %s43 = sphi 0, %s43
    %s45 = sphi 0, %s43
    %s46 = sphi 0, %s45
    %s60 = sphi 0, %s46
    %s64 = sphi 0, %s64
    %s66 = sphi 0, %s64
    %s67 = sphi 0, %s66
    %s81 = sphi 0, %s67
    %s87 = sphi 0, %s89
    %s90 = sphi 0, %s87
    %s91 = sphi 0, %s90
    %s107 = sphi 0, %s91
  $region4: #{fwd.17} parent=0 // loop_header_branch
    %12 = sbr.rel (%p10) target = $region8
  $region5: #{fwd.17} parent=0 // loop_body
    %s14 = ssub.s32 %s9, 1
    %s15 = ssub.s32 %s9, 2
    %s16 = sadd.s32 %s9, 1
    %s17 = ssub.s32 %s9, %s16
    %p18 = scmp.eq.s32.totalorder %s17, 0
    %s20 = sadd.s32 %s19, 1
    %s21 = scalar_select %p18, %s19, %s20
    %p24 = pneg %p18
    %p25 = scmp.eq.s32.totalorder %s9, 1
    %p26 = por %p24, %p25
    %p27 = scmp.ne.s32.totalorder %s19, %s22
    %p28 = scmp.eq.s32.totalorder %s9, 0
    %p29 = por %p27, %p28
    %p30 = scmp.ne.s32.totalorder %s19, %s22
    %p31 = scmp.eq.s32.totalorder %s14, 1
    %p32 = por %p30, %p31
    %p33 = scmp.ne.s32.totalorder %s22, %s23
    %p34 = scmp.eq.s32.totalorder %s14, 0
    %p35 = por %p33, %p34
    %p36 = scmp.ne.s32.totalorder %s22, %s23
    %p37 = scmp.eq.s32.totalorder %s15, 1
    %p38 = por %p36, %p37
    %p40 = scmp.ne.s32.totalorder %s23, %s39
    %p41 = scmp.eq.s32.totalorder %s15, 0
    %p42 = por %p40, %p41
    %s44 = sadd.s32 %s43, 1
    %p47 = scmp.eq.s32.totalorder %s9, 1
    %p48 = scmp.ne.s32.totalorder %s43, %s45
    %p49 = scmp.eq.s32.totalorder %s9, 0
    %p50 = por %p48, %p49
    %p51 = scmp.ne.s32.totalorder %s43, %s45
    %p52 = scmp.eq.s32.totalorder %s14, 1
    %p53 = por %p51, %p52
    %p54 = scmp.ne.s32.totalorder %s45, %s46
    %p55 = scmp.eq.s32.totalorder %s14, 0
    %p56 = por %p54, %p55
    %p57 = scmp.ne.s32.totalorder %s45, %s46
    %p58 = scmp.eq.s32.totalorder %s15, 1
    %p59 = por %p57, %p58
    %p61 = scmp.ne.s32.totalorder %s46, %s60
    %p62 = scmp.eq.s32.totalorder %s15, 0
    %p63 = por %p61, %p62
    %s65 = sadd.s32 %s64, 1
    %p68 = scmp.eq.s32.totalorder %s9, 1
    %p69 = scmp.ne.s32.totalorder %s64, %s66
    %p70 = scmp.eq.s32.totalorder %s9, 0
    %p71 = por %p69, %p70
    %p72 = scmp.ne.s32.totalorder %s64, %s66
    %p73 = scmp.eq.s32.totalorder %s14, 1
    %p74 = por %p72, %p73
    %p75 = scmp.ne.s32.totalorder %s66, %s67
    %p76 = scmp.eq.s32.totalorder %s14, 0
    %p77 = por %p75, %p76
    %p78 = scmp.ne.s32.totalorder %s66, %s67
    %p79 = scmp.eq.s32.totalorder %s15, 1
    %p80 = por %p78, %p79
    %p82 = scmp.ne.s32.totalorder %s67, %s81
    %p83 = scmp.eq.s32.totalorder %s15, 0
    %p84 = por %p82, %p83
    %s85 = ssub.s32 %s9, %s16
    %p86 = scmp.eq.s32.totalorder %s85, 0
    %s88 = sadd.s32 %s87, 1
    %s89 = scalar_select %p86, %s87, %s88
    %p92 = pneg %p86
    %p93 = scmp.eq.s32.totalorder %s9, 1
    %p94 = por %p92, %p93
    %p95 = scmp.ne.s32.totalorder %s87, %s90
    %p96 = scmp.eq.s32.totalorder %s9, 0
    %p97 = por %p95, %p96
    %p98 = scmp.ne.s32.totalorder %s87, %s90
    %p99 = scmp.eq.s32.totalorder %s14, 1
    %p100 = por %p98, %p99
    %p101 = scmp.ne.s32.totalorder %s90, %s91
    %p102 = scmp.eq.s32.totalorder %s14, 0
    %p103 = por %p101, %p102
    %p104 = scmp.ne.s32.totalorder %s90, %s91
    %p105 = scmp.eq.s32.totalorder %s15, 1
    %p106 = por %p104, %p105
    %p108 = scmp.ne.s32.totalorder %s91, %s107
    %p109 = scmp.eq.s32.totalorder %s15, 0
    %p110 = por %p108, %p109
    %p111 = scmp.le.s32.totalorder 1, %s9
    %p112 = scmp.lt.s32.totalorder %s9, 3
    %p113 = pnand %p111, %p112
    %p114 = pneg %p113
    // Predicated region
    $region9: #{fwd.17} parent=5 // pred_check
      _
    $region10: #{fwd.17} parent=5 // pred_check_branch
      %116 = sbr.rel (%p113) target = $region12
    $region11: #{fwd.17} parent=5 // pred_region
      %s117 = ssub.s32 %s9, 1
      // Predicated region
      $region13: #{fwd.17} parent=11 // pred_check
        %p118 = pneg %p56
      $region14: #{fwd.17} parent=11 // pred_check_branch
        %120 = sbr.rel (%p118) target = $region16
      $region15: #{fwd.17} parent=11 // pred_region
        _
      $region16: #{fwd.17} parent=11 // pred_fallthru
        _
      // Predicated region
      $region17: #{fwd.17} parent=11 // pred_check
        %p121 = pneg %p77
      $region18: #{fwd.17} parent=11 // pred_check_branch
        %123 = sbr.rel (%p121) target = $region20
      $region19: #{fwd.17} parent=11 // pred_region
        _
      $region20: #{fwd.17} parent=11 // pred_fallthru
        _
    $region12: #{fwd.17} parent=5 // pred_fallthru
      _
    %p124 = scmp.lt.s32.totalorder %s9, 2
    // Predicated region
    $region21: #{fwd.17} parent=5 // pred_check
      %p125 = pneg %p124
    $region22: #{fwd.17} parent=5 // pred_check_branch
      %127 = sbr.rel (%p125) target = $region24
    $region23: #{fwd.17} parent=5 // pred_region
      // Predicated region
      $region25: #{fwd.17} parent=23 // pred_check
        %p128 = pneg %p29
      $region26: #{fwd.17} parent=23 // pred_check_branch
        %130 = sbr.rel (%p128) target = $region28
      $region27: #{fwd.17} parent=23 // pred_region
        %p131 = scmp.lt.s32.totalorder %s9, 1
        %s132 = scalar_select %p131, %s9, 1
        %s133 = smul.addr %s132, 8
        %s134 = smul.addr %s133, 4
        %s135 = scalar_lea.vmem %s0, %s134
      $region28: #{fwd.17} parent=23 // pred_fallthru
        _
    $region24: #{fwd.17} parent=5 // pred_fallthru
      _
    %p136 = scmp.le.s32.totalorder 1, %s9
    %p137 = scmp.lt.s32.totalorder %s9, 3
    %p138 = pnand %p136, %p137
    %p139 = pneg %p138
    // Predicated region
    $region29: #{fwd.17} parent=5 // pred_check
      _
    $region30: #{fwd.17} parent=5 // pred_check_branch
      %141 = sbr.rel (%p138) target = $region32
    $region31: #{fwd.17} parent=5 // pred_region
      %s142 = ssub.s32 %s9, 1
      %p143 = scmp.lt.s32.totalorder %s14, 1
      %s144 = scalar_select %p143, %s14, 1
      %s145 = smul.addr %s144, 8
      %s146 = smul.addr %s145, 4
      %s147 = scalar_lea.vmem %s0, %s146
      %p148 = pneg %p35
      %p149 = pneg %p32
      %p150 = pneg %p56
      %p151 = pneg %p53
      %p152 = pneg %p77
      %p153 = pneg %p74
      %p154 = pneg %p103
      %p155 = pneg %p100
      %p156 = scmp.lt.s32.totalorder %s14, 1
      %s157 = scalar_select %p156, %s14, 1
      %s158 = smul.addr %s157, 8
      %s159 = smul.addr %s158, 8
      %s160 = scalar_lea.vmem %s3, %s159
      %p161 = scmp.lt.s32.totalorder %s14, 1
      %s162 = scalar_select %p161, %s14, 1
      %s163 = smul.addr %s162, 8
      %s164 = smul.addr %s163, 4
      %s165 = scalar_lea.vmem %s0, %s164
      %p166 = scmp.lt.s32.totalorder %s14, 1
      %s167 = scalar_select %p166, %s14, 1
      %s168 = smul.addr %s167, 8
      %s169 = smul.addr %s168, 8
      %s170 = scalar_lea.vmem %s3, %s169
      %v172 = vld [vmem:[%s165] sm:$0xf]
      %v173 = vld [vmem:[%s165 + $0x4] sm:$0xf]
      %v174 = vld [vmem:[%s165 + $0x8] sm:$0xf]
      %v175 = vld [vmem:[%s165 + $0xc] sm:$0xf]
      %v176 = vld [vmem:[%s165 + $0x10] sm:$0xf]
      %v177 = vld [vmem:[%s165 + $0x14] sm:$0xf]
      %v178 = vld [vmem:[%s165 + $0x18] sm:$0xf]
      %v179 = vld [vmem:[%s165 + $0x1c] sm:$0xf]
      %v180 = vld [vmem:[%s1] sm:$0xf]
      %v181 = vld [vmem:[%s1 + $0x4] sm:$0xf]
      %v182 = vld [vmem:[%s1 + $0x8] sm:$0xf]
      %v183 = vld [vmem:[%s1 + $0xc] sm:$0xf]
      %v184 = vld [vmem:[%s2] sm:$0x1]
      %v186 = vlaneseq
      %v187 = vshrl.u32 %v186, 7
      %v188 = vsub.s32 0, %v187
      %v189 = vrot.slane %v184, %v188
      %v199 = vunpack.c.l.b16 %v172
      %v200 = vunpack.c.l.b16 %v173
      %v201 = vunpack.c.l.b16 %v174
      %v202 = vunpack.c.l.b16 %v175
      %v203 = vunpack.c.l.b16 %v176
      %v204 = vunpack.c.l.b16 %v177
      %v205 = vunpack.c.l.b16 %v178
      %v206 = vunpack.c.l.b16 %v179
      %v207 = vpack.c.b16 %v200, %v199
      %v208 = vpack.c.b16 %v202, %v201
      %v209 = vpack.c.b16 %v204, %v203
      %v210 = vpack.c.b16 %v206, %v205
      %v215 = vunpack.c.l.b16 %v180
      %v216 = vunpack.c.l.b16 %v181
      %v217 = vunpack.c.l.b16 %v182
      %v218 = vunpack.c.l.b16 %v183
      %v219 = vpack.c.b16 %v216, %v215
      %v220 = vpack.c.b16 %v218, %v217
      %vm223 = vcmask 261120
      %v225 = vsel %vm223, %v207, 0
      %v228 = vsel %vm223, %v208, 0
      %v231 = vsel %vm223, %v209, 0
      %v234 = vsel %vm223, %v210, 0
      %236 = vmatprep.subr.bf16.mxu0 0
      %237 = vmatpush1.bf16.msra.mxu0 %v219
      %238 = vmatprep.subr.bf16.mxu0 0
      %239 = vmatpush1.bf16.msra.mxu0 %v220
      %240 = vmatprep.subr.bf16.mxu0 0
      %241 = vmatpush1.bf16.msra.mxu0 0
      %242 = vmatprep.subr.bf16.mxu0 0
      %243 = vmatpush1.bf16.msra.mxu0 0
      %244 = vmatprep.subr.bf16.mxu0 0
      %245 = vmatpush1.bf16.msra.mxu0 0
      %246 = vmatprep.subr.bf16.mxu0 0
      %247 = vmatpush1.bf16.msra.mxu0 0
      %248 = vmatprep.subr.bf16.mxu0 0
      %249 = vmatpush1.bf16.msra.mxu0 0
      %250 = vmatprep.subr.bf16.mxu0 0
      %251 = vmatpush1.bf16.msra.mxu0 0
      %252 = vmatprep.subr.bf16.mxu0 0
      %253 = vmatpush1.bf16.msra.mxu0 0
      %254 = vmatprep.subr.bf16.mxu0 0
      %255 = vmatpush1.bf16.msra.mxu0 0
      %256 = vmatprep.subr.bf16.mxu0 0
      %257 = vmatpush1.bf16.msra.mxu0 0
      %258 = vmatprep.subr.bf16.mxu0 0
      %259 = vmatpush1.bf16.msra.mxu0 0
      %260 = vmatprep.subr.bf16.mxu0 0
      %261 = vmatpush1.bf16.msra.mxu0 0
      %262 = vmatprep.subr.bf16.mxu0 0
      %263 = vmatpush1.bf16.msra.mxu0 0
      %264 = vmatprep.subr.bf16.mxu0 0
      %265 = vmatpush1.bf16.msra.mxu0 0
      %266 = vmatprep.subr.bf16.mxu0 0
      %267 = vmatpush1.bf16.msra.mxu0 0
      %268 = vmatprep.mubr.bf16.mxu0 0
      %269 = vmatmul.mubr.bf16.gmra.mrb[0].mxu0 %v225
      %v270 = vpop.f32.mrb[0].mxu0
      %v271 = vadd.f32 %v189, %v270
      %v272 = vpop.f32.mrb[0].mxu0
      %v273 = vpop.f32.mrb[0].mxu0
      %v274 = vadd.f32 %v189, %v273
      %v275 = vpop.f32.mrb[0].mxu0
      %276 = vmatprep.mubr.bf16.mxu0 0
      %277 = vmatmul.mubr.bf16.gmra.mrb[0].mxu0 %v228
      %v278 = vpop.f32.mrb[0].mxu0
      %v279 = vadd.f32 %v189, %v278
      %v280 = vpop.f32.mrb[0].mxu0
      %v281 = vpop.f32.mrb[0].mxu0
      %v282 = vadd.f32 %v189, %v281
      %v283 = vpop.f32.mrb[0].mxu0
      %284 = vmatprep.mubr.bf16.mxu0 0
      %285 = vmatmul.mubr.bf16.gmra.mrb[0].mxu0 %v231
      %v286 = vpop.f32.mrb[0].mxu0
      %v287 = vadd.f32 %v189, %v286
      %v288 = vpop.f32.mrb[0].mxu0
      %v289 = vpop.f32.mrb[0].mxu0
      %v290 = vadd.f32 %v189, %v289
      %v291 = vpop.f32.mrb[0].mxu0
      %292 = vmatprep.mubr.bf16.mxu0 0
      %293 = vmatmul.mubr.bf16.gmra.mrb[0].mxu0 %v234
      %v294 = vpop.f32.mrb[0].mxu0
      %v295 = vadd.f32 %v189, %v294
      %v296 = vpop.f32.mrb[0].mxu0
      %v297 = vpop.f32.mrb[0].mxu0
      %v298 = vadd.f32 %v189, %v297
      %v299 = vpop.f32.mrb[0].mxu0
      %300 = vdwg.mxu0
      %vm301 = vcmask 171008
      %302 = vst.msk [vmem:[%s170] sm:$0xff] %vm301, %v271
      %303 = vst.msk [vmem:[%s170 + $0x8] sm:$0xff] %vm301, %v274
      %304 = vst.msk [vmem:[%s170 + $0x10] sm:$0xff] %vm301, %v279
      %305 = vst.msk [vmem:[%s170 + $0x18] sm:$0xff] %vm301, %v282
      %306 = vst.msk [vmem:[%s170 + $0x20] sm:$0xff] %vm301, %v287
      %307 = vst.msk [vmem:[%s170 + $0x28] sm:$0xff] %vm301, %v290
      %308 = vst.msk [vmem:[%s170 + $0x30] sm:$0xff] %vm301, %v295
      %309 = vst.msk [vmem:[%s170 + $0x38] sm:$0xff] %vm301, %v298
      %p310 = scmp.lt.s32.totalorder %s14, 1
      %s311 = scalar_select %p310, %s14, 1
      %s312 = smul.addr %s311, 8
      %s313 = smul.addr %s312, 8
      %s314 = scalar_lea.vmem %s3, %s313
      // Predicated region
      $region33: #{fwd.17} parent=31 // pred_check
        %p315 = pneg %p100
      $region34: #{fwd.17} parent=31 // pred_check_branch
        %317 = sbr.rel (%p315) target = $region36
      $region35: #{fwd.17} parent=31 // pred_region
        _
      $region36: #{fwd.17} parent=31 // pred_fallthru
        _
    $region32: #{fwd.17} parent=5 // pred_fallthru
      _
    %p318 = scmp.le.s32.totalorder 2, %s9
    // Predicated region
    $region37: #{fwd.17} parent=5 // pred_check
      %p319 = pneg %p318
    $region38: #{fwd.17} parent=5 // pred_check_branch
      %321 = sbr.rel (%p319) target = $region40
    $region39: #{fwd.17} parent=5 // pred_region
      %s322 = ssub.s32 %s9, 2
      // Predicated region
      $region41: #{fwd.17} parent=39 // pred_check
        %p323 = pneg %p106
      $region42: #{fwd.17} parent=39 // pred_check_branch
        %325 = sbr.rel (%p323) target = $region44
      $region43: #{fwd.17} parent=39 // pred_region
        %p326 = scmp.lt.s32.totalorder %s15, 1
        %s327 = scalar_select %p326, %s15, 1
        %s328 = smul.addr %s327, 8
        %s329 = smul.addr %s328, 8
        %s330 = scalar_lea.vmem %s3, %s329
      $region44: #{fwd.17} parent=39 // pred_fallthru
        _
    $region40: #{fwd.17} parent=5 // pred_fallthru
      _
  $region6: #{fwd.17} parent=0 // loop_footer
    %s13 = sadd.s32 1, %s9
  $region7: #{fwd.17} parent=0 // loop_footer_branch
    %8 = sbr.rel target = $region3
  $region8: #{fwd.17} parent=0 // loop_exit
    _

</llo_original>
